<compile_context>
chip_gen: v7x
topology: tpu7x:2x2x1
jax: 0.10.0
libtpu: 0.0.40
codegen_flags: <defaults>
</compile_context>

<pallas_src>
import functools

import numpy as np
import jax
import jax.numpy as jnp
from jax.experimental import pallas as pl
from jax.experimental.pallas import tpu as pltpu


# -----------------------------------------------------------------------------
# The single fused kernel.
# -----------------------------------------------------------------------------
def _fused_kernel(pat_ref, w1_ref, w2_ref, b2_ref,
                  wf1_ref, bf1_ref, wf2_ref, bf2_ref,
                  out_ref, yp_ref, pq_ref, fcin_ref):
    f32 = jnp.float32
    bf16 = jnp.bfloat16

    # ---- conv1 (+bias via augmented K column) + ReLU + 2x2 maxpool -----------
    # pat rows: q*256 + g*64 + (i*8 + j); K = 9 taps + 1 bias-indicator column.
    z1 = jnp.dot(pat_ref[0], w1_ref[...], preferred_element_type=f32)   # (1024,16)
    z1 = jnp.maximum(jnp.maximum(z1[0:256], z1[256:512]),
                     jnp.maximum(z1[512:768], z1[768:1024]))            # pool max
    y1 = jnp.maximum(z1, 0.0)                                           # (256,16)
    # y1 row g*64 + i*8 + j == zero-padded pooled conv1 output ypad[2i+ph, 2j+pw, :]
    # with g = 2*ph + pw (padding rows are exactly zero thanks to the bias column).
    yp_ref[...] = jnp.zeros((4, 72, 16), f32)
    for g in range(4):
        yp_ref[g, 0:64, :] = y1[g * 64:(g + 1) * 64, :]

    # ---- conv2 + bias + ReLU + 2x2 maxpool ------------------------------------
    # Build pool-position-ordered im2col patches straight from the parity slabs
    # (pure contiguous offset copies -- no strided access), then ONE contraction.
    for qh in range(2):
        for qw in range(2):
            q = 2 * qh + qw
            for kh in range(3):
                for kw in range(3):
                    ph, ah = (qh + kh) & 1, (qh + kh) >> 1
                    pw, aw = (qw + kw) & 1, (qw + kw) >> 1
                    g = 2 * ph + pw
                    off = ah * 8 + aw
                    k = kh * 3 + kw
                    pq_ref[q * 56:(q + 1) * 56, k * 16:(k + 1) * 16] = (
                        yp_ref[g, off:off + 56, :])
    z2 = jnp.dot(pq_ref[...].astype(bf16), w2_ref[...],
                 preferred_element_type=f32)                            # (224,32)
    z2 = jnp.maximum(jnp.maximum(z2[0:56], z2[56:112]),
                     jnp.maximum(z2[112:168], z2[168:224]))             # pool max
    y2 = jnp.maximum(z2 + b2_ref[...], 0.0)                             # (56,32)
    # y2 row m = mh*8 + mw (mw <= 6 valid; junk rows hit zero fc1 weight rows).

    # ---- flatten (sublanes -> lanes) + fc1 + ReLU + fc2 -----------------------
    for p in range(55):
        fcin_ref[0:1, p * 32:(p + 1) * 32] = y2[p:p + 1, :]
    xf = fcin_ref[...].astype(bf16)                                     # (1,1760)
    h = jnp.dot(xf, wf1_ref[...], preferred_element_type=f32) + bf1_ref[...]
    h = jnp.maximum(h, 0.0)                                             # (1,512)
    o = jnp.dot(h.astype(bf16), wf2_ref[...],
                preferred_element_type=f32) + bf2_ref[...]              # (1,128)
    out_ref[0] = jnp.broadcast_to(o, (8, 128))


def _fused_forward(pat1, w1, w2, b2, wf1, bf1, wf2, bf2):
    B = pat1.shape[0]
    return pl.pallas_call(
        _fused_kernel,
        out_shape=jax.ShapeDtypeStruct((B, 8, 128), jnp.float32),
        grid=(B,),
        in_specs=[
            pl.BlockSpec((1, 1024, 10), lambda b: (b, 0, 0)),   # conv1 patches
            pl.BlockSpec((10, 16), lambda b: (0, 0)),           # conv1 weight (+bias row)
            pl.BlockSpec((144, 32), lambda b: (0, 0)),          # conv2 weight
            pl.BlockSpec((1, 32), lambda b: (0, 0)),            # conv2 bias
            pl.BlockSpec((1760, 512), lambda b: (0, 0)),        # fc1 weight (flatten folded in)
            pl.BlockSpec((1, 512), lambda b: (0, 0)),           # fc1 bias
            pl.BlockSpec((512, 128), lambda b: (0, 0)),         # fc2 weight (13 -> 128 pad)
            pl.BlockSpec((1, 128), lambda b: (0, 0)),           # fc2 bias (padded)
        ],
        out_specs=pl.BlockSpec((1, 8, 128), lambda b: (b, 0, 0)),
        scratch_shapes=[
            pltpu.VMEM((4, 72, 16), jnp.float32),   # parity slabs of padded conv1 output
            pltpu.VMEM((224, 144), jnp.float32),    # pool-ordered conv2 im2col patches
            pltpu.VMEM((1, 1760), jnp.float32),     # flattened fc input
        ],
        compiler_params=pltpu.CompilerParams(
            dimension_semantics=("parallel",)),     # batch shards across TCs on v7x
    )(pat1, w1, w2, b2, wf1, bf1, wf2, bf2)


# -----------------------------------------------------------------------------
# Input-side patch construction (cheap XLA on the raw image only).
# -----------------------------------------------------------------------------
def _build_conv1_patches(x_nchw):
    """(B,1,28,28) -> (B, 1024, 10) bf16 pool/parity-ordered conv1 patches."""
    B = x_nchw.shape[0]
    x = x_nchw[:, 0].astype(jnp.float32)                   # (B,28,28)
    xb = jnp.pad(x, ((0, 0), (3, 3), (3, 3)))              # (B,34,34)
    # taps[(oh,ow)][b, i*8+j] = xb[b, 4i+oh, 4j+ow]
    taps = {}
    for oh in range(6):
        for ow in range(6):
            taps[(oh, ow)] = xb[:, oh:oh + 29:4, ow:ow + 29:4].reshape(B, 64)
    # validity of (g, i, j): conv1-pooled index (2i+ph-1, 2j+pw-1) inside [0,13]^2
    ii, jj = np.meshgrid(np.arange(8), np.arange(8), indexing="ij")
    valid = {}
    for ph in range(2):
        for pw in range(2):
            h1 = 2 * ii + ph - 1
            w1 = 2 * jj + pw - 1
            ok = (h1 >= 0) & (h1 <= 13) & (w1 >= 0) & (w1 <= 13)
            valid[2 * ph + pw] = jnp.asarray(ok.astype(np.float32).reshape(64))
    blocks = []
    for qh in range(2):
        for qw in range(2):
            for ph in range(2):
                for pw in range(2):
                    v = valid[2 * ph + pw]
                    cols = [taps[(2 * ph + qh + kh, 2 * pw + qw + kw)] * v[None, :]
                            for kh in range(3) for kw in range(3)]
                    cols.append(jnp.broadcast_to(v[None, :], (B, 64)))   # bias column
                    blocks.append(jnp.stack(cols, axis=-1))              # (B,64,10)
    pat = jnp.concatenate(blocks, axis=1)                                # (B,1024,10)
    return pat.astype(jnp.bfloat16)


# -----------------------------------------------------------------------------
# Parameters (PyTorch-shaped) and kernel-ready prep (done once).
# -----------------------------------------------------------------------------
def init_params(key):
    ks = jax.random.split(key, 8)

    def u(k, shape, fan_in):
        bound = 1.0 / jnp.sqrt(jnp.float32(fan_in))
        return jax.random.uniform(k, shape, jnp.float32, -bound, bound)

    return {
        "conv1_w": u(ks[0], (16, 1, 3, 3), 1 * 9),
        "conv1_b": u(ks[1], (16,), 1 * 9),
        "conv2_w": u(ks[2], (32, 16, 3, 3), 16 * 9),
        "conv2_b": u(ks[3], (32,), 16 * 9),
        "fc1_w": u(ks[4], (512, 32 * 7 * 7), 32 * 7 * 7),
        "fc1_b": u(ks[5], (512,), 32 * 7 * 7),
        "fc2_w": u(ks[6], (13, 512), 512),
        "fc2_b": u(ks[7], (13,), 512),
    }


def prepare_params(p):
    # conv1: (16,1,3,3) -> (3,3,1,16) -> (9,16); append bias row -> (10,16)
    w1 = jnp.transpose(p["conv1_w"], (2, 3, 1, 0)).reshape(9, 16)
    w1 = jnp.concatenate([w1, p["conv1_b"].reshape(1, 16)], axis=0)
    # conv2: (32,16,3,3) -> (3,3,16,32) -> (144,32), rows (kh*3+kw)*16 + cin
    w2 = jnp.transpose(p["conv2_w"], (2, 3, 1, 0)).reshape(144, 32)
    # fc1: fold the PyTorch NCHW flatten + the kernel's 55x32 junk-padded layout
    # into the weight: rows ordered (mh, mw padded to 8, cout); junk rows (mw==7)
    # get zero weights.
    f1 = p["fc1_w"].reshape(512, 32, 7, 7).transpose(2, 3, 1, 0)    # (7,7,32,512)
    f1 = jnp.pad(f1, ((0, 0), (0, 1), (0, 0), (0, 0)))              # (7,8,32,512)
    f1 = f1.reshape(1792, 512)[:1760]
    # fc2: transpose and zero-pad 13 -> 128 output columns (lane-dense store)
    f2 = jnp.pad(jnp.transpose(p["fc2_w"]), ((0, 0), (0, 128 - 13)))
    return {
        "w1": w1.astype(jnp.bfloat16),
        "w2": w2.astype(jnp.bfloat16),
        "b2": p["conv2_b"].reshape(1, 32),
        "wf1": f1.astype(jnp.bfloat16),
        "bf1": p["fc1_b"].reshape(1, 512),
        "wf2": f2.astype(jnp.bfloat16),
        "bf2": jnp.pad(p["fc2_b"], (0, 128 - 13)).reshape(1, 128),
    }


def chess_piece_model_forward(kparams, x_nchw):
    pat = _build_conv1_patches(x_nchw)                               # (B,1024,10)
    out = _fused_forward(pat, kparams["w1"], kparams["w2"], kparams["b2"],
                         kparams["wf1"], kparams["bf1"],
                         kparams["wf2"], kparams["bf2"])             # (B,8,128)
    return out[:, 0, :13]


if __name__ == "__main__":
    key = jax.random.PRNGKey(0)
    pkey, xkey = jax.random.split(key)
    params = init_params(pkey)
    kparams = prepare_params(params)

    x = jax.random.normal(xkey, (2, 1, 28, 28), jnp.float32)         # NCHW like PyTorch

    fwd = jax.jit(functools.partial(chess_piece_model_forward, kparams))
    out = jax.block_until_ready(fwd(x))

    assert out.shape == (2, 13), out.shape
    assert out.dtype == jnp.float32
    assert bool(jnp.all(jnp.isfinite(out)))
    print("KERNEL_OK")
</pallas_src>

<mosaic_0001>
module attributes {stable_mosaic.version = 11 : i64} {
  func.func @_fused_kernel(%arg0: i32, %arg1: memref<1x1024x10xbf16, #tpu.memory_space<vmem>>, %arg2: memref<10x16xbf16, #tpu.memory_space<vmem>>, %arg3: memref<144x32xbf16, #tpu.memory_space<vmem>>, %arg4: memref<1x32xf32, #tpu.memory_space<vmem>>, %arg5: memref<1760x512xbf16, #tpu.memory_space<vmem>>, %arg6: memref<1x512xf32, #tpu.memory_space<vmem>>, %arg7: memref<512x128xbf16, #tpu.memory_space<vmem>>, %arg8: memref<1x128xf32, #tpu.memory_space<vmem>>, %arg9: memref<1x8x128xf32, #tpu.memory_space<vmem>>, %arg10: memref<4x72x16xf32, #tpu.memory_space<vmem>>, %arg11: memref<224x144xf32, #tpu.memory_space<vmem>>, %arg12: memref<1x1760xf32, #tpu.memory_space<vmem>>) attributes {dimension_semantics = [#tpu.dimension_semantics<parallel>], iteration_bounds = array<i64: 2>, scalar_prefetch = 0 : i64, scratch_operands = 3 : i64, tpu.core_type = #tpu.core_type<tc>, window_params = [{transform_indices = @transform_0, window_bounds = array<i64: 1, 1024, 10>}, {pipeline_mode = #tpu.pipeline_mode<synchronous>, transform_indices = @transform_1, window_bounds = array<i64: 10, 16>}, {pipeline_mode = #tpu.pipeline_mode<synchronous>, transform_indices = @transform_2, window_bounds = array<i64: 144, 32>}, {pipeline_mode = #tpu.pipeline_mode<synchronous>, transform_indices = @transform_3, window_bounds = array<i64: 1, 32>}, {pipeline_mode = #tpu.pipeline_mode<synchronous>, transform_indices = @transform_4, window_bounds = array<i64: 1760, 512>}, {pipeline_mode = #tpu.pipeline_mode<synchronous>, transform_indices = @transform_5, window_bounds = array<i64: 1, 512>}, {pipeline_mode = #tpu.pipeline_mode<synchronous>, transform_indices = @transform_6, window_bounds = array<i64: 512, 128>}, {pipeline_mode = #tpu.pipeline_mode<synchronous>, transform_indices = @transform_7, window_bounds = array<i64: 1, 128>}, {transform_indices = @transform_8, window_bounds = array<i64: 1, 8, 128>}]} {
    %c0 = arith.constant 0 : index
    %c0_0 = arith.constant 0 : index
    %c0_1 = arith.constant 0 : index
    %0 = vector.load %arg1[%c0, %c0_0, %c0_1] : memref<1x1024x10xbf16, #tpu.memory_space<vmem>>, vector<1x1024x10xbf16>
    %1 = vector.shape_cast %0 : vector<1x1024x10xbf16> to vector<1024x10xbf16>
    %c0_2 = arith.constant 0 : index
    %c0_3 = arith.constant 0 : index
    %2 = vector.load %arg2[%c0_2, %c0_3] : memref<10x16xbf16, #tpu.memory_space<vmem>>, vector<10x16xbf16>
    %cst = arith.constant dense<0.000000e+00> : vector<1024x16xf32>
    %3 = tpu.matmul %1, %2, %cst {dimension_numbers = #tpu.dot_dimension_numbers<[1], [0], [0], [1], [0, 0, 1, 1], [], []>} : vector<1024x10xbf16>, vector<10x16xbf16>, vector<1024x16xf32> -> vector<1024x16xf32>
    %4 = vector.extract_strided_slice %3 {offsets = [0, 0], sizes = [256, 16], strides = [1, 1]} : vector<1024x16xf32> to vector<256x16xf32>
    %5 = vector.extract_strided_slice %3 {offsets = [256, 0], sizes = [256, 16], strides = [1, 1]} : vector<1024x16xf32> to vector<256x16xf32>
    %6 = arith.maximumf %4, %5 : vector<256x16xf32>
    %7 = vector.extract_strided_slice %3 {offsets = [512, 0], sizes = [256, 16], strides = [1, 1]} : vector<1024x16xf32> to vector<256x16xf32>
    %8 = vector.extract_strided_slice %3 {offsets = [768, 0], sizes = [256, 16], strides = [1, 1]} : vector<1024x16xf32> to vector<256x16xf32>
    %9 = arith.maximumf %7, %8 : vector<256x16xf32>
    %10 = arith.maximumf %6, %9 : vector<256x16xf32>
    %cst_4 = arith.constant 0.000000e+00 : f32
    %11 = vector.broadcast %cst_4 : f32 to vector<256x16xf32>
    %12 = arith.maximumf %10, %11 : vector<256x16xf32>
    %cst_5 = arith.constant 0.000000e+00 : f32
    %13 = vector.broadcast %cst_5 : f32 to vector<4x72x16xf32>
    %c0_6 = arith.constant 0 : index
    %c0_7 = arith.constant 0 : index
    %c0_8 = arith.constant 0 : index
    %14 = vector.load %arg10[%c0_6, %c0_7, %c0_8] : memref<4x72x16xf32, #tpu.memory_space<vmem>>, vector<4x72x16xf32>
    tpu.vector_store %arg10[%c0_6, %c0_7, %c0_8], %13 {strides = array<i32>} : memref<4x72x16xf32, #tpu.memory_space<vmem>>, vector<4x72x16xf32>,
    %15 = vector.extract_strided_slice %12 {offsets = [0, 0], sizes = [64, 16], strides = [1, 1]} : vector<256x16xf32> to vector<64x16xf32>
    %c0_9 = arith.constant 0 : index
    %c0_10 = arith.constant 0 : index
    %c0_11 = arith.constant 0 : index
    %16 = vector.load %arg10[%c0_9, %c0_10, %c0_11] : memref<4x72x16xf32, #tpu.memory_space<vmem>>, vector<1x64x16xf32>
    %17 = vector.shape_cast %16 : vector<1x64x16xf32> to vector<64x16xf32>
    %18 = vector.shape_cast %15 : vector<64x16xf32> to vector<1x64x16xf32>
    tpu.vector_store %arg10[%c0_9, %c0_10, %c0_11], %18 {strides = array<i32>} : memref<4x72x16xf32, #tpu.memory_space<vmem>>, vector<1x64x16xf32>,
    %19 = vector.extract_strided_slice %12 {offsets = [64, 0], sizes = [64, 16], strides = [1, 1]} : vector<256x16xf32> to vector<64x16xf32>
    %c1 = arith.constant 1 : index
    %c0_12 = arith.constant 0 : index
    %c0_13 = arith.constant 0 : index
    %20 = vector.load %arg10[%c1, %c0_12, %c0_13] : memref<4x72x16xf32, #tpu.memory_space<vmem>>, vector<1x64x16xf32>
    %21 = vector.shape_cast %20 : vector<1x64x16xf32> to vector<64x16xf32>
    %22 = vector.shape_cast %19 : vector<64x16xf32> to vector<1x64x16xf32>
    tpu.vector_store %arg10[%c1, %c0_12, %c0_13], %22 {strides = array<i32>} : memref<4x72x16xf32, #tpu.memory_space<vmem>>, vector<1x64x16xf32>,
    %23 = vector.extract_strided_slice %12 {offsets = [128, 0], sizes = [64, 16], strides = [1, 1]} : vector<256x16xf32> to vector<64x16xf32>
    %c2 = arith.constant 2 : index
    %c0_14 = arith.constant 0 : index
    %c0_15 = arith.constant 0 : index
    %24 = vector.load %arg10[%c2, %c0_14, %c0_15] : memref<4x72x16xf32, #tpu.memory_space<vmem>>, vector<1x64x16xf32>
    %25 = vector.shape_cast %24 : vector<1x64x16xf32> to vector<64x16xf32>
    %26 = vector.shape_cast %23 : vector<64x16xf32> to vector<1x64x16xf32>
    tpu.vector_store %arg10[%c2, %c0_14, %c0_15], %26 {strides = array<i32>} : memref<4x72x16xf32, #tpu.memory_space<vmem>>, vector<1x64x16xf32>,
    %27 = vector.extract_strided_slice %12 {offsets = [192, 0], sizes = [64, 16], strides = [1, 1]} : vector<256x16xf32> to vector<64x16xf32>
    %c3 = arith.constant 3 : index
    %c0_16 = arith.constant 0 : index
    %c0_17 = arith.constant 0 : index
    %28 = vector.load %arg10[%c3, %c0_16, %c0_17] : memref<4x72x16xf32, #tpu.memory_space<vmem>>, vector<1x64x16xf32>
    %29 = vector.shape_cast %28 : vector<1x64x16xf32> to vector<64x16xf32>
    %30 = vector.shape_cast %27 : vector<64x16xf32> to vector<1x64x16xf32>
    tpu.vector_store %arg10[%c3, %c0_16, %c0_17], %30 {strides = array<i32>} : memref<4x72x16xf32, #tpu.memory_space<vmem>>, vector<1x64x16xf32>,
    %c0_18 = arith.constant 0 : index
    %c0_19 = arith.constant 0 : index
    %c0_20 = arith.constant 0 : index
    %31 = vector.load %arg10[%c0_18, %c0_19, %c0_20] : memref<4x72x16xf32, #tpu.memory_space<vmem>>, vector<1x56x16xf32>
    %32 = vector.shape_cast %31 : vector<1x56x16xf32> to vector<56x16xf32>
    %c0_21 = arith.constant 0 : index
    %c0_22 = arith.constant 0 : index
    %33 = vector.load %arg11[%c0_21, %c0_22] : memref<224x144xf32, #tpu.memory_space<vmem>>, vector<56x16xf32>
    tpu.vector_store %arg11[%c0_21, %c0_22], %32 {strides = array<i32>} : memref<224x144xf32, #tpu.memory_space<vmem>>, vector<56x16xf32>,
    %c1_23 = arith.constant 1 : index
    %c0_24 = arith.constant 0 : index
    %c0_25 = arith.constant 0 : index
    %34 = vector.load %arg10[%c1_23, %c0_24, %c0_25] : memref<4x72x16xf32, #tpu.memory_space<vmem>>, vector<1x56x16xf32>
    %35 = vector.shape_cast %34 : vector<1x56x16xf32> to vector<56x16xf32>
    %c0_26 = arith.constant 0 : index
    %c16 = arith.constant 16 : index
    %36 = vector.load %arg11[%c0_26, %c16] : memref<224x144xf32, #tpu.memory_space<vmem>>, vector<56x16xf32>
    tpu.vector_store %arg11[%c0_26, %c16], %35 {strides = array<i32>} : memref<224x144xf32, #tpu.memory_space<vmem>>, vector<56x16xf32>,
    %c0_27 = arith.constant 0 : index
    %c1_28 = arith.constant 1 : index
    %c0_29 = arith.constant 0 : index
    %37 = vector.load %arg10[%c0_27, %c1_28, %c0_29] : memref<4x72x16xf32, #tpu.memory_space<vmem>>, vector<1x56x16xf32>
    %38 = vector.shape_cast %37 : vector<1x56x16xf32> to vector<56x16xf32>
    %c0_30 = arith.constant 0 : index
    %c32 = arith.constant 32 : index
    %39 = vector.load %arg11[%c0_30, %c32] : memref<224x144xf32, #tpu.memory_space<vmem>>, vector<56x16xf32>
    tpu.vector_store %arg11[%c0_30, %c32], %38 {strides = array<i32>} : memref<224x144xf32, #tpu.memory_space<vmem>>, vector<56x16xf32>,
    %c2_31 = arith.constant 2 : index
    %c0_32 = arith.constant 0 : index
    %c0_33 = arith.constant 0 : index
    %40 = vector.load %arg10[%c2_31, %c0_32, %c0_33] : memref<4x72x16xf32, #tpu.memory_space<vmem>>, vector<1x56x16xf32>
    %41 = vector.shape_cast %40 : vector<1x56x16xf32> to vector<56x16xf32>
    %c0_34 = arith.constant 0 : index
    %c48 = arith.constant 48 : index
    %42 = vector.load %arg11[%c0_34, %c48] : memref<224x144xf32, #tpu.memory_space<vmem>>, vector<56x16xf32>
    tpu.vector_store %arg11[%c0_34, %c48], %41 {strides = array<i32>} : memref<224x144xf32, #tpu.memory_space<vmem>>, vector<56x16xf32>,
    %c3_35 = arith.constant 3 : index
    %c0_36 = arith.constant 0 : index
    %c0_37 = arith.constant 0 : index
    %43 = vector.load %arg10[%c3_35, %c0_36, %c0_37] : memref<4x72x16xf32, #tpu.memory_space<vmem>>, vector<1x56x16xf32>
    %44 = vector.shape_cast %43 : vector<1x56x16xf32> to vector<56x16xf32>
    %c0_38 = arith.constant 0 : index
    %c64 = arith.constant 64 : index
    %45 = vector.load %arg11[%c0_38, %c64] : memref<224x144xf32, #tpu.memory_space<vmem>>, vector<56x16xf32>
    tpu.vector_store %arg11[%c0_38, %c64], %44 {strides = array<i32>} : memref<224x144xf32, #tpu.memory_space<vmem>>, vector<56x16xf32>,
    %c2_39 = arith.constant 2 : index
    %c1_40 = arith.constant 1 : index
    %c0_41 = arith.constant 0 : index
    %46 = vector.load %arg10[%c2_39, %c1_40, %c0_41] : memref<4x72x16xf32, #tpu.memory_space<vmem>>, vector<1x56x16xf32>
    %47 = vector.shape_cast %46 : vector<1x56x16xf32> to vector<56x16xf32>
    %c0_42 = arith.constant 0 : index
    %c80 = arith.constant 80 : index
    %48 = vector.load %arg11[%c0_42, %c80] : memref<224x144xf32, #tpu.memory_space<vmem>>, vector<56x16xf32>
    tpu.vector_store %arg11[%c0_42, %c80], %47 {strides = array<i32>} : memref<224x144xf32, #tpu.memory_space<vmem>>, vector<56x16xf32>,
    %c0_43 = arith.constant 0 : index
    %c8 = arith.constant 8 : index
    %c0_44 = arith.constant 0 : index
    %49 = vector.load %arg10[%c0_43, %c8, %c0_44] : memref<4x72x16xf32, #tpu.memory_space<vmem>>, vector<1x56x16xf32>
    %50 = vector.shape_cast %49 : vector<1x56x16xf32> to vector<56x16xf32>
    %c0_45 = arith.constant 0 : index
    %c96 = arith.constant 96 : index
    %51 = vector.load %arg11[%c0_45, %c96] : memref<224x144xf32, #tpu.memory_space<vmem>>, vector<56x16xf32>
    tpu.vector_store %arg11[%c0_45, %c96], %50 {strides = array<i32>} : memref<224x144xf32, #tpu.memory_space<vmem>>, vector<56x16xf32>,
    %c1_46 = arith.constant 1 : index
    %c8_47 = arith.constant 8 : index
    %c0_48 = arith.constant 0 : index
    %52 = vector.load %arg10[%c1_46, %c8_47, %c0_48] : memref<4x72x16xf32, #tpu.memory_space<vmem>>, vector<1x56x16xf32>
    %53 = vector.shape_cast %52 : vector<1x56x16xf32> to vector<56x16xf32>
    %c0_49 = arith.constant 0 : index
    %c112 = arith.constant 112 : index
    %54 = vector.load %arg11[%c0_49, %c112] : memref<224x144xf32, #tpu.memory_space<vmem>>, vector<56x16xf32>
    tpu.vector_store %arg11[%c0_49, %c112], %53 {strides = array<i32>} : memref<224x144xf32, #tpu.memory_space<vmem>>, vector<56x16xf32>,
    %c0_50 = arith.constant 0 : index
    %c9 = arith.constant 9 : index
    %c0_51 = arith.constant 0 : index
    %55 = vector.load %arg10[%c0_50, %c9, %c0_51] : memref<4x72x16xf32, #tpu.memory_space<vmem>>, vector<1x56x16xf32>
    %56 = vector.shape_cast %55 : vector<1x56x16xf32> to vector<56x16xf32>
    %c0_52 = arith.constant 0 : index
    %c128 = arith.constant 128 : index
    %57 = vector.load %arg11[%c0_52, %c128] : memref<224x144xf32, #tpu.memory_space<vmem>>, vector<56x16xf32>
    tpu.vector_store %arg11[%c0_52, %c128], %56 {strides = array<i32>} : memref<224x144xf32, #tpu.memory_space<vmem>>, vector<56x16xf32>,
    %c1_53 = arith.constant 1 : index
    %c0_54 = arith.constant 0 : index
    %c0_55 = arith.constant 0 : index
    %58 = vector.load %arg10[%c1_53, %c0_54, %c0_55] : memref<4x72x16xf32, #tpu.memory_space<vmem>>, vector<1x56x16xf32>
    %59 = vector.shape_cast %58 : vector<1x56x16xf32> to vector<56x16xf32>
    %c56 = arith.constant 56 : index
    %c0_56 = arith.constant 0 : index
    %60 = vector.load %arg11[%c56, %c0_56] : memref<224x144xf32, #tpu.memory_space<vmem>>, vector<56x16xf32>
    tpu.vector_store %arg11[%c56, %c0_56], %59 {strides = array<i32>} : memref<224x144xf32, #tpu.memory_space<vmem>>, vector<56x16xf32>,
    %c0_57 = arith.constant 0 : index
    %c1_58 = arith.constant 1 : index
    %c0_59 = arith.constant 0 : index
    %61 = vector.load %arg10[%c0_57, %c1_58, %c0_59] : memref<4x72x16xf32, #tpu.memory_space<vmem>>, vector<1x56x16xf32>
    %62 = vector.shape_cast %61 : vector<1x56x16xf32> to vector<56x16xf32>
    %c56_60 = arith.constant 56 : index
    %c16_61 = arith.constant 16 : index
    %63 = vector.load %arg11[%c56_60, %c16_61] : memref<224x144xf32, #tpu.memory_space<vmem>>, vector<56x16xf32>
    tpu.vector_store %arg11[%c56_60, %c16_61], %62 {strides = array<i32>} : memref<224x144xf32, #tpu.memory_space<vmem>>, vector<56x16xf32>,
    %c1_62 = arith.constant 1 : index
    %c1_63 = arith.constant 1 : index
    %c0_64 = arith.constant 0 : index
    %64 = vector.load %arg10[%c1_62, %c1_63, %c0_64] : memref<4x72x16xf32, #tpu.memory_space<vmem>>, vector<1x56x16xf32>
    %65 = vector.shape_cast %64 : vector<1x56x16xf32> to vector<56x16xf32>
    %c56_65 = arith.constant 56 : index
    %c32_66 = arith.constant 32 : index
    %66 = vector.load %arg11[%c56_65, %c32_66] : memref<224x144xf32, #tpu.memory_space<vmem>>, vector<56x16xf32>
    tpu.vector_store %arg11[%c56_65, %c32_66], %65 {strides = array<i32>} : memref<224x144xf32, #tpu.memory_space<vmem>>, vector<56x16xf32>,
    %c3_67 = arith.constant 3 : index
    %c0_68 = arith.constant 0 : index
    %c0_69 = arith.constant 0 : index
    %67 = vector.load %arg10[%c3_67, %c0_68, %c0_69] : memref<4x72x16xf32, #tpu.memory_space<vmem>>, vector<1x56x16xf32>
    %68 = vector.shape_cast %67 : vector<1x56x16xf32> to vector<56x16xf32>
    %c56_70 = arith.constant 56 : index
    %c48_71 = arith.constant 48 : index
    %69 = vector.load %arg11[%c56_70, %c48_71] : memref<224x144xf32, #tpu.memory_space<vmem>>, vector<56x16xf32>
    tpu.vector_store %arg11[%c56_70, %c48_71], %68 {strides = array<i32>} : memref<224x144xf32, #tpu.memory_space<vmem>>, vector<56x16xf32>,
    %c2_72 = arith.constant 2 : index
    %c1_73 = arith.constant 1 : index
    %c0_74 = arith.constant 0 : index
    %70 = vector.load %arg10[%c2_72, %c1_73, %c0_74] : memref<4x72x16xf32, #tpu.memory_space<vmem>>, vector<1x56x16xf32>
    %71 = vector.shape_cast %70 : vector<1x56x16xf32> to vector<56x16xf32>
    %c56_75 = arith.constant 56 : index
    %c64_76 = arith.constant 64 : index
    %72 = vector.load %arg11[%c56_75, %c64_76] : memref<224x144xf32, #tpu.memory_space<vmem>>, vector<56x16xf32>
    tpu.vector_store %arg11[%c56_75, %c64_76], %71 {strides = array<i32>} : memref<224x144xf32, #tpu.memory_space<vmem>>, vector<56x16xf32>,
    %c3_77 = arith.constant 3 : index
    %c1_78 = arith.constant 1 : index
    %c0_79 = arith.constant 0 : index
    %73 = vector.load %arg10[%c3_77, %c1_78, %c0_79] : memref<4x72x16xf32, #tpu.memory_space<vmem>>, vector<1x56x16xf32>
    %74 = vector.shape_cast %73 : vector<1x56x16xf32> to vector<56x16xf32>
    %c56_80 = arith.constant 56 : index
    %c80_81 = arith.constant 80 : index
    %75 = vector.load %arg11[%c56_80, %c80_81] : memref<224x144xf32, #tpu.memory_space<vmem>>, vector<56x16xf32>
    tpu.vector_store %arg11[%c56_80, %c80_81], %74 {strides = array<i32>} : memref<224x144xf32, #tpu.memory_space<vmem>>, vector<56x16xf32>,
    %c1_82 = arith.constant 1 : index
    %c8_83 = arith.constant 8 : index
    %c0_84 = arith.constant 0 : index
    %76 = vector.load %arg10[%c1_82, %c8_83, %c0_84] : memref<4x72x16xf32, #tpu.memory_space<vmem>>, vector<1x56x16xf32>
    %77 = vector.shape_cast %76 : vector<1x56x16xf32> to vector<56x16xf32>
    %c56_85 = arith.constant 56 : index
    %c96_86 = arith.constant 96 : index
    %78 = vector.load %arg11[%c56_85, %c96_86] : memref<224x144xf32, #tpu.memory_space<vmem>>, vector<56x16xf32>
    tpu.vector_store %arg11[%c56_85, %c96_86], %77 {strides = array<i32>} : memref<224x144xf32, #tpu.memory_space<vmem>>, vector<56x16xf32>,
    %c0_87 = arith.constant 0 : index
    %c9_88 = arith.constant 9 : index
    %c0_89 = arith.constant 0 : index
    %79 = vector.load %arg10[%c0_87, %c9_88, %c0_89] : memref<4x72x16xf32, #tpu.memory_space<vmem>>, vector<1x56x16xf32>
    %80 = vector.shape_cast %79 : vector<1x56x16xf32> to vector<56x16xf32>
    %c56_90 = arith.constant 56 : index
    %c112_91 = arith.constant 112 : index
    %81 = vector.load %arg11[%c56_90, %c112_91] : memref<224x144xf32, #tpu.memory_space<vmem>>, vector<56x16xf32>
    tpu.vector_store %arg11[%c56_90, %c112_91], %80 {strides = array<i32>} : memref<224x144xf32, #tpu.memory_space<vmem>>, vector<56x16xf32>,
    %c1_92 = arith.constant 1 : index
    %c9_93 = arith.constant 9 : index
    %c0_94 = arith.constant 0 : index
    %82 = vector.load %arg10[%c1_92, %c9_93, %c0_94] : memref<4x72x16xf32, #tpu.memory_space<vmem>>, vector<1x56x16xf32>
    %83 = vector.shape_cast %82 : vector<1x56x16xf32> to vector<56x16xf32>
    %c56_95 = arith.constant 56 : index
    %c128_96 = arith.constant 128 : index
    %84 = vector.load %arg11[%c56_95, %c128_96] : memref<224x144xf32, #tpu.memory_space<vmem>>, vector<56x16xf32>
    tpu.vector_store %arg11[%c56_95, %c128_96], %83 {strides = array<i32>} : memref<224x144xf32, #tpu.memory_space<vmem>>, vector<56x16xf32>,
    %c2_97 = arith.constant 2 : index
    %c0_98 = arith.constant 0 : index
    %c0_99 = arith.constant 0 : index
    %85 = vector.load %arg10[%c2_97, %c0_98, %c0_99] : memref<4x72x16xf32, #tpu.memory_space<vmem>>, vector<1x56x16xf32>
    %86 = vector.shape_cast %85 : vector<1x56x16xf32> to vector<56x16xf32>
    %c112_100 = arith.constant 112 : index
    %c0_101 = arith.constant 0 : index
    %87 = vector.load %arg11[%c112_100, %c0_101] : memref<224x144xf32, #tpu.memory_space<vmem>>, vector<56x16xf32>
    tpu.vector_store %arg11[%c112_100, %c0_101], %86 {strides = array<i32>} : memref<224x144xf32, #tpu.memory_space<vmem>>, vector<56x16xf32>,
    %c3_102 = arith.constant 3 : index
    %c0_103 = arith.constant 0 : index
    %c0_104 = arith.constant 0 : index
    %88 = vector.load %arg10[%c3_102, %c0_103, %c0_104] : memref<4x72x16xf32, #tpu.memory_space<vmem>>, vector<1x56x16xf32>
    %89 = vector.shape_cast %88 : vector<1x56x16xf32> to vector<56x16xf32>
    %c112_105 = arith.constant 112 : index
    %c16_106 = arith.constant 16 : index
    %90 = vector.load %arg11[%c112_105, %c16_106] : memref<224x144xf32, #tpu.memory_space<vmem>>, vector<56x16xf32>
    tpu.vector_store %arg11[%c112_105, %c16_106], %89 {strides = array<i32>} : memref<224x144xf32, #tpu.memory_space<vmem>>, vector<56x16xf32>,
    %c2_107 = arith.constant 2 : index
    %c1_108 = arith.constant 1 : index
    %c0_109 = arith.constant 0 : index
    %91 = vector.load %arg10[%c2_107, %c1_108, %c0_109] : memref<4x72x16xf32, #tpu.memory_space<vmem>>, vector<1x56x16xf32>
    %92 = vector.shape_cast %91 : vector<1x56x16xf32> to vector<56x16xf32>
    %c112_110 = arith.constant 112 : index
    %c32_111 = arith.constant 32 : index
    %93 = vector.load %arg11[%c112_110, %c32_111] : memref<224x144xf32, #tpu.memory_space<vmem>>, vector<56x16xf32>
    tpu.vector_store %arg11[%c112_110, %c32_111], %92 {strides = array<i32>} : memref<224x144xf32, #tpu.memory_space<vmem>>, vector<56x16xf32>,
    %c0_112 = arith.constant 0 : index
    %c8_113 = arith.constant 8 : index
    %c0_114 = arith.constant 0 : index
    %94 = vector.load %arg10[%c0_112, %c8_113, %c0_114] : memref<4x72x16xf32, #tpu.memory_space<vmem>>, vector<1x56x16xf32>
    %95 = vector.shape_cast %94 : vector<1x56x16xf32> to vector<56x16xf32>
    %c112_115 = arith.constant 112 : index
    %c48_116 = arith.constant 48 : index
    %96 = vector.load %arg11[%c112_115, %c48_116] : memref<224x144xf32, #tpu.memory_space<vmem>>, vector<56x16xf32>
    tpu.vector_store %arg11[%c112_115, %c48_116], %95 {strides = array<i32>} : memref<224x144xf32, #tpu.memory_space<vmem>>, vector<56x16xf32>,
    %c1_117 = arith.constant 1 : index
    %c8_118 = arith.constant 8 : index
    %c0_119 = arith.constant 0 : index
    %97 = vector.load %arg10[%c1_117, %c8_118, %c0_119] : memref<4x72x16xf32, #tpu.memory_space<vmem>>, vector<1x56x16xf32>
    %98 = vector.shape_cast %97 : vector<1x56x16xf32> to vector<56x16xf32>
    %c112_120 = arith.constant 112 : index
    %c64_121 = arith.constant 64 : index
    %99 = vector.load %arg11[%c112_120, %c64_121] : memref<224x144xf32, #tpu.memory_space<vmem>>, vector<56x16xf32>
    tpu.vector_store %arg11[%c112_120, %c64_121], %98 {strides = array<i32>} : memref<224x144xf32, #tpu.memory_space<vmem>>, vector<56x16xf32>,
    %c0_122 = arith.constant 0 : index
    %c9_123 = arith.constant 9 : index
    %c0_124 = arith.constant 0 : index
    %100 = vector.load %arg10[%c0_122, %c9_123, %c0_124] : memref<4x72x16xf32, #tpu.memory_space<vmem>>, vector<1x56x16xf32>
    %101 = vector.shape_cast %100 : vector<1x56x16xf32> to vector<56x16xf32>
    %c112_125 = arith.constant 112 : index
    %c80_126 = arith.constant 80 : index
    %102 = vector.load %arg11[%c112_125, %c80_126] : memref<224x144xf32, #tpu.memory_space<vmem>>, vector<56x16xf32>
    tpu.vector_store %arg11[%c112_125, %c80_126], %101 {strides = array<i32>} : memref<224x144xf32, #tpu.memory_space<vmem>>, vector<56x16xf32>,
    %c2_127 = arith.constant 2 : index
    %c8_128 = arith.constant 8 : index
    %c0_129 = arith.constant 0 : index
    %103 = vector.load %arg10[%c2_127, %c8_128, %c0_129] : memref<4x72x16xf32, #tpu.memory_space<vmem>>, vector<1x56x16xf32>
    %104 = vector.shape_cast %103 : vector<1x56x16xf32> to vector<56x16xf32>
    %c112_130 = arith.constant 112 : index
    %c96_131 = arith.constant 96 : index
    %105 = vector.load %arg11[%c112_130, %c96_131] : memref<224x144xf32, #tpu.memory_space<vmem>>, vector<56x16xf32>
    tpu.vector_store %arg11[%c112_130, %c96_131], %104 {strides = array<i32>} : memref<224x144xf32, #tpu.memory_space<vmem>>, vector<56x16xf32>,
    %c3_132 = arith.constant 3 : index
    %c8_133 = arith.constant 8 : index
    %c0_134 = arith.constant 0 : index
    %106 = vector.load %arg10[%c3_132, %c8_133, %c0_134] : memref<4x72x16xf32, #tpu.memory_space<vmem>>, vector<1x56x16xf32>
    %107 = vector.shape_cast %106 : vector<1x56x16xf32> to vector<56x16xf32>
    %c112_135 = arith.constant 112 : index
    %c112_136 = arith.constant 112 : index
    %108 = vector.load %arg11[%c112_135, %c112_136] : memref<224x144xf32, #tpu.memory_space<vmem>>, vector<56x16xf32>
    tpu.vector_store %arg11[%c112_135, %c112_136], %107 {strides = array<i32>} : memref<224x144xf32, #tpu.memory_space<vmem>>, vector<56x16xf32>,
    %c2_137 = arith.constant 2 : index
    %c9_138 = arith.constant 9 : index
    %c0_139 = arith.constant 0 : index
    %109 = vector.load %arg10[%c2_137, %c9_138, %c0_139] : memref<4x72x16xf32, #tpu.memory_space<vmem>>, vector<1x56x16xf32>
    %110 = vector.shape_cast %109 : vector<1x56x16xf32> to vector<56x16xf32>
    %c112_140 = arith.constant 112 : index
    %c128_141 = arith.constant 128 : index
    %111 = vector.load %arg11[%c112_140, %c128_141] : memref<224x144xf32, #tpu.memory_space<vmem>>, vector<56x16xf32>
    tpu.vector_store %arg11[%c112_140, %c128_141], %110 {strides = array<i32>} : memref<224x144xf32, #tpu.memory_space<vmem>>, vector<56x16xf32>,
    %c3_142 = arith.constant 3 : index
    %c0_143 = arith.constant 0 : index
    %c0_144 = arith.constant 0 : index
    %112 = vector.load %arg10[%c3_142, %c0_143, %c0_144] : memref<4x72x16xf32, #tpu.memory_space<vmem>>, vector<1x56x16xf32>
    %113 = vector.shape_cast %112 : vector<1x56x16xf32> to vector<56x16xf32>
    %c168 = arith.constant 168 : index
    %c0_145 = arith.constant 0 : index
    %114 = vector.load %arg11[%c168, %c0_145] : memref<224x144xf32, #tpu.memory_space<vmem>>, vector<56x16xf32>
    tpu.vector_store %arg11[%c168, %c0_145], %113 {strides = array<i32>} : memref<224x144xf32, #tpu.memory_space<vmem>>, vector<56x16xf32>,
    %c2_146 = arith.constant 2 : index
    %c1_147 = arith.constant 1 : index
    %c0_148 = arith.constant 0 : index
    %115 = vector.load %arg10[%c2_146, %c1_147, %c0_148] : memref<4x72x16xf32, #tpu.memory_space<vmem>>, vector<1x56x16xf32>
    %116 = vector.shape_cast %115 : vector<1x56x16xf32> to vector<56x16xf32>
    %c168_149 = arith.constant 168 : index
    %c16_150 = arith.constant 16 : index
    %117 = vector.load %arg11[%c168_149, %c16_150] : memref<224x144xf32, #tpu.memory_space<vmem>>, vector<56x16xf32>
    tpu.vector_store %arg11[%c168_149, %c16_150], %116 {strides = array<i32>} : memref<224x144xf32, #tpu.memory_space<vmem>>, vector<56x16xf32>,
    %c3_151 = arith.constant 3 : index
    %c1_152 = arith.constant 1 : index
    %c0_153 = arith.constant 0 : index
    %118 = vector.load %arg10[%c3_151, %c1_152, %c0_153] : memref<4x72x16xf32, #tpu.memory_space<vmem>>, vector<1x56x16xf32>
    %119 = vector.shape_cast %118 : vector<1x56x16xf32> to vector<56x16xf32>
    %c168_154 = arith.constant 168 : index
    %c32_155 = arith.constant 32 : index
    %120 = vector.load %arg11[%c168_154, %c32_155] : memref<224x144xf32, #tpu.memory_space<vmem>>, vector<56x16xf32>
    tpu.vector_store %arg11[%c168_154, %c32_155], %119 {strides = array<i32>} : memref<224x144xf32, #tpu.memory_space<vmem>>, vector<56x16xf32>,
    %c1_156 = arith.constant 1 : index
    %c8_157 = arith.constant 8 : index
    %c0_158 = arith.constant 0 : index
    %121 = vector.load %arg10[%c1_156, %c8_157, %c0_158] : memref<4x72x16xf32, #tpu.memory_space<vmem>>, vector<1x56x16xf32>
    %122 = vector.shape_cast %121 : vector<1x56x16xf32> to vector<56x16xf32>
    %c168_159 = arith.constant 168 : index
    %c48_160 = arith.constant 48 : index
    %123 = vector.load %arg11[%c168_159, %c48_160] : memref<224x144xf32, #tpu.memory_space<vmem>>, vector<56x16xf32>
    tpu.vector_store %arg11[%c168_159, %c48_160], %122 {strides = array<i32>} : memref<224x144xf32, #tpu.memory_space<vmem>>, vector<56x16xf32>,
    %c0_161 = arith.constant 0 : index
    %c9_162 = arith.constant 9 : index
    %c0_163 = arith.constant 0 : index
    %124 = vector.load %arg10[%c0_161, %c9_162, %c0_163] : memref<4x72x16xf32, #tpu.memory_space<vmem>>, vector<1x56x16xf32>
    %125 = vector.shape_cast %124 : vector<1x56x16xf32> to vector<56x16xf32>
    %c168_164 = arith.constant 168 : index
    %c64_165 = arith.constant 64 : index
    %126 = vector.load %arg11[%c168_164, %c64_165] : memref<224x144xf32, #tpu.memory_space<vmem>>, vector<56x16xf32>
    tpu.vector_store %arg11[%c168_164, %c64_165], %125 {strides = array<i32>} : memref<224x144xf32, #tpu.memory_space<vmem>>, vector<56x16xf32>,
    %c1_166 = arith.constant 1 : index
    %c9_167 = arith.constant 9 : index
    %c0_168 = arith.constant 0 : index
    %127 = vector.load %arg10[%c1_166, %c9_167, %c0_168] : memref<4x72x16xf32, #tpu.memory_space<vmem>>, vector<1x56x16xf32>
    %128 = vector.shape_cast %127 : vector<1x56x16xf32> to vector<56x16xf32>
    %c168_169 = arith.constant 168 : index
    %c80_170 = arith.constant 80 : index
    %129 = vector.load %arg11[%c168_169, %c80_170] : memref<224x144xf32, #tpu.memory_space<vmem>>, vector<56x16xf32>
    tpu.vector_store %arg11[%c168_169, %c80_170], %128 {strides = array<i32>} : memref<224x144xf32, #tpu.memory_space<vmem>>, vector<56x16xf32>,
    %c3_171 = arith.constant 3 : index
    %c8_172 = arith.constant 8 : index
    %c0_173 = arith.constant 0 : index
    %130 = vector.load %arg10[%c3_171, %c8_172, %c0_173] : memref<4x72x16xf32, #tpu.memory_space<vmem>>, vector<1x56x16xf32>
    %131 = vector.shape_cast %130 : vector<1x56x16xf32> to vector<56x16xf32>
    %c168_174 = arith.constant 168 : index
    %c96_175 = arith.constant 96 : index
    %132 = vector.load %arg11[%c168_174, %c96_175] : memref<224x144xf32, #tpu.memory_space<vmem>>, vector<56x16xf32>
    tpu.vector_store %arg11[%c168_174, %c96_175], %131 {strides = array<i32>} : memref<224x144xf32, #tpu.memory_space<vmem>>, vector<56x16xf32>,
    %c2_176 = arith.constant 2 : index
    %c9_177 = arith.constant 9 : index
    %c0_178 = arith.constant 0 : index
    %133 = vector.load %arg10[%c2_176, %c9_177, %c0_178] : memref<4x72x16xf32, #tpu.memory_space<vmem>>, vector<1x56x16xf32>
    %134 = vector.shape_cast %133 : vector<1x56x16xf32> to vector<56x16xf32>
    %c168_179 = arith.constant 168 : index
    %c112_180 = arith.constant 112 : index
    %135 = vector.load %arg11[%c168_179, %c112_180] : memref<224x144xf32, #tpu.memory_space<vmem>>, vector<56x16xf32>
    tpu.vector_store %arg11[%c168_179, %c112_180], %134 {strides = array<i32>} : memref<224x144xf32, #tpu.memory_space<vmem>>, vector<56x16xf32>,
    %c3_181 = arith.constant 3 : index
    %c9_182 = arith.constant 9 : index
    %c0_183 = arith.constant 0 : index
    %136 = vector.load %arg10[%c3_181, %c9_182, %c0_183] : memref<4x72x16xf32, #tpu.memory_space<vmem>>, vector<1x56x16xf32>
    %137 = vector.shape_cast %136 : vector<1x56x16xf32> to vector<56x16xf32>
    %c168_184 = arith.constant 168 : index
    %c128_185 = arith.constant 128 : index
    %138 = vector.load %arg11[%c168_184, %c128_185] : memref<224x144xf32, #tpu.memory_space<vmem>>, vector<56x16xf32>
    tpu.vector_store %arg11[%c168_184, %c128_185], %137 {strides = array<i32>} : memref<224x144xf32, #tpu.memory_space<vmem>>, vector<56x16xf32>,
    %c0_186 = arith.constant 0 : index
    %c0_187 = arith.constant 0 : index
    %139 = vector.load %arg11[%c0_186, %c0_187] : memref<224x144xf32, #tpu.memory_space<vmem>>, vector<224x144xf32>
    %140 = arith.truncf %139 : vector<224x144xf32> to vector<224x144xbf16>
    %c0_188 = arith.constant 0 : index
    %c0_189 = arith.constant 0 : index
    %141 = vector.load %arg3[%c0_188, %c0_189] : memref<144x32xbf16, #tpu.memory_space<vmem>>, vector<144x32xbf16>
    %cst_190 = arith.constant dense<0.000000e+00> : vector<224x32xf32>
    %142 = tpu.matmul %140, %141, %cst_190 {dimension_numbers = #tpu.dot_dimension_numbers<[1], [0], [0], [1], [0, 0, 1, 1], [], []>} : vector<224x144xbf16>, vector<144x32xbf16>, vector<224x32xf32> -> vector<224x32xf32>
    %143 = vector.extract_strided_slice %142 {offsets = [0, 0], sizes = [56, 32], strides = [1, 1]} : vector<224x32xf32> to vector<56x32xf32>
    %144 = vector.extract_strided_slice %142 {offsets = [56, 0], sizes = [56, 32], strides = [1, 1]} : vector<224x32xf32> to vector<56x32xf32>
    %145 = arith.maximumf %143, %144 : vector<56x32xf32>
    %146 = vector.extract_strided_slice %142 {offsets = [112, 0], sizes = [56, 32], strides = [1, 1]} : vector<224x32xf32> to vector<56x32xf32>
    %147 = vector.extract_strided_slice %142 {offsets = [168, 0], sizes = [56, 32], strides = [1, 1]} : vector<224x32xf32> to vector<56x32xf32>
    %148 = arith.maximumf %146, %147 : vector<56x32xf32>
    %149 = arith.maximumf %145, %148 : vector<56x32xf32>
    %c0_191 = arith.constant 0 : index
    %c0_192 = arith.constant 0 : index
    %150 = vector.load %arg4[%c0_191, %c0_192] : memref<1x32xf32, #tpu.memory_space<vmem>>, vector<1x32xf32>
    %151 = vector.broadcast %150 : vector<1x32xf32> to vector<56x32xf32>
    %152 = arith.addf %149, %151 : vector<56x32xf32>
    %cst_193 = arith.constant 0.000000e+00 : f32
    %153 = vector.broadcast %cst_193 : f32 to vector<56x32xf32>
    %154 = arith.maximumf %152, %153 : vector<56x32xf32>
    %155 = vector.extract_strided_slice %154 {offsets = [0, 0], sizes = [1, 32], strides = [1, 1]} : vector<56x32xf32> to vector<1x32xf32>
    %c0_194 = arith.constant 0 : index
    %c0_195 = arith.constant 0 : index
    %156 = vector.load %arg12[%c0_194, %c0_195] : memref<1x1760xf32, #tpu.memory_space<vmem>>, vector<1x32xf32>
    tpu.vector_store %arg12[%c0_194, %c0_195], %155 {strides = array<i32>} : memref<1x1760xf32, #tpu.memory_space<vmem>>, vector<1x32xf32>,
    %157 = vector.extract_strided_slice %154 {offsets = [1, 0], sizes = [1, 32], strides = [1, 1]} : vector<56x32xf32> to vector<1x32xf32>
    %c0_196 = arith.constant 0 : index
    %c32_197 = arith.constant 32 : index
    %158 = vector.load %arg12[%c0_196, %c32_197] : memref<1x1760xf32, #tpu.memory_space<vmem>>, vector<1x32xf32>
    tpu.vector_store %arg12[%c0_196, %c32_197], %157 {strides = array<i32>} : memref<1x1760xf32, #tpu.memory_space<vmem>>, vector<1x32xf32>,
    %159 = vector.extract_strided_slice %154 {offsets = [2, 0], sizes = [1, 32], strides = [1, 1]} : vector<56x32xf32> to vector<1x32xf32>
    %c0_198 = arith.constant 0 : index
    %c64_199 = arith.constant 64 : index
    %160 = vector.load %arg12[%c0_198, %c64_199] : memref<1x1760xf32, #tpu.memory_space<vmem>>, vector<1x32xf32>
    tpu.vector_store %arg12[%c0_198, %c64_199], %159 {strides = array<i32>} : memref<1x1760xf32, #tpu.memory_space<vmem>>, vector<1x32xf32>,
    %161 = vector.extract_strided_slice %154 {offsets = [3, 0], sizes = [1, 32], strides = [1, 1]} : vector<56x32xf32> to vector<1x32xf32>
    %c0_200 = arith.constant 0 : index
    %c96_201 = arith.constant 96 : index
    %162 = vector.load %arg12[%c0_200, %c96_201] : memref<1x1760xf32, #tpu.memory_space<vmem>>, vector<1x32xf32>
    tpu.vector_store %arg12[%c0_200, %c96_201], %161 {strides = array<i32>} : memref<1x1760xf32, #tpu.memory_space<vmem>>, vector<1x32xf32>,
    %163 = vector.extract_strided_slice %154 {offsets = [4, 0], sizes = [1, 32], strides = [1, 1]} : vector<56x32xf32> to vector<1x32xf32>
    %c0_202 = arith.constant 0 : index
    %c128_203 = arith.constant 128 : index
    %164 = vector.load %arg12[%c0_202, %c128_203] : memref<1x1760xf32, #tpu.memory_space<vmem>>, vector<1x32xf32>
    tpu.vector_store %arg12[%c0_202, %c128_203], %163 {strides = array<i32>} : memref<1x1760xf32, #tpu.memory_space<vmem>>, vector<1x32xf32>,
    %165 = vector.extract_strided_slice %154 {offsets = [5, 0], sizes = [1, 32], strides = [1, 1]} : vector<56x32xf32> to vector<1x32xf32>
    %c0_204 = arith.constant 0 : index
    %c160 = arith.constant 160 : index
    %166 = vector.load %arg12[%c0_204, %c160] : memref<1x1760xf32, #tpu.memory_space<vmem>>, vector<1x32xf32>
    tpu.vector_store %arg12[%c0_204, %c160], %165 {strides = array<i32>} : memref<1x1760xf32, #tpu.memory_space<vmem>>, vector<1x32xf32>,
    %167 = vector.extract_strided_slice %154 {offsets = [6, 0], sizes = [1, 32], strides = [1, 1]} : vector<56x32xf32> to vector<1x32xf32>
    %c0_205 = arith.constant 0 : index
    %c192 = arith.constant 192 : index
    %168 = vector.load %arg12[%c0_205, %c192] : memref<1x1760xf32, #tpu.memory_space<vmem>>, vector<1x32xf32>
    tpu.vector_store %arg12[%c0_205, %c192], %167 {strides = array<i32>} : memref<1x1760xf32, #tpu.memory_space<vmem>>, vector<1x32xf32>,
    %169 = vector.extract_strided_slice %154 {offsets = [7, 0], sizes = [1, 32], strides = [1, 1]} : vector<56x32xf32> to vector<1x32xf32>
    %c0_206 = arith.constant 0 : index
    %c224 = arith.constant 224 : index
    %170 = vector.load %arg12[%c0_206, %c224] : memref<1x1760xf32, #tpu.memory_space<vmem>>, vector<1x32xf32>
    tpu.vector_store %arg12[%c0_206, %c224], %169 {strides = array<i32>} : memref<1x1760xf32, #tpu.memory_space<vmem>>, vector<1x32xf32>,
    %171 = vector.extract_strided_slice %154 {offsets = [8, 0], sizes = [1, 32], strides = [1, 1]} : vector<56x32xf32> to vector<1x32xf32>
    %c0_207 = arith.constant 0 : index
    %c256 = arith.constant 256 : index
    %172 = vector.load %arg12[%c0_207, %c256] : memref<1x1760xf32, #tpu.memory_space<vmem>>, vector<1x32xf32>
    tpu.vector_store %arg12[%c0_207, %c256], %171 {strides = array<i32>} : memref<1x1760xf32, #tpu.memory_space<vmem>>, vector<1x32xf32>,
    %173 = vector.extract_strided_slice %154 {offsets = [9, 0], sizes = [1, 32], strides = [1, 1]} : vector<56x32xf32> to vector<1x32xf32>
    %c0_208 = arith.constant 0 : index
    %c288 = arith.constant 288 : index
    %174 = vector.load %arg12[%c0_208, %c288] : memref<1x1760xf32, #tpu.memory_space<vmem>>, vector<1x32xf32>
    tpu.vector_store %arg12[%c0_208, %c288], %173 {strides = array<i32>} : memref<1x1760xf32, #tpu.memory_space<vmem>>, vector<1x32xf32>,
    %175 = vector.extract_strided_slice %154 {offsets = [10, 0], sizes = [1, 32], strides = [1, 1]} : vector<56x32xf32> to vector<1x32xf32>
    %c0_209 = arith.constant 0 : index
    %c320 = arith.constant 320 : index
    %176 = vector.load %arg12[%c0_209, %c320] : memref<1x1760xf32, #tpu.memory_space<vmem>>, vector<1x32xf32>
    tpu.vector_store %arg12[%c0_209, %c320], %175 {strides = array<i32>} : memref<1x1760xf32, #tpu.memory_space<vmem>>, vector<1x32xf32>,
    %177 = vector.extract_strided_slice %154 {offsets = [11, 0], sizes = [1, 32], strides = [1, 1]} : vector<56x32xf32> to vector<1x32xf32>
    %c0_210 = arith.constant 0 : index
    %c352 = arith.constant 352 : index
    %178 = vector.load %arg12[%c0_210, %c352] : memref<1x1760xf32, #tpu.memory_space<vmem>>, vector<1x32xf32>
    tpu.vector_store %arg12[%c0_210, %c352], %177 {strides = array<i32>} : memref<1x1760xf32, #tpu.memory_space<vmem>>, vector<1x32xf32>,
    %179 = vector.extract_strided_slice %154 {offsets = [12, 0], sizes = [1, 32], strides = [1, 1]} : vector<56x32xf32> to vector<1x32xf32>
    %c0_211 = arith.constant 0 : index
    %c384 = arith.constant 384 : index
    %180 = vector.load %arg12[%c0_211, %c384] : memref<1x1760xf32, #tpu.memory_space<vmem>>, vector<1x32xf32>
    tpu.vector_store %arg12[%c0_211, %c384], %179 {strides = array<i32>} : memref<1x1760xf32, #tpu.memory_space<vmem>>, vector<1x32xf32>,
    %181 = vector.extract_strided_slice %154 {offsets = [13, 0], sizes = [1, 32], strides = [1, 1]} : vector<56x32xf32> to vector<1x32xf32>
    %c0_212 = arith.constant 0 : index
    %c416 = arith.constant 416 : index
    %182 = vector.load %arg12[%c0_212, %c416] : memref<1x1760xf32, #tpu.memory_space<vmem>>, vector<1x32xf32>
    tpu.vector_store %arg12[%c0_212, %c416], %181 {strides = array<i32>} : memref<1x1760xf32, #tpu.memory_space<vmem>>, vector<1x32xf32>,
    %183 = vector.extract_strided_slice %154 {offsets = [14, 0], sizes = [1, 32], strides = [1, 1]} : vector<56x32xf32> to vector<1x32xf32>
    %c0_213 = arith.constant 0 : index
    %c448 = arith.constant 448 : index
    %184 = vector.load %arg12[%c0_213, %c448] : memref<1x1760xf32, #tpu.memory_space<vmem>>, vector<1x32xf32>
    tpu.vector_store %arg12[%c0_213, %c448], %183 {strides = array<i32>} : memref<1x1760xf32, #tpu.memory_space<vmem>>, vector<1x32xf32>,
    %185 = vector.extract_strided_slice %154 {offsets = [15, 0], sizes = [1, 32], strides = [1, 1]} : vector<56x32xf32> to vector<1x32xf32>
    %c0_214 = arith.constant 0 : index
    %c480 = arith.constant 480 : index
    %186 = vector.load %arg12[%c0_214, %c480] : memref<1x1760xf32, #tpu.memory_space<vmem>>, vector<1x32xf32>
    tpu.vector_store %arg12[%c0_214, %c480], %185 {strides = array<i32>} : memref<1x1760xf32, #tpu.memory_space<vmem>>, vector<1x32xf32>,
    %187 = vector.extract_strided_slice %154 {offsets = [16, 0], sizes = [1, 32], strides = [1, 1]} : vector<56x32xf32> to vector<1x32xf32>
    %c0_215 = arith.constant 0 : index
    %c512 = arith.constant 512 : index
    %188 = vector.load %arg12[%c0_215, %c512] : memref<1x1760xf32, #tpu.memory_space<vmem>>, vector<1x32xf32>
    tpu.vector_store %arg12[%c0_215, %c512], %187 {strides = array<i32>} : memref<1x1760xf32, #tpu.memory_space<vmem>>, vector<1x32xf32>,
    %189 = vector.extract_strided_slice %154 {offsets = [17, 0], sizes = [1, 32], strides = [1, 1]} : vector<56x32xf32> to vector<1x32xf32>
    %c0_216 = arith.constant 0 : index
    %c544 = arith.constant 544 : index
    %190 = vector.load %arg12[%c0_216, %c544] : memref<1x1760xf32, #tpu.memory_space<vmem>>, vector<1x32xf32>
    tpu.vector_store %arg12[%c0_216, %c544], %189 {strides = array<i32>} : memref<1x1760xf32, #tpu.memory_space<vmem>>, vector<1x32xf32>,
    %191 = vector.extract_strided_slice %154 {offsets = [18, 0], sizes = [1, 32], strides = [1, 1]} : vector<56x32xf32> to vector<1x32xf32>
    %c0_217 = arith.constant 0 : index
    %c576 = arith.constant 576 : index
    %192 = vector.load %arg12[%c0_217, %c576] : memref<1x1760xf32, #tpu.memory_space<vmem>>, vector<1x32xf32>
    tpu.vector_store %arg12[%c0_217, %c576], %191 {strides = array<i32>} : memref<1x1760xf32, #tpu.memory_space<vmem>>, vector<1x32xf32>,
    %193 = vector.extract_strided_slice %154 {offsets = [19, 0], sizes = [1, 32], strides = [1, 1]} : vector<56x32xf32> to vector<1x32xf32>
    %c0_218 = arith.constant 0 : index
    %c608 = arith.constant 608 : index
    %194 = vector.load %arg12[%c0_218, %c608] : memref<1x1760xf32, #tpu.memory_space<vmem>>, vector<1x32xf32>
    tpu.vector_store %arg12[%c0_218, %c608], %193 {strides = array<i32>} : memref<1x1760xf32, #tpu.memory_space<vmem>>, vector<1x32xf32>,
    %195 = vector.extract_strided_slice %154 {offsets = [20, 0], sizes = [1, 32], strides = [1, 1]} : vector<56x32xf32> to vector<1x32xf32>
    %c0_219 = arith.constant 0 : index
    %c640 = arith.constant 640 : index
    %196 = vector.load %arg12[%c0_219, %c640] : memref<1x1760xf32, #tpu.memory_space<vmem>>, vector<1x32xf32>
    tpu.vector_store %arg12[%c0_219, %c640], %195 {strides = array<i32>} : memref<1x1760xf32, #tpu.memory_space<vmem>>, vector<1x32xf32>,
    %197 = vector.extract_strided_slice %154 {offsets = [21, 0], sizes = [1, 32], strides = [1, 1]} : vector<56x32xf32> to vector<1x32xf32>
    %c0_220 = arith.constant 0 : index
    %c672 = arith.constant 672 : index
    %198 = vector.load %arg12[%c0_220, %c672] : memref<1x1760xf32, #tpu.memory_space<vmem>>, vector<1x32xf32>
    tpu.vector_store %arg12[%c0_220, %c672], %197 {strides = array<i32>} : memref<1x1760xf32, #tpu.memory_space<vmem>>, vector<1x32xf32>,
    %199 = vector.extract_strided_slice %154 {offsets = [22, 0], sizes = [1, 32], strides = [1, 1]} : vector<56x32xf32> to vector<1x32xf32>
    %c0_221 = arith.constant 0 : index
    %c704 = arith.constant 704 : index
    %200 = vector.load %arg12[%c0_221, %c704] : memref<1x1760xf32, #tpu.memory_space<vmem>>, vector<1x32xf32>
    tpu.vector_store %arg12[%c0_221, %c704], %199 {strides = array<i32>} : memref<1x1760xf32, #tpu.memory_space<vmem>>, vector<1x32xf32>,
    %201 = vector.extract_strided_slice %154 {offsets = [23, 0], sizes = [1, 32], strides = [1, 1]} : vector<56x32xf32> to vector<1x32xf32>
    %c0_222 = arith.constant 0 : index
    %c736 = arith.constant 736 : index
    %202 = vector.load %arg12[%c0_222, %c736] : memref<1x1760xf32, #tpu.memory_space<vmem>>, vector<1x32xf32>
    tpu.vector_store %arg12[%c0_222, %c736], %201 {strides = array<i32>} : memref<1x1760xf32, #tpu.memory_space<vmem>>, vector<1x32xf32>,
    %203 = vector.extract_strided_slice %154 {offsets = [24, 0], sizes = [1, 32], strides = [1, 1]} : vector<56x32xf32> to vector<1x32xf32>
    %c0_223 = arith.constant 0 : index
    %c768 = arith.constant 768 : index
    %204 = vector.load %arg12[%c0_223, %c768] : memref<1x1760xf32, #tpu.memory_space<vmem>>, vector<1x32xf32>
    tpu.vector_store %arg12[%c0_223, %c768], %203 {strides = array<i32>} : memref<1x1760xf32, #tpu.memory_space<vmem>>, vector<1x32xf32>,
    %205 = vector.extract_strided_slice %154 {offsets = [25, 0], sizes = [1, 32], strides = [1, 1]} : vector<56x32xf32> to vector<1x32xf32>
    %c0_224 = arith.constant 0 : index
    %c800 = arith.constant 800 : index
    %206 = vector.load %arg12[%c0_224, %c800] : memref<1x1760xf32, #tpu.memory_space<vmem>>, vector<1x32xf32>
    tpu.vector_store %arg12[%c0_224, %c800], %205 {strides = array<i32>} : memref<1x1760xf32, #tpu.memory_space<vmem>>, vector<1x32xf32>,
    %207 = vector.extract_strided_slice %154 {offsets = [26, 0], sizes = [1, 32], strides = [1, 1]} : vector<56x32xf32> to vector<1x32xf32>
    %c0_225 = arith.constant 0 : index
    %c832 = arith.constant 832 : index
    %208 = vector.load %arg12[%c0_225, %c832] : memref<1x1760xf32, #tpu.memory_space<vmem>>, vector<1x32xf32>
    tpu.vector_store %arg12[%c0_225, %c832], %207 {strides = array<i32>} : memref<1x1760xf32, #tpu.memory_space<vmem>>, vector<1x32xf32>,
    %209 = vector.extract_strided_slice %154 {offsets = [27, 0], sizes = [1, 32], strides = [1, 1]} : vector<56x32xf32> to vector<1x32xf32>
    %c0_226 = arith.constant 0 : index
    %c864 = arith.constant 864 : index
    %210 = vector.load %arg12[%c0_226, %c864] : memref<1x1760xf32, #tpu.memory_space<vmem>>, vector<1x32xf32>
    tpu.vector_store %arg12[%c0_226, %c864], %209 {strides = array<i32>} : memref<1x1760xf32, #tpu.memory_space<vmem>>, vector<1x32xf32>,
    %211 = vector.extract_strided_slice %154 {offsets = [28, 0], sizes = [1, 32], strides = [1, 1]} : vector<56x32xf32> to vector<1x32xf32>
    %c0_227 = arith.constant 0 : index
    %c896 = arith.constant 896 : index
    %212 = vector.load %arg12[%c0_227, %c896] : memref<1x1760xf32, #tpu.memory_space<vmem>>, vector<1x32xf32>
    tpu.vector_store %arg12[%c0_227, %c896], %211 {strides = array<i32>} : memref<1x1760xf32, #tpu.memory_space<vmem>>, vector<1x32xf32>,
    %213 = vector.extract_strided_slice %154 {offsets = [29, 0], sizes = [1, 32], strides = [1, 1]} : vector<56x32xf32> to vector<1x32xf32>
    %c0_228 = arith.constant 0 : index
    %c928 = arith.constant 928 : index
    %214 = vector.load %arg12[%c0_228, %c928] : memref<1x1760xf32, #tpu.memory_space<vmem>>, vector<1x32xf32>
    tpu.vector_store %arg12[%c0_228, %c928], %213 {strides = array<i32>} : memref<1x1760xf32, #tpu.memory_space<vmem>>, vector<1x32xf32>,
    %215 = vector.extract_strided_slice %154 {offsets = [30, 0], sizes = [1, 32], strides = [1, 1]} : vector<56x32xf32> to vector<1x32xf32>
    %c0_229 = arith.constant 0 : index
    %c960 = arith.constant 960 : index
    %216 = vector.load %arg12[%c0_229, %c960] : memref<1x1760xf32, #tpu.memory_space<vmem>>, vector<1x32xf32>
    tpu.vector_store %arg12[%c0_229, %c960], %215 {strides = array<i32>} : memref<1x1760xf32, #tpu.memory_space<vmem>>, vector<1x32xf32>,
    %217 = vector.extract_strided_slice %154 {offsets = [31, 0], sizes = [1, 32], strides = [1, 1]} : vector<56x32xf32> to vector<1x32xf32>
    %c0_230 = arith.constant 0 : index
    %c992 = arith.constant 992 : index
    %218 = vector.load %arg12[%c0_230, %c992] : memref<1x1760xf32, #tpu.memory_space<vmem>>, vector<1x32xf32>
    tpu.vector_store %arg12[%c0_230, %c992], %217 {strides = array<i32>} : memref<1x1760xf32, #tpu.memory_space<vmem>>, vector<1x32xf32>,
    %219 = vector.extract_strided_slice %154 {offsets = [32, 0], sizes = [1, 32], strides = [1, 1]} : vector<56x32xf32> to vector<1x32xf32>
    %c0_231 = arith.constant 0 : index
    %c1024 = arith.constant 1024 : index
    %220 = vector.load %arg12[%c0_231, %c1024] : memref<1x1760xf32, #tpu.memory_space<vmem>>, vector<1x32xf32>
    tpu.vector_store %arg12[%c0_231, %c1024], %219 {strides = array<i32>} : memref<1x1760xf32, #tpu.memory_space<vmem>>, vector<1x32xf32>,
    %221 = vector.extract_strided_slice %154 {offsets = [33, 0], sizes = [1, 32], strides = [1, 1]} : vector<56x32xf32> to vector<1x32xf32>
    %c0_232 = arith.constant 0 : index
    %c1056 = arith.constant 1056 : index
    %222 = vector.load %arg12[%c0_232, %c1056] : memref<1x1760xf32, #tpu.memory_space<vmem>>, vector<1x32xf32>
    tpu.vector_store %arg12[%c0_232, %c1056], %221 {strides = array<i32>} : memref<1x1760xf32, #tpu.memory_space<vmem>>, vector<1x32xf32>,
    %223 = vector.extract_strided_slice %154 {offsets = [34, 0], sizes = [1, 32], strides = [1, 1]} : vector<56x32xf32> to vector<1x32xf32>
    %c0_233 = arith.constant 0 : index
    %c1088 = arith.constant 1088 : index
    %224 = vector.load %arg12[%c0_233, %c1088] : memref<1x1760xf32, #tpu.memory_space<vmem>>, vector<1x32xf32>
    tpu.vector_store %arg12[%c0_233, %c1088], %223 {strides = array<i32>} : memref<1x1760xf32, #tpu.memory_space<vmem>>, vector<1x32xf32>,
    %225 = vector.extract_strided_slice %154 {offsets = [35, 0], sizes = [1, 32], strides = [1, 1]} : vector<56x32xf32> to vector<1x32xf32>
    %c0_234 = arith.constant 0 : index
    %c1120 = arith.constant 1120 : index
    %226 = vector.load %arg12[%c0_234, %c1120] : memref<1x1760xf32, #tpu.memory_space<vmem>>, vector<1x32xf32>
    tpu.vector_store %arg12[%c0_234, %c1120], %225 {strides = array<i32>} : memref<1x1760xf32, #tpu.memory_space<vmem>>, vector<1x32xf32>,
    %227 = vector.extract_strided_slice %154 {offsets = [36, 0], sizes = [1, 32], strides = [1, 1]} : vector<56x32xf32> to vector<1x32xf32>
    %c0_235 = arith.constant 0 : index
    %c1152 = arith.constant 1152 : index
    %228 = vector.load %arg12[%c0_235, %c1152] : memref<1x1760xf32, #tpu.memory_space<vmem>>, vector<1x32xf32>
    tpu.vector_store %arg12[%c0_235, %c1152], %227 {strides = array<i32>} : memref<1x1760xf32, #tpu.memory_space<vmem>>, vector<1x32xf32>,
    %229 = vector.extract_strided_slice %154 {offsets = [37, 0], sizes = [1, 32], strides = [1, 1]} : vector<56x32xf32> to vector<1x32xf32>
    %c0_236 = arith.constant 0 : index
    %c1184 = arith.constant 1184 : index
    %230 = vector.load %arg12[%c0_236, %c1184] : memref<1x1760xf32, #tpu.memory_space<vmem>>, vector<1x32xf32>
    tpu.vector_store %arg12[%c0_236, %c1184], %229 {strides = array<i32>} : memref<1x1760xf32, #tpu.memory_space<vmem>>, vector<1x32xf32>,
    %231 = vector.extract_strided_slice %154 {offsets = [38, 0], sizes = [1, 32], strides = [1, 1]} : vector<56x32xf32> to vector<1x32xf32>
    %c0_237 = arith.constant 0 : index
    %c1216 = arith.constant 1216 : index
    %232 = vector.load %arg12[%c0_237, %c1216] : memref<1x1760xf32, #tpu.memory_space<vmem>>, vector<1x32xf32>
    tpu.vector_store %arg12[%c0_237, %c1216], %231 {strides = array<i32>} : memref<1x1760xf32, #tpu.memory_space<vmem>>, vector<1x32xf32>,
    %233 = vector.extract_strided_slice %154 {offsets = [39, 0], sizes = [1, 32], strides = [1, 1]} : vector<56x32xf32> to vector<1x32xf32>
    %c0_238 = arith.constant 0 : index
    %c1248 = arith.constant 1248 : index
    %234 = vector.load %arg12[%c0_238, %c1248] : memref<1x1760xf32, #tpu.memory_space<vmem>>, vector<1x32xf32>
    tpu.vector_store %arg12[%c0_238, %c1248], %233 {strides = array<i32>} : memref<1x1760xf32, #tpu.memory_space<vmem>>, vector<1x32xf32>,
    %235 = vector.extract_strided_slice %154 {offsets = [40, 0], sizes = [1, 32], strides = [1, 1]} : vector<56x32xf32> to vector<1x32xf32>
    %c0_239 = arith.constant 0 : index
    %c1280 = arith.constant 1280 : index
    %236 = vector.load %arg12[%c0_239, %c1280] : memref<1x1760xf32, #tpu.memory_space<vmem>>, vector<1x32xf32>
    tpu.vector_store %arg12[%c0_239, %c1280], %235 {strides = array<i32>} : memref<1x1760xf32, #tpu.memory_space<vmem>>, vector<1x32xf32>,
    %237 = vector.extract_strided_slice %154 {offsets = [41, 0], sizes = [1, 32], strides = [1, 1]} : vector<56x32xf32> to vector<1x32xf32>
    %c0_240 = arith.constant 0 : index
    %c1312 = arith.constant 1312 : index
    %238 = vector.load %arg12[%c0_240, %c1312] : memref<1x1760xf32, #tpu.memory_space<vmem>>, vector<1x32xf32>
    tpu.vector_store %arg12[%c0_240, %c1312], %237 {strides = array<i32>} : memref<1x1760xf32, #tpu.memory_space<vmem>>, vector<1x32xf32>,
    %239 = vector.extract_strided_slice %154 {offsets = [42, 0], sizes = [1, 32], strides = [1, 1]} : vector<56x32xf32> to vector<1x32xf32>
    %c0_241 = arith.constant 0 : index
    %c1344 = arith.constant 1344 : index
    %240 = vector.load %arg12[%c0_241, %c1344] : memref<1x1760xf32, #tpu.memory_space<vmem>>, vector<1x32xf32>
    tpu.vector_store %arg12[%c0_241, %c1344], %239 {strides = array<i32>} : memref<1x1760xf32, #tpu.memory_space<vmem>>, vector<1x32xf32>,
    %241 = vector.extract_strided_slice %154 {offsets = [43, 0], sizes = [1, 32], strides = [1, 1]} : vector<56x32xf32> to vector<1x32xf32>
    %c0_242 = arith.constant 0 : index
    %c1376 = arith.constant 1376 : index
    %242 = vector.load %arg12[%c0_242, %c1376] : memref<1x1760xf32, #tpu.memory_space<vmem>>, vector<1x32xf32>
    tpu.vector_store %arg12[%c0_242, %c1376], %241 {strides = array<i32>} : memref<1x1760xf32, #tpu.memory_space<vmem>>, vector<1x32xf32>,
    %243 = vector.extract_strided_slice %154 {offsets = [44, 0], sizes = [1, 32], strides = [1, 1]} : vector<56x32xf32> to vector<1x32xf32>
    %c0_243 = arith.constant 0 : index
    %c1408 = arith.constant 1408 : index
    %244 = vector.load %arg12[%c0_243, %c1408] : memref<1x1760xf32, #tpu.memory_space<vmem>>, vector<1x32xf32>
    tpu.vector_store %arg12[%c0_243, %c1408], %243 {strides = array<i32>} : memref<1x1760xf32, #tpu.memory_space<vmem>>, vector<1x32xf32>,
    %245 = vector.extract_strided_slice %154 {offsets = [45, 0], sizes = [1, 32], strides = [1, 1]} : vector<56x32xf32> to vector<1x32xf32>
    %c0_244 = arith.constant 0 : index
    %c1440 = arith.constant 1440 : index
    %246 = vector.load %arg12[%c0_244, %c1440] : memref<1x1760xf32, #tpu.memory_space<vmem>>, vector<1x32xf32>
    tpu.vector_store %arg12[%c0_244, %c1440], %245 {strides = array<i32>} : memref<1x1760xf32, #tpu.memory_space<vmem>>, vector<1x32xf32>,
    %247 = vector.extract_strided_slice %154 {offsets = [46, 0], sizes = [1, 32], strides = [1, 1]} : vector<56x32xf32> to vector<1x32xf32>
    %c0_245 = arith.constant 0 : index
    %c1472 = arith.constant 1472 : index
    %248 = vector.load %arg12[%c0_245, %c1472] : memref<1x1760xf32, #tpu.memory_space<vmem>>, vector<1x32xf32>
    tpu.vector_store %arg12[%c0_245, %c1472], %247 {strides = array<i32>} : memref<1x1760xf32, #tpu.memory_space<vmem>>, vector<1x32xf32>,
    %249 = vector.extract_strided_slice %154 {offsets = [47, 0], sizes = [1, 32], strides = [1, 1]} : vector<56x32xf32> to vector<1x32xf32>
    %c0_246 = arith.constant 0 : index
    %c1504 = arith.constant 1504 : index
    %250 = vector.load %arg12[%c0_246, %c1504] : memref<1x1760xf32, #tpu.memory_space<vmem>>, vector<1x32xf32>
    tpu.vector_store %arg12[%c0_246, %c1504], %249 {strides = array<i32>} : memref<1x1760xf32, #tpu.memory_space<vmem>>, vector<1x32xf32>,
    %251 = vector.extract_strided_slice %154 {offsets = [48, 0], sizes = [1, 32], strides = [1, 1]} : vector<56x32xf32> to vector<1x32xf32>
    %c0_247 = arith.constant 0 : index
    %c1536 = arith.constant 1536 : index
    %252 = vector.load %arg12[%c0_247, %c1536] : memref<1x1760xf32, #tpu.memory_space<vmem>>, vector<1x32xf32>
    tpu.vector_store %arg12[%c0_247, %c1536], %251 {strides = array<i32>} : memref<1x1760xf32, #tpu.memory_space<vmem>>, vector<1x32xf32>,
    %253 = vector.extract_strided_slice %154 {offsets = [49, 0], sizes = [1, 32], strides = [1, 1]} : vector<56x32xf32> to vector<1x32xf32>
    %c0_248 = arith.constant 0 : index
    %c1568 = arith.constant 1568 : index
    %254 = vector.load %arg12[%c0_248, %c1568] : memref<1x1760xf32, #tpu.memory_space<vmem>>, vector<1x32xf32>
    tpu.vector_store %arg12[%c0_248, %c1568], %253 {strides = array<i32>} : memref<1x1760xf32, #tpu.memory_space<vmem>>, vector<1x32xf32>,
    %255 = vector.extract_strided_slice %154 {offsets = [50, 0], sizes = [1, 32], strides = [1, 1]} : vector<56x32xf32> to vector<1x32xf32>
    %c0_249 = arith.constant 0 : index
    %c1600 = arith.constant 1600 : index
    %256 = vector.load %arg12[%c0_249, %c1600] : memref<1x1760xf32, #tpu.memory_space<vmem>>, vector<1x32xf32>
    tpu.vector_store %arg12[%c0_249, %c1600], %255 {strides = array<i32>} : memref<1x1760xf32, #tpu.memory_space<vmem>>, vector<1x32xf32>,
    %257 = vector.extract_strided_slice %154 {offsets = [51, 0], sizes = [1, 32], strides = [1, 1]} : vector<56x32xf32> to vector<1x32xf32>
    %c0_250 = arith.constant 0 : index
    %c1632 = arith.constant 1632 : index
    %258 = vector.load %arg12[%c0_250, %c1632] : memref<1x1760xf32, #tpu.memory_space<vmem>>, vector<1x32xf32>
    tpu.vector_store %arg12[%c0_250, %c1632], %257 {strides = array<i32>} : memref<1x1760xf32, #tpu.memory_space<vmem>>, vector<1x32xf32>,
    %259 = vector.extract_strided_slice %154 {offsets = [52, 0], sizes = [1, 32], strides = [1, 1]} : vector<56x32xf32> to vector<1x32xf32>
    %c0_251 = arith.constant 0 : index
    %c1664 = arith.constant 1664 : index
    %260 = vector.load %arg12[%c0_251, %c1664] : memref<1x1760xf32, #tpu.memory_space<vmem>>, vector<1x32xf32>
    tpu.vector_store %arg12[%c0_251, %c1664], %259 {strides = array<i32>} : memref<1x1760xf32, #tpu.memory_space<vmem>>, vector<1x32xf32>,
    %261 = vector.extract_strided_slice %154 {offsets = [53, 0], sizes = [1, 32], strides = [1, 1]} : vector<56x32xf32> to vector<1x32xf32>
    %c0_252 = arith.constant 0 : index
    %c1696 = arith.constant 1696 : index
    %262 = vector.load %arg12[%c0_252, %c1696] : memref<1x1760xf32, #tpu.memory_space<vmem>>, vector<1x32xf32>
    tpu.vector_store %arg12[%c0_252, %c1696], %261 {strides = array<i32>} : memref<1x1760xf32, #tpu.memory_space<vmem>>, vector<1x32xf32>,
    %263 = vector.extract_strided_slice %154 {offsets = [54, 0], sizes = [1, 32], strides = [1, 1]} : vector<56x32xf32> to vector<1x32xf32>
    %c0_253 = arith.constant 0 : index
    %c1728 = arith.constant 1728 : index
    %264 = vector.load %arg12[%c0_253, %c1728] : memref<1x1760xf32, #tpu.memory_space<vmem>>, vector<1x32xf32>
    tpu.vector_store %arg12[%c0_253, %c1728], %263 {strides = array<i32>} : memref<1x1760xf32, #tpu.memory_space<vmem>>, vector<1x32xf32>,
    %c0_254 = arith.constant 0 : index
    %c0_255 = arith.constant 0 : index
    %265 = vector.load %arg12[%c0_254, %c0_255] : memref<1x1760xf32, #tpu.memory_space<vmem>>, vector<1x1760xf32>
    %266 = arith.truncf %265 : vector<1x1760xf32> to vector<1x1760xbf16>
    %c0_256 = arith.constant 0 : index
    %c0_257 = arith.constant 0 : index
    %267 = vector.load %arg5[%c0_256, %c0_257] : memref<1760x512xbf16, #tpu.memory_space<vmem>>, vector<1760x512xbf16>
    %cst_258 = arith.constant dense<0.000000e+00> : vector<1x512xf32>
    %268 = tpu.matmul %266, %267, %cst_258 {dimension_numbers = #tpu.dot_dimension_numbers<[1], [0], [0], [1], [0, 0, 1, 1], [], []>} : vector<1x1760xbf16>, vector<1760x512xbf16>, vector<1x512xf32> -> vector<1x512xf32>
    %c0_259 = arith.constant 0 : index
    %c0_260 = arith.constant 0 : index
    %269 = vector.load %arg6[%c0_259, %c0_260] : memref<1x512xf32, #tpu.memory_space<vmem>>, vector<1x512xf32>
    %270 = arith.addf %268, %269 : vector<1x512xf32>
    %cst_261 = arith.constant 0.000000e+00 : f32
    %271 = vector.broadcast %cst_261 : f32 to vector<1x512xf32>
    %272 = arith.maximumf %270, %271 : vector<1x512xf32>
    %273 = arith.truncf %272 : vector<1x512xf32> to vector<1x512xbf16>
    %c0_262 = arith.constant 0 : index
    %c0_263 = arith.constant 0 : index
    %274 = vector.load %arg7[%c0_262, %c0_263] : memref<512x128xbf16, #tpu.memory_space<vmem>>, vector<512x128xbf16>
    %cst_264 = arith.constant dense<0.000000e+00> : vector<1x128xf32>
    %275 = tpu.matmul %273, %274, %cst_264 {dimension_numbers = #tpu.dot_dimension_numbers<[1], [0], [0], [1], [0, 0, 1, 1], [], []>} : vector<1x512xbf16>, vector<512x128xbf16>, vector<1x128xf32> -> vector<1x128xf32>
    %c0_265 = arith.constant 0 : index
    %c0_266 = arith.constant 0 : index
    %276 = vector.load %arg8[%c0_265, %c0_266] : memref<1x128xf32, #tpu.memory_space<vmem>>, vector<1x128xf32>
    %277 = arith.addf %275, %276 : vector<1x128xf32>
    %278 = vector.shape_cast %277 : vector<1x128xf32> to vector<1x128xf32>
    %279 = vector.broadcast %278 : vector<1x128xf32> to vector<8x128xf32>
    %c0_267 = arith.constant 0 : index
    %c0_268 = arith.constant 0 : index
    %c0_269 = arith.constant 0 : index
    %280 = vector.load %arg9[%c0_267, %c0_268, %c0_269] : memref<1x8x128xf32, #tpu.memory_space<vmem>>, vector<1x8x128xf32>
    %281 = vector.shape_cast %280 : vector<1x8x128xf32> to vector<8x128xf32>
    %282 = vector.shape_cast %279 : vector<8x128xf32> to vector<1x8x128xf32>
    tpu.vector_store %arg9[%c0_267, %c0_268, %c0_269], %282 {strides = array<i32>} : memref<1x8x128xf32, #tpu.memory_space<vmem>>, vector<1x8x128xf32>,
    return
  }
  func.func @transform_0(%arg0: i32) -> (i32, i32, i32) {
    %c0_i32 = arith.constant 0 : i32
    %c0_i32_0 = arith.constant 0 : i32
    %c0_i32_1 = arith.constant 0 : i32
    return %arg0, %c0_i32, %c0_i32_0 : i32, i32, i32
  }
  func.func @transform_1(%arg0: i32) -> (i32, i32) {
    %c0_i32 = arith.constant 0 : i32
    %c0_i32_0 = arith.constant 0 : i32
    %c0_i32_1 = arith.constant 0 : i32
    return %c0_i32, %c0_i32_0 : i32, i32
  }
  func.func @transform_2(%arg0: i32) -> (i32, i32) {
    %c0_i32 = arith.constant 0 : i32
    %c0_i32_0 = arith.constant 0 : i32
    %c0_i32_1 = arith.constant 0 : i32
    return %c0_i32, %c0_i32_0 : i32, i32
  }
  func.func @transform_3(%arg0: i32) -> (i32, i32) {
    %c0_i32 = arith.constant 0 : i32
    %c0_i32_0 = arith.constant 0 : i32
    %c0_i32_1 = arith.constant 0 : i32
    return %c0_i32, %c0_i32_0 : i32, i32
  }
  func.func @transform_4(%arg0: i32) -> (i32, i32) {
    %c0_i32 = arith.constant 0 : i32
    %c0_i32_0 = arith.constant 0 : i32
    %c0_i32_1 = arith.constant 0 : i32
    return %c0_i32, %c0_i32_0 : i32, i32
  }
  func.func @transform_5(%arg0: i32) -> (i32, i32) {
    %c0_i32 = arith.constant 0 : i32
    %c0_i32_0 = arith.constant 0 : i32
    %c0_i32_1 = arith.constant 0 : i32
    return %c0_i32, %c0_i32_0 : i32, i32
  }
  func.func @transform_6(%arg0: i32) -> (i32, i32) {
    %c0_i32 = arith.constant 0 : i32
    %c0_i32_0 = arith.constant 0 : i32
    %c0_i32_1 = arith.constant 0 : i32
    return %c0_i32, %c0_i32_0 : i32, i32
  }
  func.func @transform_7(%arg0: i32) -> (i32, i32) {
    %c0_i32 = arith.constant 0 : i32
    %c0_i32_0 = arith.constant 0 : i32
    %c0_i32_1 = arith.constant 0 : i32
    return %c0_i32, %c0_i32_0 : i32, i32
  }
  func.func @transform_8(%arg0: i32) -> (i32, i32, i32) {
    %c0_i32 = arith.constant 0 : i32
    %c0_i32_0 = arith.constant 0 : i32
    %c0_i32_1 = arith.constant 0 : i32
    return %arg0, %c0_i32, %c0_i32_0 : i32, i32, i32
  }
}

</mosaic_0001>

<llo_original>
// kernel: chess_piece_model_forward.1
$region0: #{chess_piece_model_forward.1}
  #allocation0 [shape = 'u32[]', space=smem, size = 0x4, offset = 0x4, fixed_abs, tag = 'smem constant byte address 0x4 - core index']
  #allocation1 [shape = 'u32[144,128]{1,0:T(1,128)}', space=vmem, size = 0x12000, scoped, tag = 'internal scratch']
  #allocation2 [shape = 'f32[4,72,16]{2,1,0:T(8,128)}', space=vmem, size = 0x24000, scoped, tag = 'scratch operand']
  #allocation3 [shape = 'f32[224,144]{1,0:T(8,128)}', space=vmem, size = 0x38000, scoped, tag = 'scratch operand']
  #allocation4 [shape = 'f32[1,1760]{1,0:T(1,128)}', space=vmem, size = 0x1c00, scoped, tag = 'scratch operand']
  %s0 = inlined_call_operand.vmem [shape: bf16[2,1024,10], index: 0, kind: input, shape index: {}]
  %s1 = inlined_call_operand.vmem [shape: bf16[10,16], index: 1, kind: input, shape index: {}]
  %s2 = inlined_call_operand.vmem [shape: bf16[144,32], index: 2, kind: input, shape index: {}]
  %s3 = inlined_call_operand.vmem [shape: f32[1,32], index: 3, kind: input, shape index: {}]
  %s4 = inlined_call_operand.vmem [shape: bf16[1760,512], index: 4, kind: input, shape index: {}]
  %s5 = inlined_call_operand.vmem [shape: f32[1,512], index: 5, kind: input, shape index: {}]
  %s6 = inlined_call_operand.vmem [shape: bf16[512,128], index: 6, kind: input, shape index: {}]
  %s7 = inlined_call_operand.vmem [shape: f32[1,128], index: 7, kind: input, shape index: {}]
  %s8 = inlined_call_operand.vmem [shape: f32[2,8,128], index: 8, kind: output, shape index: {}]
  %s9 = sld [smem:[#allocation0]]
  $region65: #{chess_piece_model_forward.1} parent=0
    _
  %s11 = ssub.s32 1, %s9
  %s12 = scalar_select 0, %s11, %s9
  loop: start=0, step=1, limit=4
  $region2: #{chess_piece_model_forward.1} parent=0 // loop_pre_header
    _
  $region3: #{chess_piece_model_forward.1} parent=0 // loop_header
    %s14 = sphi 0, %s18
    %p15 = scmp.ge.s32.totalorder %s14, 4
    %s24 = sphi 0, %s26
    %s27 = sphi 0, %s24
    %s28 = sphi 0, %s27
    %s44 = sphi 0, %s28
    %s48 = sphi 0, %s48
    %s50 = sphi 0, %s48
    %s51 = sphi 0, %s50
    %s65 = sphi 0, %s51
    %s69 = sphi 0, %s69
    %s71 = sphi 0, %s69
    %s72 = sphi 0, %s71
    %s86 = sphi 0, %s72
    %s90 = sphi 0, %s90
    %s92 = sphi 0, %s90
    %s93 = sphi 0, %s92
    %s107 = sphi 0, %s93
    %s111 = sphi 0, %s111
    %s113 = sphi 0, %s111
    %s114 = sphi 0, %s113
    %s128 = sphi 0, %s114
    %s132 = sphi 0, %s132
    %s134 = sphi 0, %s132
    %s135 = sphi 0, %s134
    %s149 = sphi 0, %s135
    %s153 = sphi 0, %s153
    %s155 = sphi 0, %s153
    %s156 = sphi 0, %s155
    %s170 = sphi 0, %s156
    %s174 = sphi 0, %s174
    %s176 = sphi 0, %s174
    %s177 = sphi 0, %s176
    %s191 = sphi 0, %s177
    %s197 = sphi 0, %s199
    %s200 = sphi 0, %s197
    %s201 = sphi 0, %s200
    %s217 = sphi 0, %s201
  $region4: #{chess_piece_model_forward.1} parent=0 // loop_header_branch
    %17 = sbr.rel (%p15) target = $region8
  $region5: #{chess_piece_model_forward.1} parent=0 // loop_body
    %s19 = ssub.s32 %s14, 1
    %s20 = ssub.s32 %s14, 2
    %s21 = sadd.s32 %s14, 1
    %s22 = ssub.s32 %s14, %s21
    %p23 = scmp.eq.s32.totalorder %s22, 0
    %s25 = sadd.s32 %s24, 1
    %s26 = scalar_select %p23, %s24, %s25
    %p29 = pneg %p23
    %p30 = scmp.eq.s32.totalorder %s14, 1
    %p31 = por %p29, %p30
    %p32 = scmp.ne.s32.totalorder %s24, %s27
    %p33 = scmp.eq.s32.totalorder %s14, 0
    %p34 = por %p32, %p33
    %p35 = scmp.ne.s32.totalorder %s24, %s27
    %p36 = scmp.eq.s32.totalorder %s19, 1
    %p37 = por %p35, %p36
    %p38 = scmp.ne.s32.totalorder %s27, %s28
    %p39 = scmp.eq.s32.totalorder %s19, 0
    %p40 = por %p38, %p39
    %p41 = scmp.ne.s32.totalorder %s27, %s28
    %p42 = scmp.eq.s32.totalorder %s20, 1
    %p43 = por %p41, %p42
    %p45 = scmp.ne.s32.totalorder %s28, %s44
    %p46 = scmp.eq.s32.totalorder %s20, 0
    %p47 = por %p45, %p46
    %s49 = sadd.s32 %s48, 1
    %p52 = scmp.eq.s32.totalorder %s14, 1
    %p53 = scmp.ne.s32.totalorder %s48, %s50
    %p54 = scmp.eq.s32.totalorder %s14, 0
    %p55 = por %p53, %p54
    %p56 = scmp.ne.s32.totalorder %s48, %s50
    %p57 = scmp.eq.s32.totalorder %s19, 1
    %p58 = por %p56, %p57
    %p59 = scmp.ne.s32.totalorder %s50, %s51
    %p60 = scmp.eq.s32.totalorder %s19, 0
    %p61 = por %p59, %p60
    %p62 = scmp.ne.s32.totalorder %s50, %s51
    %p63 = scmp.eq.s32.totalorder %s20, 1
    %p64 = por %p62, %p63
    %p66 = scmp.ne.s32.totalorder %s51, %s65
    %p67 = scmp.eq.s32.totalorder %s20, 0
    %p68 = por %p66, %p67
    %s70 = sadd.s32 %s69, 1
    %p73 = scmp.eq.s32.totalorder %s14, 1
    %p74 = scmp.ne.s32.totalorder %s69, %s71
    %p75 = scmp.eq.s32.totalorder %s14, 0
    %p76 = por %p74, %p75
    %p77 = scmp.ne.s32.totalorder %s69, %s71
    %p78 = scmp.eq.s32.totalorder %s19, 1
    %p79 = por %p77, %p78
    %p80 = scmp.ne.s32.totalorder %s71, %s72
    %p81 = scmp.eq.s32.totalorder %s19, 0
    %p82 = por %p80, %p81
    %p83 = scmp.ne.s32.totalorder %s71, %s72
    %p84 = scmp.eq.s32.totalorder %s20, 1
    %p85 = por %p83, %p84
    %p87 = scmp.ne.s32.totalorder %s72, %s86
    %p88 = scmp.eq.s32.totalorder %s20, 0
    %p89 = por %p87, %p88
    %s91 = sadd.s32 %s90, 1
    %p94 = scmp.eq.s32.totalorder %s14, 1
    %p95 = scmp.ne.s32.totalorder %s90, %s92
    %p96 = scmp.eq.s32.totalorder %s14, 0
    %p97 = por %p95, %p96
    %p98 = scmp.ne.s32.totalorder %s90, %s92
    %p99 = scmp.eq.s32.totalorder %s19, 1
    %p100 = por %p98, %p99
    %p101 = scmp.ne.s32.totalorder %s92, %s93
    %p102 = scmp.eq.s32.totalorder %s19, 0
    %p103 = por %p101, %p102
    %p104 = scmp.ne.s32.totalorder %s92, %s93
    %p105 = scmp.eq.s32.totalorder %s20, 1
    %p106 = por %p104, %p105
    %p108 = scmp.ne.s32.totalorder %s93, %s107
    %p109 = scmp.eq.s32.totalorder %s20, 0
    %p110 = por %p108, %p109
    %s112 = sadd.s32 %s111, 1
    %p115 = scmp.eq.s32.totalorder %s14, 1
    %p116 = scmp.ne.s32.totalorder %s111, %s113
    %p117 = scmp.eq.s32.totalorder %s14, 0
    %p118 = por %p116, %p117
    %p119 = scmp.ne.s32.totalorder %s111, %s113
    %p120 = scmp.eq.s32.totalorder %s19, 1
    %p121 = por %p119, %p120
    %p122 = scmp.ne.s32.totalorder %s113, %s114
    %p123 = scmp.eq.s32.totalorder %s19, 0
    %p124 = por %p122, %p123
    %p125 = scmp.ne.s32.totalorder %s113, %s114
    %p126 = scmp.eq.s32.totalorder %s20, 1
    %p127 = por %p125, %p126
    %p129 = scmp.ne.s32.totalorder %s114, %s128
    %p130 = scmp.eq.s32.totalorder %s20, 0
    %p131 = por %p129, %p130
    %s133 = sadd.s32 %s132, 1
    %p136 = scmp.eq.s32.totalorder %s14, 1
    %p137 = scmp.ne.s32.totalorder %s132, %s134
    %p138 = scmp.eq.s32.totalorder %s14, 0
    %p139 = por %p137, %p138
    %p140 = scmp.ne.s32.totalorder %s132, %s134
    %p141 = scmp.eq.s32.totalorder %s19, 1
    %p142 = por %p140, %p141
    %p143 = scmp.ne.s32.totalorder %s134, %s135
    %p144 = scmp.eq.s32.totalorder %s19, 0
    %p145 = por %p143, %p144
    %p146 = scmp.ne.s32.totalorder %s134, %s135
    %p147 = scmp.eq.s32.totalorder %s20, 1
    %p148 = por %p146, %p147
    %p150 = scmp.ne.s32.totalorder %s135, %s149
    %p151 = scmp.eq.s32.totalorder %s20, 0
    %p152 = por %p150, %p151
    %s154 = sadd.s32 %s153, 1
    %p157 = scmp.eq.s32.totalorder %s14, 1
    %p158 = scmp.ne.s32.totalorder %s153, %s155
    %p159 = scmp.eq.s32.totalorder %s14, 0
    %p160 = por %p158, %p159
    %p161 = scmp.ne.s32.totalorder %s153, %s155
    %p162 = scmp.eq.s32.totalorder %s19, 1
    %p163 = por %p161, %p162
    %p164 = scmp.ne.s32.totalorder %s155, %s156
    %p165 = scmp.eq.s32.totalorder %s19, 0
    %p166 = por %p164, %p165
    %p167 = scmp.ne.s32.totalorder %s155, %s156
    %p168 = scmp.eq.s32.totalorder %s20, 1
    %p169 = por %p167, %p168
    %p171 = scmp.ne.s32.totalorder %s156, %s170
    %p172 = scmp.eq.s32.totalorder %s20, 0
    %p173 = por %p171, %p172
    %s175 = sadd.s32 %s174, 1
    %p178 = scmp.eq.s32.totalorder %s14, 1
    %p179 = scmp.ne.s32.totalorder %s174, %s176
    %p180 = scmp.eq.s32.totalorder %s14, 0
    %p181 = por %p179, %p180
    %p182 = scmp.ne.s32.totalorder %s174, %s176
    %p183 = scmp.eq.s32.totalorder %s19, 1
    %p184 = por %p182, %p183
    %p185 = scmp.ne.s32.totalorder %s176, %s177
    %p186 = scmp.eq.s32.totalorder %s19, 0
    %p187 = por %p185, %p186
    %p188 = scmp.ne.s32.totalorder %s176, %s177
    %p189 = scmp.eq.s32.totalorder %s20, 1
    %p190 = por %p188, %p189
    %p192 = scmp.ne.s32.totalorder %s177, %s191
    %p193 = scmp.eq.s32.totalorder %s20, 0
    %p194 = por %p192, %p193
    %s195 = ssub.s32 %s14, %s21
    %p196 = scmp.eq.s32.totalorder %s195, 0
    %s198 = sadd.s32 %s197, 1
    %s199 = scalar_select %p196, %s197, %s198
    %p202 = pneg %p196
    %p203 = scmp.eq.s32.totalorder %s14, 1
    %p204 = por %p202, %p203
    %p205 = scmp.ne.s32.totalorder %s197, %s200
    %p206 = scmp.eq.s32.totalorder %s14, 0
    %p207 = por %p205, %p206
    %p208 = scmp.ne.s32.totalorder %s197, %s200
    %p209 = scmp.eq.s32.totalorder %s19, 1
    %p210 = por %p208, %p209
    %p211 = scmp.ne.s32.totalorder %s200, %s201
    %p212 = scmp.eq.s32.totalorder %s19, 0
    %p213 = por %p211, %p212
    %p214 = scmp.ne.s32.totalorder %s200, %s201
    %p215 = scmp.eq.s32.totalorder %s20, 1
    %p216 = por %p214, %p215
    %p218 = scmp.ne.s32.totalorder %s201, %s217
    %p219 = scmp.eq.s32.totalorder %s20, 0
    %p220 = por %p218, %p219
    %p221 = scmp.le.s32.totalorder 1, %s14
    %p222 = scmp.lt.s32.totalorder %s14, 3
    %p223 = pnand %p221, %p222
    %p224 = pneg %p223
    // Predicated region
    $region9: #{chess_piece_model_forward.1} parent=5 // pred_check
      _
    $region10: #{chess_piece_model_forward.1} parent=5 // pred_check_branch
      %226 = sbr.rel (%p223) target = $region12
    $region11: #{chess_piece_model_forward.1} parent=5 // pred_region
      %s227 = ssub.s32 %s14, 1
      // Predicated region
      $region13: #{chess_piece_model_forward.1} parent=11 // pred_check
        %p228 = pneg %p61
      $region14: #{chess_piece_model_forward.1} parent=11 // pred_check_branch
        %230 = sbr.rel (%p228) target = $region16
      $region15: #{chess_piece_model_forward.1} parent=11 // pred_region
        _
      $region16: #{chess_piece_model_forward.1} parent=11 // pred_fallthru
        _
      // Predicated region
      $region17: #{chess_piece_model_forward.1} parent=11 // pred_check
        %p231 = pneg %p82
      $region18: #{chess_piece_model_forward.1} parent=11 // pred_check_branch
        %233 = sbr.rel (%p231) target = $region20
      $region19: #{chess_piece_model_forward.1} parent=11 // pred_region
        _
      $region20: #{chess_piece_model_forward.1} parent=11 // pred_fallthru
        _
      // Predicated region
      $region21: #{chess_piece_model_forward.1} parent=11 // pred_check
        %p234 = pneg %p103
      $region22: #{chess_piece_model_forward.1} parent=11 // pred_check_branch
        %236 = sbr.rel (%p234) target = $region24
      $region23: #{chess_piece_model_forward.1} parent=11 // pred_region
        _
      $region24: #{chess_piece_model_forward.1} parent=11 // pred_fallthru
        _
      // Predicated region
      $region25: #{chess_piece_model_forward.1} parent=11 // pred_check
        %p237 = pneg %p124
      $region26: #{chess_piece_model_forward.1} parent=11 // pred_check_branch
        %239 = sbr.rel (%p237) target = $region28
      $region27: #{chess_piece_model_forward.1} parent=11 // pred_region
        _
      $region28: #{chess_piece_model_forward.1} parent=11 // pred_fallthru
        _
      // Predicated region
      $region29: #{chess_piece_model_forward.1} parent=11 // pred_check
        %p240 = pneg %p145
      $region30: #{chess_piece_model_forward.1} parent=11 // pred_check_branch
        %242 = sbr.rel (%p240) target = $region32
      $region31: #{chess_piece_model_forward.1} parent=11 // pred_region
        _
      $region32: #{chess_piece_model_forward.1} parent=11 // pred_fallthru
        _
      // Predicated region
      $region33: #{chess_piece_model_forward.1} parent=11 // pred_check
        %p243 = pneg %p166
      $region34: #{chess_piece_model_forward.1} parent=11 // pred_check_branch
        %245 = sbr.rel (%p243) target = $region36
      $region35: #{chess_piece_model_forward.1} parent=11 // pred_region
        _
      $region36: #{chess_piece_model_forward.1} parent=11 // pred_fallthru
        _
      // Predicated region
      $region37: #{chess_piece_model_forward.1} parent=11 // pred_check
        %p246 = pneg %p187
      $region38: #{chess_piece_model_forward.1} parent=11 // pred_check_branch
        %248 = sbr.rel (%p246) target = $region40
      $region39: #{chess_piece_model_forward.1} parent=11 // pred_region
        _
      $region40: #{chess_piece_model_forward.1} parent=11 // pred_fallthru
        _
    $region12: #{chess_piece_model_forward.1} parent=5 // pred_fallthru
      _
    %p249 = scmp.lt.s32.totalorder %s14, 2
    // Predicated region
    $region41: #{chess_piece_model_forward.1} parent=5 // pred_check
      %p250 = pneg %p249
    $region42: #{chess_piece_model_forward.1} parent=5 // pred_check_branch
      %252 = sbr.rel (%p250) target = $region44
    $region43: #{chess_piece_model_forward.1} parent=5 // pred_region
      // Predicated region
      $region45: #{chess_piece_model_forward.1} parent=43 // pred_check
        %p253 = pneg %p34
      $region46: #{chess_piece_model_forward.1} parent=43 // pred_check_branch
        %255 = sbr.rel (%p253) target = $region48
      $region47: #{chess_piece_model_forward.1} parent=43 // pred_region
        %p256 = scmp.lt.s32.totalorder %s14, 1
        %s257 = scalar_select %p256, %s14, 1
        %s258 = smul.addr %s257, 128
        %s259 = smul.addr %s258, 4
        %s260 = scalar_lea.vmem %s0, %s259
      $region48: #{chess_piece_model_forward.1} parent=43 // pred_fallthru
        _
    $region44: #{chess_piece_model_forward.1} parent=5 // pred_fallthru
      _
    %p261 = scmp.le.s32.totalorder 1, %s14
    %p262 = scmp.lt.s32.totalorder %s14, 3
    %p263 = pnand %p261, %p262
    %p264 = pneg %p263
    // Predicated region
    $region49: #{chess_piece_model_forward.1} parent=5 // pred_check
      _
    $region50: #{chess_piece_model_forward.1} parent=5 // pred_check_branch
      %266 = sbr.rel (%p263) target = $region52
    $region51: #{chess_piece_model_forward.1} parent=5 // pred_region
      %s267 = ssub.s32 %s14, 1
      %p268 = scmp.lt.s32.totalorder %s19, 1
      %s269 = scalar_select %p268, %s19, 1
      %s270 = smul.addr %s269, 128
      %s271 = smul.addr %s270, 4
      %s272 = scalar_lea.vmem %s0, %s271
      %p273 = pneg %p40
      %p274 = pneg %p37
      %p275 = pneg %p61
      %p276 = pneg %p58
      %p277 = pneg %p82
      %p278 = pneg %p79
      %p279 = pneg %p103
      %p280 = pneg %p100
      %p281 = pneg %p124
      %p282 = pneg %p121
      %p283 = pneg %p145
      %p284 = pneg %p142
      %p285 = pneg %p166
      %p286 = pneg %p163
      %p287 = pneg %p187
      %p288 = pneg %p184
      %p289 = pneg %p213
      %p290 = pneg %p210
      %p291 = scmp.lt.s32.totalorder %s19, 1
      %s292 = scalar_select %p291, %s19, 1
      %s293 = smul.addr %s292, 8
      %s294 = scalar_lea.vmem %s8, %s293
      %p295 = scmp.lt.s32.totalorder %s19, 1
      %s296 = scalar_select %p295, %s19, 1
      %s297 = smul.addr %s296, 128
      %s298 = smul.addr %s297, 4
      %s299 = scalar_lea.vmem %s0, %s298
      %p300 = scmp.lt.s32.totalorder %s19, 1
      %s301 = scalar_select %p300, %s19, 1
      %s302 = smul.addr %s301, 8
      %s303 = scalar_lea.vmem %s8, %s302
      %v305 = vld [vmem:[%s299] sm:$0xf]
      %v306 = vld [vmem:[%s299 + $0x4] sm:$0xf]
      %v307 = vld [vmem:[%s299 + $0x8] sm:$0xf]
      %v308 = vld [vmem:[%s299 + $0xc] sm:$0xf]
      %v309 = vld [vmem:[%s299 + $0x10] sm:$0xf]
      %v310 = vld [vmem:[%s299 + $0x14] sm:$0xf]
      %v311 = vld [vmem:[%s299 + $0x18] sm:$0xf]
      %v312 = vld [vmem:[%s299 + $0x1c] sm:$0xf]
      %v313 = vld [vmem:[%s299 + $0x20] sm:$0xf]
      %v314 = vld [vmem:[%s299 + $0x24] sm:$0xf]
      %v315 = vld [vmem:[%s299 + $0x28] sm:$0xf]
      %v316 = vld [vmem:[%s299 + $0x2c] sm:$0xf]
      %v317 = vld [vmem:[%s299 + $0x30] sm:$0xf]
      %v318 = vld [vmem:[%s299 + $0x34] sm:$0xf]
      %v319 = vld [vmem:[%s299 + $0x38] sm:$0xf]
      %v320 = vld [vmem:[%s299 + $0x3c] sm:$0xf]
      %v321 = vld [vmem:[%s299 + $0x40] sm:$0xf]
      %v322 = vld [vmem:[%s299 + $0x44] sm:$0xf]
      %v323 = vld [vmem:[%s299 + $0x48] sm:$0xf]
      %v324 = vld [vmem:[%s299 + $0x4c] sm:$0xf]
      %v325 = vld [vmem:[%s299 + $0x50] sm:$0xf]
      %v326 = vld [vmem:[%s299 + $0x54] sm:$0xf]
      %v327 = vld [vmem:[%s299 + $0x58] sm:$0xf]
      %v328 = vld [vmem:[%s299 + $0x5c] sm:$0xf]
      %v329 = vld [vmem:[%s299 + $0x60] sm:$0xf]
      %v330 = vld [vmem:[%s299 + $0x64] sm:$0xf]
      %v331 = vld [vmem:[%s299 + $0x68] sm:$0xf]
      %v332 = vld [vmem:[%s299 + $0x6c] sm:$0xf]
      %v333 = vld [vmem:[%s299 + $0x70] sm:$0xf]
      %v334 = vld [vmem:[%s299 + $0x74] sm:$0xf]
      %v335 = vld [vmem:[%s299 + $0x78] sm:$0xf]
      %v336 = vld [vmem:[%s299 + $0x7c] sm:$0xf]
      %v337 = vld [vmem:[%s299 + $0x80] sm:$0xf]
      %v338 = vld [vmem:[%s299 + $0x84] sm:$0xf]
      %v339 = vld [vmem:[%s299 + $0x88] sm:$0xf]
      %v340 = vld [vmem:[%s299 + $0x8c] sm:$0xf]
      %v341 = vld [vmem:[%s299 + $0x90] sm:$0xf]
      %v342 = vld [vmem:[%s299 + $0x94] sm:$0xf]
      %v343 = vld [vmem:[%s299 + $0x98] sm:$0xf]
      %v344 = vld [vmem:[%s299 + $0x9c] sm:$0xf]
      %v345 = vld [vmem:[%s299 + $0xa0] sm:$0xf]
      %v346 = vld [vmem:[%s299 + $0xa4] sm:$0xf]
      %v347 = vld [vmem:[%s299 + $0xa8] sm:$0xf]
      %v348 = vld [vmem:[%s299 + $0xac] sm:$0xf]
      %v349 = vld [vmem:[%s299 + $0xb0] sm:$0xf]
      %v350 = vld [vmem:[%s299 + $0xb4] sm:$0xf]
      %v351 = vld [vmem:[%s299 + $0xb8] sm:$0xf]
      %v352 = vld [vmem:[%s299 + $0xbc] sm:$0xf]
      %v353 = vld [vmem:[%s299 + $0xc0] sm:$0xf]
      %v354 = vld [vmem:[%s299 + $0xc4] sm:$0xf]
      %v355 = vld [vmem:[%s299 + $0xc8] sm:$0xf]
      %v356 = vld [vmem:[%s299 + $0xcc] sm:$0xf]
      %v357 = vld [vmem:[%s299 + $0xd0] sm:$0xf]
      %v358 = vld [vmem:[%s299 + $0xd4] sm:$0xf]
      %v359 = vld [vmem:[%s299 + $0xd8] sm:$0xf]
      %v360 = vld [vmem:[%s299 + $0xdc] sm:$0xf]
      %v361 = vld [vmem:[%s299 + $0xe0] sm:$0xf]
      %v362 = vld [vmem:[%s299 + $0xe4] sm:$0xf]
      %v363 = vld [vmem:[%s299 + $0xe8] sm:$0xf]
      %v364 = vld [vmem:[%s299 + $0xec] sm:$0xf]
      %v365 = vld [vmem:[%s299 + $0xf0] sm:$0xf]
      %v366 = vld [vmem:[%s299 + $0xf4] sm:$0xf]
      %v367 = vld [vmem:[%s299 + $0xf8] sm:$0xf]
      %v368 = vld [vmem:[%s299 + $0xfc] sm:$0xf]
      %v369 = vld [vmem:[%s299 + $0x100] sm:$0xf]
      %v370 = vld [vmem:[%s299 + $0x104] sm:$0xf]
      %v371 = vld [vmem:[%s299 + $0x108] sm:$0xf]
      %v372 = vld [vmem:[%s299 + $0x10c] sm:$0xf]
      %v373 = vld [vmem:[%s299 + $0x110] sm:$0xf]
      %v374 = vld [vmem:[%s299 + $0x114] sm:$0xf]
      %v375 = vld [vmem:[%s299 + $0x118] sm:$0xf]
      %v376 = vld [vmem:[%s299 + $0x11c] sm:$0xf]
      %v377 = vld [vmem:[%s299 + $0x120] sm:$0xf]
      %v378 = vld [vmem:[%s299 + $0x124] sm:$0xf]
      %v379 = vld [vmem:[%s299 + $0x128] sm:$0xf]
      %v380 = vld [vmem:[%s299 + $0x12c] sm:$0xf]
      %v381 = vld [vmem:[%s299 + $0x130] sm:$0xf]
      %v382 = vld [vmem:[%s299 + $0x134] sm:$0xf]
      %v383 = vld [vmem:[%s299 + $0x138] sm:$0xf]
      %v384 = vld [vmem:[%s299 + $0x13c] sm:$0xf]
      %v385 = vld [vmem:[%s299 + $0x140] sm:$0xf]
      %v386 = vld [vmem:[%s299 + $0x144] sm:$0xf]
      %v387 = vld [vmem:[%s299 + $0x148] sm:$0xf]
      %v388 = vld [vmem:[%s299 + $0x14c] sm:$0xf]
      %v389 = vld [vmem:[%s299 + $0x150] sm:$0xf]
      %v390 = vld [vmem:[%s299 + $0x154] sm:$0xf]
      %v391 = vld [vmem:[%s299 + $0x158] sm:$0xf]
      %v392 = vld [vmem:[%s299 + $0x15c] sm:$0xf]
      %v393 = vld [vmem:[%s299 + $0x160] sm:$0xf]
      %v394 = vld [vmem:[%s299 + $0x164] sm:$0xf]
      %v395 = vld [vmem:[%s299 + $0x168] sm:$0xf]
      %v396 = vld [vmem:[%s299 + $0x16c] sm:$0xf]
      %v397 = vld [vmem:[%s299 + $0x170] sm:$0xf]
      %v398 = vld [vmem:[%s299 + $0x174] sm:$0xf]
      %v399 = vld [vmem:[%s299 + $0x178] sm:$0xf]
      %v400 = vld [vmem:[%s299 + $0x17c] sm:$0xf]
      %v401 = vld [vmem:[%s299 + $0x180] sm:$0xf]
      %v402 = vld [vmem:[%s299 + $0x184] sm:$0xf]
      %v403 = vld [vmem:[%s299 + $0x188] sm:$0xf]
      %v404 = vld [vmem:[%s299 + $0x18c] sm:$0xf]
      %v405 = vld [vmem:[%s299 + $0x190] sm:$0xf]
      %v406 = vld [vmem:[%s299 + $0x194] sm:$0xf]
      %v407 = vld [vmem:[%s299 + $0x198] sm:$0xf]
      %v408 = vld [vmem:[%s299 + $0x19c] sm:$0xf]
      %v409 = vld [vmem:[%s299 + $0x1a0] sm:$0xf]
      %v410 = vld [vmem:[%s299 + $0x1a4] sm:$0xf]
      %v411 = vld [vmem:[%s299 + $0x1a8] sm:$0xf]
      %v412 = vld [vmem:[%s299 + $0x1ac] sm:$0xf]
      %v413 = vld [vmem:[%s299 + $0x1b0] sm:$0xf]
      %v414 = vld [vmem:[%s299 + $0x1b4] sm:$0xf]
      %v415 = vld [vmem:[%s299 + $0x1b8] sm:$0xf]
      %v416 = vld [vmem:[%s299 + $0x1bc] sm:$0xf]
      %v417 = vld [vmem:[%s299 + $0x1c0] sm:$0xf]
      %v418 = vld [vmem:[%s299 + $0x1c4] sm:$0xf]
      %v419 = vld [vmem:[%s299 + $0x1c8] sm:$0xf]
      %v420 = vld [vmem:[%s299 + $0x1cc] sm:$0xf]
      %v421 = vld [vmem:[%s299 + $0x1d0] sm:$0xf]
      %v422 = vld [vmem:[%s299 + $0x1d4] sm:$0xf]
      %v423 = vld [vmem:[%s299 + $0x1d8] sm:$0xf]
      %v424 = vld [vmem:[%s299 + $0x1dc] sm:$0xf]
      %v425 = vld [vmem:[%s299 + $0x1e0] sm:$0xf]
      %v426 = vld [vmem:[%s299 + $0x1e4] sm:$0xf]
      %v427 = vld [vmem:[%s299 + $0x1e8] sm:$0xf]
      %v428 = vld [vmem:[%s299 + $0x1ec] sm:$0xf]
      %v429 = vld [vmem:[%s299 + $0x1f0] sm:$0xf]
      %v430 = vld [vmem:[%s299 + $0x1f4] sm:$0xf]
      %v431 = vld [vmem:[%s299 + $0x1f8] sm:$0xf]
      %v432 = vld [vmem:[%s299 + $0x1fc] sm:$0xf]
      %v433 = vld [vmem:[%s1] sm:$0xf]
      %v434 = vld [vmem:[%s1 + $0x4] sm:$0x1]
      %v563 = vunpack.c.l.b16 %v305
      %v564 = vunpack.c.l.b16 %v306
      %v565 = vunpack.c.l.b16 %v307
      %v566 = vunpack.c.l.b16 %v308
      %v567 = vunpack.c.l.b16 %v309
      %v568 = vunpack.c.l.b16 %v310
      %v569 = vunpack.c.l.b16 %v311
      %v570 = vunpack.c.l.b16 %v312
      %v571 = vunpack.c.l.b16 %v313
      %v572 = vunpack.c.l.b16 %v314
      %v573 = vunpack.c.l.b16 %v315
      %v574 = vunpack.c.l.b16 %v316
      %v575 = vunpack.c.l.b16 %v317
      %v576 = vunpack.c.l.b16 %v318
      %v577 = vunpack.c.l.b16 %v319
      %v578 = vunpack.c.l.b16 %v320
      %v579 = vunpack.c.l.b16 %v321
      %v580 = vunpack.c.l.b16 %v322
      %v581 = vunpack.c.l.b16 %v323
      %v582 = vunpack.c.l.b16 %v324
      %v583 = vunpack.c.l.b16 %v325
      %v584 = vunpack.c.l.b16 %v326
      %v585 = vunpack.c.l.b16 %v327
      %v586 = vunpack.c.l.b16 %v328
      %v587 = vunpack.c.l.b16 %v329
      %v588 = vunpack.c.l.b16 %v330
      %v589 = vunpack.c.l.b16 %v331
      %v590 = vunpack.c.l.b16 %v332
      %v591 = vunpack.c.l.b16 %v333
      %v592 = vunpack.c.l.b16 %v334
      %v593 = vunpack.c.l.b16 %v335
      %v594 = vunpack.c.l.b16 %v336
      %v595 = vunpack.c.l.b16 %v337
      %v596 = vunpack.c.l.b16 %v338
      %v597 = vunpack.c.l.b16 %v339
      %v598 = vunpack.c.l.b16 %v340
      %v599 = vunpack.c.l.b16 %v341
      %v600 = vunpack.c.l.b16 %v342
      %v601 = vunpack.c.l.b16 %v343
      %v602 = vunpack.c.l.b16 %v344
      %v603 = vunpack.c.l.b16 %v345
      %v604 = vunpack.c.l.b16 %v346
      %v605 = vunpack.c.l.b16 %v347
      %v606 = vunpack.c.l.b16 %v348
      %v607 = vunpack.c.l.b16 %v349
      %v608 = vunpack.c.l.b16 %v350
      %v609 = vunpack.c.l.b16 %v351
      %v610 = vunpack.c.l.b16 %v352
      %v611 = vunpack.c.l.b16 %v353
      %v612 = vunpack.c.l.b16 %v354
      %v613 = vunpack.c.l.b16 %v355
      %v614 = vunpack.c.l.b16 %v356
      %v615 = vunpack.c.l.b16 %v357
      %v616 = vunpack.c.l.b16 %v358
      %v617 = vunpack.c.l.b16 %v359
      %v618 = vunpack.c.l.b16 %v360
      %v619 = vunpack.c.l.b16 %v361
      %v620 = vunpack.c.l.b16 %v362
      %v621 = vunpack.c.l.b16 %v363
      %v622 = vunpack.c.l.b16 %v364
      %v623 = vunpack.c.l.b16 %v365
      %v624 = vunpack.c.l.b16 %v366
      %v625 = vunpack.c.l.b16 %v367
      %v626 = vunpack.c.l.b16 %v368
      %v627 = vunpack.c.l.b16 %v369
      %v628 = vunpack.c.l.b16 %v370
      %v629 = vunpack.c.l.b16 %v371
      %v630 = vunpack.c.l.b16 %v372
      %v631 = vunpack.c.l.b16 %v373
      %v632 = vunpack.c.l.b16 %v374
      %v633 = vunpack.c.l.b16 %v375
      %v634 = vunpack.c.l.b16 %v376
      %v635 = vunpack.c.l.b16 %v377
      %v636 = vunpack.c.l.b16 %v378
      %v637 = vunpack.c.l.b16 %v379
      %v638 = vunpack.c.l.b16 %v380
      %v639 = vunpack.c.l.b16 %v381
      %v640 = vunpack.c.l.b16 %v382
      %v641 = vunpack.c.l.b16 %v383
      %v642 = vunpack.c.l.b16 %v384
      %v643 = vunpack.c.l.b16 %v385
      %v644 = vunpack.c.l.b16 %v386
      %v645 = vunpack.c.l.b16 %v387
      %v646 = vunpack.c.l.b16 %v388
      %v647 = vunpack.c.l.b16 %v389
      %v648 = vunpack.c.l.b16 %v390
      %v649 = vunpack.c.l.b16 %v391
      %v650 = vunpack.c.l.b16 %v392
      %v651 = vunpack.c.l.b16 %v393
      %v652 = vunpack.c.l.b16 %v394
      %v653 = vunpack.c.l.b16 %v395
      %v654 = vunpack.c.l.b16 %v396
      %v655 = vunpack.c.l.b16 %v397
      %v656 = vunpack.c.l.b16 %v398
      %v657 = vunpack.c.l.b16 %v399
      %v658 = vunpack.c.l.b16 %v400
      %v659 = vunpack.c.l.b16 %v401
      %v660 = vunpack.c.l.b16 %v402
      %v661 = vunpack.c.l.b16 %v403
      %v662 = vunpack.c.l.b16 %v404
      %v663 = vunpack.c.l.b16 %v405
      %v664 = vunpack.c.l.b16 %v406
      %v665 = vunpack.c.l.b16 %v407
      %v666 = vunpack.c.l.b16 %v408
      %v667 = vunpack.c.l.b16 %v409
      %v668 = vunpack.c.l.b16 %v410
      %v669 = vunpack.c.l.b16 %v411
      %v670 = vunpack.c.l.b16 %v412
      %v671 = vunpack.c.l.b16 %v413
      %v672 = vunpack.c.l.b16 %v414
      %v673 = vunpack.c.l.b16 %v415
      %v674 = vunpack.c.l.b16 %v416
      %v675 = vunpack.c.l.b16 %v417
      %v676 = vunpack.c.l.b16 %v418
      %v677 = vunpack.c.l.b16 %v419
      %v678 = vunpack.c.l.b16 %v420
      %v679 = vunpack.c.l.b16 %v421
      %v680 = vunpack.c.l.b16 %v422
      %v681 = vunpack.c.l.b16 %v423
      %v682 = vunpack.c.l.b16 %v424
      %v683 = vunpack.c.l.b16 %v425
      %v684 = vunpack.c.l.b16 %v426
      %v685 = vunpack.c.l.b16 %v427
      %v686 = vunpack.c.l.b16 %v428
      %v687 = vunpack.c.l.b16 %v429
      %v688 = vunpack.c.l.b16 %v430
      %v689 = vunpack.c.l.b16 %v431
      %v690 = vunpack.c.l.b16 %v432
      %v691 = vpack.c.b16 %v564, %v563
      %v692 = vpack.c.b16 %v566, %v565
      %v693 = vpack.c.b16 %v568, %v567
      %v694 = vpack.c.b16 %v570, %v569
      %v695 = vpack.c.b16 %v572, %v571
      %v696 = vpack.c.b16 %v574, %v573
      %v697 = vpack.c.b16 %v576, %v575
      %v698 = vpack.c.b16 %v578, %v577
      %v699 = vpack.c.b16 %v580, %v579
      %v700 = vpack.c.b16 %v582, %v581
      %v701 = vpack.c.b16 %v584, %v583
      %v702 = vpack.c.b16 %v586, %v585
      %v703 = vpack.c.b16 %v588, %v587
      %v704 = vpack.c.b16 %v590, %v589
      %v705 = vpack.c.b16 %v592, %v591
      %v706 = vpack.c.b16 %v594, %v593
      %v707 = vpack.c.b16 %v596, %v595
      %v708 = vpack.c.b16 %v598, %v597
      %v709 = vpack.c.b16 %v600, %v599
      %v710 = vpack.c.b16 %v602, %v601
      %v711 = vpack.c.b16 %v604, %v603
      %v712 = vpack.c.b16 %v606, %v605
      %v713 = vpack.c.b16 %v608, %v607
      %v714 = vpack.c.b16 %v610, %v609
      %v715 = vpack.c.b16 %v612, %v611
      %v716 = vpack.c.b16 %v614, %v613
      %v717 = vpack.c.b16 %v616, %v615
      %v718 = vpack.c.b16 %v618, %v617
      %v719 = vpack.c.b16 %v620, %v619
      %v720 = vpack.c.b16 %v622, %v621
      %v721 = vpack.c.b16 %v624, %v623
      %v722 = vpack.c.b16 %v626, %v625
      %v723 = vpack.c.b16 %v628, %v627
      %v724 = vpack.c.b16 %v630, %v629
      %v725 = vpack.c.b16 %v632, %v631
      %v726 = vpack.c.b16 %v634, %v633
      %v727 = vpack.c.b16 %v636, %v635
      %v728 = vpack.c.b16 %v638, %v637
      %v729 = vpack.c.b16 %v640, %v639
      %v730 = vpack.c.b16 %v642, %v641
      %v731 = vpack.c.b16 %v644, %v643
      %v732 = vpack.c.b16 %v646, %v645
      %v733 = vpack.c.b16 %v648, %v647
      %v734 = vpack.c.b16 %v650, %v649
      %v735 = vpack.c.b16 %v652, %v651
      %v736 = vpack.c.b16 %v654, %v653
      %v737 = vpack.c.b16 %v656, %v655
      %v738 = vpack.c.b16 %v658, %v657
      %v739 = vpack.c.b16 %v660, %v659
      %v740 = vpack.c.b16 %v662, %v661
      %v741 = vpack.c.b16 %v664, %v663
      %v742 = vpack.c.b16 %v666, %v665
      %v743 = vpack.c.b16 %v668, %v667
      %v744 = vpack.c.b16 %v670, %v669
      %v745 = vpack.c.b16 %v672, %v671
      %v746 = vpack.c.b16 %v674, %v673
      %v747 = vpack.c.b16 %v676, %v675
      %v748 = vpack.c.b16 %v678, %v677
      %v749 = vpack.c.b16 %v680, %v679
      %v750 = vpack.c.b16 %v682, %v681
      %v751 = vpack.c.b16 %v684, %v683
      %v752 = vpack.c.b16 %v686, %v685
      %v753 = vpack.c.b16 %v688, %v687
      %v754 = vpack.c.b16 %v690, %v689
      %v757 = vunpack.c.l.b16 %v433
      %v758 = vunpack.c.l.b16 %v434
      %v759 = vpack.c.b16 %v758, %v757
      %vm760 = vcmask 80896
      %v762 = vsel %vm760, %v691, 0
      %v765 = vsel %vm760, %v692, 0
      %v768 = vsel %vm760, %v693, 0
      %v771 = vsel %vm760, %v694, 0
      %v774 = vsel %vm760, %v695, 0
      %v777 = vsel %vm760, %v696, 0
      %v780 = vsel %vm760, %v697, 0
      %v783 = vsel %vm760, %v698, 0
      %v786 = vsel %vm760, %v699, 0
      %v789 = vsel %vm760, %v700, 0
      %v792 = vsel %vm760, %v701, 0
      %v795 = vsel %vm760, %v702, 0
      %v798 = vsel %vm760, %v703, 0
      %v801 = vsel %vm760, %v704, 0
      %v804 = vsel %vm760, %v705, 0
      %v807 = vsel %vm760, %v706, 0
      %v810 = vsel %vm760, %v707, 0
      %v813 = vsel %vm760, %v708, 0
      %v816 = vsel %vm760, %v709, 0
      %v819 = vsel %vm760, %v710, 0
      %v822 = vsel %vm760, %v711, 0
      %v825 = vsel %vm760, %v712, 0
      %v828 = vsel %vm760, %v713, 0
      %v831 = vsel %vm760, %v714, 0
      %v834 = vsel %vm760, %v715, 0
      %v837 = vsel %vm760, %v716, 0
      %v840 = vsel %vm760, %v717, 0
      %v843 = vsel %vm760, %v718, 0
      %v846 = vsel %vm760, %v719, 0
      %v849 = vsel %vm760, %v720, 0
      %v852 = vsel %vm760, %v721, 0
      %v855 = vsel %vm760, %v722, 0
      %v858 = vsel %vm760, %v723, 0
      %v861 = vsel %vm760, %v724, 0
      %v864 = vsel %vm760, %v725, 0
      %v867 = vsel %vm760, %v726, 0
      %v870 = vsel %vm760, %v727, 0
      %v873 = vsel %vm760, %v728, 0
      %v876 = vsel %vm760, %v729, 0
      %v879 = vsel %vm760, %v730, 0
      %v882 = vsel %vm760, %v731, 0
      %v885 = vsel %vm760, %v732, 0
      %v888 = vsel %vm760, %v733, 0
      %v891 = vsel %vm760, %v734, 0
      %v894 = vsel %vm760, %v735, 0
      %v897 = vsel %vm760, %v736, 0
      %v900 = vsel %vm760, %v737, 0
      %v903 = vsel %vm760, %v738, 0
      %v906 = vsel %vm760, %v739, 0
      %v909 = vsel %vm760, %v740, 0
      %v912 = vsel %vm760, %v741, 0
      %v915 = vsel %vm760, %v742, 0
      %v918 = vsel %vm760, %v743, 0
      %v921 = vsel %vm760, %v744, 0
      %v924 = vsel %vm760, %v745, 0
      %v927 = vsel %vm760, %v746, 0
      %v930 = vsel %vm760, %v747, 0
      %v933 = vsel %vm760, %v748, 0
      %v936 = vsel %vm760, %v749, 0
      %v939 = vsel %vm760, %v750, 0
      %v942 = vsel %vm760, %v751, 0
      %v945 = vsel %vm760, %v752, 0
      %v948 = vsel %vm760, %v753, 0
      %v951 = vsel %vm760, %v754, 0
      %vm953 = vcmask 1044480
      %v955 = vsel %vm953, %v759, 0
      %957 = vmatprep.subr.bf16.mxu0 0
      %958 = vmatpush1.bf16.msra.mxu0 %v955
      %959 = vmatprep.subr.bf16.mxu0 0
      %960 = vmatpush1.bf16.msra.mxu0 0
      %961 = vmatprep.subr.bf16.mxu0 0
      %962 = vmatpush1.bf16.msra.mxu0 0
      %963 = vmatprep.subr.bf16.mxu0 0
      %964 = vmatpush1.bf16.msra.mxu0 0
      %965 = vmatprep.subr.bf16.mxu0 0
      %966 = vmatpush1.bf16.msra.mxu0 0
      %967 = vmatprep.subr.bf16.mxu0 0
      %968 = vmatpush1.bf16.msra.mxu0 0
      %969 = vmatprep.subr.bf16.mxu0 0
      %970 = vmatpush1.bf16.msra.mxu0 0
      %971 = vmatprep.subr.bf16.mxu0 0
      %972 = vmatpush1.bf16.msra.mxu0 0
      %973 = vmatprep.subr.bf16.mxu0 0
      %974 = vmatpush1.bf16.msra.mxu0 0
      %975 = vmatprep.subr.bf16.mxu0 0
      %976 = vmatpush1.bf16.msra.mxu0 0
      %977 = vmatprep.subr.bf16.mxu0 0
      %978 = vmatpush1.bf16.msra.mxu0 0
      %979 = vmatprep.subr.bf16.mxu0 0
      %980 = vmatpush1.bf16.msra.mxu0 0
      %981 = vmatprep.subr.bf16.mxu0 0
      %982 = vmatpush1.bf16.msra.mxu0 0
      %983 = vmatprep.subr.bf16.mxu0 0
      %984 = vmatpush1.bf16.msra.mxu0 0
      %985 = vmatprep.subr.bf16.mxu0 0
      %986 = vmatpush1.bf16.msra.mxu0 0
      %987 = vmatprep.subr.bf16.mxu0 0
      %988 = vmatpush1.bf16.msra.mxu0 0
      %989 = vmatprep.mubr.bf16.mxu0 0
      %990 = vmatmul.mubr.bf16.gmra.mrb[0].mxu0 %v762
      %v991 = vpop.f32.mrb[0].mxu0
      %v992 = vadd.f32 0.0, %v991
      %v993 = vpop.f32.mrb[0].mxu0
      %v994 = vpop.f32.mrb[0].mxu0
      %v995 = vadd.f32 0.0, %v994
      %v996 = vpop.f32.mrb[0].mxu0
      %997 = vmatprep.mubr.bf16.mxu0 0
      %998 = vmatmul.mubr.bf16.gmra.mrb[0].mxu0 %v765
      %v999 = vpop.f32.mrb[0].mxu0
      %v1000 = vadd.f32 0.0, %v999
      %v1001 = vpop.f32.mrb[0].mxu0
      %v1002 = vpop.f32.mrb[0].mxu0
      %v1003 = vadd.f32 0.0, %v1002
      %v1004 = vpop.f32.mrb[0].mxu0
      %1005 = vmatprep.mubr.bf16.mxu0 0
      %1006 = vmatmul.mubr.bf16.gmra.mrb[0].mxu0 %v768
      %v1007 = vpop.f32.mrb[0].mxu0
      %v1008 = vadd.f32 0.0, %v1007
      %v1009 = vpop.f32.mrb[0].mxu0
      %v1010 = vpop.f32.mrb[0].mxu0
      %v1011 = vadd.f32 0.0, %v1010
      %v1012 = vpop.f32.mrb[0].mxu0
      %1013 = vmatprep.mubr.bf16.mxu0 0
      %1014 = vmatmul.mubr.bf16.gmra.mrb[0].mxu0 %v771
      %v1015 = vpop.f32.mrb[0].mxu0
      %v1016 = vadd.f32 0.0, %v1015
      %v1017 = vpop.f32.mrb[0].mxu0
      %v1018 = vpop.f32.mrb[0].mxu0
      %v1019 = vadd.f32 0.0, %v1018
      %v1020 = vpop.f32.mrb[0].mxu0
      %1021 = vmatprep.mubr.bf16.mxu0 0
      %1022 = vmatmul.mubr.bf16.gmra.mrb[0].mxu0 %v774
      %v1023 = vpop.f32.mrb[0].mxu0
      %v1024 = vadd.f32 0.0, %v1023
      %v1025 = vpop.f32.mrb[0].mxu0
      %v1026 = vpop.f32.mrb[0].mxu0
      %v1027 = vadd.f32 0.0, %v1026
      %v1028 = vpop.f32.mrb[0].mxu0
      %1029 = vmatprep.mubr.bf16.mxu0 0
      %1030 = vmatmul.mubr.bf16.gmra.mrb[0].mxu0 %v777
      %v1031 = vpop.f32.mrb[0].mxu0
      %v1032 = vadd.f32 0.0, %v1031
      %v1033 = vpop.f32.mrb[0].mxu0
      %v1034 = vpop.f32.mrb[0].mxu0
      %v1035 = vadd.f32 0.0, %v1034
      %v1036 = vpop.f32.mrb[0].mxu0
      %1037 = vmatprep.mubr.bf16.mxu0 0
      %1038 = vmatmul.mubr.bf16.gmra.mrb[0].mxu0 %v780
      %v1039 = vpop.f32.mrb[0].mxu0
      %v1040 = vadd.f32 0.0, %v1039
      %v1041 = vpop.f32.mrb[0].mxu0
      %v1042 = vpop.f32.mrb[0].mxu0
      %v1043 = vadd.f32 0.0, %v1042
      %v1044 = vpop.f32.mrb[0].mxu0
      %1045 = vmatprep.mubr.bf16.mxu0 0
      %1046 = vmatmul.mubr.bf16.gmra.mrb[0].mxu0 %v783
      %v1047 = vpop.f32.mrb[0].mxu0
      %v1048 = vadd.f32 0.0, %v1047
      %v1049 = vpop.f32.mrb[0].mxu0
      %v1050 = vpop.f32.mrb[0].mxu0
      %v1051 = vadd.f32 0.0, %v1050
      %v1052 = vpop.f32.mrb[0].mxu0
      %1053 = vmatprep.mubr.bf16.mxu0 0
      %1054 = vmatmul.mubr.bf16.gmra.mrb[0].mxu0 %v786
      %v1055 = vpop.f32.mrb[0].mxu0
      %v1056 = vadd.f32 0.0, %v1055
      %v1057 = vpop.f32.mrb[0].mxu0
      %v1058 = vpop.f32.mrb[0].mxu0
      %v1059 = vadd.f32 0.0, %v1058
      %v1060 = vpop.f32.mrb[0].mxu0
      %1061 = vmatprep.mubr.bf16.mxu0 0
      %1062 = vmatmul.mubr.bf16.gmra.mrb[0].mxu0 %v789
      %v1063 = vpop.f32.mrb[0].mxu0
      %v1064 = vadd.f32 0.0, %v1063
      %v1065 = vpop.f32.mrb[0].mxu0
      %v1066 = vpop.f32.mrb[0].mxu0
      %v1067 = vadd.f32 0.0, %v1066
      %v1068 = vpop.f32.mrb[0].mxu0
      %1069 = vmatprep.mubr.bf16.mxu0 0
      %1070 = vmatmul.mubr.bf16.gmra.mrb[0].mxu0 %v792
      %v1071 = vpop.f32.mrb[0].mxu0
      %v1072 = vadd.f32 0.0, %v1071
      %v1073 = vpop.f32.mrb[0].mxu0
      %v1074 = vpop.f32.mrb[0].mxu0
      %v1075 = vadd.f32 0.0, %v1074
      %v1076 = vpop.f32.mrb[0].mxu0
      %1077 = vmatprep.mubr.bf16.mxu0 0
      %1078 = vmatmul.mubr.bf16.gmra.mrb[0].mxu0 %v795
      %v1079 = vpop.f32.mrb[0].mxu0
      %v1080 = vadd.f32 0.0, %v1079
      %v1081 = vpop.f32.mrb[0].mxu0
      %v1082 = vpop.f32.mrb[0].mxu0
      %v1083 = vadd.f32 0.0, %v1082
      %v1084 = vpop.f32.mrb[0].mxu0
      %1085 = vmatprep.mubr.bf16.mxu0 0
      %1086 = vmatmul.mubr.bf16.gmra.mrb[0].mxu0 %v798
      %v1087 = vpop.f32.mrb[0].mxu0
      %v1088 = vadd.f32 0.0, %v1087
      %v1089 = vpop.f32.mrb[0].mxu0
      %v1090 = vpop.f32.mrb[0].mxu0
      %v1091 = vadd.f32 0.0, %v1090
      %v1092 = vpop.f32.mrb[0].mxu0
      %1093 = vmatprep.mubr.bf16.mxu0 0
      %1094 = vmatmul.mubr.bf16.gmra.mrb[0].mxu0 %v801
      %v1095 = vpop.f32.mrb[0].mxu0
      %v1096 = vadd.f32 0.0, %v1095
      %v1097 = vpop.f32.mrb[0].mxu0
      %v1098 = vpop.f32.mrb[0].mxu0
      %v1099 = vadd.f32 0.0, %v1098
      %v1100 = vpop.f32.mrb[0].mxu0
      %1101 = vmatprep.mubr.bf16.mxu0 0
      %1102 = vmatmul.mubr.bf16.gmra.mrb[0].mxu0 %v804
      %v1103 = vpop.f32.mrb[0].mxu0
      %v1104 = vadd.f32 0.0, %v1103
      %v1105 = vpop.f32.mrb[0].mxu0
      %v1106 = vpop.f32.mrb[0].mxu0
      %v1107 = vadd.f32 0.0, %v1106
      %v1108 = vpop.f32.mrb[0].mxu0
      %1109 = vmatprep.mubr.bf16.mxu0 0
      %1110 = vmatmul.mubr.bf16.gmra.mrb[0].mxu0 %v807
      %v1111 = vpop.f32.mrb[0].mxu0
      %v1112 = vadd.f32 0.0, %v1111
      %v1113 = vpop.f32.mrb[0].mxu0
      %v1114 = vpop.f32.mrb[0].mxu0
      %v1115 = vadd.f32 0.0, %v1114
      %v1116 = vpop.f32.mrb[0].mxu0
      %1117 = vmatprep.mubr.bf16.mxu0 0
      %1118 = vmatmul.mubr.bf16.gmra.mrb[0].mxu0 %v810
      %v1119 = vpop.f32.mrb[0].mxu0
      %v1120 = vadd.f32 0.0, %v1119
      %v1121 = vpop.f32.mrb[0].mxu0
      %v1122 = vpop.f32.mrb[0].mxu0
      %v1123 = vadd.f32 0.0, %v1122
      %v1124 = vpop.f32.mrb[0].mxu0
      %1125 = vmatprep.mubr.bf16.mxu0 0
      %1126 = vmatmul.mubr.bf16.gmra.mrb[0].mxu0 %v813
      %v1127 = vpop.f32.mrb[0].mxu0
      %v1128 = vadd.f32 0.0, %v1127
      %v1129 = vpop.f32.mrb[0].mxu0
      %v1130 = vpop.f32.mrb[0].mxu0
      %v1131 = vadd.f32 0.0, %v1130
      %v1132 = vpop.f32.mrb[0].mxu0
      %1133 = vmatprep.mubr.bf16.mxu0 0
      %1134 = vmatmul.mubr.bf16.gmra.mrb[0].mxu0 %v816
      %v1135 = vpop.f32.mrb[0].mxu0
      %v1136 = vadd.f32 0.0, %v1135
      %v1137 = vpop.f32.mrb[0].mxu0
      %v1138 = vpop.f32.mrb[0].mxu0
      %v1139 = vadd.f32 0.0, %v1138
      %v1140 = vpop.f32.mrb[0].mxu0
      %1141 = vmatprep.mubr.bf16.mxu0 0
      %1142 = vmatmul.mubr.bf16.gmra.mrb[0].mxu0 %v819
      %v1143 = vpop.f32.mrb[0].mxu0
      %v1144 = vadd.f32 0.0, %v1143
      %v1145 = vpop.f32.mrb[0].mxu0
      %v1146 = vpop.f32.mrb[0].mxu0
      %v1147 = vadd.f32 0.0, %v1146
      %v1148 = vpop.f32.mrb[0].mxu0
      %1149 = vmatprep.mubr.bf16.mxu0 0
      %1150 = vmatmul.mubr.bf16.gmra.mrb[0].mxu0 %v822
      %v1151 = vpop.f32.mrb[0].mxu0
      %v1152 = vadd.f32 0.0, %v1151
      %v1153 = vpop.f32.mrb[0].mxu0
      %v1154 = vpop.f32.mrb[0].mxu0
      %v1155 = vadd.f32 0.0, %v1154
      %v1156 = vpop.f32.mrb[0].mxu0
      %1157 = vmatprep.mubr.bf16.mxu0 0
      %1158 = vmatmul.mubr.bf16.gmra.mrb[0].mxu0 %v825
      %v1159 = vpop.f32.mrb[0].mxu0
      %v1160 = vadd.f32 0.0, %v1159
      %v1161 = vpop.f32.mrb[0].mxu0
      %v1162 = vpop.f32.mrb[0].mxu0
      %v1163 = vadd.f32 0.0, %v1162
      %v1164 = vpop.f32.mrb[0].mxu0
      %1165 = vmatprep.mubr.bf16.mxu0 0
      %1166 = vmatmul.mubr.bf16.gmra.mrb[0].mxu0 %v828
      %v1167 = vpop.f32.mrb[0].mxu0
      %v1168 = vadd.f32 0.0, %v1167
      %v1169 = vpop.f32.mrb[0].mxu0
      %v1170 = vpop.f32.mrb[0].mxu0
      %v1171 = vadd.f32 0.0, %v1170
      %v1172 = vpop.f32.mrb[0].mxu0
      %1173 = vmatprep.mubr.bf16.mxu0 0
      %1174 = vmatmul.mubr.bf16.gmra.mrb[0].mxu0 %v831
      %v1175 = vpop.f32.mrb[0].mxu0
      %v1176 = vadd.f32 0.0, %v1175
      %v1177 = vpop.f32.mrb[0].mxu0
      %v1178 = vpop.f32.mrb[0].mxu0
      %v1179 = vadd.f32 0.0, %v1178
      %v1180 = vpop.f32.mrb[0].mxu0
      %1181 = vmatprep.mubr.bf16.mxu0 0
      %1182 = vmatmul.mubr.bf16.gmra.mrb[0].mxu0 %v834
      %v1183 = vpop.f32.mrb[0].mxu0
      %v1184 = vadd.f32 0.0, %v1183
      %v1185 = vpop.f32.mrb[0].mxu0
      %v1186 = vpop.f32.mrb[0].mxu0
      %v1187 = vadd.f32 0.0, %v1186
      %v1188 = vpop.f32.mrb[0].mxu0
      %1189 = vmatprep.mubr.bf16.mxu0 0
      %1190 = vmatmul.mubr.bf16.gmra.mrb[0].mxu0 %v837
      %v1191 = vpop.f32.mrb[0].mxu0
      %v1192 = vadd.f32 0.0, %v1191
      %v1193 = vpop.f32.mrb[0].mxu0
      %v1194 = vpop.f32.mrb[0].mxu0
      %v1195 = vadd.f32 0.0, %v1194
      %v1196 = vpop.f32.mrb[0].mxu0
      %1197 = vmatprep.mubr.bf16.mxu0 0
      %1198 = vmatmul.mubr.bf16.gmra.mrb[0].mxu0 %v840
      %v1199 = vpop.f32.mrb[0].mxu0
      %v1200 = vadd.f32 0.0, %v1199
      %v1201 = vpop.f32.mrb[0].mxu0
      %v1202 = vpop.f32.mrb[0].mxu0
      %v1203 = vadd.f32 0.0, %v1202
      %v1204 = vpop.f32.mrb[0].mxu0
      %1205 = vmatprep.mubr.bf16.mxu0 0
      %1206 = vmatmul.mubr.bf16.gmra.mrb[0].mxu0 %v843
      %v1207 = vpop.f32.mrb[0].mxu0
      %v1208 = vadd.f32 0.0, %v1207
      %v1209 = vpop.f32.mrb[0].mxu0
      %v1210 = vpop.f32.mrb[0].mxu0
      %v1211 = vadd.f32 0.0, %v1210
      %v1212 = vpop.f32.mrb[0].mxu0
      %1213 = vmatprep.mubr.bf16.mxu0 0
      %1214 = vmatmul.mubr.bf16.gmra.mrb[0].mxu0 %v846
      %v1215 = vpop.f32.mrb[0].mxu0
      %v1216 = vadd.f32 0.0, %v1215
      %v1217 = vpop.f32.mrb[0].mxu0
      %v1218 = vpop.f32.mrb[0].mxu0
      %v1219 = vadd.f32 0.0, %v1218
      %v1220 = vpop.f32.mrb[0].mxu0
      %1221 = vmatprep.mubr.bf16.mxu0 0
      %1222 = vmatmul.mubr.bf16.gmra.mrb[0].mxu0 %v849
      %v1223 = vpop.f32.mrb[0].mxu0
      %v1224 = vadd.f32 0.0, %v1223
      %v1225 = vpop.f32.mrb[0].mxu0
      %v1226 = vpop.f32.mrb[0].mxu0
      %v1227 = vadd.f32 0.0, %v1226
      %v1228 = vpop.f32.mrb[0].mxu0
      %1229 = vmatprep.mubr.bf16.mxu0 0
      %1230 = vmatmul.mubr.bf16.gmra.mrb[0].mxu0 %v852
      %v1231 = vpop.f32.mrb[0].mxu0
      %v1232 = vadd.f32 0.0, %v1231
      %v1233 = vpop.f32.mrb[0].mxu0
      %v1234 = vpop.f32.mrb[0].mxu0
      %v1235 = vadd.f32 0.0, %v1234
      %v1236 = vpop.f32.mrb[0].mxu0
      %1237 = vmatprep.mubr.bf16.mxu0 0
      %1238 = vmatmul.mubr.bf16.gmra.mrb[0].mxu0 %v855
      %v1239 = vpop.f32.mrb[0].mxu0
      %v1240 = vadd.f32 0.0, %v1239
      %v1241 = vpop.f32.mrb[0].mxu0
      %v1242 = vpop.f32.mrb[0].mxu0
      %v1243 = vadd.f32 0.0, %v1242
      %v1244 = vpop.f32.mrb[0].mxu0
      %1245 = vmatprep.mubr.bf16.mxu0 0
      %1246 = vmatmul.mubr.bf16.gmra.mrb[0].mxu0 %v858
      %v1247 = vpop.f32.mrb[0].mxu0
      %v1248 = vadd.f32 0.0, %v1247
      %v1249 = vpop.f32.mrb[0].mxu0
      %v1250 = vpop.f32.mrb[0].mxu0
      %v1251 = vadd.f32 0.0, %v1250
      %v1252 = vpop.f32.mrb[0].mxu0
      %1253 = vmatprep.mubr.bf16.mxu0 0
      %1254 = vmatmul.mubr.bf16.gmra.mrb[0].mxu0 %v861
      %v1255 = vpop.f32.mrb[0].mxu0
      %v1256 = vadd.f32 0.0, %v1255
      %v1257 = vpop.f32.mrb[0].mxu0
      %v1258 = vpop.f32.mrb[0].mxu0
      %v1259 = vadd.f32 0.0, %v1258
      %v1260 = vpop.f32.mrb[0].mxu0
      %1261 = vmatprep.mubr.bf16.mxu0 0
      %1262 = vmatmul.mubr.bf16.gmra.mrb[0].mxu0 %v864
      %v1263 = vpop.f32.mrb[0].mxu0
      %v1264 = vadd.f32 0.0, %v1263
      %v1265 = vpop.f32.mrb[0].mxu0
      %v1266 = vpop.f32.mrb[0].mxu0
      %v1267 = vadd.f32 0.0, %v1266
      %v1268 = vpop.f32.mrb[0].mxu0
      %1269 = vmatprep.mubr.bf16.mxu0 0
      %1270 = vmatmul.mubr.bf16.gmra.mrb[0].mxu0 %v867
      %v1271 = vpop.f32.mrb[0].mxu0
      %v1272 = vadd.f32 0.0, %v1271
      %v1273 = vpop.f32.mrb[0].mxu0
      %v1274 = vpop.f32.mrb[0].mxu0
      %v1275 = vadd.f32 0.0, %v1274
      %v1276 = vpop.f32.mrb[0].mxu0
      %1277 = vmatprep.mubr.bf16.mxu0 0
      %1278 = vmatmul.mubr.bf16.gmra.mrb[0].mxu0 %v870
      %v1279 = vpop.f32.mrb[0].mxu0
      %v1280 = vadd.f32 0.0, %v1279
      %v1281 = vpop.f32.mrb[0].mxu0
      %v1282 = vpop.f32.mrb[0].mxu0
      %v1283 = vadd.f32 0.0, %v1282
      %v1284 = vpop.f32.mrb[0].mxu0
      %1285 = vmatprep.mubr.bf16.mxu0 0
      %1286 = vmatmul.mubr.bf16.gmra.mrb[0].mxu0 %v873
      %v1287 = vpop.f32.mrb[0].mxu0
      %v1288 = vadd.f32 0.0, %v1287
      %v1289 = vpop.f32.mrb[0].mxu0
      %v1290 = vpop.f32.mrb[0].mxu0
      %v1291 = vadd.f32 0.0, %v1290
      %v1292 = vpop.f32.mrb[0].mxu0
      %1293 = vmatprep.mubr.bf16.mxu0 0
      %1294 = vmatmul.mubr.bf16.gmra.mrb[0].mxu0 %v876
      %v1295 = vpop.f32.mrb[0].mxu0
      %v1296 = vadd.f32 0.0, %v1295
      %v1297 = vpop.f32.mrb[0].mxu0
      %v1298 = vpop.f32.mrb[0].mxu0
      %v1299 = vadd.f32 0.0, %v1298
      %v1300 = vpop.f32.mrb[0].mxu0
      %1301 = vmatprep.mubr.bf16.mxu0 0
      %1302 = vmatmul.mubr.bf16.gmra.mrb[0].mxu0 %v879
      %v1303 = vpop.f32.mrb[0].mxu0
      %v1304 = vadd.f32 0.0, %v1303
      %v1305 = vpop.f32.mrb[0].mxu0
      %v1306 = vpop.f32.mrb[0].mxu0
      %v1307 = vadd.f32 0.0, %v1306
      %v1308 = vpop.f32.mrb[0].mxu0
      %1309 = vmatprep.mubr.bf16.mxu0 0
      %1310 = vmatmul.mubr.bf16.gmra.mrb[0].mxu0 %v882
      %v1311 = vpop.f32.mrb[0].mxu0
      %v1312 = vadd.f32 0.0, %v1311
      %v1313 = vpop.f32.mrb[0].mxu0
      %v1314 = vpop.f32.mrb[0].mxu0
      %v1315 = vadd.f32 0.0, %v1314
      %v1316 = vpop.f32.mrb[0].mxu0
      %1317 = vmatprep.mubr.bf16.mxu0 0
      %1318 = vmatmul.mubr.bf16.gmra.mrb[0].mxu0 %v885
      %v1319 = vpop.f32.mrb[0].mxu0
      %v1320 = vadd.f32 0.0, %v1319
      %v1321 = vpop.f32.mrb[0].mxu0
      %v1322 = vpop.f32.mrb[0].mxu0
      %v1323 = vadd.f32 0.0, %v1322
      %v1324 = vpop.f32.mrb[0].mxu0
      %1325 = vmatprep.mubr.bf16.mxu0 0
      %1326 = vmatmul.mubr.bf16.gmra.mrb[0].mxu0 %v888
      %v1327 = vpop.f32.mrb[0].mxu0
      %v1328 = vadd.f32 0.0, %v1327
      %v1329 = vpop.f32.mrb[0].mxu0
      %v1330 = vpop.f32.mrb[0].mxu0
      %v1331 = vadd.f32 0.0, %v1330
      %v1332 = vpop.f32.mrb[0].mxu0
      %1333 = vmatprep.mubr.bf16.mxu0 0
      %1334 = vmatmul.mubr.bf16.gmra.mrb[0].mxu0 %v891
      %v1335 = vpop.f32.mrb[0].mxu0
      %v1336 = vadd.f32 0.0, %v1335
      %v1337 = vpop.f32.mrb[0].mxu0
      %v1338 = vpop.f32.mrb[0].mxu0
      %v1339 = vadd.f32 0.0, %v1338
      %v1340 = vpop.f32.mrb[0].mxu0
      %1341 = vmatprep.mubr.bf16.mxu0 0
      %1342 = vmatmul.mubr.bf16.gmra.mrb[0].mxu0 %v894
      %v1343 = vpop.f32.mrb[0].mxu0
      %v1344 = vadd.f32 0.0, %v1343
      %v1345 = vpop.f32.mrb[0].mxu0
      %v1346 = vpop.f32.mrb[0].mxu0
      %v1347 = vadd.f32 0.0, %v1346
      %v1348 = vpop.f32.mrb[0].mxu0
      %1349 = vmatprep.mubr.bf16.mxu0 0
      %1350 = vmatmul.mubr.bf16.gmra.mrb[0].mxu0 %v897
      %v1351 = vpop.f32.mrb[0].mxu0
      %v1352 = vadd.f32 0.0, %v1351
      %v1353 = vpop.f32.mrb[0].mxu0
      %v1354 = vpop.f32.mrb[0].mxu0
      %v1355 = vadd.f32 0.0, %v1354
      %v1356 = vpop.f32.mrb[0].mxu0
      %1357 = vmatprep.mubr.bf16.mxu0 0
      %1358 = vmatmul.mubr.bf16.gmra.mrb[0].mxu0 %v900
      %v1359 = vpop.f32.mrb[0].mxu0
      %v1360 = vadd.f32 0.0, %v1359
      %v1361 = vpop.f32.mrb[0].mxu0
      %v1362 = vpop.f32.mrb[0].mxu0
      %v1363 = vadd.f32 0.0, %v1362
      %v1364 = vpop.f32.mrb[0].mxu0
      %1365 = vmatprep.mubr.bf16.mxu0 0
      %1366 = vmatmul.mubr.bf16.gmra.mrb[0].mxu0 %v903
      %v1367 = vpop.f32.mrb[0].mxu0
      %v1368 = vadd.f32 0.0, %v1367
      %v1369 = vpop.f32.mrb[0].mxu0
      %v1370 = vpop.f32.mrb[0].mxu0
      %v1371 = vadd.f32 0.0, %v1370
      %v1372 = vpop.f32.mrb[0].mxu0
      %1373 = vmatprep.mubr.bf16.mxu0 0
      %1374 = vmatmul.mubr.bf16.gmra.mrb[0].mxu0 %v906
      %v1375 = vpop.f32.mrb[0].mxu0
      %v1376 = vadd.f32 0.0, %v1375
      %v1377 = vpop.f32.mrb[0].mxu0
      %v1378 = vpop.f32.mrb[0].mxu0
      %v1379 = vadd.f32 0.0, %v1378
      %v1380 = vpop.f32.mrb[0].mxu0
      %1381 = vmatprep.mubr.bf16.mxu0 0
      %1382 = vmatmul.mubr.bf16.gmra.mrb[0].mxu0 %v909
      %v1383 = vpop.f32.mrb[0].mxu0
      %v1384 = vadd.f32 0.0, %v1383
      %v1385 = vpop.f32.mrb[0].mxu0
      %v1386 = vpop.f32.mrb[0].mxu0
      %v1387 = vadd.f32 0.0, %v1386
      %v1388 = vpop.f32.mrb[0].mxu0
      %1389 = vmatprep.mubr.bf16.mxu0 0
      %1390 = vmatmul.mubr.bf16.gmra.mrb[0].mxu0 %v912
      %v1391 = vpop.f32.mrb[0].mxu0
      %v1392 = vadd.f32 0.0, %v1391
      %v1393 = vpop.f32.mrb[0].mxu0
      %v1394 = vpop.f32.mrb[0].mxu0
      %v1395 = vadd.f32 0.0, %v1394
      %v1396 = vpop.f32.mrb[0].mxu0
      %1397 = vmatprep.mubr.bf16.mxu0 0
      %1398 = vmatmul.mubr.bf16.gmra.mrb[0].mxu0 %v915
      %v1399 = vpop.f32.mrb[0].mxu0
      %v1400 = vadd.f32 0.0, %v1399
      %v1401 = vpop.f32.mrb[0].mxu0
      %v1402 = vpop.f32.mrb[0].mxu0
      %v1403 = vadd.f32 0.0, %v1402
      %v1404 = vpop.f32.mrb[0].mxu0
      %1405 = vmatprep.mubr.bf16.mxu0 0
      %1406 = vmatmul.mubr.bf16.gmra.mrb[0].mxu0 %v918
      %v1407 = vpop.f32.mrb[0].mxu0
      %v1408 = vadd.f32 0.0, %v1407
      %v1409 = vpop.f32.mrb[0].mxu0
      %v1410 = vpop.f32.mrb[0].mxu0
      %v1411 = vadd.f32 0.0, %v1410
      %v1412 = vpop.f32.mrb[0].mxu0
      %1413 = vmatprep.mubr.bf16.mxu0 0
      %1414 = vmatmul.mubr.bf16.gmra.mrb[0].mxu0 %v921
      %v1415 = vpop.f32.mrb[0].mxu0
      %v1416 = vadd.f32 0.0, %v1415
      %v1417 = vpop.f32.mrb[0].mxu0
      %v1418 = vpop.f32.mrb[0].mxu0
      %v1419 = vadd.f32 0.0, %v1418
      %v1420 = vpop.f32.mrb[0].mxu0
      %1421 = vmatprep.mubr.bf16.mxu0 0
      %1422 = vmatmul.mubr.bf16.gmra.mrb[0].mxu0 %v924
      %v1423 = vpop.f32.mrb[0].mxu0
      %v1424 = vadd.f32 0.0, %v1423
      %v1425 = vpop.f32.mrb[0].mxu0
      %v1426 = vpop.f32.mrb[0].mxu0
      %v1427 = vadd.f32 0.0, %v1426
      %v1428 = vpop.f32.mrb[0].mxu0
      %1429 = vmatprep.mubr.bf16.mxu0 0
      %1430 = vmatmul.mubr.bf16.gmra.mrb[0].mxu0 %v927
      %v1431 = vpop.f32.mrb[0].mxu0
      %v1432 = vadd.f32 0.0, %v1431
      %v1433 = vpop.f32.mrb[0].mxu0
      %v1434 = vpop.f32.mrb[0].mxu0
      %v1435 = vadd.f32 0.0, %v1434
      %v1436 = vpop.f32.mrb[0].mxu0
      %1437 = vmatprep.mubr.bf16.mxu0 0
      %1438 = vmatmul.mubr.bf16.gmra.mrb[0].mxu0 %v930
      %v1439 = vpop.f32.mrb[0].mxu0
      %v1440 = vadd.f32 0.0, %v1439
      %v1441 = vpop.f32.mrb[0].mxu0
      %v1442 = vpop.f32.mrb[0].mxu0
      %v1443 = vadd.f32 0.0, %v1442
      %v1444 = vpop.f32.mrb[0].mxu0
      %1445 = vmatprep.mubr.bf16.mxu0 0
      %1446 = vmatmul.mubr.bf16.gmra.mrb[0].mxu0 %v933
      %v1447 = vpop.f32.mrb[0].mxu0
      %v1448 = vadd.f32 0.0, %v1447
      %v1449 = vpop.f32.mrb[0].mxu0
      %v1450 = vpop.f32.mrb[0].mxu0
      %v1451 = vadd.f32 0.0, %v1450
      %v1452 = vpop.f32.mrb[0].mxu0
      %1453 = vmatprep.mubr.bf16.mxu0 0
      %1454 = vmatmul.mubr.bf16.gmra.mrb[0].mxu0 %v936
      %v1455 = vpop.f32.mrb[0].mxu0
      %v1456 = vadd.f32 0.0, %v1455
      %v1457 = vpop.f32.mrb[0].mxu0
      %v1458 = vpop.f32.mrb[0].mxu0
      %v1459 = vadd.f32 0.0, %v1458
      %v1460 = vpop.f32.mrb[0].mxu0
      %1461 = vmatprep.mubr.bf16.mxu0 0
      %1462 = vmatmul.mubr.bf16.gmra.mrb[0].mxu0 %v939
      %v1463 = vpop.f32.mrb[0].mxu0
      %v1464 = vadd.f32 0.0, %v1463
      %v1465 = vpop.f32.mrb[0].mxu0
      %v1466 = vpop.f32.mrb[0].mxu0
      %v1467 = vadd.f32 0.0, %v1466
      %v1468 = vpop.f32.mrb[0].mxu0
      %1469 = vmatprep.mubr.bf16.mxu0 0
      %1470 = vmatmul.mubr.bf16.gmra.mrb[0].mxu0 %v942
      %v1471 = vpop.f32.mrb[0].mxu0
      %v1472 = vadd.f32 0.0, %v1471
      %v1473 = vpop.f32.mrb[0].mxu0
      %v1474 = vpop.f32.mrb[0].mxu0
      %v1475 = vadd.f32 0.0, %v1474
      %v1476 = vpop.f32.mrb[0].mxu0
      %1477 = vmatprep.mubr.bf16.mxu0 0
      %1478 = vmatmul.mubr.bf16.gmra.mrb[0].mxu0 %v945
      %v1479 = vpop.f32.mrb[0].mxu0
      %v1480 = vadd.f32 0.0, %v1479
      %v1481 = vpop.f32.mrb[0].mxu0
      %v1482 = vpop.f32.mrb[0].mxu0
      %v1483 = vadd.f32 0.0, %v1482
      %v1484 = vpop.f32.mrb[0].mxu0
      %1485 = vmatprep.mubr.bf16.mxu0 0
      %1486 = vmatmul.mubr.bf16.gmra.mrb[0].mxu0 %v948
      %v1487 = vpop.f32.mrb[0].mxu0
      %v1488 = vadd.f32 0.0, %v1487
      %v1489 = vpop.f32.mrb[0].mxu0
      %v1490 = vpop.f32.mrb[0].mxu0
      %v1491 = vadd.f32 0.0, %v1490
      %v1492 = vpop.f32.mrb[0].mxu0
      %1493 = vmatprep.mubr.bf16.mxu0 0
      %1494 = vmatmul.mubr.bf16.gmra.mrb[0].mxu0 %v951
      %v1495 = vpop.f32.mrb[0].mxu0
      %v1496 = vadd.f32 0.0, %v1495
      %v1497 = vpop.f32.mrb[0].mxu0
      %v1498 = vpop.f32.mrb[0].mxu0
      %v1499 = vadd.f32 0.0, %v1498
      %v1500 = vpop.f32.mrb[0].mxu0
      %1501 = vdwg.mxu0
      %v1502 = vmax.f32 %v992, %v1120
      %v1503 = vmax.f32 %v995, %v1123
      %v1504 = vmax.f32 %v1000, %v1128
      %v1505 = vmax.f32 %v1003, %v1131
      %v1506 = vmax.f32 %v1008, %v1136
      %v1507 = vmax.f32 %v1011, %v1139
      %v1508 = vmax.f32 %v1016, %v1144
      %v1509 = vmax.f32 %v1019, %v1147
      %v1510 = vmax.f32 %v1024, %v1152
      %v1511 = vmax.f32 %v1027, %v1155
      %v1512 = vmax.f32 %v1032, %v1160
      %v1513 = vmax.f32 %v1035, %v1163
      %v1514 = vmax.f32 %v1040, %v1168
      %v1515 = vmax.f32 %v1043, %v1171
      %v1516 = vmax.f32 %v1048, %v1176
      %v1517 = vmax.f32 %v1051, %v1179
      %v1518 = vmax.f32 %v1056, %v1184
      %v1519 = vmax.f32 %v1059, %v1187
      %v1520 = vmax.f32 %v1064, %v1192
      %v1521 = vmax.f32 %v1067, %v1195
      %v1522 = vmax.f32 %v1072, %v1200
      %v1523 = vmax.f32 %v1075, %v1203
      %v1524 = vmax.f32 %v1080, %v1208
      %v1525 = vmax.f32 %v1083, %v1211
      %v1526 = vmax.f32 %v1088, %v1216
      %v1527 = vmax.f32 %v1091, %v1219
      %v1528 = vmax.f32 %v1096, %v1224
      %v1529 = vmax.f32 %v1099, %v1227
      %v1530 = vmax.f32 %v1104, %v1232
      %v1531 = vmax.f32 %v1107, %v1235
      %v1532 = vmax.f32 %v1112, %v1240
      %v1533 = vmax.f32 %v1115, %v1243
      %v1534 = vmax.f32 %v1248, %v1376
      %v1535 = vmax.f32 %v1251, %v1379
      %v1536 = vmax.f32 %v1256, %v1384
      %v1537 = vmax.f32 %v1259, %v1387
      %v1538 = vmax.f32 %v1264, %v1392
      %v1539 = vmax.f32 %v1267, %v1395
      %v1540 = vmax.f32 %v1272, %v1400
      %v1541 = vmax.f32 %v1275, %v1403
      %v1542 = vmax.f32 %v1280, %v1408
      %v1543 = vmax.f32 %v1283, %v1411
      %v1544 = vmax.f32 %v1288, %v1416
      %v1545 = vmax.f32 %v1291, %v1419
      %v1546 = vmax.f32 %v1296, %v1424
      %v1547 = vmax.f32 %v1299, %v1427
      %v1548 = vmax.f32 %v1304, %v1432
      %v1549 = vmax.f32 %v1307, %v1435
      %v1550 = vmax.f32 %v1312, %v1440
      %v1551 = vmax.f32 %v1315, %v1443
      %v1552 = vmax.f32 %v1320, %v1448
      %v1553 = vmax.f32 %v1323, %v1451
      %v1554 = vmax.f32 %v1328, %v1456
      %v1555 = vmax.f32 %v1331, %v1459
      %v1556 = vmax.f32 %v1336, %v1464
      %v1557 = vmax.f32 %v1339, %v1467
      %v1558 = vmax.f32 %v1344, %v1472
      %v1559 = vmax.f32 %v1347, %v1475
      %v1560 = vmax.f32 %v1352, %v1480
      %v1561 = vmax.f32 %v1355, %v1483
      %v1562 = vmax.f32 %v1360, %v1488
      %v1563 = vmax.f32 %v1363, %v1491
      %v1564 = vmax.f32 %v1368, %v1496
      %v1565 = vmax.f32 %v1371, %v1499
      %v1566 = vmax.f32 %v1502, %v1534
      %v1567 = vmax.f32 %v1503, %v1535
      %v1568 = vmax.f32 %v1504, %v1536
      %v1569 = vmax.f32 %v1505, %v1537
      %v1570 = vmax.f32 %v1506, %v1538
      %v1571 = vmax.f32 %v1507, %v1539
      %v1572 = vmax.f32 %v1508, %v1540
      %v1573 = vmax.f32 %v1509, %v1541
      %v1574 = vmax.f32 %v1510, %v1542
      %v1575 = vmax.f32 %v1511, %v1543
      %v1576 = vmax.f32 %v1512, %v1544
      %v1577 = vmax.f32 %v1513, %v1545
      %v1578 = vmax.f32 %v1514, %v1546
      %v1579 = vmax.f32 %v1515, %v1547
      %v1580 = vmax.f32 %v1516, %v1548
      %v1581 = vmax.f32 %v1517, %v1549
      %v1582 = vmax.f32 %v1518, %v1550
      %v1583 = vmax.f32 %v1519, %v1551
      %v1584 = vmax.f32 %v1520, %v1552
      %v1585 = vmax.f32 %v1521, %v1553
      %v1586 = vmax.f32 %v1522, %v1554
      %v1587 = vmax.f32 %v1523, %v1555
      %v1588 = vmax.f32 %v1524, %v1556
      %v1589 = vmax.f32 %v1525, %v1557
      %v1590 = vmax.f32 %v1526, %v1558
      %v1591 = vmax.f32 %v1527, %v1559
      %v1592 = vmax.f32 %v1528, %v1560
      %v1593 = vmax.f32 %v1529, %v1561
      %v1594 = vmax.f32 %v1530, %v1562
      %v1595 = vmax.f32 %v1531, %v1563
      %v1596 = vmax.f32 %v1532, %v1564
      %v1597 = vmax.f32 %v1533, %v1565
      %v1598 = vmax.f32 %v1566, 0.0
      %v1599 = vmax.f32 %v1567, 0.0
      %v1600 = vmax.f32 %v1568, 0.0
      %v1601 = vmax.f32 %v1569, 0.0
      %v1602 = vmax.f32 %v1570, 0.0
      %v1603 = vmax.f32 %v1571, 0.0
      %v1604 = vmax.f32 %v1572, 0.0
      %v1605 = vmax.f32 %v1573, 0.0
      %v1606 = vmax.f32 %v1574, 0.0
      %v1607 = vmax.f32 %v1575, 0.0
      %v1608 = vmax.f32 %v1576, 0.0
      %v1609 = vmax.f32 %v1577, 0.0
      %v1610 = vmax.f32 %v1578, 0.0
      %v1611 = vmax.f32 %v1579, 0.0
      %v1612 = vmax.f32 %v1580, 0.0
      %v1613 = vmax.f32 %v1581, 0.0
      %v1614 = vmax.f32 %v1582, 0.0
      %v1615 = vmax.f32 %v1583, 0.0
      %v1616 = vmax.f32 %v1584, 0.0
      %v1617 = vmax.f32 %v1585, 0.0
      %v1618 = vmax.f32 %v1586, 0.0
      %v1619 = vmax.f32 %v1587, 0.0
      %v1620 = vmax.f32 %v1588, 0.0
      %v1621 = vmax.f32 %v1589, 0.0
      %v1622 = vmax.f32 %v1590, 0.0
      %v1623 = vmax.f32 %v1591, 0.0
      %v1624 = vmax.f32 %v1592, 0.0
      %v1625 = vmax.f32 %v1593, 0.0
      %v1626 = vmax.f32 %v1594, 0.0
      %v1627 = vmax.f32 %v1595, 0.0
      %v1628 = vmax.f32 %v1596, 0.0
      %v1629 = vmax.f32 %v1597, 0.0
      %vm1630 = vcmask 130048
      %1631 = vst.msk [vmem:[#allocation2] sm:$0xff] %vm1630, 0.0
      %1632 = vst.msk [vmem:[#allocation2 + $0x8] sm:$0xff] %vm1630, 0.0
      %1633 = vst.msk [vmem:[#allocation2 + $0x10] sm:$0xff] %vm1630, 0.0
      %1634 = vst.msk [vmem:[#allocation2 + $0x18] sm:$0xff] %vm1630, 0.0
      %1635 = vst.msk [vmem:[#allocation2 + $0x20] sm:$0xff] %vm1630, 0.0
      %1636 = vst.msk [vmem:[#allocation2 + $0x28] sm:$0xff] %vm1630, 0.0
      %1637 = vst.msk [vmem:[#allocation2 + $0x30] sm:$0xff] %vm1630, 0.0
      %1638 = vst.msk [vmem:[#allocation2 + $0x38] sm:$0xff] %vm1630, 0.0
      %1639 = vst.msk [vmem:[#allocation2 + $0x40] sm:$0xff] %vm1630, 0.0
      %1640 = vst.msk [vmem:[#allocation2 + $0x48] sm:$0xff] %vm1630, 0.0
      %1641 = vst.msk [vmem:[#allocation2 + $0x50] sm:$0xff] %vm1630, 0.0
      %1642 = vst.msk [vmem:[#allocation2 + $0x58] sm:$0xff] %vm1630, 0.0
      %1643 = vst.msk [vmem:[#allocation2 + $0x60] sm:$0xff] %vm1630, 0.0
      %1644 = vst.msk [vmem:[#allocation2 + $0x68] sm:$0xff] %vm1630, 0.0
      %1645 = vst.msk [vmem:[#allocation2 + $0x70] sm:$0xff] %vm1630, 0.0
      %1646 = vst.msk [vmem:[#allocation2 + $0x78] sm:$0xff] %vm1630, 0.0
      %1647 = vst.msk [vmem:[#allocation2 + $0x80] sm:$0xff] %vm1630, 0.0
      %1648 = vst.msk [vmem:[#allocation2 + $0x88] sm:$0xff] %vm1630, 0.0
      %1649 = vst.msk [vmem:[#allocation2 + $0x90] sm:$0xff] %vm1630, 0.0
      %1650 = vst.msk [vmem:[#allocation2 + $0x98] sm:$0xff] %vm1630, 0.0
      %1651 = vst.msk [vmem:[#allocation2 + $0xa0] sm:$0xff] %vm1630, 0.0
      %1652 = vst.msk [vmem:[#allocation2 + $0xa8] sm:$0xff] %vm1630, 0.0
      %1653 = vst.msk [vmem:[#allocation2 + $0xb0] sm:$0xff] %vm1630, 0.0
      %1654 = vst.msk [vmem:[#allocation2 + $0xb8] sm:$0xff] %vm1630, 0.0
      %1655 = vst.msk [vmem:[#allocation2 + $0xc0] sm:$0xff] %vm1630, 0.0
      %1656 = vst.msk [vmem:[#allocation2 + $0xc8] sm:$0xff] %vm1630, 0.0
      %1657 = vst.msk [vmem:[#allocation2 + $0xd0] sm:$0xff] %vm1630, 0.0
      %1658 = vst.msk [vmem:[#allocation2 + $0xd8] sm:$0xff] %vm1630, 0.0
      %1659 = vst.msk [vmem:[#allocation2 + $0xe0] sm:$0xff] %vm1630, 0.0
      %1660 = vst.msk [vmem:[#allocation2 + $0xe8] sm:$0xff] %vm1630, 0.0
      %1661 = vst.msk [vmem:[#allocation2 + $0xf0] sm:$0xff] %vm1630, 0.0
      %1662 = vst.msk [vmem:[#allocation2 + $0xf8] sm:$0xff] %vm1630, 0.0
      %1663 = vst.msk [vmem:[#allocation2 + $0x100] sm:$0xff] %vm1630, 0.0
      %1664 = vst.msk [vmem:[#allocation2 + $0x108] sm:$0xff] %vm1630, 0.0
      %1665 = vst.msk [vmem:[#allocation2 + $0x110] sm:$0xff] %vm1630, 0.0
      %1666 = vst.msk [vmem:[#allocation2 + $0x118] sm:$0xff] %vm1630, 0.0
      %1667 = vst.msk [vmem:[#allocation2] sm:$0xff] %vm1630, %v1598
      %1668 = vst.msk [vmem:[#allocation2 + $0x8] sm:$0xff] %vm1630, %v1599
      %1669 = vst.msk [vmem:[#allocation2 + $0x10] sm:$0xff] %vm1630, %v1600
      %1670 = vst.msk [vmem:[#allocation2 + $0x18] sm:$0xff] %vm1630, %v1601
      %1671 = vst.msk [vmem:[#allocation2 + $0x20] sm:$0xff] %vm1630, %v1602
      %1672 = vst.msk [vmem:[#allocation2 + $0x28] sm:$0xff] %vm1630, %v1603
      %1673 = vst.msk [vmem:[#allocation2 + $0x30] sm:$0xff] %vm1630, %v1604
      %1674 = vst.msk [vmem:[#allocation2 + $0x38] sm:$0xff] %vm1630, %v1605
      %s1675 = scalar_lea.vmem [#allocation2], 72
      %1676 = vst.msk [vmem:[%s1675] sm:$0xff] %vm1630, %v1606
      %1677 = vst.msk [vmem:[%s1675 + $0x8] sm:$0xff] %vm1630, %v1607
      %1678 = vst.msk [vmem:[%s1675 + $0x10] sm:$0xff] %vm1630, %v1608
      %1679 = vst.msk [vmem:[%s1675 + $0x18] sm:$0xff] %vm1630, %v1609
      %1680 = vst.msk [vmem:[%s1675 + $0x20] sm:$0xff] %vm1630, %v1610
      %1681 = vst.msk [vmem:[%s1675 + $0x28] sm:$0xff] %vm1630, %v1611
      %1682 = vst.msk [vmem:[%s1675 + $0x30] sm:$0xff] %vm1630, %v1612
      %1683 = vst.msk [vmem:[%s1675 + $0x38] sm:$0xff] %vm1630, %v1613
      %s1684 = scalar_lea.vmem [#allocation2], 144
      %1685 = vst.msk [vmem:[%s1684] sm:$0xff] %vm1630, %v1614
      %1686 = vst.msk [vmem:[%s1684 + $0x8] sm:$0xff] %vm1630, %v1615
      %1687 = vst.msk [vmem:[%s1684 + $0x10] sm:$0xff] %vm1630, %v1616
      %1688 = vst.msk [vmem:[%s1684 + $0x18] sm:$0xff] %vm1630, %v1617
      %1689 = vst.msk [vmem:[%s1684 + $0x20] sm:$0xff] %vm1630, %v1618
      %1690 = vst.msk [vmem:[%s1684 + $0x28] sm:$0xff] %vm1630, %v1619
      %1691 = vst.msk [vmem:[%s1684 + $0x30] sm:$0xff] %vm1630, %v1620
      %1692 = vst.msk [vmem:[%s1684 + $0x38] sm:$0xff] %vm1630, %v1621
      %s1693 = scalar_lea.vmem [#allocation2], 216
      %1694 = vst.msk [vmem:[%s1693] sm:$0xff] %vm1630, %v1622
      %1695 = vst.msk [vmem:[%s1693 + $0x8] sm:$0xff] %vm1630, %v1623
      %1696 = vst.msk [vmem:[%s1693 + $0x10] sm:$0xff] %vm1630, %v1624
      %1697 = vst.msk [vmem:[%s1693 + $0x18] sm:$0xff] %vm1630, %v1625
      %1698 = vst.msk [vmem:[%s1693 + $0x20] sm:$0xff] %vm1630, %v1626
      %1699 = vst.msk [vmem:[%s1693 + $0x28] sm:$0xff] %vm1630, %v1627
      %1700 = vst.msk [vmem:[%s1693 + $0x30] sm:$0xff] %vm1630, %v1628
      %1701 = vst.msk [vmem:[%s1693 + $0x38] sm:$0xff] %vm1630, %v1629
      %v1702 = vld [vmem:[#allocation2] sm:$0xff]
      %v1703 = vld [vmem:[#allocation2 + $0x8] sm:$0xff]
      %v1704 = vld [vmem:[#allocation2 + $0x10] sm:$0xff]
      %v1705 = vld [vmem:[#allocation2 + $0x18] sm:$0xff]
      %v1706 = vld [vmem:[#allocation2 + $0x20] sm:$0xff]
      %v1707 = vld [vmem:[#allocation2 + $0x28] sm:$0xff]
      %v1708 = vld [vmem:[#allocation2 + $0x30] sm:$0xff]
      %1709 = vst.msk [vmem:[#allocation3] sm:$0xff] %vm1630, %v1702
      %1710 = vst.msk [vmem:[#allocation3 + $0x10] sm:$0xff] %vm1630, %v1703
      %1711 = vst.msk [vmem:[#allocation3 + $0x20] sm:$0xff] %vm1630, %v1704
      %1712 = vst.msk [vmem:[#allocation3 + $0x30] sm:$0xff] %vm1630, %v1705
      %1713 = vst.msk [vmem:[#allocation3 + $0x40] sm:$0xff] %vm1630, %v1706
      %1714 = vst.msk [vmem:[#allocation3 + $0x50] sm:$0xff] %vm1630, %v1707
      %1715 = vst.msk [vmem:[#allocation3 + $0x60] sm:$0xff] %vm1630, %v1708
      %v1716 = vld [vmem:[%s1675] sm:$0xff]
      %v1717 = vld [vmem:[%s1675 + $0x8] sm:$0xff]
      %v1718 = vld [vmem:[%s1675 + $0x10] sm:$0xff]
      %v1719 = vld [vmem:[%s1675 + $0x18] sm:$0xff]
      %v1720 = vld [vmem:[%s1675 + $0x20] sm:$0xff]
      %v1721 = vld [vmem:[%s1675 + $0x28] sm:$0xff]
      %v1722 = vld [vmem:[%s1675 + $0x30] sm:$0xff]
      %1730 = vrot.lane.b32.xlu0 %v1716, 16
      %v1731 = vpop.permute.xlu0 %1730
      %1732 = vrot.lane.b32.xlu0 %v1717, 16
      %v1733 = vpop.permute.xlu0 %1732
      %1734 = vrot.lane.b32.xlu0 %v1718, 16
      %v1735 = vpop.permute.xlu0 %1734
      %1736 = vrot.lane.b32.xlu0 %v1719, 16
      %v1737 = vpop.permute.xlu0 %1736
      %1738 = vrot.lane.b32.xlu0 %v1720, 16
      %v1739 = vpop.permute.xlu0 %1738
      %1740 = vrot.lane.b32.xlu0 %v1721, 16
      %v1741 = vpop.permute.xlu0 %1740
      %1742 = vrot.lane.b32.xlu0 %v1722, 16
      %v1743 = vpop.permute.xlu0 %1742
      %vm1751 = vcmask 261248
      %1752 = vst.msk [vmem:[#allocation3] sm:$0xff] %vm1751, %v1731
      %1753 = vst.msk [vmem:[#allocation3 + $0x10] sm:$0xff] %vm1751, %v1733
      %1754 = vst.msk [vmem:[#allocation3 + $0x20] sm:$0xff] %vm1751, %v1735
      %1755 = vst.msk [vmem:[#allocation3 + $0x30] sm:$0xff] %vm1751, %v1737
      %1756 = vst.msk [vmem:[#allocation3 + $0x40] sm:$0xff] %vm1751, %v1739
      %1757 = vst.msk [vmem:[#allocation3 + $0x50] sm:$0xff] %vm1751, %v1741
      %1758 = vst.msk [vmem:[#allocation3 + $0x60] sm:$0xff] %vm1751, %v1743
      %v1759 = vld [vmem:[#allocation2 + $0x1] sm:$0xff]
      %v1760 = vld [vmem:[#allocation2 + $0x9] sm:$0xff]
      %v1761 = vld [vmem:[#allocation2 + $0x11] sm:$0xff]
      %v1762 = vld [vmem:[#allocation2 + $0x19] sm:$0xff]
      %v1763 = vld [vmem:[#allocation2 + $0x21] sm:$0xff]
      %v1764 = vld [vmem:[#allocation2 + $0x29] sm:$0xff]
      %v1765 = vld [vmem:[#allocation2 + $0x31] sm:$0xff]
      %1773 = vrot.lane.b32.xlu0 %v1759, 32
      %v1774 = vpop.permute.xlu0 %1773
      %1775 = vrot.lane.b32.xlu0 %v1760, 32
      %v1776 = vpop.permute.xlu0 %1775
      %1777 = vrot.lane.b32.xlu0 %v1761, 32
      %v1778 = vpop.permute.xlu0 %1777
      %1779 = vrot.lane.b32.xlu0 %v1762, 32
      %v1780 = vpop.permute.xlu0 %1779
      %1781 = vrot.lane.b32.xlu0 %v1763, 32
      %v1782 = vpop.permute.xlu0 %1781
      %1783 = vrot.lane.b32.xlu0 %v1764, 32
      %v1784 = vpop.permute.xlu0 %1783
      %1785 = vrot.lane.b32.xlu0 %v1765, 32
      %v1786 = vpop.permute.xlu0 %1785
      %vm1794 = vcmask 392448
      %1795 = vst.msk [vmem:[#allocation3] sm:$0xff] %vm1794, %v1774
      %1796 = vst.msk [vmem:[#allocation3 + $0x10] sm:$0xff] %vm1794, %v1776
      %1797 = vst.msk [vmem:[#allocation3 + $0x20] sm:$0xff] %vm1794, %v1778
      %1798 = vst.msk [vmem:[#allocation3 + $0x30] sm:$0xff] %vm1794, %v1780
      %1799 = vst.msk [vmem:[#allocation3 + $0x40] sm:$0xff] %vm1794, %v1782
      %1800 = vst.msk [vmem:[#allocation3 + $0x50] sm:$0xff] %vm1794, %v1784
      %1801 = vst.msk [vmem:[#allocation3 + $0x60] sm:$0xff] %vm1794, %v1786
      %v1802 = vld [vmem:[%s1684] sm:$0xff]
      %v1803 = vld [vmem:[%s1684 + $0x8] sm:$0xff]
      %v1804 = vld [vmem:[%s1684 + $0x10] sm:$0xff]
      %v1805 = vld [vmem:[%s1684 + $0x18] sm:$0xff]
      %v1806 = vld [vmem:[%s1684 + $0x20] sm:$0xff]
      %v1807 = vld [vmem:[%s1684 + $0x28] sm:$0xff]
      %v1808 = vld [vmem:[%s1684 + $0x30] sm:$0xff]
      %1816 = vrot.lane.b32.xlu0 %v1802, 48
      %v1817 = vpop.permute.xlu0 %1816
      %1818 = vrot.lane.b32.xlu0 %v1803, 48
      %v1819 = vpop.permute.xlu0 %1818
      %1820 = vrot.lane.b32.xlu0 %v1804, 48
      %v1821 = vpop.permute.xlu0 %1820
      %1822 = vrot.lane.b32.xlu0 %v1805, 48
      %v1823 = vpop.permute.xlu0 %1822
      %1824 = vrot.lane.b32.xlu0 %v1806, 48
      %v1825 = vpop.permute.xlu0 %1824
      %1826 = vrot.lane.b32.xlu0 %v1807, 48
      %v1827 = vpop.permute.xlu0 %1826
      %1828 = vrot.lane.b32.xlu0 %v1808, 48
      %v1829 = vpop.permute.xlu0 %1828
      %vm1837 = vcmask 523648
      %1838 = vst.msk [vmem:[#allocation3] sm:$0xff] %vm1837, %v1817
      %1839 = vst.msk [vmem:[#allocation3 + $0x10] sm:$0xff] %vm1837, %v1819
      %1840 = vst.msk [vmem:[#allocation3 + $0x20] sm:$0xff] %vm1837, %v1821
      %1841 = vst.msk [vmem:[#allocation3 + $0x30] sm:$0xff] %vm1837, %v1823
      %1842 = vst.msk [vmem:[#allocation3 + $0x40] sm:$0xff] %vm1837, %v1825
      %1843 = vst.msk [vmem:[#allocation3 + $0x50] sm:$0xff] %vm1837, %v1827
      %1844 = vst.msk [vmem:[#allocation3 + $0x60] sm:$0xff] %vm1837, %v1829
      %v1845 = vld [vmem:[%s1693] sm:$0xff]
      %v1846 = vld [vmem:[%s1693 + $0x8] sm:$0xff]
      %v1847 = vld [vmem:[%s1693 + $0x10] sm:$0xff]
      %v1848 = vld [vmem:[%s1693 + $0x18] sm:$0xff]
      %v1849 = vld [vmem:[%s1693 + $0x20] sm:$0xff]
      %v1850 = vld [vmem:[%s1693 + $0x28] sm:$0xff]
      %v1851 = vld [vmem:[%s1693 + $0x30] sm:$0xff]
      %1859 = vrot.lane.b32.xlu0 %v1845, 64
      %v1860 = vpop.permute.xlu0 %1859
      %1861 = vrot.lane.b32.xlu0 %v1846, 64
      %v1862 = vpop.permute.xlu0 %1861
      %1863 = vrot.lane.b32.xlu0 %v1847, 64
      %v1864 = vpop.permute.xlu0 %1863
      %1865 = vrot.lane.b32.xlu0 %v1848, 64
      %v1866 = vpop.permute.xlu0 %1865
      %1867 = vrot.lane.b32.xlu0 %v1849, 64
      %v1868 = vpop.permute.xlu0 %1867
      %1869 = vrot.lane.b32.xlu0 %v1850, 64
      %v1870 = vpop.permute.xlu0 %1869
      %1871 = vrot.lane.b32.xlu0 %v1851, 64
      %v1872 = vpop.permute.xlu0 %1871
      %vm1880 = vcmask 654848
      %1881 = vst.msk [vmem:[#allocation3] sm:$0xff] %vm1880, %v1860
      %1882 = vst.msk [vmem:[#allocation3 + $0x10] sm:$0xff] %vm1880, %v1862
      %1883 = vst.msk [vmem:[#allocation3 + $0x20] sm:$0xff] %vm1880, %v1864
      %1884 = vst.msk [vmem:[#allocation3 + $0x30] sm:$0xff] %vm1880, %v1866
      %1885 = vst.msk [vmem:[#allocation3 + $0x40] sm:$0xff] %vm1880, %v1868
      %1886 = vst.msk [vmem:[#allocation3 + $0x50] sm:$0xff] %vm1880, %v1870
      %1887 = vst.msk [vmem:[#allocation3 + $0x60] sm:$0xff] %vm1880, %v1872
      %v1888 = vld [vmem:[%s1684 + $0x1] sm:$0xff]
      %v1889 = vld [vmem:[%s1684 + $0x9] sm:$0xff]
      %v1890 = vld [vmem:[%s1684 + $0x11] sm:$0xff]
      %v1891 = vld [vmem:[%s1684 + $0x19] sm:$0xff]
      %v1892 = vld [vmem:[%s1684 + $0x21] sm:$0xff]
      %v1893 = vld [vmem:[%s1684 + $0x29] sm:$0xff]
      %v1894 = vld [vmem:[%s1684 + $0x31] sm:$0xff]
      %1902 = vrot.lane.b32.xlu0 %v1888, 80
      %v1903 = vpop.permute.xlu0 %1902
      %1904 = vrot.lane.b32.xlu0 %v1889, 80
      %v1905 = vpop.permute.xlu0 %1904
      %1906 = vrot.lane.b32.xlu0 %v1890, 80
      %v1907 = vpop.permute.xlu0 %1906
      %1908 = vrot.lane.b32.xlu0 %v1891, 80
      %v1909 = vpop.permute.xlu0 %1908
      %1910 = vrot.lane.b32.xlu0 %v1892, 80
      %v1911 = vpop.permute.xlu0 %1910
      %1912 = vrot.lane.b32.xlu0 %v1893, 80
      %v1913 = vpop.permute.xlu0 %1912
      %1914 = vrot.lane.b32.xlu0 %v1894, 80
      %v1915 = vpop.permute.xlu0 %1914
      %vm1923 = vcmask 786048
      %1924 = vst.msk [vmem:[#allocation3] sm:$0xff] %vm1923, %v1903
      %1925 = vst.msk [vmem:[#allocation3 + $0x10] sm:$0xff] %vm1923, %v1905
      %1926 = vst.msk [vmem:[#allocation3 + $0x20] sm:$0xff] %vm1923, %v1907
      %1927 = vst.msk [vmem:[#allocation3 + $0x30] sm:$0xff] %vm1923, %v1909
      %1928 = vst.msk [vmem:[#allocation3 + $0x40] sm:$0xff] %vm1923, %v1911
      %1929 = vst.msk [vmem:[#allocation3 + $0x50] sm:$0xff] %vm1923, %v1913
      %1930 = vst.msk [vmem:[#allocation3 + $0x60] sm:$0xff] %vm1923, %v1915
      %v1931 = vld [vmem:[#allocation2 + $0x8] sm:$0xff]
      %v1932 = vld [vmem:[#allocation2 + $0x10] sm:$0xff]
      %v1933 = vld [vmem:[#allocation2 + $0x18] sm:$0xff]
      %v1934 = vld [vmem:[#allocation2 + $0x20] sm:$0xff]
      %v1935 = vld [vmem:[#allocation2 + $0x28] sm:$0xff]
      %v1936 = vld [vmem:[#allocation2 + $0x30] sm:$0xff]
      %v1937 = vld [vmem:[#allocation2 + $0x38] sm:$0xff]
      %1945 = vrot.lane.b32.xlu0 %v1931, 96
      %v1946 = vpop.permute.xlu0 %1945
      %1947 = vrot.lane.b32.xlu0 %v1932, 96
      %v1948 = vpop.permute.xlu0 %1947
      %1949 = vrot.lane.b32.xlu0 %v1933, 96
      %v1950 = vpop.permute.xlu0 %1949
      %1951 = vrot.lane.b32.xlu0 %v1934, 96
      %v1952 = vpop.permute.xlu0 %1951
      %1953 = vrot.lane.b32.xlu0 %v1935, 96
      %v1954 = vpop.permute.xlu0 %1953
      %1955 = vrot.lane.b32.xlu0 %v1936, 96
      %v1956 = vpop.permute.xlu0 %1955
      %1957 = vrot.lane.b32.xlu0 %v1937, 96
      %v1958 = vpop.permute.xlu0 %1957
      %vm1966 = vcmask 917248
      %1967 = vst.msk [vmem:[#allocation3] sm:$0xff] %vm1966, %v1946
      %1968 = vst.msk [vmem:[#allocation3 + $0x10] sm:$0xff] %vm1966, %v1948
      %1969 = vst.msk [vmem:[#allocation3 + $0x20] sm:$0xff] %vm1966, %v1950
      %1970 = vst.msk [vmem:[#allocation3 + $0x30] sm:$0xff] %vm1966, %v1952
      %1971 = vst.msk [vmem:[#allocation3 + $0x40] sm:$0xff] %vm1966, %v1954
      %1972 = vst.msk [vmem:[#allocation3 + $0x50] sm:$0xff] %vm1966, %v1956
      %1973 = vst.msk [vmem:[#allocation3 + $0x60] sm:$0xff] %vm1966, %v1958
      %v1974 = vld [vmem:[%s1675 + $0x8] sm:$0xff]
      %v1975 = vld [vmem:[%s1675 + $0x10] sm:$0xff]
      %v1976 = vld [vmem:[%s1675 + $0x18] sm:$0xff]
      %v1977 = vld [vmem:[%s1675 + $0x20] sm:$0xff]
      %v1978 = vld [vmem:[%s1675 + $0x28] sm:$0xff]
      %v1979 = vld [vmem:[%s1675 + $0x30] sm:$0xff]
      %v1980 = vld [vmem:[%s1675 + $0x38] sm:$0xff]
      %1988 = vrot.lane.b32.xlu0 %v1974, 112
      %v1989 = vpop.permute.xlu0 %1988
      %1990 = vrot.lane.b32.xlu0 %v1975, 112
      %v1991 = vpop.permute.xlu0 %1990
      %1992 = vrot.lane.b32.xlu0 %v1976, 112
      %v1993 = vpop.permute.xlu0 %1992
      %1994 = vrot.lane.b32.xlu0 %v1977, 112
      %v1995 = vpop.permute.xlu0 %1994
      %1996 = vrot.lane.b32.xlu0 %v1978, 112
      %v1997 = vpop.permute.xlu0 %1996
      %1998 = vrot.lane.b32.xlu0 %v1979, 112
      %v1999 = vpop.permute.xlu0 %1998
      %2000 = vrot.lane.b32.xlu0 %v1980, 112
      %v2001 = vpop.permute.xlu0 %2000
      %vm2009 = vcmask 1048448
      %2010 = vst.msk [vmem:[#allocation3] sm:$0xff] %vm2009, %v1989
      %2011 = vst.msk [vmem:[#allocation3 + $0x10] sm:$0xff] %vm2009, %v1991
      %2012 = vst.msk [vmem:[#allocation3 + $0x20] sm:$0xff] %vm2009, %v1993
      %2013 = vst.msk [vmem:[#allocation3 + $0x30] sm:$0xff] %vm2009, %v1995
      %2014 = vst.msk [vmem:[#allocation3 + $0x40] sm:$0xff] %vm2009, %v1997
      %2015 = vst.msk [vmem:[#allocation3 + $0x50] sm:$0xff] %vm2009, %v1999
      %2016 = vst.msk [vmem:[#allocation3 + $0x60] sm:$0xff] %vm2009, %v2001
      %v2017 = vld [vmem:[#allocation2 + $0x9] sm:$0xff]
      %v2018 = vld [vmem:[#allocation2 + $0x11] sm:$0xff]
      %v2019 = vld [vmem:[#allocation2 + $0x19] sm:$0xff]
      %v2020 = vld [vmem:[#allocation2 + $0x21] sm:$0xff]
      %v2021 = vld [vmem:[#allocation2 + $0x29] sm:$0xff]
      %v2022 = vld [vmem:[#allocation2 + $0x31] sm:$0xff]
      %v2023 = vld [vmem:[#allocation2 + $0x39] sm:$0xff]
      %2024 = vst.msk [vmem:[#allocation3 + $0x8] sm:$0xff] %vm1630, %v2017
      %2025 = vst.msk [vmem:[#allocation3 + $0x18] sm:$0xff] %vm1630, %v2018
      %2026 = vst.msk [vmem:[#allocation3 + $0x28] sm:$0xff] %vm1630, %v2019
      %2027 = vst.msk [vmem:[#allocation3 + $0x38] sm:$0xff] %vm1630, %v2020
      %2028 = vst.msk [vmem:[#allocation3 + $0x48] sm:$0xff] %vm1630, %v2021
      %2029 = vst.msk [vmem:[#allocation3 + $0x58] sm:$0xff] %vm1630, %v2022
      %2030 = vst.msk [vmem:[#allocation3 + $0x68] sm:$0xff] %vm1630, %v2023
      %v2031 = vld [vmem:[%s1675] sm:$0xff]
      %v2032 = vld [vmem:[%s1675 + $0x8] sm:$0xff]
      %v2033 = vld [vmem:[%s1675 + $0x10] sm:$0xff]
      %v2034 = vld [vmem:[%s1675 + $0x18] sm:$0xff]
      %v2035 = vld [vmem:[%s1675 + $0x20] sm:$0xff]
      %v2036 = vld [vmem:[%s1675 + $0x28] sm:$0xff]
      %v2037 = vld [vmem:[%s1675 + $0x30] sm:$0xff]
      %2038 = vst.msk [vmem:[#allocation3 + $0x70] sm:$0xff] %vm1630, %v2031
      %2039 = vst.msk [vmem:[#allocation3 + $0x80] sm:$0xff] %vm1630, %v2032
      %2040 = vst.msk [vmem:[#allocation3 + $0x90] sm:$0xff] %vm1630, %v2033
      %2041 = vst.msk [vmem:[#allocation3 + $0xa0] sm:$0xff] %vm1630, %v2034
      %2042 = vst.msk [vmem:[#allocation3 + $0xb0] sm:$0xff] %vm1630, %v2035
      %2043 = vst.msk [vmem:[#allocation3 + $0xc0] sm:$0xff] %vm1630, %v2036
      %2044 = vst.msk [vmem:[#allocation3 + $0xd0] sm:$0xff] %vm1630, %v2037
      %v2045 = vld [vmem:[#allocation2 + $0x1] sm:$0xff]
      %v2046 = vld [vmem:[#allocation2 + $0x9] sm:$0xff]
      %v2047 = vld [vmem:[#allocation2 + $0x11] sm:$0xff]
      %v2048 = vld [vmem:[#allocation2 + $0x19] sm:$0xff]
      %v2049 = vld [vmem:[#allocation2 + $0x21] sm:$0xff]
      %v2050 = vld [vmem:[#allocation2 + $0x29] sm:$0xff]
      %v2051 = vld [vmem:[#allocation2 + $0x31] sm:$0xff]
      %2059 = vrot.lane.b32.xlu0 %v2045, 16
      %v2060 = vpop.permute.xlu0 %2059
      %2061 = vrot.lane.b32.xlu0 %v2046, 16
      %v2062 = vpop.permute.xlu0 %2061
      %2063 = vrot.lane.b32.xlu0 %v2047, 16
      %v2064 = vpop.permute.xlu0 %2063
      %2065 = vrot.lane.b32.xlu0 %v2048, 16
      %v2066 = vpop.permute.xlu0 %2065
      %2067 = vrot.lane.b32.xlu0 %v2049, 16
      %v2068 = vpop.permute.xlu0 %2067
      %2069 = vrot.lane.b32.xlu0 %v2050, 16
      %v2070 = vpop.permute.xlu0 %2069
      %2071 = vrot.lane.b32.xlu0 %v2051, 16
      %v2072 = vpop.permute.xlu0 %2071
      %2080 = vst.msk [vmem:[#allocation3 + $0x70] sm:$0xff] %vm1751, %v2060
      %2081 = vst.msk [vmem:[#allocation3 + $0x80] sm:$0xff] %vm1751, %v2062
      %2082 = vst.msk [vmem:[#allocation3 + $0x90] sm:$0xff] %vm1751, %v2064
      %2083 = vst.msk [vmem:[#allocation3 + $0xa0] sm:$0xff] %vm1751, %v2066
      %2084 = vst.msk [vmem:[#allocation3 + $0xb0] sm:$0xff] %vm1751, %v2068
      %2085 = vst.msk [vmem:[#allocation3 + $0xc0] sm:$0xff] %vm1751, %v2070
      %2086 = vst.msk [vmem:[#allocation3 + $0xd0] sm:$0xff] %vm1751, %v2072
      %v2087 = vld [vmem:[%s1675 + $0x1] sm:$0xff]
      %v2088 = vld [vmem:[%s1675 + $0x9] sm:$0xff]
      %v2089 = vld [vmem:[%s1675 + $0x11] sm:$0xff]
      %v2090 = vld [vmem:[%s1675 + $0x19] sm:$0xff]
      %v2091 = vld [vmem:[%s1675 + $0x21] sm:$0xff]
      %v2092 = vld [vmem:[%s1675 + $0x29] sm:$0xff]
      %v2093 = vld [vmem:[%s1675 + $0x31] sm:$0xff]
      %2101 = vrot.lane.b32.xlu0 %v2087, 32
      %v2102 = vpop.permute.xlu0 %2101
      %2103 = vrot.lane.b32.xlu0 %v2088, 32
      %v2104 = vpop.permute.xlu0 %2103
      %2105 = vrot.lane.b32.xlu0 %v2089, 32
      %v2106 = vpop.permute.xlu0 %2105
      %2107 = vrot.lane.b32.xlu0 %v2090, 32
      %v2108 = vpop.permute.xlu0 %2107
      %2109 = vrot.lane.b32.xlu0 %v2091, 32
      %v2110 = vpop.permute.xlu0 %2109
      %2111 = vrot.lane.b32.xlu0 %v2092, 32
      %v2112 = vpop.permute.xlu0 %2111
      %2113 = vrot.lane.b32.xlu0 %v2093, 32
      %v2114 = vpop.permute.xlu0 %2113
      %2122 = vst.msk [vmem:[#allocation3 + $0x70] sm:$0xff] %vm1794, %v2102
      %2123 = vst.msk [vmem:[#allocation3 + $0x80] sm:$0xff] %vm1794, %v2104
      %2124 = vst.msk [vmem:[#allocation3 + $0x90] sm:$0xff] %vm1794, %v2106
      %2125 = vst.msk [vmem:[#allocation3 + $0xa0] sm:$0xff] %vm1794, %v2108
      %2126 = vst.msk [vmem:[#allocation3 + $0xb0] sm:$0xff] %vm1794, %v2110
      %2127 = vst.msk [vmem:[#allocation3 + $0xc0] sm:$0xff] %vm1794, %v2112
      %2128 = vst.msk [vmem:[#allocation3 + $0xd0] sm:$0xff] %vm1794, %v2114
      %v2129 = vld [vmem:[%s1693] sm:$0xff]
      %v2130 = vld [vmem:[%s1693 + $0x8] sm:$0xff]
      %v2131 = vld [vmem:[%s1693 + $0x10] sm:$0xff]
      %v2132 = vld [vmem:[%s1693 + $0x18] sm:$0xff]
      %v2133 = vld [vmem:[%s1693 + $0x20] sm:$0xff]
      %v2134 = vld [vmem:[%s1693 + $0x28] sm:$0xff]
      %v2135 = vld [vmem:[%s1693 + $0x30] sm:$0xff]
      %2143 = vrot.lane.b32.xlu0 %v2129, 48
      %v2144 = vpop.permute.xlu0 %2143
      %2145 = vrot.lane.b32.xlu0 %v2130, 48
      %v2146 = vpop.permute.xlu0 %2145
      %2147 = vrot.lane.b32.xlu0 %v2131, 48
      %v2148 = vpop.permute.xlu0 %2147
      %2149 = vrot.lane.b32.xlu0 %v2132, 48
      %v2150 = vpop.permute.xlu0 %2149
      %2151 = vrot.lane.b32.xlu0 %v2133, 48
      %v2152 = vpop.permute.xlu0 %2151
      %2153 = vrot.lane.b32.xlu0 %v2134, 48
      %v2154 = vpop.permute.xlu0 %2153
      %2155 = vrot.lane.b32.xlu0 %v2135, 48
      %v2156 = vpop.permute.xlu0 %2155
      %2164 = vst.msk [vmem:[#allocation3 + $0x70] sm:$0xff] %vm1837, %v2144
      %2165 = vst.msk [vmem:[#allocation3 + $0x80] sm:$0xff] %vm1837, %v2146
      %2166 = vst.msk [vmem:[#allocation3 + $0x90] sm:$0xff] %vm1837, %v2148
      %2167 = vst.msk [vmem:[#allocation3 + $0xa0] sm:$0xff] %vm1837, %v2150
      %2168 = vst.msk [vmem:[#allocation3 + $0xb0] sm:$0xff] %vm1837, %v2152
      %2169 = vst.msk [vmem:[#allocation3 + $0xc0] sm:$0xff] %vm1837, %v2154
      %2170 = vst.msk [vmem:[#allocation3 + $0xd0] sm:$0xff] %vm1837, %v2156
      %v2171 = vld [vmem:[%s1684 + $0x1] sm:$0xff]
      %v2172 = vld [vmem:[%s1684 + $0x9] sm:$0xff]
      %v2173 = vld [vmem:[%s1684 + $0x11] sm:$0xff]
      %v2174 = vld [vmem:[%s1684 + $0x19] sm:$0xff]
      %v2175 = vld [vmem:[%s1684 + $0x21] sm:$0xff]
      %v2176 = vld [vmem:[%s1684 + $0x29] sm:$0xff]
      %v2177 = vld [vmem:[%s1684 + $0x31] sm:$0xff]
      %2185 = vrot.lane.b32.xlu0 %v2171, 64
      %v2186 = vpop.permute.xlu0 %2185
      %2187 = vrot.lane.b32.xlu0 %v2172, 64
      %v2188 = vpop.permute.xlu0 %2187
      %2189 = vrot.lane.b32.xlu0 %v2173, 64
      %v2190 = vpop.permute.xlu0 %2189
      %2191 = vrot.lane.b32.xlu0 %v2174, 64
      %v2192 = vpop.permute.xlu0 %2191
      %2193 = vrot.lane.b32.xlu0 %v2175, 64
      %v2194 = vpop.permute.xlu0 %2193
      %2195 = vrot.lane.b32.xlu0 %v2176, 64
      %v2196 = vpop.permute.xlu0 %2195
      %2197 = vrot.lane.b32.xlu0 %v2177, 64
      %v2198 = vpop.permute.xlu0 %2197
      %2206 = vst.msk [vmem:[#allocation3 + $0x70] sm:$0xff] %vm1880, %v2186
      %2207 = vst.msk [vmem:[#allocation3 + $0x80] sm:$0xff] %vm1880, %v2188
      %2208 = vst.msk [vmem:[#allocation3 + $0x90] sm:$0xff] %vm1880, %v2190
      %2209 = vst.msk [vmem:[#allocation3 + $0xa0] sm:$0xff] %vm1880, %v2192
      %2210 = vst.msk [vmem:[#allocation3 + $0xb0] sm:$0xff] %vm1880, %v2194
      %2211 = vst.msk [vmem:[#allocation3 + $0xc0] sm:$0xff] %vm1880, %v2196
      %2212 = vst.msk [vmem:[#allocation3 + $0xd0] sm:$0xff] %vm1880, %v2198
      %v2213 = vld [vmem:[%s1693 + $0x1] sm:$0xff]
      %v2214 = vld [vmem:[%s1693 + $0x9] sm:$0xff]
      %v2215 = vld [vmem:[%s1693 + $0x11] sm:$0xff]
      %v2216 = vld [vmem:[%s1693 + $0x19] sm:$0xff]
      %v2217 = vld [vmem:[%s1693 + $0x21] sm:$0xff]
      %v2218 = vld [vmem:[%s1693 + $0x29] sm:$0xff]
      %v2219 = vld [vmem:[%s1693 + $0x31] sm:$0xff]
      %2227 = vrot.lane.b32.xlu0 %v2213, 80
      %v2228 = vpop.permute.xlu0 %2227
      %2229 = vrot.lane.b32.xlu0 %v2214, 80
      %v2230 = vpop.permute.xlu0 %2229
      %2231 = vrot.lane.b32.xlu0 %v2215, 80
      %v2232 = vpop.permute.xlu0 %2231
      %2233 = vrot.lane.b32.xlu0 %v2216, 80
      %v2234 = vpop.permute.xlu0 %2233
      %2235 = vrot.lane.b32.xlu0 %v2217, 80
      %v2236 = vpop.permute.xlu0 %2235
      %2237 = vrot.lane.b32.xlu0 %v2218, 80
      %v2238 = vpop.permute.xlu0 %2237
      %2239 = vrot.lane.b32.xlu0 %v2219, 80
      %v2240 = vpop.permute.xlu0 %2239
      %2248 = vst.msk [vmem:[#allocation3 + $0x70] sm:$0xff] %vm1923, %v2228
      %2249 = vst.msk [vmem:[#allocation3 + $0x80] sm:$0xff] %vm1923, %v2230
      %2250 = vst.msk [vmem:[#allocation3 + $0x90] sm:$0xff] %vm1923, %v2232
      %2251 = vst.msk [vmem:[#allocation3 + $0xa0] sm:$0xff] %vm1923, %v2234
      %2252 = vst.msk [vmem:[#allocation3 + $0xb0] sm:$0xff] %vm1923, %v2236
      %2253 = vst.msk [vmem:[#allocation3 + $0xc0] sm:$0xff] %vm1923, %v2238
      %2254 = vst.msk [vmem:[#allocation3 + $0xd0] sm:$0xff] %vm1923, %v2240
      %v2255 = vld [vmem:[%s1675 + $0x8] sm:$0xff]
      %v2256 = vld [vmem:[%s1675 + $0x10] sm:$0xff]
      %v2257 = vld [vmem:[%s1675 + $0x18] sm:$0xff]
      %v2258 = vld [vmem:[%s1675 + $0x20] sm:$0xff]
      %v2259 = vld [vmem:[%s1675 + $0x28] sm:$0xff]
      %v2260 = vld [vmem:[%s1675 + $0x30] sm:$0xff]
      %v2261 = vld [vmem:[%s1675 + $0x38] sm:$0xff]
      %2269 = vrot.lane.b32.xlu0 %v2255, 96
      %v2270 = vpop.permute.xlu0 %2269
      %2271 = vrot.lane.b32.xlu0 %v2256, 96
      %v2272 = vpop.permute.xlu0 %2271
      %2273 = vrot.lane.b32.xlu0 %v2257, 96
      %v2274 = vpop.permute.xlu0 %2273
      %2275 = vrot.lane.b32.xlu0 %v2258, 96
      %v2276 = vpop.permute.xlu0 %2275
      %2277 = vrot.lane.b32.xlu0 %v2259, 96
      %v2278 = vpop.permute.xlu0 %2277
      %2279 = vrot.lane.b32.xlu0 %v2260, 96
      %v2280 = vpop.permute.xlu0 %2279
      %2281 = vrot.lane.b32.xlu0 %v2261, 96
      %v2282 = vpop.permute.xlu0 %2281
      %2290 = vst.msk [vmem:[#allocation3 + $0x70] sm:$0xff] %vm1966, %v2270
      %2291 = vst.msk [vmem:[#allocation3 + $0x80] sm:$0xff] %vm1966, %v2272
      %2292 = vst.msk [vmem:[#allocation3 + $0x90] sm:$0xff] %vm1966, %v2274
      %2293 = vst.msk [vmem:[#allocation3 + $0xa0] sm:$0xff] %vm1966, %v2276
      %2294 = vst.msk [vmem:[#allocation3 + $0xb0] sm:$0xff] %vm1966, %v2278
      %2295 = vst.msk [vmem:[#allocation3 + $0xc0] sm:$0xff] %vm1966, %v2280
      %2296 = vst.msk [vmem:[#allocation3 + $0xd0] sm:$0xff] %vm1966, %v2282
      %v2297 = vld [vmem:[#allocation2 + $0x9] sm:$0xff]
      %v2298 = vld [vmem:[#allocation2 + $0x11] sm:$0xff]
      %v2299 = vld [vmem:[#allocation2 + $0x19] sm:$0xff]
      %v2300 = vld [vmem:[#allocation2 + $0x21] sm:$0xff]
      %v2301 = vld [vmem:[#allocation2 + $0x29] sm:$0xff]
      %v2302 = vld [vmem:[#allocation2 + $0x31] sm:$0xff]
      %v2303 = vld [vmem:[#allocation2 + $0x39] sm:$0xff]
      %2311 = vrot.lane.b32.xlu0 %v2297, 112
      %v2312 = vpop.permute.xlu0 %2311
      %2313 = vrot.lane.b32.xlu0 %v2298, 112
      %v2314 = vpop.permute.xlu0 %2313
      %2315 = vrot.lane.b32.xlu0 %v2299, 112
      %v2316 = vpop.permute.xlu0 %2315
      %2317 = vrot.lane.b32.xlu0 %v2300, 112
      %v2318 = vpop.permute.xlu0 %2317
      %2319 = vrot.lane.b32.xlu0 %v2301, 112
      %v2320 = vpop.permute.xlu0 %2319
      %2321 = vrot.lane.b32.xlu0 %v2302, 112
      %v2322 = vpop.permute.xlu0 %2321
      %2323 = vrot.lane.b32.xlu0 %v2303, 112
      %v2324 = vpop.permute.xlu0 %2323
      %2332 = vst.msk [vmem:[#allocation3 + $0x70] sm:$0xff] %vm2009, %v2312
      %2333 = vst.msk [vmem:[#allocation3 + $0x80] sm:$0xff] %vm2009, %v2314
      %2334 = vst.msk [vmem:[#allocation3 + $0x90] sm:$0xff] %vm2009, %v2316
      %2335 = vst.msk [vmem:[#allocation3 + $0xa0] sm:$0xff] %vm2009, %v2318
      %2336 = vst.msk [vmem:[#allocation3 + $0xb0] sm:$0xff] %vm2009, %v2320
      %2337 = vst.msk [vmem:[#allocation3 + $0xc0] sm:$0xff] %vm2009, %v2322
      %2338 = vst.msk [vmem:[#allocation3 + $0xd0] sm:$0xff] %vm2009, %v2324
      %v2339 = vld [vmem:[%s1675 + $0x9] sm:$0xff]
      %v2340 = vld [vmem:[%s1675 + $0x11] sm:$0xff]
      %v2341 = vld [vmem:[%s1675 + $0x19] sm:$0xff]
      %v2342 = vld [vmem:[%s1675 + $0x21] sm:$0xff]
      %v2343 = vld [vmem:[%s1675 + $0x29] sm:$0xff]
      %v2344 = vld [vmem:[%s1675 + $0x31] sm:$0xff]
      %v2345 = vld [vmem:[%s1675 + $0x39] sm:$0xff]
      %2346 = vst.msk [vmem:[#allocation3 + $0x78] sm:$0xff] %vm1630, %v2339
      %2347 = vst.msk [vmem:[#allocation3 + $0x88] sm:$0xff] %vm1630, %v2340
      %2348 = vst.msk [vmem:[#allocation3 + $0x98] sm:$0xff] %vm1630, %v2341
      %2349 = vst.msk [vmem:[#allocation3 + $0xa8] sm:$0xff] %vm1630, %v2342
      %2350 = vst.msk [vmem:[#allocation3 + $0xb8] sm:$0xff] %vm1630, %v2343
      %2351 = vst.msk [vmem:[#allocation3 + $0xc8] sm:$0xff] %vm1630, %v2344
      %2352 = vst.msk [vmem:[#allocation3 + $0xd8] sm:$0xff] %vm1630, %v2345
      %v2353 = vld [vmem:[%s1684] sm:$0xff]
      %v2354 = vld [vmem:[%s1684 + $0x8] sm:$0xff]
      %v2355 = vld [vmem:[%s1684 + $0x10] sm:$0xff]
      %v2356 = vld [vmem:[%s1684 + $0x18] sm:$0xff]
      %v2357 = vld [vmem:[%s1684 + $0x20] sm:$0xff]
      %v2358 = vld [vmem:[%s1684 + $0x28] sm:$0xff]
      %v2359 = vld [vmem:[%s1684 + $0x30] sm:$0xff]
      %2360 = vst.msk [vmem:[#allocation3 + $0xe0] sm:$0xff] %vm1630, %v2353
      %2361 = vst.msk [vmem:[#allocation3 + $0xf0] sm:$0xff] %vm1630, %v2354
      %2362 = vst.msk [vmem:[#allocation3 + $0x100] sm:$0xff] %vm1630, %v2355
      %2363 = vst.msk [vmem:[#allocation3 + $0x110] sm:$0xff] %vm1630, %v2356
      %2364 = vst.msk [vmem:[#allocation3 + $0x120] sm:$0xff] %vm1630, %v2357
      %2365 = vst.msk [vmem:[#allocation3 + $0x130] sm:$0xff] %vm1630, %v2358
      %2366 = vst.msk [vmem:[#allocation3 + $0x140] sm:$0xff] %vm1630, %v2359
      %v2367 = vld [vmem:[%s1693] sm:$0xff]
      %v2368 = vld [vmem:[%s1693 + $0x8] sm:$0xff]
      %v2369 = vld [vmem:[%s1693 + $0x10] sm:$0xff]
      %v2370 = vld [vmem:[%s1693 + $0x18] sm:$0xff]
      %v2371 = vld [vmem:[%s1693 + $0x20] sm:$0xff]
      %v2372 = vld [vmem:[%s1693 + $0x28] sm:$0xff]
      %v2373 = vld [vmem:[%s1693 + $0x30] sm:$0xff]
      %2381 = vrot.lane.b32.xlu0 %v2367, 16
      %v2382 = vpop.permute.xlu0 %2381
      %2383 = vrot.lane.b32.xlu0 %v2368, 16
      %v2384 = vpop.permute.xlu0 %2383
      %2385 = vrot.lane.b32.xlu0 %v2369, 16
      %v2386 = vpop.permute.xlu0 %2385
      %2387 = vrot.lane.b32.xlu0 %v2370, 16
      %v2388 = vpop.permute.xlu0 %2387
      %2389 = vrot.lane.b32.xlu0 %v2371, 16
      %v2390 = vpop.permute.xlu0 %2389
      %2391 = vrot.lane.b32.xlu0 %v2372, 16
      %v2392 = vpop.permute.xlu0 %2391
      %2393 = vrot.lane.b32.xlu0 %v2373, 16
      %v2394 = vpop.permute.xlu0 %2393
      %2402 = vst.msk [vmem:[#allocation3 + $0xe0] sm:$0xff] %vm1751, %v2382
      %2403 = vst.msk [vmem:[#allocation3 + $0xf0] sm:$0xff] %vm1751, %v2384
      %2404 = vst.msk [vmem:[#allocation3 + $0x100] sm:$0xff] %vm1751, %v2386
      %2405 = vst.msk [vmem:[#allocation3 + $0x110] sm:$0xff] %vm1751, %v2388
      %2406 = vst.msk [vmem:[#allocation3 + $0x120] sm:$0xff] %vm1751, %v2390
      %2407 = vst.msk [vmem:[#allocation3 + $0x130] sm:$0xff] %vm1751, %v2392
      %2408 = vst.msk [vmem:[#allocation3 + $0x140] sm:$0xff] %vm1751, %v2394
      %v2409 = vld [vmem:[%s1684 + $0x1] sm:$0xff]
      %v2410 = vld [vmem:[%s1684 + $0x9] sm:$0xff]
      %v2411 = vld [vmem:[%s1684 + $0x11] sm:$0xff]
      %v2412 = vld [vmem:[%s1684 + $0x19] sm:$0xff]
      %v2413 = vld [vmem:[%s1684 + $0x21] sm:$0xff]
      %v2414 = vld [vmem:[%s1684 + $0x29] sm:$0xff]
      %v2415 = vld [vmem:[%s1684 + $0x31] sm:$0xff]
      %2423 = vrot.lane.b32.xlu0 %v2409, 32
      %v2424 = vpop.permute.xlu0 %2423
      %2425 = vrot.lane.b32.xlu0 %v2410, 32
      %v2426 = vpop.permute.xlu0 %2425
      %2427 = vrot.lane.b32.xlu0 %v2411, 32
      %v2428 = vpop.permute.xlu0 %2427
      %2429 = vrot.lane.b32.xlu0 %v2412, 32
      %v2430 = vpop.permute.xlu0 %2429
      %2431 = vrot.lane.b32.xlu0 %v2413, 32
      %v2432 = vpop.permute.xlu0 %2431
      %2433 = vrot.lane.b32.xlu0 %v2414, 32
      %v2434 = vpop.permute.xlu0 %2433
      %2435 = vrot.lane.b32.xlu0 %v2415, 32
      %v2436 = vpop.permute.xlu0 %2435
      %2444 = vst.msk [vmem:[#allocation3 + $0xe0] sm:$0xff] %vm1794, %v2424
      %2445 = vst.msk [vmem:[#allocation3 + $0xf0] sm:$0xff] %vm1794, %v2426
      %2446 = vst.msk [vmem:[#allocation3 + $0x100] sm:$0xff] %vm1794, %v2428
      %2447 = vst.msk [vmem:[#allocation3 + $0x110] sm:$0xff] %vm1794, %v2430
      %2448 = vst.msk [vmem:[#allocation3 + $0x120] sm:$0xff] %vm1794, %v2432
      %2449 = vst.msk [vmem:[#allocation3 + $0x130] sm:$0xff] %vm1794, %v2434
      %2450 = vst.msk [vmem:[#allocation3 + $0x140] sm:$0xff] %vm1794, %v2436
      %v2451 = vld [vmem:[#allocation2 + $0x8] sm:$0xff]
      %v2452 = vld [vmem:[#allocation2 + $0x10] sm:$0xff]
      %v2453 = vld [vmem:[#allocation2 + $0x18] sm:$0xff]
      %v2454 = vld [vmem:[#allocation2 + $0x20] sm:$0xff]
      %v2455 = vld [vmem:[#allocation2 + $0x28] sm:$0xff]
      %v2456 = vld [vmem:[#allocation2 + $0x30] sm:$0xff]
      %v2457 = vld [vmem:[#allocation2 + $0x38] sm:$0xff]
      %2465 = vrot.lane.b32.xlu0 %v2451, 48
      %v2466 = vpop.permute.xlu0 %2465
      %2467 = vrot.lane.b32.xlu0 %v2452, 48
      %v2468 = vpop.permute.xlu0 %2467
      %2469 = vrot.lane.b32.xlu0 %v2453, 48
      %v2470 = vpop.permute.xlu0 %2469
      %2471 = vrot.lane.b32.xlu0 %v2454, 48
      %v2472 = vpop.permute.xlu0 %2471
      %2473 = vrot.lane.b32.xlu0 %v2455, 48
      %v2474 = vpop.permute.xlu0 %2473
      %2475 = vrot.lane.b32.xlu0 %v2456, 48
      %v2476 = vpop.permute.xlu0 %2475
      %2477 = vrot.lane.b32.xlu0 %v2457, 48
      %v2478 = vpop.permute.xlu0 %2477
      %2486 = vst.msk [vmem:[#allocation3 + $0xe0] sm:$0xff] %vm1837, %v2466
      %2487 = vst.msk [vmem:[#allocation3 + $0xf0] sm:$0xff] %vm1837, %v2468
      %2488 = vst.msk [vmem:[#allocation3 + $0x100] sm:$0xff] %vm1837, %v2470
      %2489 = vst.msk [vmem:[#allocation3 + $0x110] sm:$0xff] %vm1837, %v2472
      %2490 = vst.msk [vmem:[#allocation3 + $0x120] sm:$0xff] %vm1837, %v2474
      %2491 = vst.msk [vmem:[#allocation3 + $0x130] sm:$0xff] %vm1837, %v2476
      %2492 = vst.msk [vmem:[#allocation3 + $0x140] sm:$0xff] %vm1837, %v2478
      %v2493 = vld [vmem:[%s1675 + $0x8] sm:$0xff]
      %v2494 = vld [vmem:[%s1675 + $0x10] sm:$0xff]
      %v2495 = vld [vmem:[%s1675 + $0x18] sm:$0xff]
      %v2496 = vld [vmem:[%s1675 + $0x20] sm:$0xff]
      %v2497 = vld [vmem:[%s1675 + $0x28] sm:$0xff]
      %v2498 = vld [vmem:[%s1675 + $0x30] sm:$0xff]
      %v2499 = vld [vmem:[%s1675 + $0x38] sm:$0xff]
      %2507 = vrot.lane.b32.xlu0 %v2493, 64
      %v2508 = vpop.permute.xlu0 %2507
      %2509 = vrot.lane.b32.xlu0 %v2494, 64
      %v2510 = vpop.permute.xlu0 %2509
      %2511 = vrot.lane.b32.xlu0 %v2495, 64
      %v2512 = vpop.permute.xlu0 %2511
      %2513 = vrot.lane.b32.xlu0 %v2496, 64
      %v2514 = vpop.permute.xlu0 %2513
      %2515 = vrot.lane.b32.xlu0 %v2497, 64
      %v2516 = vpop.permute.xlu0 %2515
      %2517 = vrot.lane.b32.xlu0 %v2498, 64
      %v2518 = vpop.permute.xlu0 %2517
      %2519 = vrot.lane.b32.xlu0 %v2499, 64
      %v2520 = vpop.permute.xlu0 %2519
      %2528 = vst.msk [vmem:[#allocation3 + $0xe0] sm:$0xff] %vm1880, %v2508
      %2529 = vst.msk [vmem:[#allocation3 + $0xf0] sm:$0xff] %vm1880, %v2510
      %2530 = vst.msk [vmem:[#allocation3 + $0x100] sm:$0xff] %vm1880, %v2512
      %2531 = vst.msk [vmem:[#allocation3 + $0x110] sm:$0xff] %vm1880, %v2514
      %2532 = vst.msk [vmem:[#allocation3 + $0x120] sm:$0xff] %vm1880, %v2516
      %2533 = vst.msk [vmem:[#allocation3 + $0x130] sm:$0xff] %vm1880, %v2518
      %2534 = vst.msk [vmem:[#allocation3 + $0x140] sm:$0xff] %vm1880, %v2520
      %v2535 = vld [vmem:[#allocation2 + $0x9] sm:$0xff]
      %v2536 = vld [vmem:[#allocation2 + $0x11] sm:$0xff]
      %v2537 = vld [vmem:[#allocation2 + $0x19] sm:$0xff]
      %v2538 = vld [vmem:[#allocation2 + $0x21] sm:$0xff]
      %v2539 = vld [vmem:[#allocation2 + $0x29] sm:$0xff]
      %v2540 = vld [vmem:[#allocation2 + $0x31] sm:$0xff]
      %v2541 = vld [vmem:[#allocation2 + $0x39] sm:$0xff]
      %2549 = vrot.lane.b32.xlu0 %v2535, 80
      %v2550 = vpop.permute.xlu0 %2549
      %2551 = vrot.lane.b32.xlu0 %v2536, 80
      %v2552 = vpop.permute.xlu0 %2551
      %2553 = vrot.lane.b32.xlu0 %v2537, 80
      %v2554 = vpop.permute.xlu0 %2553
      %2555 = vrot.lane.b32.xlu0 %v2538, 80
      %v2556 = vpop.permute.xlu0 %2555
      %2557 = vrot.lane.b32.xlu0 %v2539, 80
      %v2558 = vpop.permute.xlu0 %2557
      %2559 = vrot.lane.b32.xlu0 %v2540, 80
      %v2560 = vpop.permute.xlu0 %2559
      %2561 = vrot.lane.b32.xlu0 %v2541, 80
      %v2562 = vpop.permute.xlu0 %2561
      %2570 = vst.msk [vmem:[#allocation3 + $0xe0] sm:$0xff] %vm1923, %v2550
      %2571 = vst.msk [vmem:[#allocation3 + $0xf0] sm:$0xff] %vm1923, %v2552
      %2572 = vst.msk [vmem:[#allocation3 + $0x100] sm:$0xff] %vm1923, %v2554
      %2573 = vst.msk [vmem:[#allocation3 + $0x110] sm:$0xff] %vm1923, %v2556
      %2574 = vst.msk [vmem:[#allocation3 + $0x120] sm:$0xff] %vm1923, %v2558
      %2575 = vst.msk [vmem:[#allocation3 + $0x130] sm:$0xff] %vm1923, %v2560
      %2576 = vst.msk [vmem:[#allocation3 + $0x140] sm:$0xff] %vm1923, %v2562
      %v2577 = vld [vmem:[%s1684 + $0x8] sm:$0xff]
      %v2578 = vld [vmem:[%s1684 + $0x10] sm:$0xff]
      %v2579 = vld [vmem:[%s1684 + $0x18] sm:$0xff]
      %v2580 = vld [vmem:[%s1684 + $0x20] sm:$0xff]
      %v2581 = vld [vmem:[%s1684 + $0x28] sm:$0xff]
      %v2582 = vld [vmem:[%s1684 + $0x30] sm:$0xff]
      %v2583 = vld [vmem:[%s1684 + $0x38] sm:$0xff]
      %2591 = vrot.lane.b32.xlu0 %v2577, 96
      %v2592 = vpop.permute.xlu0 %2591
      %2593 = vrot.lane.b32.xlu0 %v2578, 96
      %v2594 = vpop.permute.xlu0 %2593
      %2595 = vrot.lane.b32.xlu0 %v2579, 96
      %v2596 = vpop.permute.xlu0 %2595
      %2597 = vrot.lane.b32.xlu0 %v2580, 96
      %v2598 = vpop.permute.xlu0 %2597
      %2599 = vrot.lane.b32.xlu0 %v2581, 96
      %v2600 = vpop.permute.xlu0 %2599
      %2601 = vrot.lane.b32.xlu0 %v2582, 96
      %v2602 = vpop.permute.xlu0 %2601
      %2603 = vrot.lane.b32.xlu0 %v2583, 96
      %v2604 = vpop.permute.xlu0 %2603
      %2612 = vst.msk [vmem:[#allocation3 + $0xe0] sm:$0xff] %vm1966, %v2592
      %2613 = vst.msk [vmem:[#allocation3 + $0xf0] sm:$0xff] %vm1966, %v2594
      %2614 = vst.msk [vmem:[#allocation3 + $0x100] sm:$0xff] %vm1966, %v2596
      %2615 = vst.msk [vmem:[#allocation3 + $0x110] sm:$0xff] %vm1966, %v2598
      %2616 = vst.msk [vmem:[#allocation3 + $0x120] sm:$0xff] %vm1966, %v2600
      %2617 = vst.msk [vmem:[#allocation3 + $0x130] sm:$0xff] %vm1966, %v2602
      %2618 = vst.msk [vmem:[#allocation3 + $0x140] sm:$0xff] %vm1966, %v2604
      %v2619 = vld [vmem:[%s1693 + $0x8] sm:$0xff]
      %v2620 = vld [vmem:[%s1693 + $0x10] sm:$0xff]
      %v2621 = vld [vmem:[%s1693 + $0x18] sm:$0xff]
      %v2622 = vld [vmem:[%s1693 + $0x20] sm:$0xff]
      %v2623 = vld [vmem:[%s1693 + $0x28] sm:$0xff]
      %v2624 = vld [vmem:[%s1693 + $0x30] sm:$0xff]
      %v2625 = vld [vmem:[%s1693 + $0x38] sm:$0xff]
      %2633 = vrot.lane.b32.xlu0 %v2619, 112
      %v2634 = vpop.permute.xlu0 %2633
      %2635 = vrot.lane.b32.xlu0 %v2620, 112
      %v2636 = vpop.permute.xlu0 %2635
      %2637 = vrot.lane.b32.xlu0 %v2621, 112
      %v2638 = vpop.permute.xlu0 %2637
      %2639 = vrot.lane.b32.xlu0 %v2622, 112
      %v2640 = vpop.permute.xlu0 %2639
      %2641 = vrot.lane.b32.xlu0 %v2623, 112
      %v2642 = vpop.permute.xlu0 %2641
      %2643 = vrot.lane.b32.xlu0 %v2624, 112
      %v2644 = vpop.permute.xlu0 %2643
      %2645 = vrot.lane.b32.xlu0 %v2625, 112
      %v2646 = vpop.permute.xlu0 %2645
      %2654 = vst.msk [vmem:[#allocation3 + $0xe0] sm:$0xff] %vm2009, %v2634
      %2655 = vst.msk [vmem:[#allocation3 + $0xf0] sm:$0xff] %vm2009, %v2636
      %2656 = vst.msk [vmem:[#allocation3 + $0x100] sm:$0xff] %vm2009, %v2638
      %2657 = vst.msk [vmem:[#allocation3 + $0x110] sm:$0xff] %vm2009, %v2640
      %2658 = vst.msk [vmem:[#allocation3 + $0x120] sm:$0xff] %vm2009, %v2642
      %2659 = vst.msk [vmem:[#allocation3 + $0x130] sm:$0xff] %vm2009, %v2644
      %2660 = vst.msk [vmem:[#allocation3 + $0x140] sm:$0xff] %vm2009, %v2646
      %v2661 = vld [vmem:[%s1684 + $0x9] sm:$0xff]
      %v2662 = vld [vmem:[%s1684 + $0x11] sm:$0xff]
      %v2663 = vld [vmem:[%s1684 + $0x19] sm:$0xff]
      %v2664 = vld [vmem:[%s1684 + $0x21] sm:$0xff]
      %v2665 = vld [vmem:[%s1684 + $0x29] sm:$0xff]
      %v2666 = vld [vmem:[%s1684 + $0x31] sm:$0xff]
      %v2667 = vld [vmem:[%s1684 + $0x39] sm:$0xff]
      %2668 = vst.msk [vmem:[#allocation3 + $0xe8] sm:$0xff] %vm1630, %v2661
      %2669 = vst.msk [vmem:[#allocation3 + $0xf8] sm:$0xff] %vm1630, %v2662
      %2670 = vst.msk [vmem:[#allocation3 + $0x108] sm:$0xff] %vm1630, %v2663
      %2671 = vst.msk [vmem:[#allocation3 + $0x118] sm:$0xff] %vm1630, %v2664
      %2672 = vst.msk [vmem:[#allocation3 + $0x128] sm:$0xff] %vm1630, %v2665
      %2673 = vst.msk [vmem:[#allocation3 + $0x138] sm:$0xff] %vm1630, %v2666
      %2674 = vst.msk [vmem:[#allocation3 + $0x148] sm:$0xff] %vm1630, %v2667
      %v2675 = vld [vmem:[%s1693] sm:$0xff]
      %v2676 = vld [vmem:[%s1693 + $0x8] sm:$0xff]
      %v2677 = vld [vmem:[%s1693 + $0x10] sm:$0xff]
      %v2678 = vld [vmem:[%s1693 + $0x18] sm:$0xff]
      %v2679 = vld [vmem:[%s1693 + $0x20] sm:$0xff]
      %v2680 = vld [vmem:[%s1693 + $0x28] sm:$0xff]
      %v2681 = vld [vmem:[%s1693 + $0x30] sm:$0xff]
      %2682 = vst.msk [vmem:[#allocation3 + $0x150] sm:$0xff] %vm1630, %v2675
      %2683 = vst.msk [vmem:[#allocation3 + $0x160] sm:$0xff] %vm1630, %v2676
      %2684 = vst.msk [vmem:[#allocation3 + $0x170] sm:$0xff] %vm1630, %v2677
      %2685 = vst.msk [vmem:[#allocation3 + $0x180] sm:$0xff] %vm1630, %v2678
      %2686 = vst.msk [vmem:[#allocation3 + $0x190] sm:$0xff] %vm1630, %v2679
      %2687 = vst.msk [vmem:[#allocation3 + $0x1a0] sm:$0xff] %vm1630, %v2680
      %2688 = vst.msk [vmem:[#allocation3 + $0x1b0] sm:$0xff] %vm1630, %v2681
      %v2689 = vld [vmem:[%s1684 + $0x1] sm:$0xff]
      %v2690 = vld [vmem:[%s1684 + $0x9] sm:$0xff]
      %v2691 = vld [vmem:[%s1684 + $0x11] sm:$0xff]
      %v2692 = vld [vmem:[%s1684 + $0x19] sm:$0xff]
      %v2693 = vld [vmem:[%s1684 + $0x21] sm:$0xff]
      %v2694 = vld [vmem:[%s1684 + $0x29] sm:$0xff]
      %v2695 = vld [vmem:[%s1684 + $0x31] sm:$0xff]
      %2703 = vrot.lane.b32.xlu0 %v2689, 16
      %v2704 = vpop.permute.xlu0 %2703
      %2705 = vrot.lane.b32.xlu0 %v2690, 16
      %v2706 = vpop.permute.xlu0 %2705
      %2707 = vrot.lane.b32.xlu0 %v2691, 16
      %v2708 = vpop.permute.xlu0 %2707
      %2709 = vrot.lane.b32.xlu0 %v2692, 16
      %v2710 = vpop.permute.xlu0 %2709
      %2711 = vrot.lane.b32.xlu0 %v2693, 16
      %v2712 = vpop.permute.xlu0 %2711
      %2713 = vrot.lane.b32.xlu0 %v2694, 16
      %v2714 = vpop.permute.xlu0 %2713
      %2715 = vrot.lane.b32.xlu0 %v2695, 16
      %v2716 = vpop.permute.xlu0 %2715
      %2724 = vst.msk [vmem:[#allocation3 + $0x150] sm:$0xff] %vm1751, %v2704
      %2725 = vst.msk [vmem:[#allocation3 + $0x160] sm:$0xff] %vm1751, %v2706
      %2726 = vst.msk [vmem:[#allocation3 + $0x170] sm:$0xff] %vm1751, %v2708
      %2727 = vst.msk [vmem:[#allocation3 + $0x180] sm:$0xff] %vm1751, %v2710
      %2728 = vst.msk [vmem:[#allocation3 + $0x190] sm:$0xff] %vm1751, %v2712
      %2729 = vst.msk [vmem:[#allocation3 + $0x1a0] sm:$0xff] %vm1751, %v2714
      %2730 = vst.msk [vmem:[#allocation3 + $0x1b0] sm:$0xff] %vm1751, %v2716
      %v2731 = vld [vmem:[%s1693 + $0x1] sm:$0xff]
      %v2732 = vld [vmem:[%s1693 + $0x9] sm:$0xff]
      %v2733 = vld [vmem:[%s1693 + $0x11] sm:$0xff]
      %v2734 = vld [vmem:[%s1693 + $0x19] sm:$0xff]
      %v2735 = vld [vmem:[%s1693 + $0x21] sm:$0xff]
      %v2736 = vld [vmem:[%s1693 + $0x29] sm:$0xff]
      %v2737 = vld [vmem:[%s1693 + $0x31] sm:$0xff]
      %2745 = vrot.lane.b32.xlu0 %v2731, 32
      %v2746 = vpop.permute.xlu0 %2745
      %2747 = vrot.lane.b32.xlu0 %v2732, 32
      %v2748 = vpop.permute.xlu0 %2747
      %2749 = vrot.lane.b32.xlu0 %v2733, 32
      %v2750 = vpop.permute.xlu0 %2749
      %2751 = vrot.lane.b32.xlu0 %v2734, 32
      %v2752 = vpop.permute.xlu0 %2751
      %2753 = vrot.lane.b32.xlu0 %v2735, 32
      %v2754 = vpop.permute.xlu0 %2753
      %2755 = vrot.lane.b32.xlu0 %v2736, 32
      %v2756 = vpop.permute.xlu0 %2755
      %2757 = vrot.lane.b32.xlu0 %v2737, 32
      %v2758 = vpop.permute.xlu0 %2757
      %2766 = vst.msk [vmem:[#allocation3 + $0x150] sm:$0xff] %vm1794, %v2746
      %2767 = vst.msk [vmem:[#allocation3 + $0x160] sm:$0xff] %vm1794, %v2748
      %2768 = vst.msk [vmem:[#allocation3 + $0x170] sm:$0xff] %vm1794, %v2750
      %2769 = vst.msk [vmem:[#allocation3 + $0x180] sm:$0xff] %vm1794, %v2752
      %2770 = vst.msk [vmem:[#allocation3 + $0x190] sm:$0xff] %vm1794, %v2754
      %2771 = vst.msk [vmem:[#allocation3 + $0x1a0] sm:$0xff] %vm1794, %v2756
      %2772 = vst.msk [vmem:[#allocation3 + $0x1b0] sm:$0xff] %vm1794, %v2758
      %v2773 = vld [vmem:[%s1675 + $0x8] sm:$0xff]
      %v2774 = vld [vmem:[%s1675 + $0x10] sm:$0xff]
      %v2775 = vld [vmem:[%s1675 + $0x18] sm:$0xff]
      %v2776 = vld [vmem:[%s1675 + $0x20] sm:$0xff]
      %v2777 = vld [vmem:[%s1675 + $0x28] sm:$0xff]
      %v2778 = vld [vmem:[%s1675 + $0x30] sm:$0xff]
      %v2779 = vld [vmem:[%s1675 + $0x38] sm:$0xff]
      %2787 = vrot.lane.b32.xlu0 %v2773, 48
      %v2788 = vpop.permute.xlu0 %2787
      %2789 = vrot.lane.b32.xlu0 %v2774, 48
      %v2790 = vpop.permute.xlu0 %2789
      %2791 = vrot.lane.b32.xlu0 %v2775, 48
      %v2792 = vpop.permute.xlu0 %2791
      %2793 = vrot.lane.b32.xlu0 %v2776, 48
      %v2794 = vpop.permute.xlu0 %2793
      %2795 = vrot.lane.b32.xlu0 %v2777, 48
      %v2796 = vpop.permute.xlu0 %2795
      %2797 = vrot.lane.b32.xlu0 %v2778, 48
      %v2798 = vpop.permute.xlu0 %2797
      %2799 = vrot.lane.b32.xlu0 %v2779, 48
      %v2800 = vpop.permute.xlu0 %2799
      %2808 = vst.msk [vmem:[#allocation3 + $0x150] sm:$0xff] %vm1837, %v2788
      %2809 = vst.msk [vmem:[#allocation3 + $0x160] sm:$0xff] %vm1837, %v2790
      %2810 = vst.msk [vmem:[#allocation3 + $0x170] sm:$0xff] %vm1837, %v2792
      %2811 = vst.msk [vmem:[#allocation3 + $0x180] sm:$0xff] %vm1837, %v2794
      %2812 = vst.msk [vmem:[#allocation3 + $0x190] sm:$0xff] %vm1837, %v2796
      %2813 = vst.msk [vmem:[#allocation3 + $0x1a0] sm:$0xff] %vm1837, %v2798
      %2814 = vst.msk [vmem:[#allocation3 + $0x1b0] sm:$0xff] %vm1837, %v2800
      %v2815 = vld [vmem:[#allocation2 + $0x9] sm:$0xff]
      %v2816 = vld [vmem:[#allocation2 + $0x11] sm:$0xff]
      %v2817 = vld [vmem:[#allocation2 + $0x19] sm:$0xff]
      %v2818 = vld [vmem:[#allocation2 + $0x21] sm:$0xff]
      %v2819 = vld [vmem:[#allocation2 + $0x29] sm:$0xff]
      %v2820 = vld [vmem:[#allocation2 + $0x31] sm:$0xff]
      %v2821 = vld [vmem:[#allocation2 + $0x39] sm:$0xff]
      %2829 = vrot.lane.b32.xlu0 %v2815, 64
      %v2830 = vpop.permute.xlu0 %2829
      %2831 = vrot.lane.b32.xlu0 %v2816, 64
      %v2832 = vpop.permute.xlu0 %2831
      %2833 = vrot.lane.b32.xlu0 %v2817, 64
      %v2834 = vpop.permute.xlu0 %2833
      %2835 = vrot.lane.b32.xlu0 %v2818, 64
      %v2836 = vpop.permute.xlu0 %2835
      %2837 = vrot.lane.b32.xlu0 %v2819, 64
      %v2838 = vpop.permute.xlu0 %2837
      %2839 = vrot.lane.b32.xlu0 %v2820, 64
      %v2840 = vpop.permute.xlu0 %2839
      %2841 = vrot.lane.b32.xlu0 %v2821, 64
      %v2842 = vpop.permute.xlu0 %2841
      %2850 = vst.msk [vmem:[#allocation3 + $0x150] sm:$0xff] %vm1880, %v2830
      %2851 = vst.msk [vmem:[#allocation3 + $0x160] sm:$0xff] %vm1880, %v2832
      %2852 = vst.msk [vmem:[#allocation3 + $0x170] sm:$0xff] %vm1880, %v2834
      %2853 = vst.msk [vmem:[#allocation3 + $0x180] sm:$0xff] %vm1880, %v2836
      %2854 = vst.msk [vmem:[#allocation3 + $0x190] sm:$0xff] %vm1880, %v2838
      %2855 = vst.msk [vmem:[#allocation3 + $0x1a0] sm:$0xff] %vm1880, %v2840
      %2856 = vst.msk [vmem:[#allocation3 + $0x1b0] sm:$0xff] %vm1880, %v2842
      %v2857 = vld [vmem:[%s1675 + $0x9] sm:$0xff]
      %v2858 = vld [vmem:[%s1675 + $0x11] sm:$0xff]
      %v2859 = vld [vmem:[%s1675 + $0x19] sm:$0xff]
      %v2860 = vld [vmem:[%s1675 + $0x21] sm:$0xff]
      %v2861 = vld [vmem:[%s1675 + $0x29] sm:$0xff]
      %v2862 = vld [vmem:[%s1675 + $0x31] sm:$0xff]
      %v2863 = vld [vmem:[%s1675 + $0x39] sm:$0xff]
      %2871 = vrot.lane.b32.xlu0 %v2857, 80
      %v2872 = vpop.permute.xlu0 %2871
      %2873 = vrot.lane.b32.xlu0 %v2858, 80
      %v2874 = vpop.permute.xlu0 %2873
      %2875 = vrot.lane.b32.xlu0 %v2859, 80
      %v2876 = vpop.permute.xlu0 %2875
      %2877 = vrot.lane.b32.xlu0 %v2860, 80
      %v2878 = vpop.permute.xlu0 %2877
      %2879 = vrot.lane.b32.xlu0 %v2861, 80
      %v2880 = vpop.permute.xlu0 %2879
      %2881 = vrot.lane.b32.xlu0 %v2862, 80
      %v2882 = vpop.permute.xlu0 %2881
      %2883 = vrot.lane.b32.xlu0 %v2863, 80
      %v2884 = vpop.permute.xlu0 %2883
      %2892 = vst.msk [vmem:[#allocation3 + $0x150] sm:$0xff] %vm1923, %v2872
      %2893 = vst.msk [vmem:[#allocation3 + $0x160] sm:$0xff] %vm1923, %v2874
      %2894 = vst.msk [vmem:[#allocation3 + $0x170] sm:$0xff] %vm1923, %v2876
      %2895 = vst.msk [vmem:[#allocation3 + $0x180] sm:$0xff] %vm1923, %v2878
      %2896 = vst.msk [vmem:[#allocation3 + $0x190] sm:$0xff] %vm1923, %v2880
      %2897 = vst.msk [vmem:[#allocation3 + $0x1a0] sm:$0xff] %vm1923, %v2882
      %2898 = vst.msk [vmem:[#allocation3 + $0x1b0] sm:$0xff] %vm1923, %v2884
      %v2899 = vld [vmem:[%s1693 + $0x8] sm:$0xff]
      %v2900 = vld [vmem:[%s1693 + $0x10] sm:$0xff]
      %v2901 = vld [vmem:[%s1693 + $0x18] sm:$0xff]
      %v2902 = vld [vmem:[%s1693 + $0x20] sm:$0xff]
      %v2903 = vld [vmem:[%s1693 + $0x28] sm:$0xff]
      %v2904 = vld [vmem:[%s1693 + $0x30] sm:$0xff]
      %v2905 = vld [vmem:[%s1693 + $0x38] sm:$0xff]
      %2913 = vrot.lane.b32.xlu0 %v2899, 96
      %v2914 = vpop.permute.xlu0 %2913
      %2915 = vrot.lane.b32.xlu0 %v2900, 96
      %v2916 = vpop.permute.xlu0 %2915
      %2917 = vrot.lane.b32.xlu0 %v2901, 96
      %v2918 = vpop.permute.xlu0 %2917
      %2919 = vrot.lane.b32.xlu0 %v2902, 96
      %v2920 = vpop.permute.xlu0 %2919
      %2921 = vrot.lane.b32.xlu0 %v2903, 96
      %v2922 = vpop.permute.xlu0 %2921
      %2923 = vrot.lane.b32.xlu0 %v2904, 96
      %v2924 = vpop.permute.xlu0 %2923
      %2925 = vrot.lane.b32.xlu0 %v2905, 96
      %v2926 = vpop.permute.xlu0 %2925
      %2934 = vst.msk [vmem:[#allocation3 + $0x150] sm:$0xff] %vm1966, %v2914
      %2935 = vst.msk [vmem:[#allocation3 + $0x160] sm:$0xff] %vm1966, %v2916
      %2936 = vst.msk [vmem:[#allocation3 + $0x170] sm:$0xff] %vm1966, %v2918
      %2937 = vst.msk [vmem:[#allocation3 + $0x180] sm:$0xff] %vm1966, %v2920
      %2938 = vst.msk [vmem:[#allocation3 + $0x190] sm:$0xff] %vm1966, %v2922
      %2939 = vst.msk [vmem:[#allocation3 + $0x1a0] sm:$0xff] %vm1966, %v2924
      %2940 = vst.msk [vmem:[#allocation3 + $0x1b0] sm:$0xff] %vm1966, %v2926
      %v2941 = vld [vmem:[%s1684 + $0x9] sm:$0xff]
      %v2942 = vld [vmem:[%s1684 + $0x11] sm:$0xff]
      %v2943 = vld [vmem:[%s1684 + $0x19] sm:$0xff]
      %v2944 = vld [vmem:[%s1684 + $0x21] sm:$0xff]
      %v2945 = vld [vmem:[%s1684 + $0x29] sm:$0xff]
      %v2946 = vld [vmem:[%s1684 + $0x31] sm:$0xff]
      %v2947 = vld [vmem:[%s1684 + $0x39] sm:$0xff]
      %2955 = vrot.lane.b32.xlu0 %v2941, 112
      %v2956 = vpop.permute.xlu0 %2955
      %2957 = vrot.lane.b32.xlu0 %v2942, 112
      %v2958 = vpop.permute.xlu0 %2957
      %2959 = vrot.lane.b32.xlu0 %v2943, 112
      %v2960 = vpop.permute.xlu0 %2959
      %2961 = vrot.lane.b32.xlu0 %v2944, 112
      %v2962 = vpop.permute.xlu0 %2961
      %2963 = vrot.lane.b32.xlu0 %v2945, 112
      %v2964 = vpop.permute.xlu0 %2963
      %2965 = vrot.lane.b32.xlu0 %v2946, 112
      %v2966 = vpop.permute.xlu0 %2965
      %2967 = vrot.lane.b32.xlu0 %v2947, 112
      %v2968 = vpop.permute.xlu0 %2967
      %2976 = vst.msk [vmem:[#allocation3 + $0x150] sm:$0xff] %vm2009, %v2956
      %2977 = vst.msk [vmem:[#allocation3 + $0x160] sm:$0xff] %vm2009, %v2958
      %2978 = vst.msk [vmem:[#allocation3 + $0x170] sm:$0xff] %vm2009, %v2960
      %2979 = vst.msk [vmem:[#allocation3 + $0x180] sm:$0xff] %vm2009, %v2962
      %2980 = vst.msk [vmem:[#allocation3 + $0x190] sm:$0xff] %vm2009, %v2964
      %2981 = vst.msk [vmem:[#allocation3 + $0x1a0] sm:$0xff] %vm2009, %v2966
      %2982 = vst.msk [vmem:[#allocation3 + $0x1b0] sm:$0xff] %vm2009, %v2968
      %v2983 = vld [vmem:[%s1693 + $0x9] sm:$0xff]
      %v2984 = vld [vmem:[%s1693 + $0x11] sm:$0xff]
      %v2985 = vld [vmem:[%s1693 + $0x19] sm:$0xff]
      %v2986 = vld [vmem:[%s1693 + $0x21] sm:$0xff]
      %v2987 = vld [vmem:[%s1693 + $0x29] sm:$0xff]
      %v2988 = vld [vmem:[%s1693 + $0x31] sm:$0xff]
      %v2989 = vld [vmem:[%s1693 + $0x39] sm:$0xff]
      %2990 = vst.msk [vmem:[#allocation3 + $0x158] sm:$0xff] %vm1630, %v2983
      %2991 = vst.msk [vmem:[#allocation3 + $0x168] sm:$0xff] %vm1630, %v2984
      %2992 = vst.msk [vmem:[#allocation3 + $0x178] sm:$0xff] %vm1630, %v2985
      %2993 = vst.msk [vmem:[#allocation3 + $0x188] sm:$0xff] %vm1630, %v2986
      %2994 = vst.msk [vmem:[#allocation3 + $0x198] sm:$0xff] %vm1630, %v2987
      %2995 = vst.msk [vmem:[#allocation3 + $0x1a8] sm:$0xff] %vm1630, %v2988
      %2996 = vst.msk [vmem:[#allocation3 + $0x1b8] sm:$0xff] %vm1630, %v2989
      %v2997 = vld [vmem:[#allocation3] sm:$0xff]
      %v2998 = vld [vmem:[#allocation3 + $0x8] sm:$0xff]
      %v2999 = vld [vmem:[#allocation3 + $0x10] sm:$0xff]
      %v3000 = vld [vmem:[#allocation3 + $0x18] sm:$0xff]
      %v3001 = vld [vmem:[#allocation3 + $0x20] sm:$0xff]
      %v3002 = vld [vmem:[#allocation3 + $0x28] sm:$0xff]
      %v3003 = vld [vmem:[#allocation3 + $0x30] sm:$0xff]
      %v3004 = vld [vmem:[#allocation3 + $0x38] sm:$0xff]
      %v3005 = vld [vmem:[#allocation3 + $0x40] sm:$0xff]
      %v3006 = vld [vmem:[#allocation3 + $0x48] sm:$0xff]
      %v3007 = vld [vmem:[#allocation3 + $0x50] sm:$0xff]
      %v3008 = vld [vmem:[#allocation3 + $0x58] sm:$0xff]
      %v3009 = vld [vmem:[#allocation3 + $0x60] sm:$0xff]
      %v3010 = vld [vmem:[#allocation3 + $0x68] sm:$0xff]
      %v3011 = vld [vmem:[#allocation3 + $0x70] sm:$0xff]
      %v3012 = vld [vmem:[#allocation3 + $0x78] sm:$0xff]
      %v3013 = vld [vmem:[#allocation3 + $0x80] sm:$0xff]
      %v3014 = vld [vmem:[#allocation3 + $0x88] sm:$0xff]
      %v3015 = vld [vmem:[#allocation3 + $0x90] sm:$0xff]
      %v3016 = vld [vmem:[#allocation3 + $0x98] sm:$0xff]
      %v3017 = vld [vmem:[#allocation3 + $0xa0] sm:$0xff]
      %v3018 = vld [vmem:[#allocation3 + $0xa8] sm:$0xff]
      %v3019 = vld [vmem:[#allocation3 + $0xb0] sm:$0xff]
      %v3020 = vld [vmem:[#allocation3 + $0xb8] sm:$0xff]
      %v3021 = vld [vmem:[#allocation3 + $0xc0] sm:$0xff]
      %v3022 = vld [vmem:[#allocation3 + $0xc8] sm:$0xff]
      %v3023 = vld [vmem:[#allocation3 + $0xd0] sm:$0xff]
      %v3024 = vld [vmem:[#allocation3 + $0xd8] sm:$0xff]
      %v3025 = vld [vmem:[#allocation3 + $0xe0] sm:$0xff]
      %v3026 = vld [vmem:[#allocation3 + $0xe8] sm:$0xff]
      %v3027 = vld [vmem:[#allocation3 + $0xf0] sm:$0xff]
      %v3028 = vld [vmem:[#allocation3 + $0xf8] sm:$0xff]
      %v3029 = vld [vmem:[#allocation3 + $0x100] sm:$0xff]
      %v3030 = vld [vmem:[#allocation3 + $0x108] sm:$0xff]
      %v3031 = vld [vmem:[#allocation3 + $0x110] sm:$0xff]
      %v3032 = vld [vmem:[#allocation3 + $0x118] sm:$0xff]
      %v3033 = vld [vmem:[#allocation3 + $0x120] sm:$0xff]
      %v3034 = vld [vmem:[#allocation3 + $0x128] sm:$0xff]
      %v3035 = vld [vmem:[#allocation3 + $0x130] sm:$0xff]
      %v3036 = vld [vmem:[#allocation3 + $0x138] sm:$0xff]
      %v3037 = vld [vmem:[#allocation3 + $0x140] sm:$0xff]
      %v3038 = vld [vmem:[#allocation3 + $0x148] sm:$0xff]
      %v3039 = vld [vmem:[#allocation3 + $0x150] sm:$0xff]
      %v3040 = vld [vmem:[#allocation3 + $0x158] sm:$0xff]
      %v3041 = vld [vmem:[#allocation3 + $0x160] sm:$0xff]
      %v3042 = vld [vmem:[#allocation3 + $0x168] sm:$0xff]
      %v3043 = vld [vmem:[#allocation3 + $0x170] sm:$0xff]
      %v3044 = vld [vmem:[#allocation3 + $0x178] sm:$0xff]
      %v3045 = vld [vmem:[#allocation3 + $0x180] sm:$0xff]
      %v3046 = vld [vmem:[#allocation3 + $0x188] sm:$0xff]
      %v3047 = vld [vmem:[#allocation3 + $0x190] sm:$0xff]
      %v3048 = vld [vmem:[#allocation3 + $0x198] sm:$0xff]
      %v3049 = vld [vmem:[#allocation3 + $0x1a0] sm:$0xff]
      %v3050 = vld [vmem:[#allocation3 + $0x1a8] sm:$0xff]
      %v3051 = vld [vmem:[#allocation3 + $0x1b0] sm:$0xff]
      %v3052 = vld [vmem:[#allocation3 + $0x1b8] sm:$0xff]
      %v3053 = vpack.c.bf16 %v2999, %v2997
      %v3054 = vpack.c.bf16 %v3000, %v2998
      %v3055 = vpack.c.bf16 %v3003, %v3001
      %v3056 = vpack.c.bf16 %v3004, %v3002
      %v3057 = vpack.c.bf16 %v3007, %v3005
      %v3058 = vpack.c.bf16 %v3008, %v3006
      %v3059 = vpack.c.bf16 %v3011, %v3009
      %v3060 = vpack.c.bf16 %v3012, %v3010
      %v3061 = vpack.c.bf16 %v3015, %v3013
      %v3062 = vpack.c.bf16 %v3016, %v3014
      %v3063 = vpack.c.bf16 %v3019, %v3017
      %v3064 = vpack.c.bf16 %v3020, %v3018
      %v3065 = vpack.c.bf16 %v3023, %v3021
      %v3066 = vpack.c.bf16 %v3024, %v3022
      %v3067 = vpack.c.bf16 %v3027, %v3025
      %v3068 = vpack.c.bf16 %v3028, %v3026
      %v3069 = vpack.c.bf16 %v3031, %v3029
      %v3070 = vpack.c.bf16 %v3032, %v3030
      %v3071 = vpack.c.bf16 %v3035, %v3033
      %v3072 = vpack.c.bf16 %v3036, %v3034
      %v3073 = vpack.c.bf16 %v3039, %v3037
      %v3074 = vpack.c.bf16 %v3040, %v3038
      %v3075 = vpack.c.bf16 %v3043, %v3041
      %v3076 = vpack.c.bf16 %v3044, %v3042
      %v3077 = vpack.c.bf16 %v3047, %v3045
      %v3078 = vpack.c.bf16 %v3048, %v3046
      %v3079 = vpack.c.bf16 %v3051, %v3049
      %v3080 = vpack.c.bf16 %v3052, %v3050
      %v3081 = vld [vmem:[%s2] sm:$0xf]
      %v3082 = vld [vmem:[%s2 + $0x4] sm:$0xf]
      %v3083 = vld [vmem:[%s2 + $0x8] sm:$0xf]
      %v3084 = vld [vmem:[%s2 + $0xc] sm:$0xf]
      %v3085 = vld [vmem:[%s2 + $0x10] sm:$0xf]
      %v3086 = vld [vmem:[%s2 + $0x14] sm:$0xf]
      %v3087 = vld [vmem:[%s2 + $0x18] sm:$0xf]
      %v3088 = vld [vmem:[%s2 + $0x1c] sm:$0xf]
      %v3089 = vld [vmem:[%s2 + $0x20] sm:$0xf]
      %v3090 = vld [vmem:[%s2 + $0x24] sm:$0xf]
      %v3091 = vld [vmem:[%s2 + $0x28] sm:$0xf]
      %v3092 = vld [vmem:[%s2 + $0x2c] sm:$0xf]
      %v3093 = vld [vmem:[%s2 + $0x30] sm:$0xf]
      %v3094 = vld [vmem:[%s2 + $0x34] sm:$0xf]
      %v3095 = vld [vmem:[%s2 + $0x38] sm:$0xf]
      %v3096 = vld [vmem:[%s2 + $0x3c] sm:$0xf]
      %v3097 = vld [vmem:[%s2 + $0x40] sm:$0xf]
      %v3098 = vld [vmem:[%s2 + $0x44] sm:$0xf]
      %v3117 = vunpack.c.l.b16 %v3081
      %v3118 = vunpack.c.l.b16 %v3082
      %v3119 = vunpack.c.l.b16 %v3083
      %v3120 = vunpack.c.l.b16 %v3084
      %v3121 = vunpack.c.l.b16 %v3085
      %v3122 = vunpack.c.l.b16 %v3086
      %v3123 = vunpack.c.l.b16 %v3087
      %v3124 = vunpack.c.l.b16 %v3088
      %v3125 = vunpack.c.l.b16 %v3089
      %v3126 = vunpack.c.l.b16 %v3090
      %v3127 = vunpack.c.l.b16 %v3091
      %v3128 = vunpack.c.l.b16 %v3092
      %v3129 = vunpack.c.l.b16 %v3093
      %v3130 = vunpack.c.l.b16 %v3094
      %v3131 = vunpack.c.l.b16 %v3095
      %v3132 = vunpack.c.l.b16 %v3096
      %v3133 = vunpack.c.l.b16 %v3097
      %v3134 = vunpack.c.l.b16 %v3098
      %v3135 = vpack.c.b16 %v3118, %v3117
      %v3136 = vpack.c.b16 %v3120, %v3119
      %v3137 = vpack.c.b16 %v3122, %v3121
      %v3138 = vpack.c.b16 %v3124, %v3123
      %v3139 = vpack.c.b16 %v3126, %v3125
      %v3140 = vpack.c.b16 %v3128, %v3127
      %v3141 = vpack.c.b16 %v3130, %v3129
      %v3142 = vpack.c.b16 %v3132, %v3131
      %v3143 = vpack.c.b16 %v3134, %v3133
      %v3154 = vsel %vm1630, %v3054, 0
      %v3157 = vsel %vm1630, %v3056, 0
      %v3160 = vsel %vm1630, %v3058, 0
      %v3163 = vsel %vm1630, %v3060, 0
      %v3166 = vsel %vm1630, %v3062, 0
      %v3169 = vsel %vm1630, %v3064, 0
      %v3172 = vsel %vm1630, %v3066, 0
      %v3175 = vsel %vm1630, %v3068, 0
      %v3178 = vsel %vm1630, %v3070, 0
      %v3181 = vsel %vm1630, %v3072, 0
      %v3184 = vsel %vm1630, %v3074, 0
      %v3187 = vsel %vm1630, %v3076, 0
      %v3190 = vsel %vm1630, %v3078, 0
      %v3193 = vsel %vm1630, %v3080, 0
      %3195 = vmatprep.subr.bf16.mxu0 0
      %3196 = vmatpush1.bf16.msra.mxu0 %v3135
      %3197 = vmatprep.subr.bf16.mxu0 0
      %3198 = vmatpush1.bf16.msra.mxu0 %v3136
      %3199 = vmatprep.subr.bf16.mxu0 0
      %3200 = vmatpush1.bf16.msra.mxu0 %v3137
      %3201 = vmatprep.subr.bf16.mxu0 0
      %3202 = vmatpush1.bf16.msra.mxu0 %v3138
      %3203 = vmatprep.subr.bf16.mxu0 0
      %3204 = vmatpush1.bf16.msra.mxu0 %v3139
      %3205 = vmatprep.subr.bf16.mxu0 0
      %3206 = vmatpush1.bf16.msra.mxu0 %v3140
      %3207 = vmatprep.subr.bf16.mxu0 0
      %3208 = vmatpush1.bf16.msra.mxu0 %v3141
      %3209 = vmatprep.subr.bf16.mxu0 0
      %3210 = vmatpush1.bf16.msra.mxu0 %v3142
      %3211 = vmatprep.subr.bf16.mxu0 0
      %3212 = vmatpush1.bf16.msra.mxu0 %v3143
      %3213 = vmatprep.subr.bf16.mxu0 0
      %3214 = vmatpush1.bf16.msra.mxu0 0
      %3215 = vmatprep.subr.bf16.mxu0 0
      %3216 = vmatpush1.bf16.msra.mxu0 0
      %3217 = vmatprep.subr.bf16.mxu0 0
      %3218 = vmatpush1.bf16.msra.mxu0 0
      %3219 = vmatprep.subr.bf16.mxu0 0
      %3220 = vmatpush1.bf16.msra.mxu0 0
      %3221 = vmatprep.subr.bf16.mxu0 0
      %3222 = vmatpush1.bf16.msra.mxu0 0
      %3223 = vmatprep.subr.bf16.mxu0 0
      %3224 = vmatpush1.bf16.msra.mxu0 0
      %3225 = vmatprep.subr.bf16.mxu0 0
      %3226 = vmatpush1.bf16.msra.mxu0 0
      %3227 = vmatprep.mubr.bf16.mxu0 %v3154
      %3228 = vmatmul.mubr.bf16.gmra.mrb[0].mxu0 %v3053
      %v3229 = vpop.f32.mrb[0].mxu0
      %v3230 = vadd.f32 0.0, %v3229
      %v3231 = vpop.f32.mrb[0].mxu0
      %v3232 = vpop.f32.mrb[0].mxu0
      %v3233 = vadd.f32 0.0, %v3232
      %v3234 = vpop.f32.mrb[0].mxu0
      %3235 = vmatprep.mubr.bf16.mxu0 %v3157
      %3236 = vmatmul.mubr.bf16.gmra.mrb[0].mxu0 %v3055
      %v3237 = vpop.f32.mrb[0].mxu0
      %v3238 = vadd.f32 0.0, %v3237
      %v3239 = vpop.f32.mrb[0].mxu0
      %v3240 = vpop.f32.mrb[0].mxu0
      %v3241 = vadd.f32 0.0, %v3240
      %v3242 = vpop.f32.mrb[0].mxu0
      %3243 = vmatprep.mubr.bf16.mxu0 %v3160
      %3244 = vmatmul.mubr.bf16.gmra.mrb[0].mxu0 %v3057
      %v3245 = vpop.f32.mrb[0].mxu0
      %v3246 = vadd.f32 0.0, %v3245
      %v3247 = vpop.f32.mrb[0].mxu0
      %v3248 = vpop.f32.mrb[0].mxu0
      %v3249 = vadd.f32 0.0, %v3248
      %v3250 = vpop.f32.mrb[0].mxu0
      %3251 = vmatprep.mubr.bf16.mxu0 %v3163
      %3252 = vmatmul.mubr.bf16.gmra.mrb[0].mxu0 %v3059
      %v3253 = vpop.f32.mrb[0].mxu0
      %v3254 = vadd.f32 0.0, %v3253
      %v3255 = vpop.f32.mrb[0].mxu0
      %v3256 = vpop.f32.mrb[0].mxu0
      %v3257 = vadd.f32 0.0, %v3256
      %v3258 = vpop.f32.mrb[0].mxu0
      %3259 = vmatprep.mubr.bf16.mxu0 %v3166
      %3260 = vmatmul.mubr.bf16.gmra.mrb[0].mxu0 %v3061
      %v3261 = vpop.f32.mrb[0].mxu0
      %v3262 = vadd.f32 0.0, %v3261
      %v3263 = vpop.f32.mrb[0].mxu0
      %v3264 = vpop.f32.mrb[0].mxu0
      %v3265 = vadd.f32 0.0, %v3264
      %v3266 = vpop.f32.mrb[0].mxu0
      %3267 = vmatprep.mubr.bf16.mxu0 %v3169
      %3268 = vmatmul.mubr.bf16.gmra.mrb[0].mxu0 %v3063
      %v3269 = vpop.f32.mrb[0].mxu0
      %v3270 = vadd.f32 0.0, %v3269
      %v3271 = vpop.f32.mrb[0].mxu0
      %v3272 = vpop.f32.mrb[0].mxu0
      %v3273 = vadd.f32 0.0, %v3272
      %v3274 = vpop.f32.mrb[0].mxu0
      %3275 = vmatprep.mubr.bf16.mxu0 %v3172
      %3276 = vmatmul.mubr.bf16.gmra.mrb[0].mxu0 %v3065
      %v3277 = vpop.f32.mrb[0].mxu0
      %v3278 = vadd.f32 0.0, %v3277
      %v3279 = vpop.f32.mrb[0].mxu0
      %v3280 = vpop.f32.mrb[0].mxu0
      %v3281 = vadd.f32 0.0, %v3280
      %v3282 = vpop.f32.mrb[0].mxu0
      %3283 = vmatprep.mubr.bf16.mxu0 %v3175
      %3284 = vmatmul.mubr.bf16.gmra.mrb[0].mxu0 %v3067
      %v3285 = vpop.f32.mrb[0].mxu0
      %v3286 = vadd.f32 0.0, %v3285
      %v3287 = vpop.f32.mrb[0].mxu0
      %v3288 = vpop.f32.mrb[0].mxu0
      %v3289 = vadd.f32 0.0, %v3288
      %v3290 = vpop.f32.mrb[0].mxu0
      %3291 = vmatprep.mubr.bf16.mxu0 %v3178
      %3292 = vmatmul.mubr.bf16.gmra.mrb[0].mxu0 %v3069
      %v3293 = vpop.f32.mrb[0].mxu0
      %v3294 = vadd.f32 0.0, %v3293
      %v3295 = vpop.f32.mrb[0].mxu0
      %v3296 = vpop.f32.mrb[0].mxu0
      %v3297 = vadd.f32 0.0, %v3296
      %v3298 = vpop.f32.mrb[0].mxu0
      %3299 = vmatprep.mubr.bf16.mxu0 %v3181
      %3300 = vmatmul.mubr.bf16.gmra.mrb[0].mxu0 %v3071
      %v3301 = vpop.f32.mrb[0].mxu0
      %v3302 = vadd.f32 0.0, %v3301
      %v3303 = vpop.f32.mrb[0].mxu0
      %v3304 = vpop.f32.mrb[0].mxu0
      %v3305 = vadd.f32 0.0, %v3304
      %v3306 = vpop.f32.mrb[0].mxu0
      %3307 = vmatprep.mubr.bf16.mxu0 %v3184
      %3308 = vmatmul.mubr.bf16.gmra.mrb[0].mxu0 %v3073
      %v3309 = vpop.f32.mrb[0].mxu0
      %v3310 = vadd.f32 0.0, %v3309
      %v3311 = vpop.f32.mrb[0].mxu0
      %v3312 = vpop.f32.mrb[0].mxu0
      %v3313 = vadd.f32 0.0, %v3312
      %v3314 = vpop.f32.mrb[0].mxu0
      %3315 = vmatprep.mubr.bf16.mxu0 %v3187
      %3316 = vmatmul.mubr.bf16.gmra.mrb[0].mxu0 %v3075
      %v3317 = vpop.f32.mrb[0].mxu0
      %v3318 = vadd.f32 0.0, %v3317
      %v3319 = vpop.f32.mrb[0].mxu0
      %v3320 = vpop.f32.mrb[0].mxu0
      %v3321 = vadd.f32 0.0, %v3320
      %v3322 = vpop.f32.mrb[0].mxu0
      %3323 = vmatprep.mubr.bf16.mxu0 %v3190
      %3324 = vmatmul.mubr.bf16.gmra.mrb[0].mxu0 %v3077
      %v3325 = vpop.f32.mrb[0].mxu0
      %v3326 = vadd.f32 0.0, %v3325
      %v3327 = vpop.f32.mrb[0].mxu0
      %v3328 = vpop.f32.mrb[0].mxu0
      %v3329 = vadd.f32 0.0, %v3328
      %v3330 = vpop.f32.mrb[0].mxu0
      %3331 = vmatprep.mubr.bf16.mxu0 %v3193
      %3332 = vmatmul.mubr.bf16.gmra.mrb[0].mxu0 %v3079
      %v3333 = vpop.f32.mrb[0].mxu0
      %v3334 = vadd.f32 0.0, %v3333
      %v3335 = vpop.f32.mrb[0].mxu0
      %v3336 = vpop.f32.mrb[0].mxu0
      %v3337 = vadd.f32 0.0, %v3336
      %v3338 = vpop.f32.mrb[0].mxu0
      %3339 = vdwg.mxu0
      %v3340 = vmax.f32 %v3230, %v3257
      %v3341 = vmax.f32 %v3233, %v3262
      %v3342 = vmax.f32 %v3238, %v3265
      %v3343 = vmax.f32 %v3241, %v3270
      %v3344 = vmax.f32 %v3246, %v3273
      %v3345 = vmax.f32 %v3249, %v3278
      %v3346 = vmax.f32 %v3254, %v3281
      %v3347 = vmax.f32 %v3286, %v3313
      %v3348 = vmax.f32 %v3289, %v3318
      %v3349 = vmax.f32 %v3294, %v3321
      %v3350 = vmax.f32 %v3297, %v3326
      %v3351 = vmax.f32 %v3302, %v3329
      %v3352 = vmax.f32 %v3305, %v3334
      %v3353 = vmax.f32 %v3310, %v3337
      %v3354 = vmax.f32 %v3340, %v3347
      %v3355 = vmax.f32 %v3341, %v3348
      %v3356 = vmax.f32 %v3342, %v3349
      %v3357 = vmax.f32 %v3343, %v3350
      %v3358 = vmax.f32 %v3344, %v3351
      %v3359 = vmax.f32 %v3345, %v3352
      %v3360 = vmax.f32 %v3346, %v3353
      %v3361 = vld [vmem:[%s3] sm:$0x1]
      %v3363 = vlaneseq
      %v3364 = vshrl.u32 %v3363, 7
      %v3365 = vsub.s32 0, %v3364
      %v3366 = vrot.slane %v3361, %v3365
      %v3368 = vadd.f32 %v3354, %v3366
      %v3369 = vadd.f32 %v3355, %v3366
      %v3370 = vadd.f32 %v3356, %v3366
      %v3371 = vadd.f32 %v3357, %v3366
      %v3372 = vadd.f32 %v3358, %v3366
      %v3373 = vadd.f32 %v3359, %v3366
      %v3374 = vadd.f32 %v3360, %v3366
      %v3375 = vmax.f32 %v3368, 0.0
      %v3376 = vmax.f32 %v3369, 0.0
      %v3377 = vmax.f32 %v3370, 0.0
      %v3378 = vmax.f32 %v3371, 0.0
      %v3379 = vmax.f32 %v3372, 0.0
      %v3380 = vmax.f32 %v3373, 0.0
      %v3381 = vmax.f32 %v3374, 0.0
      %v3382 = vlaneseq
      %vm3383 = vcmp.ge.s32.totalorder %v3382, 0
      %vm3384 = vcmp.lt.s32.totalorder %v3382, 32
      %vm3385 = vmand %vm3383, %vm3384
      %3386 = vst.msk [vmem:[#allocation4] sm:$0x1] %vm3385, %v3375
      %v3389 = vunpack.c.l.s4 1966171168
      %v3390 = vunpack.c.0.s8 %v3389
      %v3391 = vlaneseq
      %v3392 = vshrl.u32 %v3391, 7
      %v3393 = vsub.s32 %v3390, %v3392
      %v3394 = vrot.slane %v3375, %v3393
      %v3395 = vcombine.high %v3394, %v3394
      %v3397 = vunpack.c.l.s4 1966171168
      %v3398 = vunpack.c.0.s8 %v3397
      %v3399 = vlaneseq
      %v3400 = vshrl.u32 %v3399, 7
      %v3401 = vsub.s32 %v3398, %v3400
      %v3402 = vrot.slane %v3394, %v3401
      %v3404 = vunpack.c.l.s4 1966171168
      %v3405 = vunpack.c.0.s8 %v3404
      %v3406 = vlaneseq
      %v3407 = vshrl.u32 %v3406, 7
      %v3408 = vsub.s32 %v3405, %v3407
      %v3409 = vrot.slane %v3395, %v3408
      %3410 = vrot.lane.b32.xlu0 %v3409, 32
      %v3411 = vpop.permute.xlu0 %3410
      %vm3413 = vcmp.ge.s32.totalorder %v3382, 32
      %vm3414 = vcmp.lt.s32.totalorder %v3382, 64
      %vm3415 = vmand %vm3413, %vm3414
      %3416 = vst.msk [vmem:[#allocation4] sm:$0x1] %vm3415, %v3411
      %v3417 = vcombine.high %v3402, %v3402
      %3418 = vrot.lane.b32.xlu0 %v3417, 64
      %v3419 = vpop.permute.xlu0 %3418
      %vm3421 = vcmp.ge.s32.totalorder %v3382, 64
      %vm3422 = vcmp.lt.s32.totalorder %v3382, 96
      %vm3423 = vmand %vm3421, %vm3422
      %3424 = vst.msk [vmem:[#allocation4] sm:$0x1] %vm3423, %v3419
      %v3425 = vcombine.high %v3409, %v3409
      %3426 = vrot.lane.b32.xlu0 %v3425, 96
      %v3427 = vpop.permute.xlu0 %3426
      %vm3429 = vcmp.ge.s32.totalorder %v3382, 96
      %vm3430 = vcmp.lt.s32.totalorder %v3382, 128
      %vm3431 = vmand %vm3429, %vm3430
      %3432 = vst.msk [vmem:[#allocation4] sm:$0x1] %vm3431, %v3427
      %v3433 = vcombine.high %v3375, %v3375
      %v3435 = vunpack.c.l.s4 1966171168
      %v3436 = vunpack.c.0.s8 %v3435
      %v3437 = vlaneseq
      %v3438 = vshrl.u32 %v3437, 7
      %v3439 = vsub.s32 %v3436, %v3438
      %v3440 = vrot.slane %v3433, %v3439
      %v3442 = vunpack.c.l.s4 1966171168
      %v3443 = vunpack.c.0.s8 %v3442
      %v3444 = vlaneseq
      %v3445 = vshrl.u32 %v3444, 7
      %v3446 = vsub.s32 %v3443, %v3445
      %v3447 = vrot.slane %v3440, %v3446
      %3449 = vst.msk [vmem:[#allocation4 + $0x1] sm:$0x1] %vm3385, %v3447
      %v3450 = vcombine.high %v3440, %v3440
      %v3452 = vunpack.c.l.s4 1966171168
      %v3453 = vunpack.c.0.s8 %v3452
      %v3454 = vlaneseq
      %v3455 = vshrl.u32 %v3454, 7
      %v3456 = vsub.s32 %v3453, %v3455
      %v3457 = vrot.slane %v3450, %v3456
      %3458 = vrot.lane.b32.xlu0 %v3457, 32
      %v3459 = vpop.permute.xlu0 %3458
      %3461 = vst.msk [vmem:[#allocation4 + $0x1] sm:$0x1] %vm3415, %v3459
      %v3462 = vcombine.high %v3447, %v3447
      %3463 = vrot.lane.b32.xlu0 %v3462, 64
      %v3464 = vpop.permute.xlu0 %3463
      %3466 = vst.msk [vmem:[#allocation4 + $0x1] sm:$0x1] %vm3423, %v3464
      %v3467 = vcombine.high %v3457, %v3457
      %3468 = vrot.lane.b32.xlu0 %v3467, 96
      %v3469 = vpop.permute.xlu0 %3468
      %3471 = vst.msk [vmem:[#allocation4 + $0x1] sm:$0x1] %vm3431, %v3469
      %3472 = vst.msk [vmem:[#allocation4 + $0x2] sm:$0x1] %vm3385, %v3376
      %v3475 = vunpack.c.l.s4 1966171168
      %v3476 = vunpack.c.0.s8 %v3475
      %v3477 = vlaneseq
      %v3478 = vshrl.u32 %v3477, 7
      %v3479 = vsub.s32 %v3476, %v3478
      %v3480 = vrot.slane %v3376, %v3479
      %v3481 = vcombine.high %v3480, %v3480
      %v3483 = vunpack.c.l.s4 1966171168
      %v3484 = vunpack.c.0.s8 %v3483
      %v3485 = vlaneseq
      %v3486 = vshrl.u32 %v3485, 7
      %v3487 = vsub.s32 %v3484, %v3486
      %v3488 = vrot.slane %v3480, %v3487
      %v3490 = vunpack.c.l.s4 1966171168
      %v3491 = vunpack.c.0.s8 %v3490
      %v3492 = vlaneseq
      %v3493 = vshrl.u32 %v3492, 7
      %v3494 = vsub.s32 %v3491, %v3493
      %v3495 = vrot.slane %v3481, %v3494
      %3496 = vrot.lane.b32.xlu0 %v3495, 32
      %v3497 = vpop.permute.xlu0 %3496
      %3499 = vst.msk [vmem:[#allocation4 + $0x2] sm:$0x1] %vm3415, %v3497
      %v3500 = vcombine.high %v3488, %v3488
      %3501 = vrot.lane.b32.xlu0 %v3500, 64
      %v3502 = vpop.permute.xlu0 %3501
      %3504 = vst.msk [vmem:[#allocation4 + $0x2] sm:$0x1] %vm3423, %v3502
      %v3505 = vcombine.high %v3495, %v3495
      %3506 = vrot.lane.b32.xlu0 %v3505, 96
      %v3507 = vpop.permute.xlu0 %3506
      %3509 = vst.msk [vmem:[#allocation4 + $0x2] sm:$0x1] %vm3431, %v3507
      %v3510 = vcombine.high %v3376, %v3376
      %v3512 = vunpack.c.l.s4 1966171168
      %v3513 = vunpack.c.0.s8 %v3512
      %v3514 = vlaneseq
      %v3515 = vshrl.u32 %v3514, 7
      %v3516 = vsub.s32 %v3513, %v3515
      %v3517 = vrot.slane %v3510, %v3516
      %v3519 = vunpack.c.l.s4 1966171168
      %v3520 = vunpack.c.0.s8 %v3519
      %v3521 = vlaneseq
      %v3522 = vshrl.u32 %v3521, 7
      %v3523 = vsub.s32 %v3520, %v3522
      %v3524 = vrot.slane %v3517, %v3523
      %3526 = vst.msk [vmem:[#allocation4 + $0x3] sm:$0x1] %vm3385, %v3524
      %v3527 = vcombine.high %v3517, %v3517
      %v3529 = vunpack.c.l.s4 1966171168
      %v3530 = vunpack.c.0.s8 %v3529
      %v3531 = vlaneseq
      %v3532 = vshrl.u32 %v3531, 7
      %v3533 = vsub.s32 %v3530, %v3532
      %v3534 = vrot.slane %v3527, %v3533
      %3535 = vrot.lane.b32.xlu0 %v3534, 32
      %v3536 = vpop.permute.xlu0 %3535
      %3538 = vst.msk [vmem:[#allocation4 + $0x3] sm:$0x1] %vm3415, %v3536
      %v3539 = vcombine.high %v3524, %v3524
      %3540 = vrot.lane.b32.xlu0 %v3539, 64
      %v3541 = vpop.permute.xlu0 %3540
      %3543 = vst.msk [vmem:[#allocation4 + $0x3] sm:$0x1] %vm3423, %v3541
      %v3544 = vcombine.high %v3534, %v3534
      %3545 = vrot.lane.b32.xlu0 %v3544, 96
      %v3546 = vpop.permute.xlu0 %3545
      %3548 = vst.msk [vmem:[#allocation4 + $0x3] sm:$0x1] %vm3431, %v3546
      %3549 = vst.msk [vmem:[#allocation4 + $0x4] sm:$0x1] %vm3385, %v3377
      %v3552 = vunpack.c.l.s4 1966171168
      %v3553 = vunpack.c.0.s8 %v3552
      %v3554 = vlaneseq
      %v3555 = vshrl.u32 %v3554, 7
      %v3556 = vsub.s32 %v3553, %v3555
      %v3557 = vrot.slane %v3377, %v3556
      %v3558 = vcombine.high %v3557, %v3557
      %v3560 = vunpack.c.l.s4 1966171168
      %v3561 = vunpack.c.0.s8 %v3560
      %v3562 = vlaneseq
      %v3563 = vshrl.u32 %v3562, 7
      %v3564 = vsub.s32 %v3561, %v3563
      %v3565 = vrot.slane %v3557, %v3564
      %v3567 = vunpack.c.l.s4 1966171168
      %v3568 = vunpack.c.0.s8 %v3567
      %v3569 = vlaneseq
      %v3570 = vshrl.u32 %v3569, 7
      %v3571 = vsub.s32 %v3568, %v3570
      %v3572 = vrot.slane %v3558, %v3571
      %3573 = vrot.lane.b32.xlu0 %v3572, 32
      %v3574 = vpop.permute.xlu0 %3573
      %3576 = vst.msk [vmem:[#allocation4 + $0x4] sm:$0x1] %vm3415, %v3574
      %v3577 = vcombine.high %v3565, %v3565
      %3578 = vrot.lane.b32.xlu0 %v3577, 64
      %v3579 = vpop.permute.xlu0 %3578
      %3581 = vst.msk [vmem:[#allocation4 + $0x4] sm:$0x1] %vm3423, %v3579
      %v3582 = vcombine.high %v3572, %v3572
      %3583 = vrot.lane.b32.xlu0 %v3582, 96
      %v3584 = vpop.permute.xlu0 %3583
      %3586 = vst.msk [vmem:[#allocation4 + $0x4] sm:$0x1] %vm3431, %v3584
      %v3587 = vcombine.high %v3377, %v3377
      %v3589 = vunpack.c.l.s4 1966171168
      %v3590 = vunpack.c.0.s8 %v3589
      %v3591 = vlaneseq
      %v3592 = vshrl.u32 %v3591, 7
      %v3593 = vsub.s32 %v3590, %v3592
      %v3594 = vrot.slane %v3587, %v3593
      %v3596 = vunpack.c.l.s4 1966171168
      %v3597 = vunpack.c.0.s8 %v3596
      %v3598 = vlaneseq
      %v3599 = vshrl.u32 %v3598, 7
      %v3600 = vsub.s32 %v3597, %v3599
      %v3601 = vrot.slane %v3594, %v3600
      %3603 = vst.msk [vmem:[#allocation4 + $0x5] sm:$0x1] %vm3385, %v3601
      %v3604 = vcombine.high %v3594, %v3594
      %v3606 = vunpack.c.l.s4 1966171168
      %v3607 = vunpack.c.0.s8 %v3606
      %v3608 = vlaneseq
      %v3609 = vshrl.u32 %v3608, 7
      %v3610 = vsub.s32 %v3607, %v3609
      %v3611 = vrot.slane %v3604, %v3610
      %3612 = vrot.lane.b32.xlu0 %v3611, 32
      %v3613 = vpop.permute.xlu0 %3612
      %3615 = vst.msk [vmem:[#allocation4 + $0x5] sm:$0x1] %vm3415, %v3613
      %v3616 = vcombine.high %v3601, %v3601
      %3617 = vrot.lane.b32.xlu0 %v3616, 64
      %v3618 = vpop.permute.xlu0 %3617
      %3620 = vst.msk [vmem:[#allocation4 + $0x5] sm:$0x1] %vm3423, %v3618
      %v3621 = vcombine.high %v3611, %v3611
      %3622 = vrot.lane.b32.xlu0 %v3621, 96
      %v3623 = vpop.permute.xlu0 %3622
      %3625 = vst.msk [vmem:[#allocation4 + $0x5] sm:$0x1] %vm3431, %v3623
      %3626 = vst.msk [vmem:[#allocation4 + $0x6] sm:$0x1] %vm3385, %v3378
      %v3629 = vunpack.c.l.s4 1966171168
      %v3630 = vunpack.c.0.s8 %v3629
      %v3631 = vlaneseq
      %v3632 = vshrl.u32 %v3631, 7
      %v3633 = vsub.s32 %v3630, %v3632
      %v3634 = vrot.slane %v3378, %v3633
      %v3635 = vcombine.high %v3634, %v3634
      %v3637 = vunpack.c.l.s4 1966171168
      %v3638 = vunpack.c.0.s8 %v3637
      %v3639 = vlaneseq
      %v3640 = vshrl.u32 %v3639, 7
      %v3641 = vsub.s32 %v3638, %v3640
      %v3642 = vrot.slane %v3634, %v3641
      %v3644 = vunpack.c.l.s4 1966171168
      %v3645 = vunpack.c.0.s8 %v3644
      %v3646 = vlaneseq
      %v3647 = vshrl.u32 %v3646, 7
      %v3648 = vsub.s32 %v3645, %v3647
      %v3649 = vrot.slane %v3635, %v3648
      %3650 = vrot.lane.b32.xlu0 %v3649, 32
      %v3651 = vpop.permute.xlu0 %3650
      %3653 = vst.msk [vmem:[#allocation4 + $0x6] sm:$0x1] %vm3415, %v3651
      %v3654 = vcombine.high %v3642, %v3642
      %3655 = vrot.lane.b32.xlu0 %v3654, 64
      %v3656 = vpop.permute.xlu0 %3655
      %3658 = vst.msk [vmem:[#allocation4 + $0x6] sm:$0x1] %vm3423, %v3656
      %v3659 = vcombine.high %v3649, %v3649
      %3660 = vrot.lane.b32.xlu0 %v3659, 96
      %v3661 = vpop.permute.xlu0 %3660
      %3663 = vst.msk [vmem:[#allocation4 + $0x6] sm:$0x1] %vm3431, %v3661
      %v3664 = vcombine.high %v3378, %v3378
      %v3666 = vunpack.c.l.s4 1966171168
      %v3667 = vunpack.c.0.s8 %v3666
      %v3668 = vlaneseq
      %v3669 = vshrl.u32 %v3668, 7
      %v3670 = vsub.s32 %v3667, %v3669
      %v3671 = vrot.slane %v3664, %v3670
      %v3673 = vunpack.c.l.s4 1966171168
      %v3674 = vunpack.c.0.s8 %v3673
      %v3675 = vlaneseq
      %v3676 = vshrl.u32 %v3675, 7
      %v3677 = vsub.s32 %v3674, %v3676
      %v3678 = vrot.slane %v3671, %v3677
      %3680 = vst.msk [vmem:[#allocation4 + $0x7] sm:$0x1] %vm3385, %v3678
      %v3681 = vcombine.high %v3671, %v3671
      %v3683 = vunpack.c.l.s4 1966171168
      %v3684 = vunpack.c.0.s8 %v3683
      %v3685 = vlaneseq
      %v3686 = vshrl.u32 %v3685, 7
      %v3687 = vsub.s32 %v3684, %v3686
      %v3688 = vrot.slane %v3681, %v3687
      %3689 = vrot.lane.b32.xlu0 %v3688, 32
      %v3690 = vpop.permute.xlu0 %3689
      %3692 = vst.msk [vmem:[#allocation4 + $0x7] sm:$0x1] %vm3415, %v3690
      %v3693 = vcombine.high %v3678, %v3678
      %3694 = vrot.lane.b32.xlu0 %v3693, 64
      %v3695 = vpop.permute.xlu0 %3694
      %3697 = vst.msk [vmem:[#allocation4 + $0x7] sm:$0x1] %vm3423, %v3695
      %v3698 = vcombine.high %v3688, %v3688
      %3699 = vrot.lane.b32.xlu0 %v3698, 96
      %v3700 = vpop.permute.xlu0 %3699
      %3702 = vst.msk [vmem:[#allocation4 + $0x7] sm:$0x1] %vm3431, %v3700
      %3703 = vst.msk [vmem:[#allocation4 + $0x8] sm:$0x1] %vm3385, %v3379
      %v3706 = vunpack.c.l.s4 1966171168
      %v3707 = vunpack.c.0.s8 %v3706
      %v3708 = vlaneseq
      %v3709 = vshrl.u32 %v3708, 7
      %v3710 = vsub.s32 %v3707, %v3709
      %v3711 = vrot.slane %v3379, %v3710
      %v3712 = vcombine.high %v3711, %v3711
      %v3714 = vunpack.c.l.s4 1966171168
      %v3715 = vunpack.c.0.s8 %v3714
      %v3716 = vlaneseq
      %v3717 = vshrl.u32 %v3716, 7
      %v3718 = vsub.s32 %v3715, %v3717
      %v3719 = vrot.slane %v3711, %v3718
      %v3721 = vunpack.c.l.s4 1966171168
      %v3722 = vunpack.c.0.s8 %v3721
      %v3723 = vlaneseq
      %v3724 = vshrl.u32 %v3723, 7
      %v3725 = vsub.s32 %v3722, %v3724
      %v3726 = vrot.slane %v3712, %v3725
      %3727 = vrot.lane.b32.xlu0 %v3726, 32
      %v3728 = vpop.permute.xlu0 %3727
      %3730 = vst.msk [vmem:[#allocation4 + $0x8] sm:$0x1] %vm3415, %v3728
      %v3731 = vcombine.high %v3719, %v3719
      %3732 = vrot.lane.b32.xlu0 %v3731, 64
      %v3733 = vpop.permute.xlu0 %3732
      %3735 = vst.msk [vmem:[#allocation4 + $0x8] sm:$0x1] %vm3423, %v3733
      %v3736 = vcombine.high %v3726, %v3726
      %3737 = vrot.lane.b32.xlu0 %v3736, 96
      %v3738 = vpop.permute.xlu0 %3737
      %3740 = vst.msk [vmem:[#allocation4 + $0x8] sm:$0x1] %vm3431, %v3738
      %v3741 = vcombine.high %v3379, %v3379
      %v3743 = vunpack.c.l.s4 1966171168
      %v3744 = vunpack.c.0.s8 %v3743
      %v3745 = vlaneseq
      %v3746 = vshrl.u32 %v3745, 7
      %v3747 = vsub.s32 %v3744, %v3746
      %v3748 = vrot.slane %v3741, %v3747
      %v3750 = vunpack.c.l.s4 1966171168
      %v3751 = vunpack.c.0.s8 %v3750
      %v3752 = vlaneseq
      %v3753 = vshrl.u32 %v3752, 7
      %v3754 = vsub.s32 %v3751, %v3753
      %v3755 = vrot.slane %v3748, %v3754
      %3757 = vst.msk [vmem:[#allocation4 + $0x9] sm:$0x1] %vm3385, %v3755
      %v3758 = vcombine.high %v3748, %v3748
      %v3760 = vunpack.c.l.s4 1966171168
      %v3761 = vunpack.c.0.s8 %v3760
      %v3762 = vlaneseq
      %v3763 = vshrl.u32 %v3762, 7
      %v3764 = vsub.s32 %v3761, %v3763
      %v3765 = vrot.slane %v3758, %v3764
      %3766 = vrot.lane.b32.xlu0 %v3765, 32
      %v3767 = vpop.permute.xlu0 %3766
      %3769 = vst.msk [vmem:[#allocation4 + $0x9] sm:$0x1] %vm3415, %v3767
      %v3770 = vcombine.high %v3755, %v3755
      %3771 = vrot.lane.b32.xlu0 %v3770, 64
      %v3772 = vpop.permute.xlu0 %3771
      %3774 = vst.msk [vmem:[#allocation4 + $0x9] sm:$0x1] %vm3423, %v3772
      %v3775 = vcombine.high %v3765, %v3765
      %3776 = vrot.lane.b32.xlu0 %v3775, 96
      %v3777 = vpop.permute.xlu0 %3776
      %3779 = vst.msk [vmem:[#allocation4 + $0x9] sm:$0x1] %vm3431, %v3777
      %3780 = vst.msk [vmem:[#allocation4 + $0xa] sm:$0x1] %vm3385, %v3380
      %v3783 = vunpack.c.l.s4 1966171168
      %v3784 = vunpack.c.0.s8 %v3783
      %v3785 = vlaneseq
      %v3786 = vshrl.u32 %v3785, 7
      %v3787 = vsub.s32 %v3784, %v3786
      %v3788 = vrot.slane %v3380, %v3787
      %v3789 = vcombine.high %v3788, %v3788
      %v3791 = vunpack.c.l.s4 1966171168
      %v3792 = vunpack.c.0.s8 %v3791
      %v3793 = vlaneseq
      %v3794 = vshrl.u32 %v3793, 7
      %v3795 = vsub.s32 %v3792, %v3794
      %v3796 = vrot.slane %v3788, %v3795
      %v3798 = vunpack.c.l.s4 1966171168
      %v3799 = vunpack.c.0.s8 %v3798
      %v3800 = vlaneseq
      %v3801 = vshrl.u32 %v3800, 7
      %v3802 = vsub.s32 %v3799, %v3801
      %v3803 = vrot.slane %v3789, %v3802
      %3804 = vrot.lane.b32.xlu0 %v3803, 32
      %v3805 = vpop.permute.xlu0 %3804
      %3807 = vst.msk [vmem:[#allocation4 + $0xa] sm:$0x1] %vm3415, %v3805
      %v3808 = vcombine.high %v3796, %v3796
      %3809 = vrot.lane.b32.xlu0 %v3808, 64
      %v3810 = vpop.permute.xlu0 %3809
      %3812 = vst.msk [vmem:[#allocation4 + $0xa] sm:$0x1] %vm3423, %v3810
      %v3813 = vcombine.high %v3803, %v3803
      %3814 = vrot.lane.b32.xlu0 %v3813, 96
      %v3815 = vpop.permute.xlu0 %3814
      %3817 = vst.msk [vmem:[#allocation4 + $0xa] sm:$0x1] %vm3431, %v3815
      %v3818 = vcombine.high %v3380, %v3380
      %v3820 = vunpack.c.l.s4 1966171168
      %v3821 = vunpack.c.0.s8 %v3820
      %v3822 = vlaneseq
      %v3823 = vshrl.u32 %v3822, 7
      %v3824 = vsub.s32 %v3821, %v3823
      %v3825 = vrot.slane %v3818, %v3824
      %v3827 = vunpack.c.l.s4 1966171168
      %v3828 = vunpack.c.0.s8 %v3827
      %v3829 = vlaneseq
      %v3830 = vshrl.u32 %v3829, 7
      %v3831 = vsub.s32 %v3828, %v3830
      %v3832 = vrot.slane %v3825, %v3831
      %3834 = vst.msk [vmem:[#allocation4 + $0xb] sm:$0x1] %vm3385, %v3832
      %v3835 = vcombine.high %v3825, %v3825
      %v3837 = vunpack.c.l.s4 1966171168
      %v3838 = vunpack.c.0.s8 %v3837
      %v3839 = vlaneseq
      %v3840 = vshrl.u32 %v3839, 7
      %v3841 = vsub.s32 %v3838, %v3840
      %v3842 = vrot.slane %v3835, %v3841
      %3843 = vrot.lane.b32.xlu0 %v3842, 32
      %v3844 = vpop.permute.xlu0 %3843
      %3846 = vst.msk [vmem:[#allocation4 + $0xb] sm:$0x1] %vm3415, %v3844
      %v3847 = vcombine.high %v3832, %v3832
      %3848 = vrot.lane.b32.xlu0 %v3847, 64
      %v3849 = vpop.permute.xlu0 %3848
      %3851 = vst.msk [vmem:[#allocation4 + $0xb] sm:$0x1] %vm3423, %v3849
      %v3852 = vcombine.high %v3842, %v3842
      %3853 = vrot.lane.b32.xlu0 %v3852, 96
      %v3854 = vpop.permute.xlu0 %3853
      %3856 = vst.msk [vmem:[#allocation4 + $0xb] sm:$0x1] %vm3431, %v3854
      %3857 = vst.msk [vmem:[#allocation4 + $0xc] sm:$0x1] %vm3385, %v3381
      %v3860 = vunpack.c.l.s4 1966171168
      %v3861 = vunpack.c.0.s8 %v3860
      %v3862 = vlaneseq
      %v3863 = vshrl.u32 %v3862, 7
      %v3864 = vsub.s32 %v3861, %v3863
      %v3865 = vrot.slane %v3381, %v3864
      %v3866 = vcombine.high %v3865, %v3865
      %v3868 = vunpack.c.l.s4 1966171168
      %v3869 = vunpack.c.0.s8 %v3868
      %v3870 = vlaneseq
      %v3871 = vshrl.u32 %v3870, 7
      %v3872 = vsub.s32 %v3869, %v3871
      %v3873 = vrot.slane %v3865, %v3872
      %v3875 = vunpack.c.l.s4 1966171168
      %v3876 = vunpack.c.0.s8 %v3875
      %v3877 = vlaneseq
      %v3878 = vshrl.u32 %v3877, 7
      %v3879 = vsub.s32 %v3876, %v3878
      %v3880 = vrot.slane %v3866, %v3879
      %3881 = vrot.lane.b32.xlu0 %v3880, 32
      %v3882 = vpop.permute.xlu0 %3881
      %3884 = vst.msk [vmem:[#allocation4 + $0xc] sm:$0x1] %vm3415, %v3882
      %v3885 = vcombine.high %v3873, %v3873
      %3886 = vrot.lane.b32.xlu0 %v3885, 64
      %v3887 = vpop.permute.xlu0 %3886
      %3889 = vst.msk [vmem:[#allocation4 + $0xc] sm:$0x1] %vm3423, %v3887
      %v3890 = vcombine.high %v3880, %v3880
      %3891 = vrot.lane.b32.xlu0 %v3890, 96
      %v3892 = vpop.permute.xlu0 %3891
      %3894 = vst.msk [vmem:[#allocation4 + $0xc] sm:$0x1] %vm3431, %v3892
      %v3895 = vcombine.high %v3381, %v3381
      %v3897 = vunpack.c.l.s4 1966171168
      %v3898 = vunpack.c.0.s8 %v3897
      %v3899 = vlaneseq
      %v3900 = vshrl.u32 %v3899, 7
      %v3901 = vsub.s32 %v3898, %v3900
      %v3902 = vrot.slane %v3895, %v3901
      %v3904 = vunpack.c.l.s4 1966171168
      %v3905 = vunpack.c.0.s8 %v3904
      %v3906 = vlaneseq
      %v3907 = vshrl.u32 %v3906, 7
      %v3908 = vsub.s32 %v3905, %v3907
      %v3909 = vrot.slane %v3902, %v3908
      %3911 = vst.msk [vmem:[#allocation4 + $0xd] sm:$0x1] %vm3385, %v3909
      %v3912 = vcombine.high %v3902, %v3902
      %v3914 = vunpack.c.l.s4 1966171168
      %v3915 = vunpack.c.0.s8 %v3914
      %v3916 = vlaneseq
      %v3917 = vshrl.u32 %v3916, 7
      %v3918 = vsub.s32 %v3915, %v3917
      %v3919 = vrot.slane %v3912, %v3918
      %3920 = vrot.lane.b32.xlu0 %v3919, 32
      %v3921 = vpop.permute.xlu0 %3920
      %3923 = vst.msk [vmem:[#allocation4 + $0xd] sm:$0x1] %vm3415, %v3921
      %v3924 = vcombine.high %v3909, %v3909
      %3925 = vrot.lane.b32.xlu0 %v3924, 64
      %v3926 = vpop.permute.xlu0 %3925
      %3928 = vst.msk [vmem:[#allocation4 + $0xd] sm:$0x1] %vm3423, %v3926
      %v3929 = vld [vmem:[#allocation4] sm:$0xff]
      %v3930 = vld [vmem:[#allocation4 + $0x8] sm:$0x3f]
      %v3933 = vlaneseq
      %v3934 = vshrl.u32 %v3933, 7
      %v3935 = vsub.s32 0, %v3934
      %v3936 = vrot.slane %v3929, %v3935
      %v3937 = vlaneseq
      %v3938 = vshrl.u32 %v3937, 7
      %v3939 = vsub.s32 1, %v3938
      %v3940 = vrot.slane %v3929, %v3939
      %v3941 = vlaneseq
      %v3942 = vshrl.u32 %v3941, 7
      %v3943 = vsub.s32 2, %v3942
      %v3944 = vrot.slane %v3929, %v3943
      %v3945 = vlaneseq
      %v3946 = vshrl.u32 %v3945, 7
      %v3947 = vsub.s32 3, %v3946
      %v3948 = vrot.slane %v3929, %v3947
      %v3949 = vlaneseq
      %v3950 = vshrl.u32 %v3949, 7
      %v3951 = vsub.s32 4, %v3950
      %v3952 = vrot.slane %v3929, %v3951
      %v3953 = vlaneseq
      %v3954 = vshrl.u32 %v3953, 7
      %v3955 = vsub.s32 5, %v3954
      %v3956 = vrot.slane %v3929, %v3955
      %v3957 = vlaneseq
      %v3958 = vshrl.u32 %v3957, 7
      %v3959 = vsub.s32 6, %v3958
      %v3960 = vrot.slane %v3929, %v3959
      %v3961 = vlaneseq
      %v3962 = vshrl.u32 %v3961, 7
      %v3963 = vsub.s32 7, %v3962
      %v3964 = vrot.slane %v3929, %v3963
      %v3965 = vlaneseq
      %v3966 = vshrl.u32 %v3965, 7
      %v3967 = vsub.s32 0, %v3966
      %v3968 = vrot.slane %v3930, %v3967
      %v3969 = vlaneseq
      %v3970 = vshrl.u32 %v3969, 7
      %v3971 = vsub.s32 1, %v3970
      %v3972 = vrot.slane %v3930, %v3971
      %v3973 = vlaneseq
      %v3974 = vshrl.u32 %v3973, 7
      %v3975 = vsub.s32 2, %v3974
      %v3976 = vrot.slane %v3930, %v3975
      %v3977 = vlaneseq
      %v3978 = vshrl.u32 %v3977, 7
      %v3979 = vsub.s32 3, %v3978
      %v3980 = vrot.slane %v3930, %v3979
      %v3981 = vlaneseq
      %v3982 = vshrl.u32 %v3981, 7
      %v3983 = vsub.s32 4, %v3982
      %v3984 = vrot.slane %v3930, %v3983
      %v3985 = vlaneseq
      %v3986 = vshrl.u32 %v3985, 7
      %v3987 = vsub.s32 5, %v3986
      %v3988 = vrot.slane %v3930, %v3987
      %v4003 = vpack.c.bf16 %v3936, %v3936
      %v4004 = vpack.c.bf16 %v3940, %v3940
      %v4005 = vpack.c.bf16 %v3944, %v3944
      %v4006 = vpack.c.bf16 %v3948, %v3948
      %v4007 = vpack.c.bf16 %v3952, %v3952
      %v4008 = vpack.c.bf16 %v3956, %v3956
      %v4009 = vpack.c.bf16 %v3960, %v3960
      %v4010 = vpack.c.bf16 %v3964, %v3964
      %v4011 = vpack.c.bf16 %v3968, %v3968
      %v4012 = vpack.c.bf16 %v3972, %v3972
      %v4013 = vpack.c.bf16 %v3976, %v3976
      %v4014 = vpack.c.bf16 %v3980, %v3980
      %v4015 = vpack.c.bf16 %v3984, %v3984
      %v4016 = vpack.c.bf16 %v3988, %v3988
      %v4017 = vld [vmem:[%s4] sm:$0xff]
      %v4018 = vld [vmem:[%s4 + $0x8] sm:$0xff]
      %v4019 = vld [vmem:[%s4 + $0x10] sm:$0xff]
      %v4020 = vld [vmem:[%s4 + $0x18] sm:$0xff]
      %v4021 = vld [vmem:[%s4 + $0x20] sm:$0xff]
      %v4022 = vld [vmem:[%s4 + $0x28] sm:$0xff]
      %v4023 = vld [vmem:[%s4 + $0x30] sm:$0xff]
      %v4024 = vld [vmem:[%s4 + $0x38] sm:$0xff]
      %v4025 = vld [vmem:[%s4 + $0x40] sm:$0xff]
      %v4026 = vld [vmem:[%s4 + $0x48] sm:$0xff]
      %v4027 = vld [vmem:[%s4 + $0x50] sm:$0xff]
      %v4028 = vld [vmem:[%s4 + $0x58] sm:$0xff]
      %v4029 = vld [vmem:[%s4 + $0x60] sm:$0xff]
      %v4030 = vld [vmem:[%s4 + $0x68] sm:$0xff]
      %v4031 = vld [vmem:[%s4 + $0x70] sm:$0xff]
      %v4032 = vld [vmem:[%s4 + $0x78] sm:$0xff]
      %v4033 = vld [vmem:[%s4 + $0x80] sm:$0xff]
      %v4034 = vld [vmem:[%s4 + $0x88] sm:$0xff]
      %v4035 = vld [vmem:[%s4 + $0x90] sm:$0xff]
      %v4036 = vld [vmem:[%s4 + $0x98] sm:$0xff]
      %v4037 = vld [vmem:[%s4 + $0xa0] sm:$0xff]
      %v4038 = vld [vmem:[%s4 + $0xa8] sm:$0xff]
      %v4039 = vld [vmem:[%s4 + $0xb0] sm:$0xff]
      %v4040 = vld [vmem:[%s4 + $0xb8] sm:$0xff]
      %v4041 = vld [vmem:[%s4 + $0xc0] sm:$0xff]
      %v4042 = vld [vmem:[%s4 + $0xc8] sm:$0xff]
      %v4043 = vld [vmem:[%s4 + $0xd0] sm:$0xff]
      %v4044 = vld [vmem:[%s4 + $0xd8] sm:$0xff]
      %v4045 = vld [vmem:[%s4 + $0xe0] sm:$0xff]
      %v4046 = vld [vmem:[%s4 + $0xe8] sm:$0xff]
      %v4047 = vld [vmem:[%s4 + $0xf0] sm:$0xff]
      %v4048 = vld [vmem:[%s4 + $0xf8] sm:$0xff]
      %v4049 = vld [vmem:[%s4 + $0x100] sm:$0xff]
      %v4050 = vld [vmem:[%s4 + $0x108] sm:$0xff]
      %v4051 = vld [vmem:[%s4 + $0x110] sm:$0xff]
      %v4052 = vld [vmem:[%s4 + $0x118] sm:$0xff]
      %v4053 = vld [vmem:[%s4 + $0x120] sm:$0xff]
      %v4054 = vld [vmem:[%s4 + $0x128] sm:$0xff]
      %v4055 = vld [vmem:[%s4 + $0x130] sm:$0xff]
      %v4056 = vld [vmem:[%s4 + $0x138] sm:$0xff]
      %v4057 = vld [vmem:[%s4 + $0x140] sm:$0xff]
      %v4058 = vld [vmem:[%s4 + $0x148] sm:$0xff]
      %v4059 = vld [vmem:[%s4 + $0x150] sm:$0xff]
      %v4060 = vld [vmem:[%s4 + $0x158] sm:$0xff]
      %v4061 = vld [vmem:[%s4 + $0x160] sm:$0xff]
      %v4062 = vld [vmem:[%s4 + $0x168] sm:$0xff]
      %v4063 = vld [vmem:[%s4 + $0x170] sm:$0xff]
      %v4064 = vld [vmem:[%s4 + $0x178] sm:$0xff]
      %v4065 = vld [vmem:[%s4 + $0x180] sm:$0xff]
      %v4066 = vld [vmem:[%s4 + $0x188] sm:$0xff]
      %v4067 = vld [vmem:[%s4 + $0x190] sm:$0xff]
      %v4068 = vld [vmem:[%s4 + $0x198] sm:$0xff]
      %v4069 = vld [vmem:[%s4 + $0x1a0] sm:$0xff]
      %v4070 = vld [vmem:[%s4 + $0x1a8] sm:$0xff]
      %v4071 = vld [vmem:[%s4 + $0x1b0] sm:$0xff]
      %v4072 = vld [vmem:[%s4 + $0x1b8] sm:$0xff]
      %v4073 = vld [vmem:[%s4 + $0x1c0] sm:$0xff]
      %v4074 = vld [vmem:[%s4 + $0x1c8] sm:$0xff]
      %v4075 = vld [vmem:[%s4 + $0x1d0] sm:$0xff]
      %v4076 = vld [vmem:[%s4 + $0x1d8] sm:$0xff]
      %v4077 = vld [vmem:[%s4 + $0x1e0] sm:$0xff]
      %v4078 = vld [vmem:[%s4 + $0x1e8] sm:$0xff]
      %v4079 = vld [vmem:[%s4 + $0x1f0] sm:$0xff]
      %v4080 = vld [vmem:[%s4 + $0x1f8] sm:$0xff]
      %v4081 = vld [vmem:[%s4 + $0x200] sm:$0xff]
      %v4082 = vld [vmem:[%s4 + $0x208] sm:$0xff]
      %v4083 = vld [vmem:[%s4 + $0x210] sm:$0xff]
      %v4084 = vld [vmem:[%s4 + $0x218] sm:$0xff]
      %v4085 = vld [vmem:[%s4 + $0x220] sm:$0xff]
      %v4086 = vld [vmem:[%s4 + $0x228] sm:$0xff]
      %v4087 = vld [vmem:[%s4 + $0x230] sm:$0xff]
      %v4088 = vld [vmem:[%s4 + $0x238] sm:$0xff]
      %v4089 = vld [vmem:[%s4 + $0x240] sm:$0xff]
      %v4090 = vld [vmem:[%s4 + $0x248] sm:$0xff]
      %v4091 = vld [vmem:[%s4 + $0x250] sm:$0xff]
      %v4092 = vld [vmem:[%s4 + $0x258] sm:$0xff]
      %v4093 = vld [vmem:[%s4 + $0x260] sm:$0xff]
      %v4094 = vld [vmem:[%s4 + $0x268] sm:$0xff]
      %v4095 = vld [vmem:[%s4 + $0x270] sm:$0xff]
      %v4096 = vld [vmem:[%s4 + $0x278] sm:$0xff]
      %v4097 = vld [vmem:[%s4 + $0x280] sm:$0xff]
      %v4098 = vld [vmem:[%s4 + $0x288] sm:$0xff]
      %v4099 = vld [vmem:[%s4 + $0x290] sm:$0xff]
      %v4100 = vld [vmem:[%s4 + $0x298] sm:$0xff]
      %v4101 = vld [vmem:[%s4 + $0x2a0] sm:$0xff]
      %v4102 = vld [vmem:[%s4 + $0x2a8] sm:$0xff]
      %v4103 = vld [vmem:[%s4 + $0x2b0] sm:$0xff]
      %v4104 = vld [vmem:[%s4 + $0x2b8] sm:$0xff]
      %v4105 = vld [vmem:[%s4 + $0x2c0] sm:$0xff]
      %v4106 = vld [vmem:[%s4 + $0x2c8] sm:$0xff]
      %v4107 = vld [vmem:[%s4 + $0x2d0] sm:$0xff]
      %v4108 = vld [vmem:[%s4 + $0x2d8] sm:$0xff]
      %v4109 = vld [vmem:[%s4 + $0x2e0] sm:$0xff]
      %v4110 = vld [vmem:[%s4 + $0x2e8] sm:$0xff]
      %v4111 = vld [vmem:[%s4 + $0x2f0] sm:$0xff]
      %v4112 = vld [vmem:[%s4 + $0x2f8] sm:$0xff]
      %v4113 = vld [vmem:[%s4 + $0x300] sm:$0xff]
      %v4114 = vld [vmem:[%s4 + $0x308] sm:$0xff]
      %v4115 = vld [vmem:[%s4 + $0x310] sm:$0xff]
      %v4116 = vld [vmem:[%s4 + $0x318] sm:$0xff]
      %v4117 = vld [vmem:[%s4 + $0x320] sm:$0xff]
      %v4118 = vld [vmem:[%s4 + $0x328] sm:$0xff]
      %v4119 = vld [vmem:[%s4 + $0x330] sm:$0xff]
      %v4120 = vld [vmem:[%s4 + $0x338] sm:$0xff]
      %v4121 = vld [vmem:[%s4 + $0x340] sm:$0xff]
      %v4122 = vld [vmem:[%s4 + $0x348] sm:$0xff]
      %v4123 = vld [vmem:[%s4 + $0x350] sm:$0xff]
      %v4124 = vld [vmem:[%s4 + $0x358] sm:$0xff]
      %v4125 = vld [vmem:[%s4 + $0x360] sm:$0xff]
      %v4126 = vld [vmem:[%s4 + $0x368] sm:$0xff]
      %v4127 = vld [vmem:[%s4 + $0x370] sm:$0xff]
      %v4128 = vld [vmem:[%s4 + $0x378] sm:$0xff]
      %v4129 = vld [vmem:[%s4 + $0x380] sm:$0xff]
      %v4130 = vld [vmem:[%s4 + $0x388] sm:$0xff]
      %v4131 = vld [vmem:[%s4 + $0x390] sm:$0xff]
      %v4132 = vld [vmem:[%s4 + $0x398] sm:$0xff]
      %v4133 = vld [vmem:[%s4 + $0x3a0] sm:$0xff]
      %v4134 = vld [vmem:[%s4 + $0x3a8] sm:$0xff]
      %v4135 = vld [vmem:[%s4 + $0x3b0] sm:$0xff]
      %v4136 = vld [vmem:[%s4 + $0x3b8] sm:$0xff]
      %v4137 = vld [vmem:[%s4 + $0x3c0] sm:$0xff]
      %v4138 = vld [vmem:[%s4 + $0x3c8] sm:$0xff]
      %v4139 = vld [vmem:[%s4 + $0x3d0] sm:$0xff]
      %v4140 = vld [vmem:[%s4 + $0x3d8] sm:$0xff]
      %v4141 = vld [vmem:[%s4 + $0x3e0] sm:$0xff]
      %v4142 = vld [vmem:[%s4 + $0x3e8] sm:$0xff]
      %v4143 = vld [vmem:[%s4 + $0x3f0] sm:$0xff]
      %v4144 = vld [vmem:[%s4 + $0x3f8] sm:$0xff]
      %v4145 = vld [vmem:[%s4 + $0x400] sm:$0xff]
      %v4146 = vld [vmem:[%s4 + $0x408] sm:$0xff]
      %v4147 = vld [vmem:[%s4 + $0x410] sm:$0xff]
      %v4148 = vld [vmem:[%s4 + $0x418] sm:$0xff]
      %v4149 = vld [vmem:[%s4 + $0x420] sm:$0xff]
      %v4150 = vld [vmem:[%s4 + $0x428] sm:$0xff]
      %v4151 = vld [vmem:[%s4 + $0x430] sm:$0xff]
      %v4152 = vld [vmem:[%s4 + $0x438] sm:$0xff]
      %v4153 = vld [vmem:[%s4 + $0x440] sm:$0xff]
      %v4154 = vld [vmem:[%s4 + $0x448] sm:$0xff]
      %v4155 = vld [vmem:[%s4 + $0x450] sm:$0xff]
      %v4156 = vld [vmem:[%s4 + $0x458] sm:$0xff]
      %v4157 = vld [vmem:[%s4 + $0x460] sm:$0xff]
      %v4158 = vld [vmem:[%s4 + $0x468] sm:$0xff]
      %v4159 = vld [vmem:[%s4 + $0x470] sm:$0xff]
      %v4160 = vld [vmem:[%s4 + $0x478] sm:$0xff]
      %v4161 = vld [vmem:[%s4 + $0x480] sm:$0xff]
      %v4162 = vld [vmem:[%s4 + $0x488] sm:$0xff]
      %v4163 = vld [vmem:[%s4 + $0x490] sm:$0xff]
      %v4164 = vld [vmem:[%s4 + $0x498] sm:$0xff]
      %v4165 = vld [vmem:[%s4 + $0x4a0] sm:$0xff]
      %v4166 = vld [vmem:[%s4 + $0x4a8] sm:$0xff]
      %v4167 = vld [vmem:[%s4 + $0x4b0] sm:$0xff]
      %v4168 = vld [vmem:[%s4 + $0x4b8] sm:$0xff]
      %v4169 = vld [vmem:[%s4 + $0x4c0] sm:$0xff]
      %v4170 = vld [vmem:[%s4 + $0x4c8] sm:$0xff]
      %v4171 = vld [vmem:[%s4 + $0x4d0] sm:$0xff]
      %v4172 = vld [vmem:[%s4 + $0x4d8] sm:$0xff]
      %v4173 = vld [vmem:[%s4 + $0x4e0] sm:$0xff]
      %v4174 = vld [vmem:[%s4 + $0x4e8] sm:$0xff]
      %v4175 = vld [vmem:[%s4 + $0x4f0] sm:$0xff]
      %v4176 = vld [vmem:[%s4 + $0x4f8] sm:$0xff]
      %v4177 = vld [vmem:[%s4 + $0x500] sm:$0xff]
      %v4178 = vld [vmem:[%s4 + $0x508] sm:$0xff]
      %v4179 = vld [vmem:[%s4 + $0x510] sm:$0xff]
      %v4180 = vld [vmem:[%s4 + $0x518] sm:$0xff]
      %v4181 = vld [vmem:[%s4 + $0x520] sm:$0xff]
      %v4182 = vld [vmem:[%s4 + $0x528] sm:$0xff]
      %v4183 = vld [vmem:[%s4 + $0x530] sm:$0xff]
      %v4184 = vld [vmem:[%s4 + $0x538] sm:$0xff]
      %v4185 = vld [vmem:[%s4 + $0x540] sm:$0xff]
      %v4186 = vld [vmem:[%s4 + $0x548] sm:$0xff]
      %v4187 = vld [vmem:[%s4 + $0x550] sm:$0xff]
      %v4188 = vld [vmem:[%s4 + $0x558] sm:$0xff]
      %v4189 = vld [vmem:[%s4 + $0x560] sm:$0xff]
      %v4190 = vld [vmem:[%s4 + $0x568] sm:$0xff]
      %v4191 = vld [vmem:[%s4 + $0x570] sm:$0xff]
      %v4192 = vld [vmem:[%s4 + $0x578] sm:$0xff]
      %v4193 = vld [vmem:[%s4 + $0x580] sm:$0xff]
      %v4194 = vld [vmem:[%s4 + $0x588] sm:$0xff]
      %v4195 = vld [vmem:[%s4 + $0x590] sm:$0xff]
      %v4196 = vld [vmem:[%s4 + $0x598] sm:$0xff]
      %v4197 = vld [vmem:[%s4 + $0x5a0] sm:$0xff]
      %v4198 = vld [vmem:[%s4 + $0x5a8] sm:$0xff]
      %v4199 = vld [vmem:[%s4 + $0x5b0] sm:$0xff]
      %v4200 = vld [vmem:[%s4 + $0x5b8] sm:$0xff]
      %v4201 = vld [vmem:[%s4 + $0x5c0] sm:$0xff]
      %v4202 = vld [vmem:[%s4 + $0x5c8] sm:$0xff]
      %v4203 = vld [vmem:[%s4 + $0x5d0] sm:$0xff]
      %v4204 = vld [vmem:[%s4 + $0x5d8] sm:$0xff]
      %v4205 = vld [vmem:[%s4 + $0x5e0] sm:$0xff]
      %v4206 = vld [vmem:[%s4 + $0x5e8] sm:$0xff]
      %v4207 = vld [vmem:[%s4 + $0x5f0] sm:$0xff]
      %v4208 = vld [vmem:[%s4 + $0x5f8] sm:$0xff]
      %v4209 = vld [vmem:[%s4 + $0x600] sm:$0xff]
      %v4210 = vld [vmem:[%s4 + $0x608] sm:$0xff]
      %v4211 = vld [vmem:[%s4 + $0x610] sm:$0xff]
      %v4212 = vld [vmem:[%s4 + $0x618] sm:$0xff]
      %v4213 = vld [vmem:[%s4 + $0x620] sm:$0xff]
      %v4214 = vld [vmem:[%s4 + $0x628] sm:$0xff]
      %v4215 = vld [vmem:[%s4 + $0x630] sm:$0xff]
      %v4216 = vld [vmem:[%s4 + $0x638] sm:$0xff]
      %v4217 = vld [vmem:[%s4 + $0x640] sm:$0xff]
      %v4218 = vld [vmem:[%s4 + $0x648] sm:$0xff]
      %v4219 = vld [vmem:[%s4 + $0x650] sm:$0xff]
      %v4220 = vld [vmem:[%s4 + $0x658] sm:$0xff]
      %v4221 = vld [vmem:[%s4 + $0x660] sm:$0xff]
      %v4222 = vld [vmem:[%s4 + $0x668] sm:$0xff]
      %v4223 = vld [vmem:[%s4 + $0x670] sm:$0xff]
      %v4224 = vld [vmem:[%s4 + $0x678] sm:$0xff]
      %v4225 = vld [vmem:[%s4 + $0x680] sm:$0xff]
      %v4226 = vld [vmem:[%s4 + $0x688] sm:$0xff]
      %v4227 = vld [vmem:[%s4 + $0x690] sm:$0xff]
      %v4228 = vld [vmem:[%s4 + $0x698] sm:$0xff]
      %v4229 = vld [vmem:[%s4 + $0x6a0] sm:$0xff]
      %v4230 = vld [vmem:[%s4 + $0x6a8] sm:$0xff]
      %v4231 = vld [vmem:[%s4 + $0x6b0] sm:$0xff]
      %v4232 = vld [vmem:[%s4 + $0x6b8] sm:$0xff]
      %v4233 = vld [vmem:[%s4 + $0x6c0] sm:$0xff]
      %v4234 = vld [vmem:[%s4 + $0x6c8] sm:$0xff]
      %v4235 = vld [vmem:[%s4 + $0x6d0] sm:$0xff]
      %v4236 = vld [vmem:[%s4 + $0x6d8] sm:$0xff]
      %v4237 = vld [vmem:[%s4 + $0x6e0] sm:$0xff]
      %v4238 = vld [vmem:[%s4 + $0x6e8] sm:$0xff]
      %v4239 = vld [vmem:[%s4 + $0x6f0] sm:$0xff]
      %v4240 = vld [vmem:[%s4 + $0x6f8] sm:$0xff]
      %v4241 = vld [vmem:[%s4 + $0x700] sm:$0xff]
      %v4242 = vld [vmem:[%s4 + $0x708] sm:$0xff]
      %v4243 = vld [vmem:[%s4 + $0x710] sm:$0xff]
      %v4244 = vld [vmem:[%s4 + $0x718] sm:$0xff]
      %v4245 = vld [vmem:[%s4 + $0x720] sm:$0xff]
      %v4246 = vld [vmem:[%s4 + $0x728] sm:$0xff]
      %v4247 = vld [vmem:[%s4 + $0x730] sm:$0xff]
      %v4248 = vld [vmem:[%s4 + $0x738] sm:$0xff]
      %v4249 = vld [vmem:[%s4 + $0x740] sm:$0xff]
      %v4250 = vld [vmem:[%s4 + $0x748] sm:$0xff]
      %v4251 = vld [vmem:[%s4 + $0x750] sm:$0xff]
      %v4252 = vld [vmem:[%s4 + $0x758] sm:$0xff]
      %v4253 = vld [vmem:[%s4 + $0x760] sm:$0xff]
      %v4254 = vld [vmem:[%s4 + $0x768] sm:$0xff]
      %v4255 = vld [vmem:[%s4 + $0x770] sm:$0xff]
      %v4256 = vld [vmem:[%s4 + $0x778] sm:$0xff]
      %v4257 = vld [vmem:[%s4 + $0x780] sm:$0xff]
      %v4258 = vld [vmem:[%s4 + $0x788] sm:$0xff]
      %v4259 = vld [vmem:[%s4 + $0x790] sm:$0xff]
      %v4260 = vld [vmem:[%s4 + $0x798] sm:$0xff]
      %v4261 = vld [vmem:[%s4 + $0x7a0] sm:$0xff]
      %v4262 = vld [vmem:[%s4 + $0x7a8] sm:$0xff]
      %v4263 = vld [vmem:[%s4 + $0x7b0] sm:$0xff]
      %v4264 = vld [vmem:[%s4 + $0x7b8] sm:$0xff]
      %v4265 = vld [vmem:[%s4 + $0x7c0] sm:$0xff]
      %v4266 = vld [vmem:[%s4 + $0x7c8] sm:$0xff]
      %v4267 = vld [vmem:[%s4 + $0x7d0] sm:$0xff]
      %v4268 = vld [vmem:[%s4 + $0x7d8] sm:$0xff]
      %v4269 = vld [vmem:[%s4 + $0x7e0] sm:$0xff]
      %v4270 = vld [vmem:[%s4 + $0x7e8] sm:$0xff]
      %v4271 = vld [vmem:[%s4 + $0x7f0] sm:$0xff]
      %v4272 = vld [vmem:[%s4 + $0x7f8] sm:$0xff]
      %v4273 = vld [vmem:[%s4 + $0x800] sm:$0xff]
      %v4274 = vld [vmem:[%s4 + $0x808] sm:$0xff]
      %v4275 = vld [vmem:[%s4 + $0x810] sm:$0xff]
      %v4276 = vld [vmem:[%s4 + $0x818] sm:$0xff]
      %v4277 = vld [vmem:[%s4 + $0x820] sm:$0xff]
      %v4278 = vld [vmem:[%s4 + $0x828] sm:$0xff]
      %v4279 = vld [vmem:[%s4 + $0x830] sm:$0xff]
      %v4280 = vld [vmem:[%s4 + $0x838] sm:$0xff]
      %v4281 = vld [vmem:[%s4 + $0x840] sm:$0xff]
      %v4282 = vld [vmem:[%s4 + $0x848] sm:$0xff]
      %v4283 = vld [vmem:[%s4 + $0x850] sm:$0xff]
      %v4284 = vld [vmem:[%s4 + $0x858] sm:$0xff]
      %v4285 = vld [vmem:[%s4 + $0x860] sm:$0xff]
      %v4286 = vld [vmem:[%s4 + $0x868] sm:$0xff]
      %v4287 = vld [vmem:[%s4 + $0x870] sm:$0xff]
      %v4288 = vld [vmem:[%s4 + $0x878] sm:$0xff]
      %v4289 = vld [vmem:[%s4 + $0x880] sm:$0xff]
      %v4290 = vld [vmem:[%s4 + $0x888] sm:$0xff]
      %v4291 = vld [vmem:[%s4 + $0x890] sm:$0xff]
      %v4292 = vld [vmem:[%s4 + $0x898] sm:$0xff]
      %v4293 = vld [vmem:[%s4 + $0x8a0] sm:$0xff]
      %v4294 = vld [vmem:[%s4 + $0x8a8] sm:$0xff]
      %v4295 = vld [vmem:[%s4 + $0x8b0] sm:$0xff]
      %v4296 = vld [vmem:[%s4 + $0x8b8] sm:$0xff]
      %v4297 = vld [vmem:[%s4 + $0x8c0] sm:$0xff]
      %v4298 = vld [vmem:[%s4 + $0x8c8] sm:$0xff]
      %v4299 = vld [vmem:[%s4 + $0x8d0] sm:$0xff]
      %v4300 = vld [vmem:[%s4 + $0x8d8] sm:$0xff]
      %v4301 = vld [vmem:[%s4 + $0x8e0] sm:$0xff]
      %v4302 = vld [vmem:[%s4 + $0x8e8] sm:$0xff]
      %v4303 = vld [vmem:[%s4 + $0x8f0] sm:$0xff]
      %v4304 = vld [vmem:[%s4 + $0x8f8] sm:$0xff]
      %v4305 = vld [vmem:[%s4 + $0x900] sm:$0xff]
      %v4306 = vld [vmem:[%s4 + $0x908] sm:$0xff]
      %v4307 = vld [vmem:[%s4 + $0x910] sm:$0xff]
      %v4308 = vld [vmem:[%s4 + $0x918] sm:$0xff]
      %v4309 = vld [vmem:[%s4 + $0x920] sm:$0xff]
      %v4310 = vld [vmem:[%s4 + $0x928] sm:$0xff]
      %v4311 = vld [vmem:[%s4 + $0x930] sm:$0xff]
      %v4312 = vld [vmem:[%s4 + $0x938] sm:$0xff]
      %v4313 = vld [vmem:[%s4 + $0x940] sm:$0xff]
      %v4314 = vld [vmem:[%s4 + $0x948] sm:$0xff]
      %v4315 = vld [vmem:[%s4 + $0x950] sm:$0xff]
      %v4316 = vld [vmem:[%s4 + $0x958] sm:$0xff]
      %v4317 = vld [vmem:[%s4 + $0x960] sm:$0xff]
      %v4318 = vld [vmem:[%s4 + $0x968] sm:$0xff]
      %v4319 = vld [vmem:[%s4 + $0x970] sm:$0xff]
      %v4320 = vld [vmem:[%s4 + $0x978] sm:$0xff]
      %v4321 = vld [vmem:[%s4 + $0x980] sm:$0xff]
      %v4322 = vld [vmem:[%s4 + $0x988] sm:$0xff]
      %v4323 = vld [vmem:[%s4 + $0x990] sm:$0xff]
      %v4324 = vld [vmem:[%s4 + $0x998] sm:$0xff]
      %v4325 = vld [vmem:[%s4 + $0x9a0] sm:$0xff]
      %v4326 = vld [vmem:[%s4 + $0x9a8] sm:$0xff]
      %v4327 = vld [vmem:[%s4 + $0x9b0] sm:$0xff]
      %v4328 = vld [vmem:[%s4 + $0x9b8] sm:$0xff]
      %v4329 = vld [vmem:[%s4 + $0x9c0] sm:$0xff]
      %v4330 = vld [vmem:[%s4 + $0x9c8] sm:$0xff]
      %v4331 = vld [vmem:[%s4 + $0x9d0] sm:$0xff]
      %v4332 = vld [vmem:[%s4 + $0x9d8] sm:$0xff]
      %v4333 = vld [vmem:[%s4 + $0x9e0] sm:$0xff]
      %v4334 = vld [vmem:[%s4 + $0x9e8] sm:$0xff]
      %v4335 = vld [vmem:[%s4 + $0x9f0] sm:$0xff]
      %v4336 = vld [vmem:[%s4 + $0x9f8] sm:$0xff]
      %v4337 = vld [vmem:[%s4 + $0xa00] sm:$0xff]
      %v4338 = vld [vmem:[%s4 + $0xa08] sm:$0xff]
      %v4339 = vld [vmem:[%s4 + $0xa10] sm:$0xff]
      %v4340 = vld [vmem:[%s4 + $0xa18] sm:$0xff]
      %v4341 = vld [vmem:[%s4 + $0xa20] sm:$0xff]
      %v4342 = vld [vmem:[%s4 + $0xa28] sm:$0xff]
      %v4343 = vld [vmem:[%s4 + $0xa30] sm:$0xff]
      %v4344 = vld [vmem:[%s4 + $0xa38] sm:$0xff]
      %v4345 = vld [vmem:[%s4 + $0xa40] sm:$0xff]
      %v4346 = vld [vmem:[%s4 + $0xa48] sm:$0xff]
      %v4347 = vld [vmem:[%s4 + $0xa50] sm:$0xff]
      %v4348 = vld [vmem:[%s4 + $0xa58] sm:$0xff]
      %v4349 = vld [vmem:[%s4 + $0xa60] sm:$0xff]
      %v4350 = vld [vmem:[%s4 + $0xa68] sm:$0xff]
      %v4351 = vld [vmem:[%s4 + $0xa70] sm:$0xff]
      %v4352 = vld [vmem:[%s4 + $0xa78] sm:$0xff]
      %v4353 = vld [vmem:[%s4 + $0xa80] sm:$0xff]
      %v4354 = vld [vmem:[%s4 + $0xa88] sm:$0xff]
      %v4355 = vld [vmem:[%s4 + $0xa90] sm:$0xff]
      %v4356 = vld [vmem:[%s4 + $0xa98] sm:$0xff]
      %v4357 = vld [vmem:[%s4 + $0xaa0] sm:$0xff]
      %v4358 = vld [vmem:[%s4 + $0xaa8] sm:$0xff]
      %v4359 = vld [vmem:[%s4 + $0xab0] sm:$0xff]
      %v4360 = vld [vmem:[%s4 + $0xab8] sm:$0xff]
      %v4361 = vld [vmem:[%s4 + $0xac0] sm:$0xff]
      %v4362 = vld [vmem:[%s4 + $0xac8] sm:$0xff]
      %v4363 = vld [vmem:[%s4 + $0xad0] sm:$0xff]
      %v4364 = vld [vmem:[%s4 + $0xad8] sm:$0xff]
      %v4365 = vld [vmem:[%s4 + $0xae0] sm:$0xff]
      %v4366 = vld [vmem:[%s4 + $0xae8] sm:$0xff]
      %v4367 = vld [vmem:[%s4 + $0xaf0] sm:$0xff]
      %v4368 = vld [vmem:[%s4 + $0xaf8] sm:$0xff]
      %v4369 = vld [vmem:[%s4 + $0xb00] sm:$0xff]
      %v4370 = vld [vmem:[%s4 + $0xb08] sm:$0xff]
      %v4371 = vld [vmem:[%s4 + $0xb10] sm:$0xff]
      %v4372 = vld [vmem:[%s4 + $0xb18] sm:$0xff]
      %v4373 = vld [vmem:[%s4 + $0xb20] sm:$0xff]
      %v4374 = vld [vmem:[%s4 + $0xb28] sm:$0xff]
      %v4375 = vld [vmem:[%s4 + $0xb30] sm:$0xff]
      %v4376 = vld [vmem:[%s4 + $0xb38] sm:$0xff]
      %v4377 = vld [vmem:[%s4 + $0xb40] sm:$0xff]
      %v4378 = vld [vmem:[%s4 + $0xb48] sm:$0xff]
      %v4379 = vld [vmem:[%s4 + $0xb50] sm:$0xff]
      %v4380 = vld [vmem:[%s4 + $0xb58] sm:$0xff]
      %v4381 = vld [vmem:[%s4 + $0xb60] sm:$0xff]
      %v4382 = vld [vmem:[%s4 + $0xb68] sm:$0xff]
      %v4383 = vld [vmem:[%s4 + $0xb70] sm:$0xff]
      %v4384 = vld [vmem:[%s4 + $0xb78] sm:$0xff]
      %v4385 = vld [vmem:[%s4 + $0xb80] sm:$0xff]
      %v4386 = vld [vmem:[%s4 + $0xb88] sm:$0xff]
      %v4387 = vld [vmem:[%s4 + $0xb90] sm:$0xff]
      %v4388 = vld [vmem:[%s4 + $0xb98] sm:$0xff]
      %v4389 = vld [vmem:[%s4 + $0xba0] sm:$0xff]
      %v4390 = vld [vmem:[%s4 + $0xba8] sm:$0xff]
      %v4391 = vld [vmem:[%s4 + $0xbb0] sm:$0xff]
      %v4392 = vld [vmem:[%s4 + $0xbb8] sm:$0xff]
      %v4393 = vld [vmem:[%s4 + $0xbc0] sm:$0xff]
      %v4394 = vld [vmem:[%s4 + $0xbc8] sm:$0xff]
      %v4395 = vld [vmem:[%s4 + $0xbd0] sm:$0xff]
      %v4396 = vld [vmem:[%s4 + $0xbd8] sm:$0xff]
      %v4397 = vld [vmem:[%s4 + $0xbe0] sm:$0xff]
      %v4398 = vld [vmem:[%s4 + $0xbe8] sm:$0xff]
      %v4399 = vld [vmem:[%s4 + $0xbf0] sm:$0xff]
      %v4400 = vld [vmem:[%s4 + $0xbf8] sm:$0xff]
      %v4401 = vld [vmem:[%s4 + $0xc00] sm:$0xff]
      %v4402 = vld [vmem:[%s4 + $0xc08] sm:$0xff]
      %v4403 = vld [vmem:[%s4 + $0xc10] sm:$0xff]
      %v4404 = vld [vmem:[%s4 + $0xc18] sm:$0xff]
      %v4405 = vld [vmem:[%s4 + $0xc20] sm:$0xff]
      %v4406 = vld [vmem:[%s4 + $0xc28] sm:$0xff]
      %v4407 = vld [vmem:[%s4 + $0xc30] sm:$0xff]
      %v4408 = vld [vmem:[%s4 + $0xc38] sm:$0xff]
      %v4409 = vld [vmem:[%s4 + $0xc40] sm:$0xff]
      %v4410 = vld [vmem:[%s4 + $0xc48] sm:$0xff]
      %v4411 = vld [vmem:[%s4 + $0xc50] sm:$0xff]
      %v4412 = vld [vmem:[%s4 + $0xc58] sm:$0xff]
      %v4413 = vld [vmem:[%s4 + $0xc60] sm:$0xff]
      %v4414 = vld [vmem:[%s4 + $0xc68] sm:$0xff]
      %v4415 = vld [vmem:[%s4 + $0xc70] sm:$0xff]
      %v4416 = vld [vmem:[%s4 + $0xc78] sm:$0xff]
      %v4417 = vld [vmem:[%s4 + $0xc80] sm:$0xff]
      %v4418 = vld [vmem:[%s4 + $0xc88] sm:$0xff]
      %v4419 = vld [vmem:[%s4 + $0xc90] sm:$0xff]
      %v4420 = vld [vmem:[%s4 + $0xc98] sm:$0xff]
      %v4421 = vld [vmem:[%s4 + $0xca0] sm:$0xff]
      %v4422 = vld [vmem:[%s4 + $0xca8] sm:$0xff]
      %v4423 = vld [vmem:[%s4 + $0xcb0] sm:$0xff]
      %v4424 = vld [vmem:[%s4 + $0xcb8] sm:$0xff]
      %v4425 = vld [vmem:[%s4 + $0xcc0] sm:$0xff]
      %v4426 = vld [vmem:[%s4 + $0xcc8] sm:$0xff]
      %v4427 = vld [vmem:[%s4 + $0xcd0] sm:$0xff]
      %v4428 = vld [vmem:[%s4 + $0xcd8] sm:$0xff]
      %v4429 = vld [vmem:[%s4 + $0xce0] sm:$0xff]
      %v4430 = vld [vmem:[%s4 + $0xce8] sm:$0xff]
      %v4431 = vld [vmem:[%s4 + $0xcf0] sm:$0xff]
      %v4432 = vld [vmem:[%s4 + $0xcf8] sm:$0xff]
      %v4433 = vld [vmem:[%s4 + $0xd00] sm:$0xff]
      %v4434 = vld [vmem:[%s4 + $0xd08] sm:$0xff]
      %v4435 = vld [vmem:[%s4 + $0xd10] sm:$0xff]
      %v4436 = vld [vmem:[%s4 + $0xd18] sm:$0xff]
      %v4437 = vld [vmem:[%s4 + $0xd20] sm:$0xff]
      %v4438 = vld [vmem:[%s4 + $0xd28] sm:$0xff]
      %v4439 = vld [vmem:[%s4 + $0xd30] sm:$0xff]
      %v4440 = vld [vmem:[%s4 + $0xd38] sm:$0xff]
      %v4441 = vld [vmem:[%s4 + $0xd40] sm:$0xff]
      %v4442 = vld [vmem:[%s4 + $0xd48] sm:$0xff]
      %v4443 = vld [vmem:[%s4 + $0xd50] sm:$0xff]
      %v4444 = vld [vmem:[%s4 + $0xd58] sm:$0xff]
      %v4445 = vld [vmem:[%s4 + $0xd60] sm:$0xff]
      %v4446 = vld [vmem:[%s4 + $0xd68] sm:$0xff]
      %v4447 = vld [vmem:[%s4 + $0xd70] sm:$0xff]
      %v4448 = vld [vmem:[%s4 + $0xd78] sm:$0xff]
      %v4449 = vld [vmem:[%s4 + $0xd80] sm:$0xff]
      %v4450 = vld [vmem:[%s4 + $0xd88] sm:$0xff]
      %v4451 = vld [vmem:[%s4 + $0xd90] sm:$0xff]
      %v4452 = vld [vmem:[%s4 + $0xd98] sm:$0xff]
      %v4453 = vld [vmem:[%s4 + $0xda0] sm:$0xff]
      %v4454 = vld [vmem:[%s4 + $0xda8] sm:$0xff]
      %v4455 = vld [vmem:[%s4 + $0xdb0] sm:$0xff]
      %v4456 = vld [vmem:[%s4 + $0xdb8] sm:$0xff]
      %v4457 = vld [vmem:[%s5] sm:$0xf]
      %v4898 = vunpack.c.l.b16 %v4017
      %v4899 = vunpack.c.h.b16 %v4017
      %v4900 = vunpack.c.l.b16 %v4018
      %v4901 = vunpack.c.h.b16 %v4018
      %v4902 = vunpack.c.l.b16 %v4019
      %v4903 = vunpack.c.h.b16 %v4019
      %v4904 = vunpack.c.l.b16 %v4020
      %v4905 = vunpack.c.h.b16 %v4020
      %v4906 = vunpack.c.l.b16 %v4021
      %v4907 = vunpack.c.h.b16 %v4021
      %v4908 = vunpack.c.l.b16 %v4022
      %v4909 = vunpack.c.h.b16 %v4022
      %v4910 = vunpack.c.l.b16 %v4023
      %v4911 = vunpack.c.h.b16 %v4023
      %v4912 = vunpack.c.l.b16 %v4024
      %v4913 = vunpack.c.h.b16 %v4024
      %v4914 = vunpack.c.l.b16 %v4025
      %v4915 = vunpack.c.h.b16 %v4025
      %v4916 = vunpack.c.l.b16 %v4026
      %v4917 = vunpack.c.h.b16 %v4026
      %v4918 = vunpack.c.l.b16 %v4027
      %v4919 = vunpack.c.h.b16 %v4027
      %v4920 = vunpack.c.l.b16 %v4028
      %v4921 = vunpack.c.h.b16 %v4028
      %v4922 = vunpack.c.l.b16 %v4029
      %v4923 = vunpack.c.h.b16 %v4029
      %v4924 = vunpack.c.l.b16 %v4030
      %v4925 = vunpack.c.h.b16 %v4030
      %v4926 = vunpack.c.l.b16 %v4031
      %v4927 = vunpack.c.h.b16 %v4031
      %v4928 = vunpack.c.l.b16 %v4032
      %v4929 = vunpack.c.h.b16 %v4032
      %v4930 = vunpack.c.l.b16 %v4033
      %v4931 = vunpack.c.h.b16 %v4033
      %v4932 = vunpack.c.l.b16 %v4034
      %v4933 = vunpack.c.h.b16 %v4034
      %v4934 = vunpack.c.l.b16 %v4035
      %v4935 = vunpack.c.h.b16 %v4035
      %v4936 = vunpack.c.l.b16 %v4036
      %v4937 = vunpack.c.h.b16 %v4036
      %v4938 = vunpack.c.l.b16 %v4037
      %v4939 = vunpack.c.h.b16 %v4037
      %v4940 = vunpack.c.l.b16 %v4038
      %v4941 = vunpack.c.h.b16 %v4038
      %v4942 = vunpack.c.l.b16 %v4039
      %v4943 = vunpack.c.h.b16 %v4039
      %v4944 = vunpack.c.l.b16 %v4040
      %v4945 = vunpack.c.h.b16 %v4040
      %v4946 = vunpack.c.l.b16 %v4041
      %v4947 = vunpack.c.h.b16 %v4041
      %v4948 = vunpack.c.l.b16 %v4042
      %v4949 = vunpack.c.h.b16 %v4042
      %v4950 = vunpack.c.l.b16 %v4043
      %v4951 = vunpack.c.h.b16 %v4043
      %v4952 = vunpack.c.l.b16 %v4044
      %v4953 = vunpack.c.h.b16 %v4044
      %v4954 = vunpack.c.l.b16 %v4045
      %v4955 = vunpack.c.h.b16 %v4045
      %v4956 = vunpack.c.l.b16 %v4046
      %v4957 = vunpack.c.h.b16 %v4046
      %v4958 = vunpack.c.l.b16 %v4047
      %v4959 = vunpack.c.h.b16 %v4047
      %v4960 = vunpack.c.l.b16 %v4048
      %v4961 = vunpack.c.h.b16 %v4048
      %v4962 = vunpack.c.l.b16 %v4049
      %v4963 = vunpack.c.h.b16 %v4049
      %v4964 = vunpack.c.l.b16 %v4050
      %v4965 = vunpack.c.h.b16 %v4050
      %v4966 = vunpack.c.l.b16 %v4051
      %v4967 = vunpack.c.h.b16 %v4051
      %v4968 = vunpack.c.l.b16 %v4052
      %v4969 = vunpack.c.h.b16 %v4052
      %v4970 = vunpack.c.l.b16 %v4053
      %v4971 = vunpack.c.h.b16 %v4053
      %v4972 = vunpack.c.l.b16 %v4054
      %v4973 = vunpack.c.h.b16 %v4054
      %v4974 = vunpack.c.l.b16 %v4055
      %v4975 = vunpack.c.h.b16 %v4055
      %v4976 = vunpack.c.l.b16 %v4056
      %v4977 = vunpack.c.h.b16 %v4056
      %v4978 = vunpack.c.l.b16 %v4057
      %v4979 = vunpack.c.h.b16 %v4057
      %v4980 = vunpack.c.l.b16 %v4058
      %v4981 = vunpack.c.h.b16 %v4058
      %v4982 = vunpack.c.l.b16 %v4059
      %v4983 = vunpack.c.h.b16 %v4059
      %v4984 = vunpack.c.l.b16 %v4060
      %v4985 = vunpack.c.h.b16 %v4060
      %v4986 = vunpack.c.l.b16 %v4061
      %v4987 = vunpack.c.h.b16 %v4061
      %v4988 = vunpack.c.l.b16 %v4062
      %v4989 = vunpack.c.h.b16 %v4062
      %v4990 = vunpack.c.l.b16 %v4063
      %v4991 = vunpack.c.h.b16 %v4063
      %v4992 = vunpack.c.l.b16 %v4064
      %v4993 = vunpack.c.h.b16 %v4064
      %v4994 = vunpack.c.l.b16 %v4065
      %v4995 = vunpack.c.h.b16 %v4065
      %v4996 = vunpack.c.l.b16 %v4066
      %v4997 = vunpack.c.h.b16 %v4066
      %v4998 = vunpack.c.l.b16 %v4067
      %v4999 = vunpack.c.h.b16 %v4067
      %v5000 = vunpack.c.l.b16 %v4068
      %v5001 = vunpack.c.h.b16 %v4068
      %v5002 = vunpack.c.l.b16 %v4069
      %v5003 = vunpack.c.h.b16 %v4069
      %v5004 = vunpack.c.l.b16 %v4070
      %v5005 = vunpack.c.h.b16 %v4070
      %v5006 = vunpack.c.l.b16 %v4071
      %v5007 = vunpack.c.h.b16 %v4071
      %v5008 = vunpack.c.l.b16 %v4072
      %v5009 = vunpack.c.h.b16 %v4072
      %v5010 = vunpack.c.l.b16 %v4073
      %v5011 = vunpack.c.h.b16 %v4073
      %v5012 = vunpack.c.l.b16 %v4074
      %v5013 = vunpack.c.h.b16 %v4074
      %v5014 = vunpack.c.l.b16 %v4075
      %v5015 = vunpack.c.h.b16 %v4075
      %v5016 = vunpack.c.l.b16 %v4076
      %v5017 = vunpack.c.h.b16 %v4076
      %v5018 = vunpack.c.l.b16 %v4077
      %v5019 = vunpack.c.h.b16 %v4077
      %v5020 = vunpack.c.l.b16 %v4078
      %v5021 = vunpack.c.h.b16 %v4078
      %v5022 = vunpack.c.l.b16 %v4079
      %v5023 = vunpack.c.h.b16 %v4079
      %v5024 = vunpack.c.l.b16 %v4080
      %v5025 = vunpack.c.h.b16 %v4080
      %v5026 = vunpack.c.l.b16 %v4081
      %v5027 = vunpack.c.h.b16 %v4081
      %v5028 = vunpack.c.l.b16 %v4082
      %v5029 = vunpack.c.h.b16 %v4082
      %v5030 = vunpack.c.l.b16 %v4083
      %v5031 = vunpack.c.h.b16 %v4083
      %v5032 = vunpack.c.l.b16 %v4084
      %v5033 = vunpack.c.h.b16 %v4084
      %v5034 = vunpack.c.l.b16 %v4085
      %v5035 = vunpack.c.h.b16 %v4085
      %v5036 = vunpack.c.l.b16 %v4086
      %v5037 = vunpack.c.h.b16 %v4086
      %v5038 = vunpack.c.l.b16 %v4087
      %v5039 = vunpack.c.h.b16 %v4087
      %v5040 = vunpack.c.l.b16 %v4088
      %v5041 = vunpack.c.h.b16 %v4088
      %v5042 = vunpack.c.l.b16 %v4089
      %v5043 = vunpack.c.h.b16 %v4089
      %v5044 = vunpack.c.l.b16 %v4090
      %v5045 = vunpack.c.h.b16 %v4090
      %v5046 = vunpack.c.l.b16 %v4091
      %v5047 = vunpack.c.h.b16 %v4091
      %v5048 = vunpack.c.l.b16 %v4092
      %v5049 = vunpack.c.h.b16 %v4092
      %v5050 = vunpack.c.l.b16 %v4093
      %v5051 = vunpack.c.h.b16 %v4093
      %v5052 = vunpack.c.l.b16 %v4094
      %v5053 = vunpack.c.h.b16 %v4094
      %v5054 = vunpack.c.l.b16 %v4095
      %v5055 = vunpack.c.h.b16 %v4095
      %v5056 = vunpack.c.l.b16 %v4096
      %v5057 = vunpack.c.h.b16 %v4096
      %v5058 = vunpack.c.l.b16 %v4097
      %v5059 = vunpack.c.h.b16 %v4097
      %v5060 = vunpack.c.l.b16 %v4098
      %v5061 = vunpack.c.h.b16 %v4098
      %v5062 = vunpack.c.l.b16 %v4099
      %v5063 = vunpack.c.h.b16 %v4099
      %v5064 = vunpack.c.l.b16 %v4100
      %v5065 = vunpack.c.h.b16 %v4100
      %v5066 = vunpack.c.l.b16 %v4101
      %v5067 = vunpack.c.h.b16 %v4101
      %v5068 = vunpack.c.l.b16 %v4102
      %v5069 = vunpack.c.h.b16 %v4102
      %v5070 = vunpack.c.l.b16 %v4103
      %v5071 = vunpack.c.h.b16 %v4103
      %v5072 = vunpack.c.l.b16 %v4104
      %v5073 = vunpack.c.h.b16 %v4104
      %v5074 = vunpack.c.l.b16 %v4105
      %v5075 = vunpack.c.h.b16 %v4105
      %v5076 = vunpack.c.l.b16 %v4106
      %v5077 = vunpack.c.h.b16 %v4106
      %v5078 = vunpack.c.l.b16 %v4107
      %v5079 = vunpack.c.h.b16 %v4107
      %v5080 = vunpack.c.l.b16 %v4108
      %v5081 = vunpack.c.h.b16 %v4108
      %v5082 = vunpack.c.l.b16 %v4109
      %v5083 = vunpack.c.h.b16 %v4109
      %v5084 = vunpack.c.l.b16 %v4110
      %v5085 = vunpack.c.h.b16 %v4110
      %v5086 = vunpack.c.l.b16 %v4111
      %v5087 = vunpack.c.h.b16 %v4111
      %v5088 = vunpack.c.l.b16 %v4112
      %v5089 = vunpack.c.h.b16 %v4112
      %v5090 = vunpack.c.l.b16 %v4113
      %v5091 = vunpack.c.h.b16 %v4113
      %v5092 = vunpack.c.l.b16 %v4114
      %v5093 = vunpack.c.h.b16 %v4114
      %v5094 = vunpack.c.l.b16 %v4115
      %v5095 = vunpack.c.h.b16 %v4115
      %v5096 = vunpack.c.l.b16 %v4116
      %v5097 = vunpack.c.h.b16 %v4116
      %v5098 = vunpack.c.l.b16 %v4117
      %v5099 = vunpack.c.h.b16 %v4117
      %v5100 = vunpack.c.l.b16 %v4118
      %v5101 = vunpack.c.h.b16 %v4118
      %v5102 = vunpack.c.l.b16 %v4119
      %v5103 = vunpack.c.h.b16 %v4119
      %v5104 = vunpack.c.l.b16 %v4120
      %v5105 = vunpack.c.h.b16 %v4120
      %v5106 = vunpack.c.l.b16 %v4121
      %v5107 = vunpack.c.h.b16 %v4121
      %v5108 = vunpack.c.l.b16 %v4122
      %v5109 = vunpack.c.h.b16 %v4122
      %v5110 = vunpack.c.l.b16 %v4123
      %v5111 = vunpack.c.h.b16 %v4123
      %v5112 = vunpack.c.l.b16 %v4124
      %v5113 = vunpack.c.h.b16 %v4124
      %v5114 = vunpack.c.l.b16 %v4125
      %v5115 = vunpack.c.h.b16 %v4125
      %v5116 = vunpack.c.l.b16 %v4126
      %v5117 = vunpack.c.h.b16 %v4126
      %v5118 = vunpack.c.l.b16 %v4127
      %v5119 = vunpack.c.h.b16 %v4127
      %v5120 = vunpack.c.l.b16 %v4128
      %v5121 = vunpack.c.h.b16 %v4128
      %v5122 = vunpack.c.l.b16 %v4129
      %v5123 = vunpack.c.h.b16 %v4129
      %v5124 = vunpack.c.l.b16 %v4130
      %v5125 = vunpack.c.h.b16 %v4130
      %v5126 = vunpack.c.l.b16 %v4131
      %v5127 = vunpack.c.h.b16 %v4131
      %v5128 = vunpack.c.l.b16 %v4132
      %v5129 = vunpack.c.h.b16 %v4132
      %v5130 = vunpack.c.l.b16 %v4133
      %v5131 = vunpack.c.h.b16 %v4133
      %v5132 = vunpack.c.l.b16 %v4134
      %v5133 = vunpack.c.h.b16 %v4134
      %v5134 = vunpack.c.l.b16 %v4135
      %v5135 = vunpack.c.h.b16 %v4135
      %v5136 = vunpack.c.l.b16 %v4136
      %v5137 = vunpack.c.h.b16 %v4136
      %v5138 = vunpack.c.l.b16 %v4137
      %v5139 = vunpack.c.h.b16 %v4137
      %v5140 = vunpack.c.l.b16 %v4138
      %v5141 = vunpack.c.h.b16 %v4138
      %v5142 = vunpack.c.l.b16 %v4139
      %v5143 = vunpack.c.h.b16 %v4139
      %v5144 = vunpack.c.l.b16 %v4140
      %v5145 = vunpack.c.h.b16 %v4140
      %v5146 = vunpack.c.l.b16 %v4141
      %v5147 = vunpack.c.h.b16 %v4141
      %v5148 = vunpack.c.l.b16 %v4142
      %v5149 = vunpack.c.h.b16 %v4142
      %v5150 = vunpack.c.l.b16 %v4143
      %v5151 = vunpack.c.h.b16 %v4143
      %v5152 = vunpack.c.l.b16 %v4144
      %v5153 = vunpack.c.h.b16 %v4144
      %v5154 = vunpack.c.l.b16 %v4145
      %v5155 = vunpack.c.h.b16 %v4145
      %v5156 = vunpack.c.l.b16 %v4146
      %v5157 = vunpack.c.h.b16 %v4146
      %v5158 = vunpack.c.l.b16 %v4147
      %v5159 = vunpack.c.h.b16 %v4147
      %v5160 = vunpack.c.l.b16 %v4148
      %v5161 = vunpack.c.h.b16 %v4148
      %v5162 = vunpack.c.l.b16 %v4149
      %v5163 = vunpack.c.h.b16 %v4149
      %v5164 = vunpack.c.l.b16 %v4150
      %v5165 = vunpack.c.h.b16 %v4150
      %v5166 = vunpack.c.l.b16 %v4151
      %v5167 = vunpack.c.h.b16 %v4151
      %v5168 = vunpack.c.l.b16 %v4152
      %v5169 = vunpack.c.h.b16 %v4152
      %v5170 = vunpack.c.l.b16 %v4153
      %v5171 = vunpack.c.h.b16 %v4153
      %v5172 = vunpack.c.l.b16 %v4154
      %v5173 = vunpack.c.h.b16 %v4154
      %v5174 = vunpack.c.l.b16 %v4155
      %v5175 = vunpack.c.h.b16 %v4155
      %v5176 = vunpack.c.l.b16 %v4156
      %v5177 = vunpack.c.h.b16 %v4156
      %v5178 = vunpack.c.l.b16 %v4157
      %v5179 = vunpack.c.h.b16 %v4157
      %v5180 = vunpack.c.l.b16 %v4158
      %v5181 = vunpack.c.h.b16 %v4158
      %v5182 = vunpack.c.l.b16 %v4159
      %v5183 = vunpack.c.h.b16 %v4159
      %v5184 = vunpack.c.l.b16 %v4160
      %v5185 = vunpack.c.h.b16 %v4160
      %v5186 = vunpack.c.l.b16 %v4161
      %v5187 = vunpack.c.h.b16 %v4161
      %v5188 = vunpack.c.l.b16 %v4162
      %v5189 = vunpack.c.h.b16 %v4162
      %v5190 = vunpack.c.l.b16 %v4163
      %v5191 = vunpack.c.h.b16 %v4163
      %v5192 = vunpack.c.l.b16 %v4164
      %v5193 = vunpack.c.h.b16 %v4164
      %v5194 = vunpack.c.l.b16 %v4165
      %v5195 = vunpack.c.h.b16 %v4165
      %v5196 = vunpack.c.l.b16 %v4166
      %v5197 = vunpack.c.h.b16 %v4166
      %v5198 = vunpack.c.l.b16 %v4167
      %v5199 = vunpack.c.h.b16 %v4167
      %v5200 = vunpack.c.l.b16 %v4168
      %v5201 = vunpack.c.h.b16 %v4168
      %v5202 = vunpack.c.l.b16 %v4169
      %v5203 = vunpack.c.h.b16 %v4169
      %v5204 = vunpack.c.l.b16 %v4170
      %v5205 = vunpack.c.h.b16 %v4170
      %v5206 = vunpack.c.l.b16 %v4171
      %v5207 = vunpack.c.h.b16 %v4171
      %v5208 = vunpack.c.l.b16 %v4172
      %v5209 = vunpack.c.h.b16 %v4172
      %v5210 = vunpack.c.l.b16 %v4173
      %v5211 = vunpack.c.h.b16 %v4173
      %v5212 = vunpack.c.l.b16 %v4174
      %v5213 = vunpack.c.h.b16 %v4174
      %v5214 = vunpack.c.l.b16 %v4175
      %v5215 = vunpack.c.h.b16 %v4175
      %v5216 = vunpack.c.l.b16 %v4176
      %v5217 = vunpack.c.h.b16 %v4176
      %v5218 = vunpack.c.l.b16 %v4177
      %v5219 = vunpack.c.h.b16 %v4177
      %v5220 = vunpack.c.l.b16 %v4178
      %v5221 = vunpack.c.h.b16 %v4178
      %v5222 = vunpack.c.l.b16 %v4179
      %v5223 = vunpack.c.h.b16 %v4179
      %v5224 = vunpack.c.l.b16 %v4180
      %v5225 = vunpack.c.h.b16 %v4180
      %v5226 = vunpack.c.l.b16 %v4181
      %v5227 = vunpack.c.h.b16 %v4181
      %v5228 = vunpack.c.l.b16 %v4182
      %v5229 = vunpack.c.h.b16 %v4182
      %v5230 = vunpack.c.l.b16 %v4183
      %v5231 = vunpack.c.h.b16 %v4183
      %v5232 = vunpack.c.l.b16 %v4184
      %v5233 = vunpack.c.h.b16 %v4184
      %v5234 = vunpack.c.l.b16 %v4185
      %v5235 = vunpack.c.h.b16 %v4185
      %v5236 = vunpack.c.l.b16 %v4186
      %v5237 = vunpack.c.h.b16 %v4186
      %v5238 = vunpack.c.l.b16 %v4187
      %v5239 = vunpack.c.h.b16 %v4187
      %v5240 = vunpack.c.l.b16 %v4188
      %v5241 = vunpack.c.h.b16 %v4188
      %v5242 = vunpack.c.l.b16 %v4189
      %v5243 = vunpack.c.h.b16 %v4189
      %v5244 = vunpack.c.l.b16 %v4190
      %v5245 = vunpack.c.h.b16 %v4190
      %v5246 = vunpack.c.l.b16 %v4191
      %v5247 = vunpack.c.h.b16 %v4191
      %v5248 = vunpack.c.l.b16 %v4192
      %v5249 = vunpack.c.h.b16 %v4192
      %v5250 = vunpack.c.l.b16 %v4193
      %v5251 = vunpack.c.h.b16 %v4193
      %v5252 = vunpack.c.l.b16 %v4194
      %v5253 = vunpack.c.h.b16 %v4194
      %v5254 = vunpack.c.l.b16 %v4195
      %v5255 = vunpack.c.h.b16 %v4195
      %v5256 = vunpack.c.l.b16 %v4196
      %v5257 = vunpack.c.h.b16 %v4196
      %v5258 = vunpack.c.l.b16 %v4197
      %v5259 = vunpack.c.h.b16 %v4197
      %v5260 = vunpack.c.l.b16 %v4198
      %v5261 = vunpack.c.h.b16 %v4198
      %v5262 = vunpack.c.l.b16 %v4199
      %v5263 = vunpack.c.h.b16 %v4199
      %v5264 = vunpack.c.l.b16 %v4200
      %v5265 = vunpack.c.h.b16 %v4200
      %v5266 = vunpack.c.l.b16 %v4201
      %v5267 = vunpack.c.h.b16 %v4201
      %v5268 = vunpack.c.l.b16 %v4202
      %v5269 = vunpack.c.h.b16 %v4202
      %v5270 = vunpack.c.l.b16 %v4203
      %v5271 = vunpack.c.h.b16 %v4203
      %v5272 = vunpack.c.l.b16 %v4204
      %v5273 = vunpack.c.h.b16 %v4204
      %v5274 = vunpack.c.l.b16 %v4205
      %v5275 = vunpack.c.h.b16 %v4205
      %v5276 = vunpack.c.l.b16 %v4206
      %v5277 = vunpack.c.h.b16 %v4206
      %v5278 = vunpack.c.l.b16 %v4207
      %v5279 = vunpack.c.h.b16 %v4207
      %v5280 = vunpack.c.l.b16 %v4208
      %v5281 = vunpack.c.h.b16 %v4208
      %v5282 = vunpack.c.l.b16 %v4209
      %v5283 = vunpack.c.h.b16 %v4209
      %v5284 = vunpack.c.l.b16 %v4210
      %v5285 = vunpack.c.h.b16 %v4210
      %v5286 = vunpack.c.l.b16 %v4211
      %v5287 = vunpack.c.h.b16 %v4211
      %v5288 = vunpack.c.l.b16 %v4212
      %v5289 = vunpack.c.h.b16 %v4212
      %v5290 = vunpack.c.l.b16 %v4213
      %v5291 = vunpack.c.h.b16 %v4213
      %v5292 = vunpack.c.l.b16 %v4214
      %v5293 = vunpack.c.h.b16 %v4214
      %v5294 = vunpack.c.l.b16 %v4215
      %v5295 = vunpack.c.h.b16 %v4215
      %v5296 = vunpack.c.l.b16 %v4216
      %v5297 = vunpack.c.h.b16 %v4216
      %v5298 = vunpack.c.l.b16 %v4217
      %v5299 = vunpack.c.h.b16 %v4217
      %v5300 = vunpack.c.l.b16 %v4218
      %v5301 = vunpack.c.h.b16 %v4218
      %v5302 = vunpack.c.l.b16 %v4219
      %v5303 = vunpack.c.h.b16 %v4219
      %v5304 = vunpack.c.l.b16 %v4220
      %v5305 = vunpack.c.h.b16 %v4220
      %v5306 = vunpack.c.l.b16 %v4221
      %v5307 = vunpack.c.h.b16 %v4221
      %v5308 = vunpack.c.l.b16 %v4222
      %v5309 = vunpack.c.h.b16 %v4222
      %v5310 = vunpack.c.l.b16 %v4223
      %v5311 = vunpack.c.h.b16 %v4223
      %v5312 = vunpack.c.l.b16 %v4224
      %v5313 = vunpack.c.h.b16 %v4224
      %v5314 = vunpack.c.l.b16 %v4225
      %v5315 = vunpack.c.h.b16 %v4225
      %v5316 = vunpack.c.l.b16 %v4226
      %v5317 = vunpack.c.h.b16 %v4226
      %v5318 = vunpack.c.l.b16 %v4227
      %v5319 = vunpack.c.h.b16 %v4227
      %v5320 = vunpack.c.l.b16 %v4228
      %v5321 = vunpack.c.h.b16 %v4228
      %v5322 = vunpack.c.l.b16 %v4229
      %v5323 = vunpack.c.h.b16 %v4229
      %v5324 = vunpack.c.l.b16 %v4230
      %v5325 = vunpack.c.h.b16 %v4230
      %v5326 = vunpack.c.l.b16 %v4231
      %v5327 = vunpack.c.h.b16 %v4231
      %v5328 = vunpack.c.l.b16 %v4232
      %v5329 = vunpack.c.h.b16 %v4232
      %v5330 = vunpack.c.l.b16 %v4233
      %v5331 = vunpack.c.h.b16 %v4233
      %v5332 = vunpack.c.l.b16 %v4234
      %v5333 = vunpack.c.h.b16 %v4234
      %v5334 = vunpack.c.l.b16 %v4235
      %v5335 = vunpack.c.h.b16 %v4235
      %v5336 = vunpack.c.l.b16 %v4236
      %v5337 = vunpack.c.h.b16 %v4236
      %v5338 = vunpack.c.l.b16 %v4237
      %v5339 = vunpack.c.h.b16 %v4237
      %v5340 = vunpack.c.l.b16 %v4238
      %v5341 = vunpack.c.h.b16 %v4238
      %v5342 = vunpack.c.l.b16 %v4239
      %v5343 = vunpack.c.h.b16 %v4239
      %v5344 = vunpack.c.l.b16 %v4240
      %v5345 = vunpack.c.h.b16 %v4240
      %v5346 = vunpack.c.l.b16 %v4241
      %v5347 = vunpack.c.h.b16 %v4241
      %v5348 = vunpack.c.l.b16 %v4242
      %v5349 = vunpack.c.h.b16 %v4242
      %v5350 = vunpack.c.l.b16 %v4243
      %v5351 = vunpack.c.h.b16 %v4243
      %v5352 = vunpack.c.l.b16 %v4244
      %v5353 = vunpack.c.h.b16 %v4244
      %v5354 = vunpack.c.l.b16 %v4245
      %v5355 = vunpack.c.h.b16 %v4245
      %v5356 = vunpack.c.l.b16 %v4246
      %v5357 = vunpack.c.h.b16 %v4246
      %v5358 = vunpack.c.l.b16 %v4247
      %v5359 = vunpack.c.h.b16 %v4247
      %v5360 = vunpack.c.l.b16 %v4248
      %v5361 = vunpack.c.h.b16 %v4248
      %v5362 = vunpack.c.l.b16 %v4249
      %v5363 = vunpack.c.h.b16 %v4249
      %v5364 = vunpack.c.l.b16 %v4250
      %v5365 = vunpack.c.h.b16 %v4250
      %v5366 = vunpack.c.l.b16 %v4251
      %v5367 = vunpack.c.h.b16 %v4251
      %v5368 = vunpack.c.l.b16 %v4252
      %v5369 = vunpack.c.h.b16 %v4252
      %v5370 = vunpack.c.l.b16 %v4253
      %v5371 = vunpack.c.h.b16 %v4253
      %v5372 = vunpack.c.l.b16 %v4254
      %v5373 = vunpack.c.h.b16 %v4254
      %v5374 = vunpack.c.l.b16 %v4255
      %v5375 = vunpack.c.h.b16 %v4255
      %v5376 = vunpack.c.l.b16 %v4256
      %v5377 = vunpack.c.h.b16 %v4256
      %v5378 = vunpack.c.l.b16 %v4257
      %v5379 = vunpack.c.h.b16 %v4257
      %v5380 = vunpack.c.l.b16 %v4258
      %v5381 = vunpack.c.h.b16 %v4258
      %v5382 = vunpack.c.l.b16 %v4259
      %v5383 = vunpack.c.h.b16 %v4259
      %v5384 = vunpack.c.l.b16 %v4260
      %v5385 = vunpack.c.h.b16 %v4260
      %v5386 = vunpack.c.l.b16 %v4261
      %v5387 = vunpack.c.h.b16 %v4261
      %v5388 = vunpack.c.l.b16 %v4262
      %v5389 = vunpack.c.h.b16 %v4262
      %v5390 = vunpack.c.l.b16 %v4263
      %v5391 = vunpack.c.h.b16 %v4263
      %v5392 = vunpack.c.l.b16 %v4264
      %v5393 = vunpack.c.h.b16 %v4264
      %v5394 = vunpack.c.l.b16 %v4265
      %v5395 = vunpack.c.h.b16 %v4265
      %v5396 = vunpack.c.l.b16 %v4266
      %v5397 = vunpack.c.h.b16 %v4266
      %v5398 = vunpack.c.l.b16 %v4267
      %v5399 = vunpack.c.h.b16 %v4267
      %v5400 = vunpack.c.l.b16 %v4268
      %v5401 = vunpack.c.h.b16 %v4268
      %v5402 = vunpack.c.l.b16 %v4269
      %v5403 = vunpack.c.h.b16 %v4269
      %v5404 = vunpack.c.l.b16 %v4270
      %v5405 = vunpack.c.h.b16 %v4270
      %v5406 = vunpack.c.l.b16 %v4271
      %v5407 = vunpack.c.h.b16 %v4271
      %v5408 = vunpack.c.l.b16 %v4272
      %v5409 = vunpack.c.h.b16 %v4272
      %v5410 = vunpack.c.l.b16 %v4273
      %v5411 = vunpack.c.h.b16 %v4273
      %v5412 = vunpack.c.l.b16 %v4274
      %v5413 = vunpack.c.h.b16 %v4274
      %v5414 = vunpack.c.l.b16 %v4275
      %v5415 = vunpack.c.h.b16 %v4275
      %v5416 = vunpack.c.l.b16 %v4276
      %v5417 = vunpack.c.h.b16 %v4276
      %v5418 = vunpack.c.l.b16 %v4277
      %v5419 = vunpack.c.h.b16 %v4277
      %v5420 = vunpack.c.l.b16 %v4278
      %v5421 = vunpack.c.h.b16 %v4278
      %v5422 = vunpack.c.l.b16 %v4279
      %v5423 = vunpack.c.h.b16 %v4279
      %v5424 = vunpack.c.l.b16 %v4280
      %v5425 = vunpack.c.h.b16 %v4280
      %v5426 = vunpack.c.l.b16 %v4281
      %v5427 = vunpack.c.h.b16 %v4281
      %v5428 = vunpack.c.l.b16 %v4282
      %v5429 = vunpack.c.h.b16 %v4282
      %v5430 = vunpack.c.l.b16 %v4283
      %v5431 = vunpack.c.h.b16 %v4283
      %v5432 = vunpack.c.l.b16 %v4284
      %v5433 = vunpack.c.h.b16 %v4284
      %v5434 = vunpack.c.l.b16 %v4285
      %v5435 = vunpack.c.h.b16 %v4285
      %v5436 = vunpack.c.l.b16 %v4286
      %v5437 = vunpack.c.h.b16 %v4286
      %v5438 = vunpack.c.l.b16 %v4287
      %v5439 = vunpack.c.h.b16 %v4287
      %v5440 = vunpack.c.l.b16 %v4288
      %v5441 = vunpack.c.h.b16 %v4288
      %v5442 = vunpack.c.l.b16 %v4289
      %v5443 = vunpack.c.h.b16 %v4289
      %v5444 = vunpack.c.l.b16 %v4290
      %v5445 = vunpack.c.h.b16 %v4290
      %v5446 = vunpack.c.l.b16 %v4291
      %v5447 = vunpack.c.h.b16 %v4291
      %v5448 = vunpack.c.l.b16 %v4292
      %v5449 = vunpack.c.h.b16 %v4292
      %v5450 = vunpack.c.l.b16 %v4293
      %v5451 = vunpack.c.h.b16 %v4293
      %v5452 = vunpack.c.l.b16 %v4294
      %v5453 = vunpack.c.h.b16 %v4294
      %v5454 = vunpack.c.l.b16 %v4295
      %v5455 = vunpack.c.h.b16 %v4295
      %v5456 = vunpack.c.l.b16 %v4296
      %v5457 = vunpack.c.h.b16 %v4296
      %v5458 = vunpack.c.l.b16 %v4297
      %v5459 = vunpack.c.h.b16 %v4297
      %v5460 = vunpack.c.l.b16 %v4298
      %v5461 = vunpack.c.h.b16 %v4298
      %v5462 = vunpack.c.l.b16 %v4299
      %v5463 = vunpack.c.h.b16 %v4299
      %v5464 = vunpack.c.l.b16 %v4300
      %v5465 = vunpack.c.h.b16 %v4300
      %v5466 = vunpack.c.l.b16 %v4301
      %v5467 = vunpack.c.h.b16 %v4301
      %v5468 = vunpack.c.l.b16 %v4302
      %v5469 = vunpack.c.h.b16 %v4302
      %v5470 = vunpack.c.l.b16 %v4303
      %v5471 = vunpack.c.h.b16 %v4303
      %v5472 = vunpack.c.l.b16 %v4304
      %v5473 = vunpack.c.h.b16 %v4304
      %v5474 = vunpack.c.l.b16 %v4305
      %v5475 = vunpack.c.h.b16 %v4305
      %v5476 = vunpack.c.l.b16 %v4306
      %v5477 = vunpack.c.h.b16 %v4306
      %v5478 = vunpack.c.l.b16 %v4307
      %v5479 = vunpack.c.h.b16 %v4307
      %v5480 = vunpack.c.l.b16 %v4308
      %v5481 = vunpack.c.h.b16 %v4308
      %v5482 = vunpack.c.l.b16 %v4309
      %v5483 = vunpack.c.h.b16 %v4309
      %v5484 = vunpack.c.l.b16 %v4310
      %v5485 = vunpack.c.h.b16 %v4310
      %v5486 = vunpack.c.l.b16 %v4311
      %v5487 = vunpack.c.h.b16 %v4311
      %v5488 = vunpack.c.l.b16 %v4312
      %v5489 = vunpack.c.h.b16 %v4312
      %v5490 = vunpack.c.l.b16 %v4313
      %v5491 = vunpack.c.h.b16 %v4313
      %v5492 = vunpack.c.l.b16 %v4314
      %v5493 = vunpack.c.h.b16 %v4314
      %v5494 = vunpack.c.l.b16 %v4315
      %v5495 = vunpack.c.h.b16 %v4315
      %v5496 = vunpack.c.l.b16 %v4316
      %v5497 = vunpack.c.h.b16 %v4316
      %v5498 = vunpack.c.l.b16 %v4317
      %v5499 = vunpack.c.h.b16 %v4317
      %v5500 = vunpack.c.l.b16 %v4318
      %v5501 = vunpack.c.h.b16 %v4318
      %v5502 = vunpack.c.l.b16 %v4319
      %v5503 = vunpack.c.h.b16 %v4319
      %v5504 = vunpack.c.l.b16 %v4320
      %v5505 = vunpack.c.h.b16 %v4320
      %v5506 = vunpack.c.l.b16 %v4321
      %v5507 = vunpack.c.h.b16 %v4321
      %v5508 = vunpack.c.l.b16 %v4322
      %v5509 = vunpack.c.h.b16 %v4322
      %v5510 = vunpack.c.l.b16 %v4323
      %v5511 = vunpack.c.h.b16 %v4323
      %v5512 = vunpack.c.l.b16 %v4324
      %v5513 = vunpack.c.h.b16 %v4324
      %v5514 = vunpack.c.l.b16 %v4325
      %v5515 = vunpack.c.h.b16 %v4325
      %v5516 = vunpack.c.l.b16 %v4326
      %v5517 = vunpack.c.h.b16 %v4326
      %v5518 = vunpack.c.l.b16 %v4327
      %v5519 = vunpack.c.h.b16 %v4327
      %v5520 = vunpack.c.l.b16 %v4328
      %v5521 = vunpack.c.h.b16 %v4328
      %v5522 = vunpack.c.l.b16 %v4329
      %v5523 = vunpack.c.h.b16 %v4329
      %v5524 = vunpack.c.l.b16 %v4330
      %v5525 = vunpack.c.h.b16 %v4330
      %v5526 = vunpack.c.l.b16 %v4331
      %v5527 = vunpack.c.h.b16 %v4331
      %v5528 = vunpack.c.l.b16 %v4332
      %v5529 = vunpack.c.h.b16 %v4332
      %v5530 = vunpack.c.l.b16 %v4333
      %v5531 = vunpack.c.h.b16 %v4333
      %v5532 = vunpack.c.l.b16 %v4334
      %v5533 = vunpack.c.h.b16 %v4334
      %v5534 = vunpack.c.l.b16 %v4335
      %v5535 = vunpack.c.h.b16 %v4335
      %v5536 = vunpack.c.l.b16 %v4336
      %v5537 = vunpack.c.h.b16 %v4336
      %v5538 = vunpack.c.l.b16 %v4337
      %v5539 = vunpack.c.h.b16 %v4337
      %v5540 = vunpack.c.l.b16 %v4338
      %v5541 = vunpack.c.h.b16 %v4338
      %v5542 = vunpack.c.l.b16 %v4339
      %v5543 = vunpack.c.h.b16 %v4339
      %v5544 = vunpack.c.l.b16 %v4340
      %v5545 = vunpack.c.h.b16 %v4340
      %v5546 = vunpack.c.l.b16 %v4341
      %v5547 = vunpack.c.h.b16 %v4341
      %v5548 = vunpack.c.l.b16 %v4342
      %v5549 = vunpack.c.h.b16 %v4342
      %v5550 = vunpack.c.l.b16 %v4343
      %v5551 = vunpack.c.h.b16 %v4343
      %v5552 = vunpack.c.l.b16 %v4344
      %v5553 = vunpack.c.h.b16 %v4344
      %v5554 = vunpack.c.l.b16 %v4345
      %v5555 = vunpack.c.h.b16 %v4345
      %v5556 = vunpack.c.l.b16 %v4346
      %v5557 = vunpack.c.h.b16 %v4346
      %v5558 = vunpack.c.l.b16 %v4347
      %v5559 = vunpack.c.h.b16 %v4347
      %v5560 = vunpack.c.l.b16 %v4348
      %v5561 = vunpack.c.h.b16 %v4348
      %v5562 = vunpack.c.l.b16 %v4349
      %v5563 = vunpack.c.h.b16 %v4349
      %v5564 = vunpack.c.l.b16 %v4350
      %v5565 = vunpack.c.h.b16 %v4350
      %v5566 = vunpack.c.l.b16 %v4351
      %v5567 = vunpack.c.h.b16 %v4351
      %v5568 = vunpack.c.l.b16 %v4352
      %v5569 = vunpack.c.h.b16 %v4352
      %v5570 = vunpack.c.l.b16 %v4353
      %v5571 = vunpack.c.h.b16 %v4353
      %v5572 = vunpack.c.l.b16 %v4354
      %v5573 = vunpack.c.h.b16 %v4354
      %v5574 = vunpack.c.l.b16 %v4355
      %v5575 = vunpack.c.h.b16 %v4355
      %v5576 = vunpack.c.l.b16 %v4356
      %v5577 = vunpack.c.h.b16 %v4356
      %v5578 = vunpack.c.l.b16 %v4357
      %v5579 = vunpack.c.h.b16 %v4357
      %v5580 = vunpack.c.l.b16 %v4358
      %v5581 = vunpack.c.h.b16 %v4358
      %v5582 = vunpack.c.l.b16 %v4359
      %v5583 = vunpack.c.h.b16 %v4359
      %v5584 = vunpack.c.l.b16 %v4360
      %v5585 = vunpack.c.h.b16 %v4360
      %v5586 = vunpack.c.l.b16 %v4361
      %v5587 = vunpack.c.h.b16 %v4361
      %v5588 = vunpack.c.l.b16 %v4362
      %v5589 = vunpack.c.h.b16 %v4362
      %v5590 = vunpack.c.l.b16 %v4363
      %v5591 = vunpack.c.h.b16 %v4363
      %v5592 = vunpack.c.l.b16 %v4364
      %v5593 = vunpack.c.h.b16 %v4364
      %v5594 = vunpack.c.l.b16 %v4365
      %v5595 = vunpack.c.h.b16 %v4365
      %v5596 = vunpack.c.l.b16 %v4366
      %v5597 = vunpack.c.h.b16 %v4366
      %v5598 = vunpack.c.l.b16 %v4367
      %v5599 = vunpack.c.h.b16 %v4367
      %v5600 = vunpack.c.l.b16 %v4368
      %v5601 = vunpack.c.h.b16 %v4368
      %v5602 = vunpack.c.l.b16 %v4369
      %v5603 = vunpack.c.h.b16 %v4369
      %v5604 = vunpack.c.l.b16 %v4370
      %v5605 = vunpack.c.h.b16 %v4370
      %v5606 = vunpack.c.l.b16 %v4371
      %v5607 = vunpack.c.h.b16 %v4371
      %v5608 = vunpack.c.l.b16 %v4372
      %v5609 = vunpack.c.h.b16 %v4372
      %v5610 = vunpack.c.l.b16 %v4373
      %v5611 = vunpack.c.h.b16 %v4373
      %v5612 = vunpack.c.l.b16 %v4374
      %v5613 = vunpack.c.h.b16 %v4374
      %v5614 = vunpack.c.l.b16 %v4375
      %v5615 = vunpack.c.h.b16 %v4375
      %v5616 = vunpack.c.l.b16 %v4376
      %v5617 = vunpack.c.h.b16 %v4376
      %v5618 = vunpack.c.l.b16 %v4377
      %v5619 = vunpack.c.h.b16 %v4377
      %v5620 = vunpack.c.l.b16 %v4378
      %v5621 = vunpack.c.h.b16 %v4378
      %v5622 = vunpack.c.l.b16 %v4379
      %v5623 = vunpack.c.h.b16 %v4379
      %v5624 = vunpack.c.l.b16 %v4380
      %v5625 = vunpack.c.h.b16 %v4380
      %v5626 = vunpack.c.l.b16 %v4381
      %v5627 = vunpack.c.h.b16 %v4381
      %v5628 = vunpack.c.l.b16 %v4382
      %v5629 = vunpack.c.h.b16 %v4382
      %v5630 = vunpack.c.l.b16 %v4383
      %v5631 = vunpack.c.h.b16 %v4383
      %v5632 = vunpack.c.l.b16 %v4384
      %v5633 = vunpack.c.h.b16 %v4384
      %v5634 = vunpack.c.l.b16 %v4385
      %v5635 = vunpack.c.h.b16 %v4385
      %v5636 = vunpack.c.l.b16 %v4386
      %v5637 = vunpack.c.h.b16 %v4386
      %v5638 = vunpack.c.l.b16 %v4387
      %v5639 = vunpack.c.h.b16 %v4387
      %v5640 = vunpack.c.l.b16 %v4388
      %v5641 = vunpack.c.h.b16 %v4388
      %v5642 = vunpack.c.l.b16 %v4389
      %v5643 = vunpack.c.h.b16 %v4389
      %v5644 = vunpack.c.l.b16 %v4390
      %v5645 = vunpack.c.h.b16 %v4390
      %v5646 = vunpack.c.l.b16 %v4391
      %v5647 = vunpack.c.h.b16 %v4391
      %v5648 = vunpack.c.l.b16 %v4392
      %v5649 = vunpack.c.h.b16 %v4392
      %v5650 = vunpack.c.l.b16 %v4393
      %v5651 = vunpack.c.h.b16 %v4393
      %v5652 = vunpack.c.l.b16 %v4394
      %v5653 = vunpack.c.h.b16 %v4394
      %v5654 = vunpack.c.l.b16 %v4395
      %v5655 = vunpack.c.h.b16 %v4395
      %v5656 = vunpack.c.l.b16 %v4396
      %v5657 = vunpack.c.h.b16 %v4396
      %v5658 = vunpack.c.l.b16 %v4397
      %v5659 = vunpack.c.h.b16 %v4397
      %v5660 = vunpack.c.l.b16 %v4398
      %v5661 = vunpack.c.h.b16 %v4398
      %v5662 = vunpack.c.l.b16 %v4399
      %v5663 = vunpack.c.h.b16 %v4399
      %v5664 = vunpack.c.l.b16 %v4400
      %v5665 = vunpack.c.h.b16 %v4400
      %v5666 = vunpack.c.l.b16 %v4401
      %v5667 = vunpack.c.h.b16 %v4401
      %v5668 = vunpack.c.l.b16 %v4402
      %v5669 = vunpack.c.h.b16 %v4402
      %v5670 = vunpack.c.l.b16 %v4403
      %v5671 = vunpack.c.h.b16 %v4403
      %v5672 = vunpack.c.l.b16 %v4404
      %v5673 = vunpack.c.h.b16 %v4404
      %v5674 = vunpack.c.l.b16 %v4405
      %v5675 = vunpack.c.h.b16 %v4405
      %v5676 = vunpack.c.l.b16 %v4406
      %v5677 = vunpack.c.h.b16 %v4406
      %v5678 = vunpack.c.l.b16 %v4407
      %v5679 = vunpack.c.h.b16 %v4407
      %v5680 = vunpack.c.l.b16 %v4408
      %v5681 = vunpack.c.h.b16 %v4408
      %v5682 = vunpack.c.l.b16 %v4409
      %v5683 = vunpack.c.h.b16 %v4409
      %v5684 = vunpack.c.l.b16 %v4410
      %v5685 = vunpack.c.h.b16 %v4410
      %v5686 = vunpack.c.l.b16 %v4411
      %v5687 = vunpack.c.h.b16 %v4411
      %v5688 = vunpack.c.l.b16 %v4412
      %v5689 = vunpack.c.h.b16 %v4412
      %v5690 = vunpack.c.l.b16 %v4413
      %v5691 = vunpack.c.h.b16 %v4413
      %v5692 = vunpack.c.l.b16 %v4414
      %v5693 = vunpack.c.h.b16 %v4414
      %v5694 = vunpack.c.l.b16 %v4415
      %v5695 = vunpack.c.h.b16 %v4415
      %v5696 = vunpack.c.l.b16 %v4416
      %v5697 = vunpack.c.h.b16 %v4416
      %v5698 = vunpack.c.l.b16 %v4417
      %v5699 = vunpack.c.h.b16 %v4417
      %v5700 = vunpack.c.l.b16 %v4418
      %v5701 = vunpack.c.h.b16 %v4418
      %v5702 = vunpack.c.l.b16 %v4419
      %v5703 = vunpack.c.h.b16 %v4419
      %v5704 = vunpack.c.l.b16 %v4420
      %v5705 = vunpack.c.h.b16 %v4420
      %v5706 = vunpack.c.l.b16 %v4421
      %v5707 = vunpack.c.h.b16 %v4421
      %v5708 = vunpack.c.l.b16 %v4422
      %v5709 = vunpack.c.h.b16 %v4422
      %v5710 = vunpack.c.l.b16 %v4423
      %v5711 = vunpack.c.h.b16 %v4423
      %v5712 = vunpack.c.l.b16 %v4424
      %v5713 = vunpack.c.h.b16 %v4424
      %v5714 = vunpack.c.l.b16 %v4425
      %v5715 = vunpack.c.h.b16 %v4425
      %v5716 = vunpack.c.l.b16 %v4426
      %v5717 = vunpack.c.h.b16 %v4426
      %v5718 = vunpack.c.l.b16 %v4427
      %v5719 = vunpack.c.h.b16 %v4427
      %v5720 = vunpack.c.l.b16 %v4428
      %v5721 = vunpack.c.h.b16 %v4428
      %v5722 = vunpack.c.l.b16 %v4429
      %v5723 = vunpack.c.h.b16 %v4429
      %v5724 = vunpack.c.l.b16 %v4430
      %v5725 = vunpack.c.h.b16 %v4430
      %v5726 = vunpack.c.l.b16 %v4431
      %v5727 = vunpack.c.h.b16 %v4431
      %v5728 = vunpack.c.l.b16 %v4432
      %v5729 = vunpack.c.h.b16 %v4432
      %v5730 = vunpack.c.l.b16 %v4433
      %v5731 = vunpack.c.h.b16 %v4433
      %v5732 = vunpack.c.l.b16 %v4434
      %v5733 = vunpack.c.h.b16 %v4434
      %v5734 = vunpack.c.l.b16 %v4435
      %v5735 = vunpack.c.h.b16 %v4435
      %v5736 = vunpack.c.l.b16 %v4436
      %v5737 = vunpack.c.h.b16 %v4436
      %v5738 = vunpack.c.l.b16 %v4437
      %v5739 = vunpack.c.h.b16 %v4437
      %v5740 = vunpack.c.l.b16 %v4438
      %v5741 = vunpack.c.h.b16 %v4438
      %v5742 = vunpack.c.l.b16 %v4439
      %v5743 = vunpack.c.h.b16 %v4439
      %v5744 = vunpack.c.l.b16 %v4440
      %v5745 = vunpack.c.h.b16 %v4440
      %v5746 = vunpack.c.l.b16 %v4441
      %v5747 = vunpack.c.h.b16 %v4441
      %v5748 = vunpack.c.l.b16 %v4442
      %v5749 = vunpack.c.h.b16 %v4442
      %v5750 = vunpack.c.l.b16 %v4443
      %v5751 = vunpack.c.h.b16 %v4443
      %v5752 = vunpack.c.l.b16 %v4444
      %v5753 = vunpack.c.h.b16 %v4444
      %v5754 = vunpack.c.l.b16 %v4445
      %v5755 = vunpack.c.h.b16 %v4445
      %v5756 = vunpack.c.l.b16 %v4446
      %v5757 = vunpack.c.h.b16 %v4446
      %v5758 = vunpack.c.l.b16 %v4447
      %v5759 = vunpack.c.h.b16 %v4447
      %v5760 = vunpack.c.l.b16 %v4448
      %v5761 = vunpack.c.h.b16 %v4448
      %v5762 = vunpack.c.l.b16 %v4449
      %v5763 = vunpack.c.h.b16 %v4449
      %v5764 = vunpack.c.l.b16 %v4450
      %v5765 = vunpack.c.h.b16 %v4450
      %v5766 = vunpack.c.l.b16 %v4451
      %v5767 = vunpack.c.h.b16 %v4451
      %v5768 = vunpack.c.l.b16 %v4452
      %v5769 = vunpack.c.h.b16 %v4452
      %v5770 = vunpack.c.l.b16 %v4453
      %v5771 = vunpack.c.h.b16 %v4453
      %v5772 = vunpack.c.l.b16 %v4454
      %v5773 = vunpack.c.h.b16 %v4454
      %v5774 = vunpack.c.l.b16 %v4455
      %v5775 = vunpack.c.h.b16 %v4455
      %v5776 = vunpack.c.l.b16 %v4456
      %v5777 = vunpack.c.h.b16 %v4456
      %v5778 = vpack.c.b16 %v4902, %v4898
      %v5779 = vpack.c.b16 %v4903, %v4899
      %v5780 = vpack.c.b16 %v4904, %v4900
      %v5781 = vpack.c.b16 %v4905, %v4901
      %v5782 = vpack.c.b16 %v4910, %v4906
      %v5783 = vpack.c.b16 %v4911, %v4907
      %v5784 = vpack.c.b16 %v4912, %v4908
      %v5785 = vpack.c.b16 %v4913, %v4909
      %v5786 = vpack.c.b16 %v4918, %v4914
      %v5787 = vpack.c.b16 %v4919, %v4915
      %v5788 = vpack.c.b16 %v4920, %v4916
      %v5789 = vpack.c.b16 %v4921, %v4917
      %v5790 = vpack.c.b16 %v4926, %v4922
      %v5791 = vpack.c.b16 %v4927, %v4923
      %v5792 = vpack.c.b16 %v4928, %v4924
      %v5793 = vpack.c.b16 %v4929, %v4925
      %v5794 = vpack.c.b16 %v4934, %v4930
      %v5795 = vpack.c.b16 %v4935, %v4931
      %v5796 = vpack.c.b16 %v4936, %v4932
      %v5797 = vpack.c.b16 %v4937, %v4933
      %v5798 = vpack.c.b16 %v4942, %v4938
      %v5799 = vpack.c.b16 %v4943, %v4939
      %v5800 = vpack.c.b16 %v4944, %v4940
      %v5801 = vpack.c.b16 %v4945, %v4941
      %v5802 = vpack.c.b16 %v4950, %v4946
      %v5803 = vpack.c.b16 %v4951, %v4947
      %v5804 = vpack.c.b16 %v4952, %v4948
      %v5805 = vpack.c.b16 %v4953, %v4949
      %v5806 = vpack.c.b16 %v4958, %v4954
      %v5807 = vpack.c.b16 %v4959, %v4955
      %v5808 = vpack.c.b16 %v4960, %v4956
      %v5809 = vpack.c.b16 %v4961, %v4957
      %v5810 = vpack.c.b16 %v4966, %v4962
      %v5811 = vpack.c.b16 %v4967, %v4963
      %v5812 = vpack.c.b16 %v4968, %v4964
      %v5813 = vpack.c.b16 %v4969, %v4965
      %v5814 = vpack.c.b16 %v4974, %v4970
      %v5815 = vpack.c.b16 %v4975, %v4971
      %v5816 = vpack.c.b16 %v4976, %v4972
      %v5817 = vpack.c.b16 %v4977, %v4973
      %v5818 = vpack.c.b16 %v4982, %v4978
      %v5819 = vpack.c.b16 %v4983, %v4979
      %v5820 = vpack.c.b16 %v4984, %v4980
      %v5821 = vpack.c.b16 %v4985, %v4981
      %v5822 = vpack.c.b16 %v4990, %v4986
      %v5823 = vpack.c.b16 %v4991, %v4987
      %v5824 = vpack.c.b16 %v4992, %v4988
      %v5825 = vpack.c.b16 %v4993, %v4989
      %v5826 = vpack.c.b16 %v4998, %v4994
      %v5827 = vpack.c.b16 %v4999, %v4995
      %v5828 = vpack.c.b16 %v5000, %v4996
      %v5829 = vpack.c.b16 %v5001, %v4997
      %v5830 = vpack.c.b16 %v5006, %v5002
      %v5831 = vpack.c.b16 %v5007, %v5003
      %v5832 = vpack.c.b16 %v5008, %v5004
      %v5833 = vpack.c.b16 %v5009, %v5005
      %v5834 = vpack.c.b16 %v5014, %v5010
      %v5835 = vpack.c.b16 %v5015, %v5011
      %v5836 = vpack.c.b16 %v5016, %v5012
      %v5837 = vpack.c.b16 %v5017, %v5013
      %v5838 = vpack.c.b16 %v5022, %v5018
      %v5839 = vpack.c.b16 %v5023, %v5019
      %v5840 = vpack.c.b16 %v5024, %v5020
      %v5841 = vpack.c.b16 %v5025, %v5021
      %v5842 = vpack.c.b16 %v5030, %v5026
      %v5843 = vpack.c.b16 %v5031, %v5027
      %v5844 = vpack.c.b16 %v5032, %v5028
      %v5845 = vpack.c.b16 %v5033, %v5029
      %v5846 = vpack.c.b16 %v5038, %v5034
      %v5847 = vpack.c.b16 %v5039, %v5035
      %v5848 = vpack.c.b16 %v5040, %v5036
      %v5849 = vpack.c.b16 %v5041, %v5037
      %v5850 = vpack.c.b16 %v5046, %v5042
      %v5851 = vpack.c.b16 %v5047, %v5043
      %v5852 = vpack.c.b16 %v5048, %v5044
      %v5853 = vpack.c.b16 %v5049, %v5045
      %v5854 = vpack.c.b16 %v5054, %v5050
      %v5855 = vpack.c.b16 %v5055, %v5051
      %v5856 = vpack.c.b16 %v5056, %v5052
      %v5857 = vpack.c.b16 %v5057, %v5053
      %v5858 = vpack.c.b16 %v5062, %v5058
      %v5859 = vpack.c.b16 %v5063, %v5059
      %v5860 = vpack.c.b16 %v5064, %v5060
      %v5861 = vpack.c.b16 %v5065, %v5061
      %v5862 = vpack.c.b16 %v5070, %v5066
      %v5863 = vpack.c.b16 %v5071, %v5067
      %v5864 = vpack.c.b16 %v5072, %v5068
      %v5865 = vpack.c.b16 %v5073, %v5069
      %v5866 = vpack.c.b16 %v5078, %v5074
      %v5867 = vpack.c.b16 %v5079, %v5075
      %v5868 = vpack.c.b16 %v5080, %v5076
      %v5869 = vpack.c.b16 %v5081, %v5077
      %v5870 = vpack.c.b16 %v5086, %v5082
      %v5871 = vpack.c.b16 %v5087, %v5083
      %v5872 = vpack.c.b16 %v5088, %v5084
      %v5873 = vpack.c.b16 %v5089, %v5085
      %v5874 = vpack.c.b16 %v5094, %v5090
      %v5875 = vpack.c.b16 %v5095, %v5091
      %v5876 = vpack.c.b16 %v5096, %v5092
      %v5877 = vpack.c.b16 %v5097, %v5093
      %v5878 = vpack.c.b16 %v5102, %v5098
      %v5879 = vpack.c.b16 %v5103, %v5099
      %v5880 = vpack.c.b16 %v5104, %v5100
      %v5881 = vpack.c.b16 %v5105, %v5101
      %v5882 = vpack.c.b16 %v5110, %v5106
      %v5883 = vpack.c.b16 %v5111, %v5107
      %v5884 = vpack.c.b16 %v5112, %v5108
      %v5885 = vpack.c.b16 %v5113, %v5109
      %v5886 = vpack.c.b16 %v5118, %v5114
      %v5887 = vpack.c.b16 %v5119, %v5115
      %v5888 = vpack.c.b16 %v5120, %v5116
      %v5889 = vpack.c.b16 %v5121, %v5117
      %v5890 = vpack.c.b16 %v5126, %v5122
      %v5891 = vpack.c.b16 %v5127, %v5123
      %v5892 = vpack.c.b16 %v5128, %v5124
      %v5893 = vpack.c.b16 %v5129, %v5125
      %v5894 = vpack.c.b16 %v5134, %v5130
      %v5895 = vpack.c.b16 %v5135, %v5131
      %v5896 = vpack.c.b16 %v5136, %v5132
      %v5897 = vpack.c.b16 %v5137, %v5133
      %v5898 = vpack.c.b16 %v5142, %v5138
      %v5899 = vpack.c.b16 %v5143, %v5139
      %v5900 = vpack.c.b16 %v5144, %v5140
      %v5901 = vpack.c.b16 %v5145, %v5141
      %v5902 = vpack.c.b16 %v5150, %v5146
      %v5903 = vpack.c.b16 %v5151, %v5147
      %v5904 = vpack.c.b16 %v5152, %v5148
      %v5905 = vpack.c.b16 %v5153, %v5149
      %v5906 = vpack.c.b16 %v5158, %v5154
      %v5907 = vpack.c.b16 %v5159, %v5155
      %v5908 = vpack.c.b16 %v5160, %v5156
      %v5909 = vpack.c.b16 %v5161, %v5157
      %v5910 = vpack.c.b16 %v5166, %v5162
      %v5911 = vpack.c.b16 %v5167, %v5163
      %v5912 = vpack.c.b16 %v5168, %v5164
      %v5913 = vpack.c.b16 %v5169, %v5165
      %v5914 = vpack.c.b16 %v5174, %v5170
      %v5915 = vpack.c.b16 %v5175, %v5171
      %v5916 = vpack.c.b16 %v5176, %v5172
      %v5917 = vpack.c.b16 %v5177, %v5173
      %v5918 = vpack.c.b16 %v5182, %v5178
      %v5919 = vpack.c.b16 %v5183, %v5179
      %v5920 = vpack.c.b16 %v5184, %v5180
      %v5921 = vpack.c.b16 %v5185, %v5181
      %v5922 = vpack.c.b16 %v5190, %v5186
      %v5923 = vpack.c.b16 %v5191, %v5187
      %v5924 = vpack.c.b16 %v5192, %v5188
      %v5925 = vpack.c.b16 %v5193, %v5189
      %v5926 = vpack.c.b16 %v5198, %v5194
      %v5927 = vpack.c.b16 %v5199, %v5195
      %v5928 = vpack.c.b16 %v5200, %v5196
      %v5929 = vpack.c.b16 %v5201, %v5197
      %v5930 = vpack.c.b16 %v5206, %v5202
      %v5931 = vpack.c.b16 %v5207, %v5203
      %v5932 = vpack.c.b16 %v5208, %v5204
      %v5933 = vpack.c.b16 %v5209, %v5205
      %v5934 = vpack.c.b16 %v5214, %v5210
      %v5935 = vpack.c.b16 %v5215, %v5211
      %v5936 = vpack.c.b16 %v5216, %v5212
      %v5937 = vpack.c.b16 %v5217, %v5213
      %v5938 = vpack.c.b16 %v5222, %v5218
      %v5939 = vpack.c.b16 %v5223, %v5219
      %v5940 = vpack.c.b16 %v5224, %v5220
      %v5941 = vpack.c.b16 %v5225, %v5221
      %v5942 = vpack.c.b16 %v5230, %v5226
      %v5943 = vpack.c.b16 %v5231, %v5227
      %v5944 = vpack.c.b16 %v5232, %v5228
      %v5945 = vpack.c.b16 %v5233, %v5229
      %v5946 = vpack.c.b16 %v5238, %v5234
      %v5947 = vpack.c.b16 %v5239, %v5235
      %v5948 = vpack.c.b16 %v5240, %v5236
      %v5949 = vpack.c.b16 %v5241, %v5237
      %v5950 = vpack.c.b16 %v5246, %v5242
      %v5951 = vpack.c.b16 %v5247, %v5243
      %v5952 = vpack.c.b16 %v5248, %v5244
      %v5953 = vpack.c.b16 %v5249, %v5245
      %v5954 = vpack.c.b16 %v5254, %v5250
      %v5955 = vpack.c.b16 %v5255, %v5251
      %v5956 = vpack.c.b16 %v5256, %v5252
      %v5957 = vpack.c.b16 %v5257, %v5253
      %v5958 = vpack.c.b16 %v5262, %v5258
      %v5959 = vpack.c.b16 %v5263, %v5259
      %v5960 = vpack.c.b16 %v5264, %v5260
      %v5961 = vpack.c.b16 %v5265, %v5261
      %v5962 = vpack.c.b16 %v5270, %v5266
      %v5963 = vpack.c.b16 %v5271, %v5267
      %v5964 = vpack.c.b16 %v5272, %v5268
      %v5965 = vpack.c.b16 %v5273, %v5269
      %v5966 = vpack.c.b16 %v5278, %v5274
      %v5967 = vpack.c.b16 %v5279, %v5275
      %v5968 = vpack.c.b16 %v5280, %v5276
      %v5969 = vpack.c.b16 %v5281, %v5277
      %v5970 = vpack.c.b16 %v5286, %v5282
      %v5971 = vpack.c.b16 %v5287, %v5283
      %v5972 = vpack.c.b16 %v5288, %v5284
      %v5973 = vpack.c.b16 %v5289, %v5285
      %v5974 = vpack.c.b16 %v5294, %v5290
      %v5975 = vpack.c.b16 %v5295, %v5291
      %v5976 = vpack.c.b16 %v5296, %v5292
      %v5977 = vpack.c.b16 %v5297, %v5293
      %v5978 = vpack.c.b16 %v5302, %v5298
      %v5979 = vpack.c.b16 %v5303, %v5299
      %v5980 = vpack.c.b16 %v5304, %v5300
      %v5981 = vpack.c.b16 %v5305, %v5301
      %v5982 = vpack.c.b16 %v5310, %v5306
      %v5983 = vpack.c.b16 %v5311, %v5307
      %v5984 = vpack.c.b16 %v5312, %v5308
      %v5985 = vpack.c.b16 %v5313, %v5309
      %v5986 = vpack.c.b16 %v5318, %v5314
      %v5987 = vpack.c.b16 %v5319, %v5315
      %v5988 = vpack.c.b16 %v5320, %v5316
      %v5989 = vpack.c.b16 %v5321, %v5317
      %v5990 = vpack.c.b16 %v5326, %v5322
      %v5991 = vpack.c.b16 %v5327, %v5323
      %v5992 = vpack.c.b16 %v5328, %v5324
      %v5993 = vpack.c.b16 %v5329, %v5325
      %v5994 = vpack.c.b16 %v5334, %v5330
      %v5995 = vpack.c.b16 %v5335, %v5331
      %v5996 = vpack.c.b16 %v5336, %v5332
      %v5997 = vpack.c.b16 %v5337, %v5333
      %v5998 = vpack.c.b16 %v5342, %v5338
      %v5999 = vpack.c.b16 %v5343, %v5339
      %v6000 = vpack.c.b16 %v5344, %v5340
      %v6001 = vpack.c.b16 %v5345, %v5341
      %v6002 = vpack.c.b16 %v5350, %v5346
      %v6003 = vpack.c.b16 %v5351, %v5347
      %v6004 = vpack.c.b16 %v5352, %v5348
      %v6005 = vpack.c.b16 %v5353, %v5349
      %v6006 = vpack.c.b16 %v5358, %v5354
      %v6007 = vpack.c.b16 %v5359, %v5355
      %v6008 = vpack.c.b16 %v5360, %v5356
      %v6009 = vpack.c.b16 %v5361, %v5357
      %v6010 = vpack.c.b16 %v5366, %v5362
      %v6011 = vpack.c.b16 %v5367, %v5363
      %v6012 = vpack.c.b16 %v5368, %v5364
      %v6013 = vpack.c.b16 %v5369, %v5365
      %v6014 = vpack.c.b16 %v5374, %v5370
      %v6015 = vpack.c.b16 %v5375, %v5371
      %v6016 = vpack.c.b16 %v5376, %v5372
      %v6017 = vpack.c.b16 %v5377, %v5373
      %v6018 = vpack.c.b16 %v5382, %v5378
      %v6019 = vpack.c.b16 %v5383, %v5379
      %v6020 = vpack.c.b16 %v5384, %v5380
      %v6021 = vpack.c.b16 %v5385, %v5381
      %v6022 = vpack.c.b16 %v5390, %v5386
      %v6023 = vpack.c.b16 %v5391, %v5387
      %v6024 = vpack.c.b16 %v5392, %v5388
      %v6025 = vpack.c.b16 %v5393, %v5389
      %v6026 = vpack.c.b16 %v5398, %v5394
      %v6027 = vpack.c.b16 %v5399, %v5395
      %v6028 = vpack.c.b16 %v5400, %v5396
      %v6029 = vpack.c.b16 %v5401, %v5397
      %v6030 = vpack.c.b16 %v5406, %v5402
      %v6031 = vpack.c.b16 %v5407, %v5403
      %v6032 = vpack.c.b16 %v5408, %v5404
      %v6033 = vpack.c.b16 %v5409, %v5405
      %v6034 = vpack.c.b16 %v5414, %v5410
      %v6035 = vpack.c.b16 %v5415, %v5411
      %v6036 = vpack.c.b16 %v5416, %v5412
      %v6037 = vpack.c.b16 %v5417, %v5413
      %v6038 = vpack.c.b16 %v5422, %v5418
      %v6039 = vpack.c.b16 %v5423, %v5419
      %v6040 = vpack.c.b16 %v5424, %v5420
      %v6041 = vpack.c.b16 %v5425, %v5421
      %v6042 = vpack.c.b16 %v5430, %v5426
      %v6043 = vpack.c.b16 %v5431, %v5427
      %v6044 = vpack.c.b16 %v5432, %v5428
      %v6045 = vpack.c.b16 %v5433, %v5429
      %v6046 = vpack.c.b16 %v5438, %v5434
      %v6047 = vpack.c.b16 %v5439, %v5435
      %v6048 = vpack.c.b16 %v5440, %v5436
      %v6049 = vpack.c.b16 %v5441, %v5437
      %v6050 = vpack.c.b16 %v5446, %v5442
      %v6051 = vpack.c.b16 %v5447, %v5443
      %v6052 = vpack.c.b16 %v5448, %v5444
      %v6053 = vpack.c.b16 %v5449, %v5445
      %v6054 = vpack.c.b16 %v5454, %v5450
      %v6055 = vpack.c.b16 %v5455, %v5451
      %v6056 = vpack.c.b16 %v5456, %v5452
      %v6057 = vpack.c.b16 %v5457, %v5453
      %v6058 = vpack.c.b16 %v5462, %v5458
      %v6059 = vpack.c.b16 %v5463, %v5459
      %v6060 = vpack.c.b16 %v5464, %v5460
      %v6061 = vpack.c.b16 %v5465, %v5461
      %v6062 = vpack.c.b16 %v5470, %v5466
      %v6063 = vpack.c.b16 %v5471, %v5467
      %v6064 = vpack.c.b16 %v5472, %v5468
      %v6065 = vpack.c.b16 %v5473, %v5469
      %v6066 = vpack.c.b16 %v5478, %v5474
      %v6067 = vpack.c.b16 %v5479, %v5475
      %v6068 = vpack.c.b16 %v5480, %v5476
      %v6069 = vpack.c.b16 %v5481, %v5477
      %v6070 = vpack.c.b16 %v5486, %v5482
      %v6071 = vpack.c.b16 %v5487, %v5483
      %v6072 = vpack.c.b16 %v5488, %v5484
      %v6073 = vpack.c.b16 %v5489, %v5485
      %v6074 = vpack.c.b16 %v5494, %v5490
      %v6075 = vpack.c.b16 %v5495, %v5491
      %v6076 = vpack.c.b16 %v5496, %v5492
      %v6077 = vpack.c.b16 %v5497, %v5493
      %v6078 = vpack.c.b16 %v5502, %v5498
      %v6079 = vpack.c.b16 %v5503, %v5499
      %v6080 = vpack.c.b16 %v5504, %v5500
      %v6081 = vpack.c.b16 %v5505, %v5501
      %v6082 = vpack.c.b16 %v5510, %v5506
      %v6083 = vpack.c.b16 %v5511, %v5507
      %v6084 = vpack.c.b16 %v5512, %v5508
      %v6085 = vpack.c.b16 %v5513, %v5509
      %v6086 = vpack.c.b16 %v5518, %v5514
      %v6087 = vpack.c.b16 %v5519, %v5515
      %v6088 = vpack.c.b16 %v5520, %v5516
      %v6089 = vpack.c.b16 %v5521, %v5517
      %v6090 = vpack.c.b16 %v5526, %v5522
      %v6091 = vpack.c.b16 %v5527, %v5523
      %v6092 = vpack.c.b16 %v5528, %v5524
      %v6093 = vpack.c.b16 %v5529, %v5525
      %v6094 = vpack.c.b16 %v5534, %v5530
      %v6095 = vpack.c.b16 %v5535, %v5531
      %v6096 = vpack.c.b16 %v5536, %v5532
      %v6097 = vpack.c.b16 %v5537, %v5533
      %v6098 = vpack.c.b16 %v5542, %v5538
      %v6099 = vpack.c.b16 %v5543, %v5539
      %v6100 = vpack.c.b16 %v5544, %v5540
      %v6101 = vpack.c.b16 %v5545, %v5541
      %v6102 = vpack.c.b16 %v5550, %v5546
      %v6103 = vpack.c.b16 %v5551, %v5547
      %v6104 = vpack.c.b16 %v5552, %v5548
      %v6105 = vpack.c.b16 %v5553, %v5549
      %v6106 = vpack.c.b16 %v5558, %v5554
      %v6107 = vpack.c.b16 %v5559, %v5555
      %v6108 = vpack.c.b16 %v5560, %v5556
      %v6109 = vpack.c.b16 %v5561, %v5557
      %v6110 = vpack.c.b16 %v5566, %v5562
      %v6111 = vpack.c.b16 %v5567, %v5563
      %v6112 = vpack.c.b16 %v5568, %v5564
      %v6113 = vpack.c.b16 %v5569, %v5565
      %v6114 = vpack.c.b16 %v5574, %v5570
      %v6115 = vpack.c.b16 %v5575, %v5571
      %v6116 = vpack.c.b16 %v5576, %v5572
      %v6117 = vpack.c.b16 %v5577, %v5573
      %v6118 = vpack.c.b16 %v5582, %v5578
      %v6119 = vpack.c.b16 %v5583, %v5579
      %v6120 = vpack.c.b16 %v5584, %v5580
      %v6121 = vpack.c.b16 %v5585, %v5581
      %v6122 = vpack.c.b16 %v5590, %v5586
      %v6123 = vpack.c.b16 %v5591, %v5587
      %v6124 = vpack.c.b16 %v5592, %v5588
      %v6125 = vpack.c.b16 %v5593, %v5589
      %v6126 = vpack.c.b16 %v5598, %v5594
      %v6127 = vpack.c.b16 %v5599, %v5595
      %v6128 = vpack.c.b16 %v5600, %v5596
      %v6129 = vpack.c.b16 %v5601, %v5597
      %v6130 = vpack.c.b16 %v5606, %v5602
      %v6131 = vpack.c.b16 %v5607, %v5603
      %v6132 = vpack.c.b16 %v5608, %v5604
      %v6133 = vpack.c.b16 %v5609, %v5605
      %v6134 = vpack.c.b16 %v5614, %v5610
      %v6135 = vpack.c.b16 %v5615, %v5611
      %v6136 = vpack.c.b16 %v5616, %v5612
      %v6137 = vpack.c.b16 %v5617, %v5613
      %v6138 = vpack.c.b16 %v5622, %v5618
      %v6139 = vpack.c.b16 %v5623, %v5619
      %v6140 = vpack.c.b16 %v5624, %v5620
      %v6141 = vpack.c.b16 %v5625, %v5621
      %v6142 = vpack.c.b16 %v5630, %v5626
      %v6143 = vpack.c.b16 %v5631, %v5627
      %v6144 = vpack.c.b16 %v5632, %v5628
      %v6145 = vpack.c.b16 %v5633, %v5629
      %v6146 = vpack.c.b16 %v5638, %v5634
      %v6147 = vpack.c.b16 %v5639, %v5635
      %v6148 = vpack.c.b16 %v5640, %v5636
      %v6149 = vpack.c.b16 %v5641, %v5637
      %v6150 = vpack.c.b16 %v5646, %v5642
      %v6151 = vpack.c.b16 %v5647, %v5643
      %v6152 = vpack.c.b16 %v5648, %v5644
      %v6153 = vpack.c.b16 %v5649, %v5645
      %v6154 = vpack.c.b16 %v5654, %v5650
      %v6155 = vpack.c.b16 %v5655, %v5651
      %v6156 = vpack.c.b16 %v5656, %v5652
      %v6157 = vpack.c.b16 %v5657, %v5653
      %v6158 = vpack.c.b16 %v5662, %v5658
      %v6159 = vpack.c.b16 %v5663, %v5659
      %v6160 = vpack.c.b16 %v5664, %v5660
      %v6161 = vpack.c.b16 %v5665, %v5661
      %v6162 = vpack.c.b16 %v5670, %v5666
      %v6163 = vpack.c.b16 %v5671, %v5667
      %v6164 = vpack.c.b16 %v5672, %v5668
      %v6165 = vpack.c.b16 %v5673, %v5669
      %v6166 = vpack.c.b16 %v5678, %v5674
      %v6167 = vpack.c.b16 %v5679, %v5675
      %v6168 = vpack.c.b16 %v5680, %v5676
      %v6169 = vpack.c.b16 %v5681, %v5677
      %v6170 = vpack.c.b16 %v5686, %v5682
      %v6171 = vpack.c.b16 %v5687, %v5683
      %v6172 = vpack.c.b16 %v5688, %v5684
      %v6173 = vpack.c.b16 %v5689, %v5685
      %v6174 = vpack.c.b16 %v5694, %v5690
      %v6175 = vpack.c.b16 %v5695, %v5691
      %v6176 = vpack.c.b16 %v5696, %v5692
      %v6177 = vpack.c.b16 %v5697, %v5693
      %v6178 = vpack.c.b16 %v5702, %v5698
      %v6179 = vpack.c.b16 %v5703, %v5699
      %v6180 = vpack.c.b16 %v5704, %v5700
      %v6181 = vpack.c.b16 %v5705, %v5701
      %v6182 = vpack.c.b16 %v5710, %v5706
      %v6183 = vpack.c.b16 %v5711, %v5707
      %v6184 = vpack.c.b16 %v5712, %v5708
      %v6185 = vpack.c.b16 %v5713, %v5709
      %v6186 = vpack.c.b16 %v5718, %v5714
      %v6187 = vpack.c.b16 %v5719, %v5715
      %v6188 = vpack.c.b16 %v5720, %v5716
      %v6189 = vpack.c.b16 %v5721, %v5717
      %v6190 = vpack.c.b16 %v5726, %v5722
      %v6191 = vpack.c.b16 %v5727, %v5723
      %v6192 = vpack.c.b16 %v5728, %v5724
      %v6193 = vpack.c.b16 %v5729, %v5725
      %v6194 = vpack.c.b16 %v5734, %v5730
      %v6195 = vpack.c.b16 %v5735, %v5731
      %v6196 = vpack.c.b16 %v5736, %v5732
      %v6197 = vpack.c.b16 %v5737, %v5733
      %v6198 = vpack.c.b16 %v5742, %v5738
      %v6199 = vpack.c.b16 %v5743, %v5739
      %v6200 = vpack.c.b16 %v5744, %v5740
      %v6201 = vpack.c.b16 %v5745, %v5741
      %v6202 = vpack.c.b16 %v5750, %v5746
      %v6203 = vpack.c.b16 %v5751, %v5747
      %v6204 = vpack.c.b16 %v5752, %v5748
      %v6205 = vpack.c.b16 %v5753, %v5749
      %v6206 = vpack.c.b16 %v5758, %v5754
      %v6207 = vpack.c.b16 %v5759, %v5755
      %v6208 = vpack.c.b16 %v5760, %v5756
      %v6209 = vpack.c.b16 %v5761, %v5757
      %v6210 = vpack.c.b16 %v5766, %v5762
      %v6211 = vpack.c.b16 %v5767, %v5763
      %v6212 = vpack.c.b16 %v5768, %v5764
      %v6213 = vpack.c.b16 %v5769, %v5765
      %v6214 = vpack.c.b16 %v5774, %v5770
      %v6215 = vpack.c.b16 %v5775, %v5771
      %v6216 = vpack.c.b16 %v5776, %v5772
      %v6217 = vpack.c.b16 %v5777, %v5773
      %v6659 = vlaneseq
      %v6660 = vshrl.u32 %v6659, 7
      %v6661 = vsub.s32 0, %v6660
      %v6662 = vrot.slane %v4457, %v6661
      %v6663 = vlaneseq
      %v6664 = vshrl.u32 %v6663, 7
      %v6665 = vsub.s32 1, %v6664
      %v6666 = vrot.slane %v4457, %v6665
      %v6667 = vlaneseq
      %v6668 = vshrl.u32 %v6667, 7
      %v6669 = vsub.s32 2, %v6668
      %v6670 = vrot.slane %v4457, %v6669
      %v6671 = vlaneseq
      %v6672 = vshrl.u32 %v6671, 7
      %v6673 = vsub.s32 3, %v6672
      %v6674 = vrot.slane %v4457, %v6673
      %vm6679 = vcmask 785408
      %v6681 = vsel %vm6679, %v4016, 0
      %6683 = vmatprep.subr.bf16.mxu0 %v5779
      %6684 = vmatpush1.bf16.msra.mxu0 %v5778
      %6685 = vmatprep.subr.bf16.mxu0 %v5783
      %6686 = vmatpush1.bf16.msra.mxu0 %v5782
      %6687 = vmatprep.subr.bf16.mxu0 %v5787
      %6688 = vmatpush1.bf16.msra.mxu0 %v5786
      %6689 = vmatprep.subr.bf16.mxu0 %v5791
      %6690 = vmatpush1.bf16.msra.mxu0 %v5790
      %6691 = vmatprep.subr.bf16.mxu0 %v5795
      %6692 = vmatpush1.bf16.msra.mxu0 %v5794
      %6693 = vmatprep.subr.bf16.mxu0 %v5799
      %6694 = vmatpush1.bf16.msra.mxu0 %v5798
      %6695 = vmatprep.subr.bf16.mxu0 %v5803
      %6696 = vmatpush1.bf16.msra.mxu0 %v5802
      %6697 = vmatprep.subr.bf16.mxu0 %v5807
      %6698 = vmatpush1.bf16.msra.mxu0 %v5806
      %6699 = vmatprep.subr.bf16.mxu0 %v5811
      %6700 = vmatpush1.bf16.msra.mxu0 %v5810
      %6701 = vmatprep.subr.bf16.mxu0 %v5815
      %6702 = vmatpush1.bf16.msra.mxu0 %v5814
      %6703 = vmatprep.subr.bf16.mxu0 %v5819
      %6704 = vmatpush1.bf16.msra.mxu0 %v5818
      %6705 = vmatprep.subr.bf16.mxu0 %v5823
      %6706 = vmatpush1.bf16.msra.mxu0 %v5822
      %6707 = vmatprep.subr.bf16.mxu0 %v5827
      %6708 = vmatpush1.bf16.msra.mxu0 %v5826
      %6709 = vmatprep.subr.bf16.mxu0 %v5831
      %6710 = vmatpush1.bf16.msra.mxu0 %v5830
      %6711 = vmatprep.subr.bf16.mxu0 %v5835
      %6712 = vmatpush1.bf16.msra.mxu0 %v5834
      %6713 = vmatprep.subr.bf16.mxu0 %v5839
      %6714 = vmatpush1.bf16.msra.mxu0 %v5838
      %6715 = vmatprep.mubr.bf16.mxu0 %v4004
      %6716 = vmatmul.mubr.bf16.gmra.mrb[0].mxu0 %v4003
      %v6717 = vpop.f32.mrb[0].mxu0
      %v6718 = vadd.f32 %v6662, %v6717
      %v6719 = vpop.f32.mrb[0].mxu0
      %v6720 = vadd.f32 %v6666, %v6719
      %v6721 = vpop.f32.mrb[0].mxu0
      %v6722 = vpop.f32.mrb[0].mxu0
      %6723 = vdwg.mxu0
      %6724 = vmatprep.subr.bf16.mxu0 %v5843
      %6725 = vmatpush1.bf16.msra.mxu0 %v5842
      %6726 = vmatprep.subr.bf16.mxu0 %v5847
      %6727 = vmatpush1.bf16.msra.mxu0 %v5846
      %6728 = vmatprep.subr.bf16.mxu0 %v5851
      %6729 = vmatpush1.bf16.msra.mxu0 %v5850
      %6730 = vmatprep.subr.bf16.mxu0 %v5855
      %6731 = vmatpush1.bf16.msra.mxu0 %v5854
      %6732 = vmatprep.subr.bf16.mxu0 %v5859
      %6733 = vmatpush1.bf16.msra.mxu0 %v5858
      %6734 = vmatprep.subr.bf16.mxu0 %v5863
      %6735 = vmatpush1.bf16.msra.mxu0 %v5862
      %6736 = vmatprep.subr.bf16.mxu0 %v5867
      %6737 = vmatpush1.bf16.msra.mxu0 %v5866
      %6738 = vmatprep.subr.bf16.mxu0 %v5871
      %6739 = vmatpush1.bf16.msra.mxu0 %v5870
      %6740 = vmatprep.subr.bf16.mxu0 %v5875
      %6741 = vmatpush1.bf16.msra.mxu0 %v5874
      %6742 = vmatprep.subr.bf16.mxu0 %v5879
      %6743 = vmatpush1.bf16.msra.mxu0 %v5878
      %6744 = vmatprep.subr.bf16.mxu0 %v5883
      %6745 = vmatpush1.bf16.msra.mxu0 %v5882
      %6746 = vmatprep.subr.bf16.mxu0 %v5887
      %6747 = vmatpush1.bf16.msra.mxu0 %v5886
      %6748 = vmatprep.subr.bf16.mxu0 %v5891
      %6749 = vmatpush1.bf16.msra.mxu0 %v5890
      %6750 = vmatprep.subr.bf16.mxu0 %v5895
      %6751 = vmatpush1.bf16.msra.mxu0 %v5894
      %6752 = vmatprep.subr.bf16.mxu0 %v5899
      %6753 = vmatpush1.bf16.msra.mxu0 %v5898
      %6754 = vmatprep.subr.bf16.mxu0 %v5903
      %6755 = vmatpush1.bf16.msra.mxu0 %v5902
      %6756 = vmatprep.mubr.bf16.mxu0 %v4006
      %6757 = vmatmul.mubr.bf16.gmra.mrb[0].mxu0 %v4005
      %v6758 = vpop.f32.mrb[0].mxu0
      %v6759 = vadd.f32 %v6718, %v6758
      %v6760 = vpop.f32.mrb[0].mxu0
      %v6761 = vadd.f32 %v6720, %v6760
      %v6762 = vpop.f32.mrb[0].mxu0
      %v6763 = vpop.f32.mrb[0].mxu0
      %6764 = vdwg.mxu0
      %6765 = vmatprep.subr.bf16.mxu0 %v5907
      %6766 = vmatpush1.bf16.msra.mxu0 %v5906
      %6767 = vmatprep.subr.bf16.mxu0 %v5911
      %6768 = vmatpush1.bf16.msra.mxu0 %v5910
      %6769 = vmatprep.subr.bf16.mxu0 %v5915
      %6770 = vmatpush1.bf16.msra.mxu0 %v5914
      %6771 = vmatprep.subr.bf16.mxu0 %v5919
      %6772 = vmatpush1.bf16.msra.mxu0 %v5918
      %6773 = vmatprep.subr.bf16.mxu0 %v5923
      %6774 = vmatpush1.bf16.msra.mxu0 %v5922
      %6775 = vmatprep.subr.bf16.mxu0 %v5927
      %6776 = vmatpush1.bf16.msra.mxu0 %v5926
      %6777 = vmatprep.subr.bf16.mxu0 %v5931
      %6778 = vmatpush1.bf16.msra.mxu0 %v5930
      %6779 = vmatprep.subr.bf16.mxu0 %v5935
      %6780 = vmatpush1.bf16.msra.mxu0 %v5934
      %6781 = vmatprep.subr.bf16.mxu0 %v5939
      %6782 = vmatpush1.bf16.msra.mxu0 %v5938
      %6783 = vmatprep.subr.bf16.mxu0 %v5943
      %6784 = vmatpush1.bf16.msra.mxu0 %v5942
      %6785 = vmatprep.subr.bf16.mxu0 %v5947
      %6786 = vmatpush1.bf16.msra.mxu0 %v5946
      %6787 = vmatprep.subr.bf16.mxu0 %v5951
      %6788 = vmatpush1.bf16.msra.mxu0 %v5950
      %6789 = vmatprep.subr.bf16.mxu0 %v5955
      %6790 = vmatpush1.bf16.msra.mxu0 %v5954
      %6791 = vmatprep.subr.bf16.mxu0 %v5959
      %6792 = vmatpush1.bf16.msra.mxu0 %v5958
      %6793 = vmatprep.subr.bf16.mxu0 %v5963
      %6794 = vmatpush1.bf16.msra.mxu0 %v5962
      %6795 = vmatprep.subr.bf16.mxu0 %v5967
      %6796 = vmatpush1.bf16.msra.mxu0 %v5966
      %6797 = vmatprep.mubr.bf16.mxu0 %v4008
      %6798 = vmatmul.mubr.bf16.gmra.mrb[0].mxu0 %v4007
      %v6799 = vpop.f32.mrb[0].mxu0
      %v6800 = vadd.f32 %v6759, %v6799
      %v6801 = vpop.f32.mrb[0].mxu0
      %v6802 = vadd.f32 %v6761, %v6801
      %v6803 = vpop.f32.mrb[0].mxu0
      %v6804 = vpop.f32.mrb[0].mxu0
      %6805 = vdwg.mxu0
      %6806 = vmatprep.subr.bf16.mxu0 %v5971
      %6807 = vmatpush1.bf16.msra.mxu0 %v5970
      %6808 = vmatprep.subr.bf16.mxu0 %v5975
      %6809 = vmatpush1.bf16.msra.mxu0 %v5974
      %6810 = vmatprep.subr.bf16.mxu0 %v5979
      %6811 = vmatpush1.bf16.msra.mxu0 %v5978
      %6812 = vmatprep.subr.bf16.mxu0 %v5983
      %6813 = vmatpush1.bf16.msra.mxu0 %v5982
      %6814 = vmatprep.subr.bf16.mxu0 %v5987
      %6815 = vmatpush1.bf16.msra.mxu0 %v5986
      %6816 = vmatprep.subr.bf16.mxu0 %v5991
      %6817 = vmatpush1.bf16.msra.mxu0 %v5990
      %6818 = vmatprep.subr.bf16.mxu0 %v5995
      %6819 = vmatpush1.bf16.msra.mxu0 %v5994
      %6820 = vmatprep.subr.bf16.mxu0 %v5999
      %6821 = vmatpush1.bf16.msra.mxu0 %v5998
      %6822 = vmatprep.subr.bf16.mxu0 %v6003
      %6823 = vmatpush1.bf16.msra.mxu0 %v6002
      %6824 = vmatprep.subr.bf16.mxu0 %v6007
      %6825 = vmatpush1.bf16.msra.mxu0 %v6006
      %6826 = vmatprep.subr.bf16.mxu0 %v6011
      %6827 = vmatpush1.bf16.msra.mxu0 %v6010
      %6828 = vmatprep.subr.bf16.mxu0 %v6015
      %6829 = vmatpush1.bf16.msra.mxu0 %v6014
      %6830 = vmatprep.subr.bf16.mxu0 %v6019
      %6831 = vmatpush1.bf16.msra.mxu0 %v6018
      %6832 = vmatprep.subr.bf16.mxu0 %v6023
      %6833 = vmatpush1.bf16.msra.mxu0 %v6022
      %6834 = vmatprep.subr.bf16.mxu0 %v6027
      %6835 = vmatpush1.bf16.msra.mxu0 %v6026
      %6836 = vmatprep.subr.bf16.mxu0 %v6031
      %6837 = vmatpush1.bf16.msra.mxu0 %v6030
      %6838 = vmatprep.mubr.bf16.mxu0 %v4010
      %6839 = vmatmul.mubr.bf16.gmra.mrb[0].mxu0 %v4009
      %v6840 = vpop.f32.mrb[0].mxu0
      %v6841 = vadd.f32 %v6800, %v6840
      %v6842 = vpop.f32.mrb[0].mxu0
      %v6843 = vadd.f32 %v6802, %v6842
      %v6844 = vpop.f32.mrb[0].mxu0
      %v6845 = vpop.f32.mrb[0].mxu0
      %6846 = vdwg.mxu0
      %6847 = vmatprep.subr.bf16.mxu0 %v6035
      %6848 = vmatpush1.bf16.msra.mxu0 %v6034
      %6849 = vmatprep.subr.bf16.mxu0 %v6039
      %6850 = vmatpush1.bf16.msra.mxu0 %v6038
      %6851 = vmatprep.subr.bf16.mxu0 %v6043
      %6852 = vmatpush1.bf16.msra.mxu0 %v6042
      %6853 = vmatprep.subr.bf16.mxu0 %v6047
      %6854 = vmatpush1.bf16.msra.mxu0 %v6046
      %6855 = vmatprep.subr.bf16.mxu0 %v6051
      %6856 = vmatpush1.bf16.msra.mxu0 %v6050
      %6857 = vmatprep.subr.bf16.mxu0 %v6055
      %6858 = vmatpush1.bf16.msra.mxu0 %v6054
      %6859 = vmatprep.subr.bf16.mxu0 %v6059
      %6860 = vmatpush1.bf16.msra.mxu0 %v6058
      %6861 = vmatprep.subr.bf16.mxu0 %v6063
      %6862 = vmatpush1.bf16.msra.mxu0 %v6062
      %6863 = vmatprep.subr.bf16.mxu0 %v6067
      %6864 = vmatpush1.bf16.msra.mxu0 %v6066
      %6865 = vmatprep.subr.bf16.mxu0 %v6071
      %6866 = vmatpush1.bf16.msra.mxu0 %v6070
      %6867 = vmatprep.subr.bf16.mxu0 %v6075
      %6868 = vmatpush1.bf16.msra.mxu0 %v6074
      %6869 = vmatprep.subr.bf16.mxu0 %v6079
      %6870 = vmatpush1.bf16.msra.mxu0 %v6078
      %6871 = vmatprep.subr.bf16.mxu0 %v6083
      %6872 = vmatpush1.bf16.msra.mxu0 %v6082
      %6873 = vmatprep.subr.bf16.mxu0 %v6087
      %6874 = vmatpush1.bf16.msra.mxu0 %v6086
      %6875 = vmatprep.subr.bf16.mxu0 %v6091
      %6876 = vmatpush1.bf16.msra.mxu0 %v6090
      %6877 = vmatprep.subr.bf16.mxu0 %v6095
      %6878 = vmatpush1.bf16.msra.mxu0 %v6094
      %6879 = vmatprep.mubr.bf16.mxu0 %v4012
      %6880 = vmatmul.mubr.bf16.gmra.mrb[0].mxu0 %v4011
      %v6881 = vpop.f32.mrb[0].mxu0
      %v6882 = vadd.f32 %v6841, %v6881
      %v6883 = vpop.f32.mrb[0].mxu0
      %v6884 = vadd.f32 %v6843, %v6883
      %v6885 = vpop.f32.mrb[0].mxu0
      %v6886 = vpop.f32.mrb[0].mxu0
      %6887 = vdwg.mxu0
      %6888 = vmatprep.subr.bf16.mxu0 %v6099
      %6889 = vmatpush1.bf16.msra.mxu0 %v6098
      %6890 = vmatprep.subr.bf16.mxu0 %v6103
      %6891 = vmatpush1.bf16.msra.mxu0 %v6102
      %6892 = vmatprep.subr.bf16.mxu0 %v6107
      %6893 = vmatpush1.bf16.msra.mxu0 %v6106
      %6894 = vmatprep.subr.bf16.mxu0 %v6111
      %6895 = vmatpush1.bf16.msra.mxu0 %v6110
      %6896 = vmatprep.subr.bf16.mxu0 %v6115
      %6897 = vmatpush1.bf16.msra.mxu0 %v6114
      %6898 = vmatprep.subr.bf16.mxu0 %v6119
      %6899 = vmatpush1.bf16.msra.mxu0 %v6118
      %6900 = vmatprep.subr.bf16.mxu0 %v6123
      %6901 = vmatpush1.bf16.msra.mxu0 %v6122
      %6902 = vmatprep.subr.bf16.mxu0 %v6127
      %6903 = vmatpush1.bf16.msra.mxu0 %v6126
      %6904 = vmatprep.subr.bf16.mxu0 %v6131
      %6905 = vmatpush1.bf16.msra.mxu0 %v6130
      %6906 = vmatprep.subr.bf16.mxu0 %v6135
      %6907 = vmatpush1.bf16.msra.mxu0 %v6134
      %6908 = vmatprep.subr.bf16.mxu0 %v6139
      %6909 = vmatpush1.bf16.msra.mxu0 %v6138
      %6910 = vmatprep.subr.bf16.mxu0 %v6143
      %6911 = vmatpush1.bf16.msra.mxu0 %v6142
      %6912 = vmatprep.subr.bf16.mxu0 %v6147
      %6913 = vmatpush1.bf16.msra.mxu0 %v6146
      %6914 = vmatprep.subr.bf16.mxu0 %v6151
      %6915 = vmatpush1.bf16.msra.mxu0 %v6150
      %6916 = vmatprep.subr.bf16.mxu0 %v6155
      %6917 = vmatpush1.bf16.msra.mxu0 %v6154
      %6918 = vmatprep.subr.bf16.mxu0 %v6159
      %6919 = vmatpush1.bf16.msra.mxu0 %v6158
      %6920 = vmatprep.mubr.bf16.mxu0 %v4014
      %6921 = vmatmul.mubr.bf16.gmra.mrb[0].mxu0 %v4013
      %v6922 = vpop.f32.mrb[0].mxu0
      %v6923 = vadd.f32 %v6882, %v6922
      %v6924 = vpop.f32.mrb[0].mxu0
      %v6925 = vadd.f32 %v6884, %v6924
      %v6926 = vpop.f32.mrb[0].mxu0
      %v6927 = vpop.f32.mrb[0].mxu0
      %6928 = vdwg.mxu0
      %6929 = vmatprep.subr.bf16.mxu0 %v6163
      %6930 = vmatpush1.bf16.msra.mxu0 %v6162
      %6931 = vmatprep.subr.bf16.mxu0 %v6167
      %6932 = vmatpush1.bf16.msra.mxu0 %v6166
      %6933 = vmatprep.subr.bf16.mxu0 %v6171
      %6934 = vmatpush1.bf16.msra.mxu0 %v6170
      %6935 = vmatprep.subr.bf16.mxu0 %v6175
      %6936 = vmatpush1.bf16.msra.mxu0 %v6174
      %6937 = vmatprep.subr.bf16.mxu0 %v6179
      %6938 = vmatpush1.bf16.msra.mxu0 %v6178
      %6939 = vmatprep.subr.bf16.mxu0 %v6183
      %6940 = vmatpush1.bf16.msra.mxu0 %v6182
      %6941 = vmatprep.subr.bf16.mxu0 %v6187
      %6942 = vmatpush1.bf16.msra.mxu0 %v6186
      %6943 = vmatprep.subr.bf16.mxu0 %v6191
      %6944 = vmatpush1.bf16.msra.mxu0 %v6190
      %6945 = vmatprep.subr.bf16.mxu0 %v6195
      %6946 = vmatpush1.bf16.msra.mxu0 %v6194
      %6947 = vmatprep.subr.bf16.mxu0 %v6199
      %6948 = vmatpush1.bf16.msra.mxu0 %v6198
      %6949 = vmatprep.subr.bf16.mxu0 %v6203
      %6950 = vmatpush1.bf16.msra.mxu0 %v6202
      %6951 = vmatprep.subr.bf16.mxu0 %v6207
      %6952 = vmatpush1.bf16.msra.mxu0 %v6206
      %6953 = vmatprep.subr.bf16.mxu0 %v6211
      %6954 = vmatpush1.bf16.msra.mxu0 %v6210
      %6955 = vmatprep.subr.bf16.mxu0 %v6215
      %6956 = vmatpush1.bf16.msra.mxu0 %v6214
      %6957 = vmatprep.subr.bf16.mxu0 0
      %6958 = vmatpush1.bf16.msra.mxu0 0
      %6959 = vmatprep.subr.bf16.mxu0 0
      %6960 = vmatpush1.bf16.msra.mxu0 0
      %6961 = vmatprep.mubr.bf16.mxu0 %v6681
      %6962 = vmatmul.mubr.bf16.gmra.mrb[0].mxu0 %v4015
      %v6963 = vpop.f32.mrb[0].mxu0
      %v6964 = vadd.f32 %v6923, %v6963
      %v6965 = vpop.f32.mrb[0].mxu0
      %v6966 = vadd.f32 %v6925, %v6965
      %v6967 = vpop.f32.mrb[0].mxu0
      %v6968 = vpop.f32.mrb[0].mxu0
      %6969 = vdwg.mxu0
      %6970 = vmatprep.subr.bf16.mxu0 %v5781
      %6971 = vmatpush1.bf16.msra.mxu0 %v5780
      %6972 = vmatprep.subr.bf16.mxu0 %v5785
      %6973 = vmatpush1.bf16.msra.mxu0 %v5784
      %6974 = vmatprep.subr.bf16.mxu0 %v5789
      %6975 = vmatpush1.bf16.msra.mxu0 %v5788
      %6976 = vmatprep.subr.bf16.mxu0 %v5793
      %6977 = vmatpush1.bf16.msra.mxu0 %v5792
      %6978 = vmatprep.subr.bf16.mxu0 %v5797
      %6979 = vmatpush1.bf16.msra.mxu0 %v5796
      %6980 = vmatprep.subr.bf16.mxu0 %v5801
      %6981 = vmatpush1.bf16.msra.mxu0 %v5800
      %6982 = vmatprep.subr.bf16.mxu0 %v5805
      %6983 = vmatpush1.bf16.msra.mxu0 %v5804
      %6984 = vmatprep.subr.bf16.mxu0 %v5809
      %6985 = vmatpush1.bf16.msra.mxu0 %v5808
      %6986 = vmatprep.subr.bf16.mxu0 %v5813
      %6987 = vmatpush1.bf16.msra.mxu0 %v5812
      %6988 = vmatprep.subr.bf16.mxu0 %v5817
      %6989 = vmatpush1.bf16.msra.mxu0 %v5816
      %6990 = vmatprep.subr.bf16.mxu0 %v5821
      %6991 = vmatpush1.bf16.msra.mxu0 %v5820
      %6992 = vmatprep.subr.bf16.mxu0 %v5825
      %6993 = vmatpush1.bf16.msra.mxu0 %v5824
      %6994 = vmatprep.subr.bf16.mxu0 %v5829
      %6995 = vmatpush1.bf16.msra.mxu0 %v5828
      %6996 = vmatprep.subr.bf16.mxu0 %v5833
      %6997 = vmatpush1.bf16.msra.mxu0 %v5832
      %6998 = vmatprep.subr.bf16.mxu0 %v5837
      %6999 = vmatpush1.bf16.msra.mxu0 %v5836
      %7000 = vmatprep.subr.bf16.mxu0 %v5841
      %7001 = vmatpush1.bf16.msra.mxu0 %v5840
      %7002 = vmatprep.mubr.bf16.mxu0 %v4004
      %7003 = vmatmul.mubr.bf16.gmra.mrb[0].mxu0 %v4003
      %v7004 = vpop.f32.mrb[0].mxu0
      %v7005 = vadd.f32 %v6670, %v7004
      %v7006 = vpop.f32.mrb[0].mxu0
      %v7007 = vadd.f32 %v6674, %v7006
      %v7008 = vpop.f32.mrb[0].mxu0
      %v7009 = vpop.f32.mrb[0].mxu0
      %7010 = vdwg.mxu0
      %7011 = vmatprep.subr.bf16.mxu0 %v5845
      %7012 = vmatpush1.bf16.msra.mxu0 %v5844
      %7013 = vmatprep.subr.bf16.mxu0 %v5849
      %7014 = vmatpush1.bf16.msra.mxu0 %v5848
      %7015 = vmatprep.subr.bf16.mxu0 %v5853
      %7016 = vmatpush1.bf16.msra.mxu0 %v5852
      %7017 = vmatprep.subr.bf16.mxu0 %v5857
      %7018 = vmatpush1.bf16.msra.mxu0 %v5856
      %7019 = vmatprep.subr.bf16.mxu0 %v5861
      %7020 = vmatpush1.bf16.msra.mxu0 %v5860
      %7021 = vmatprep.subr.bf16.mxu0 %v5865
      %7022 = vmatpush1.bf16.msra.mxu0 %v5864
      %7023 = vmatprep.subr.bf16.mxu0 %v5869
      %7024 = vmatpush1.bf16.msra.mxu0 %v5868
      %7025 = vmatprep.subr.bf16.mxu0 %v5873
      %7026 = vmatpush1.bf16.msra.mxu0 %v5872
      %7027 = vmatprep.subr.bf16.mxu0 %v5877
      %7028 = vmatpush1.bf16.msra.mxu0 %v5876
      %7029 = vmatprep.subr.bf16.mxu0 %v5881
      %7030 = vmatpush1.bf16.msra.mxu0 %v5880
      %7031 = vmatprep.subr.bf16.mxu0 %v5885
      %7032 = vmatpush1.bf16.msra.mxu0 %v5884
      %7033 = vmatprep.subr.bf16.mxu0 %v5889
      %7034 = vmatpush1.bf16.msra.mxu0 %v5888
      %7035 = vmatprep.subr.bf16.mxu0 %v5893
      %7036 = vmatpush1.bf16.msra.mxu0 %v5892
      %7037 = vmatprep.subr.bf16.mxu0 %v5897
      %7038 = vmatpush1.bf16.msra.mxu0 %v5896
      %7039 = vmatprep.subr.bf16.mxu0 %v5901
      %7040 = vmatpush1.bf16.msra.mxu0 %v5900
      %7041 = vmatprep.subr.bf16.mxu0 %v5905
      %7042 = vmatpush1.bf16.msra.mxu0 %v5904
      %7043 = vmatprep.mubr.bf16.mxu0 %v4006
      %7044 = vmatmul.mubr.bf16.gmra.mrb[0].mxu0 %v4005
      %v7045 = vpop.f32.mrb[0].mxu0
      %v7046 = vadd.f32 %v7005, %v7045
      %v7047 = vpop.f32.mrb[0].mxu0
      %v7048 = vadd.f32 %v7007, %v7047
      %v7049 = vpop.f32.mrb[0].mxu0
      %v7050 = vpop.f32.mrb[0].mxu0
      %7051 = vdwg.mxu0
      %7052 = vmatprep.subr.bf16.mxu0 %v5909
      %7053 = vmatpush1.bf16.msra.mxu0 %v5908
      %7054 = vmatprep.subr.bf16.mxu0 %v5913
      %7055 = vmatpush1.bf16.msra.mxu0 %v5912
      %7056 = vmatprep.subr.bf16.mxu0 %v5917
      %7057 = vmatpush1.bf16.msra.mxu0 %v5916
      %7058 = vmatprep.subr.bf16.mxu0 %v5921
      %7059 = vmatpush1.bf16.msra.mxu0 %v5920
      %7060 = vmatprep.subr.bf16.mxu0 %v5925
      %7061 = vmatpush1.bf16.msra.mxu0 %v5924
      %7062 = vmatprep.subr.bf16.mxu0 %v5929
      %7063 = vmatpush1.bf16.msra.mxu0 %v5928
      %7064 = vmatprep.subr.bf16.mxu0 %v5933
      %7065 = vmatpush1.bf16.msra.mxu0 %v5932
      %7066 = vmatprep.subr.bf16.mxu0 %v5937
      %7067 = vmatpush1.bf16.msra.mxu0 %v5936
      %7068 = vmatprep.subr.bf16.mxu0 %v5941
      %7069 = vmatpush1.bf16.msra.mxu0 %v5940
      %7070 = vmatprep.subr.bf16.mxu0 %v5945
      %7071 = vmatpush1.bf16.msra.mxu0 %v5944
      %7072 = vmatprep.subr.bf16.mxu0 %v5949
      %7073 = vmatpush1.bf16.msra.mxu0 %v5948
      %7074 = vmatprep.subr.bf16.mxu0 %v5953
      %7075 = vmatpush1.bf16.msra.mxu0 %v5952
      %7076 = vmatprep.subr.bf16.mxu0 %v5957
      %7077 = vmatpush1.bf16.msra.mxu0 %v5956
      %7078 = vmatprep.subr.bf16.mxu0 %v5961
      %7079 = vmatpush1.bf16.msra.mxu0 %v5960
      %7080 = vmatprep.subr.bf16.mxu0 %v5965
      %7081 = vmatpush1.bf16.msra.mxu0 %v5964
      %7082 = vmatprep.subr.bf16.mxu0 %v5969
      %7083 = vmatpush1.bf16.msra.mxu0 %v5968
      %7084 = vmatprep.mubr.bf16.mxu0 %v4008
      %7085 = vmatmul.mubr.bf16.gmra.mrb[0].mxu0 %v4007
      %v7086 = vpop.f32.mrb[0].mxu0
      %v7087 = vadd.f32 %v7046, %v7086
      %v7088 = vpop.f32.mrb[0].mxu0
      %v7089 = vadd.f32 %v7048, %v7088
      %v7090 = vpop.f32.mrb[0].mxu0
      %v7091 = vpop.f32.mrb[0].mxu0
      %7092 = vdwg.mxu0
      %7093 = vmatprep.subr.bf16.mxu0 %v5973
      %7094 = vmatpush1.bf16.msra.mxu0 %v5972
      %7095 = vmatprep.subr.bf16.mxu0 %v5977
      %7096 = vmatpush1.bf16.msra.mxu0 %v5976
      %7097 = vmatprep.subr.bf16.mxu0 %v5981
      %7098 = vmatpush1.bf16.msra.mxu0 %v5980
      %7099 = vmatprep.subr.bf16.mxu0 %v5985
      %7100 = vmatpush1.bf16.msra.mxu0 %v5984
      %7101 = vmatprep.subr.bf16.mxu0 %v5989
      %7102 = vmatpush1.bf16.msra.mxu0 %v5988
      %7103 = vmatprep.subr.bf16.mxu0 %v5993
      %7104 = vmatpush1.bf16.msra.mxu0 %v5992
      %7105 = vmatprep.subr.bf16.mxu0 %v5997
      %7106 = vmatpush1.bf16.msra.mxu0 %v5996
      %7107 = vmatprep.subr.bf16.mxu0 %v6001
      %7108 = vmatpush1.bf16.msra.mxu0 %v6000
      %7109 = vmatprep.subr.bf16.mxu0 %v6005
      %7110 = vmatpush1.bf16.msra.mxu0 %v6004
      %7111 = vmatprep.subr.bf16.mxu0 %v6009
      %7112 = vmatpush1.bf16.msra.mxu0 %v6008
      %7113 = vmatprep.subr.bf16.mxu0 %v6013
      %7114 = vmatpush1.bf16.msra.mxu0 %v6012
      %7115 = vmatprep.subr.bf16.mxu0 %v6017
      %7116 = vmatpush1.bf16.msra.mxu0 %v6016
      %7117 = vmatprep.subr.bf16.mxu0 %v6021
      %7118 = vmatpush1.bf16.msra.mxu0 %v6020
      %7119 = vmatprep.subr.bf16.mxu0 %v6025
      %7120 = vmatpush1.bf16.msra.mxu0 %v6024
      %7121 = vmatprep.subr.bf16.mxu0 %v6029
      %7122 = vmatpush1.bf16.msra.mxu0 %v6028
      %7123 = vmatprep.subr.bf16.mxu0 %v6033
      %7124 = vmatpush1.bf16.msra.mxu0 %v6032
      %7125 = vmatprep.mubr.bf16.mxu0 %v4010
      %7126 = vmatmul.mubr.bf16.gmra.mrb[0].mxu0 %v4009
      %v7127 = vpop.f32.mrb[0].mxu0
      %v7128 = vadd.f32 %v7087, %v7127
      %v7129 = vpop.f32.mrb[0].mxu0
      %v7130 = vadd.f32 %v7089, %v7129
      %v7131 = vpop.f32.mrb[0].mxu0
      %v7132 = vpop.f32.mrb[0].mxu0
      %7133 = vdwg.mxu0
      %7134 = vmatprep.subr.bf16.mxu0 %v6037
      %7135 = vmatpush1.bf16.msra.mxu0 %v6036
      %7136 = vmatprep.subr.bf16.mxu0 %v6041
      %7137 = vmatpush1.bf16.msra.mxu0 %v6040
      %7138 = vmatprep.subr.bf16.mxu0 %v6045
      %7139 = vmatpush1.bf16.msra.mxu0 %v6044
      %7140 = vmatprep.subr.bf16.mxu0 %v6049
      %7141 = vmatpush1.bf16.msra.mxu0 %v6048
      %7142 = vmatprep.subr.bf16.mxu0 %v6053
      %7143 = vmatpush1.bf16.msra.mxu0 %v6052
      %7144 = vmatprep.subr.bf16.mxu0 %v6057
      %7145 = vmatpush1.bf16.msra.mxu0 %v6056
      %7146 = vmatprep.subr.bf16.mxu0 %v6061
      %7147 = vmatpush1.bf16.msra.mxu0 %v6060
      %7148 = vmatprep.subr.bf16.mxu0 %v6065
      %7149 = vmatpush1.bf16.msra.mxu0 %v6064
      %7150 = vmatprep.subr.bf16.mxu0 %v6069
      %7151 = vmatpush1.bf16.msra.mxu0 %v6068
      %7152 = vmatprep.subr.bf16.mxu0 %v6073
      %7153 = vmatpush1.bf16.msra.mxu0 %v6072
      %7154 = vmatprep.subr.bf16.mxu0 %v6077
      %7155 = vmatpush1.bf16.msra.mxu0 %v6076
      %7156 = vmatprep.subr.bf16.mxu0 %v6081
      %7157 = vmatpush1.bf16.msra.mxu0 %v6080
      %7158 = vmatprep.subr.bf16.mxu0 %v6085
      %7159 = vmatpush1.bf16.msra.mxu0 %v6084
      %7160 = vmatprep.subr.bf16.mxu0 %v6089
      %7161 = vmatpush1.bf16.msra.mxu0 %v6088
      %7162 = vmatprep.subr.bf16.mxu0 %v6093
      %7163 = vmatpush1.bf16.msra.mxu0 %v6092
      %7164 = vmatprep.subr.bf16.mxu0 %v6097
      %7165 = vmatpush1.bf16.msra.mxu0 %v6096
      %7166 = vmatprep.mubr.bf16.mxu0 %v4012
      %7167 = vmatmul.mubr.bf16.gmra.mrb[0].mxu0 %v4011
      %v7168 = vpop.f32.mrb[0].mxu0
      %v7169 = vadd.f32 %v7128, %v7168
      %v7170 = vpop.f32.mrb[0].mxu0
      %v7171 = vadd.f32 %v7130, %v7170
      %v7172 = vpop.f32.mrb[0].mxu0
      %v7173 = vpop.f32.mrb[0].mxu0
      %7174 = vdwg.mxu0
      %7175 = vmatprep.subr.bf16.mxu0 %v6101
      %7176 = vmatpush1.bf16.msra.mxu0 %v6100
      %7177 = vmatprep.subr.bf16.mxu0 %v6105
      %7178 = vmatpush1.bf16.msra.mxu0 %v6104
      %7179 = vmatprep.subr.bf16.mxu0 %v6109
      %7180 = vmatpush1.bf16.msra.mxu0 %v6108
      %7181 = vmatprep.subr.bf16.mxu0 %v6113
      %7182 = vmatpush1.bf16.msra.mxu0 %v6112
      %7183 = vmatprep.subr.bf16.mxu0 %v6117
      %7184 = vmatpush1.bf16.msra.mxu0 %v6116
      %7185 = vmatprep.subr.bf16.mxu0 %v6121
      %7186 = vmatpush1.bf16.msra.mxu0 %v6120
      %7187 = vmatprep.subr.bf16.mxu0 %v6125
      %7188 = vmatpush1.bf16.msra.mxu0 %v6124
      %7189 = vmatprep.subr.bf16.mxu0 %v6129
      %7190 = vmatpush1.bf16.msra.mxu0 %v6128
      %7191 = vmatprep.subr.bf16.mxu0 %v6133
      %7192 = vmatpush1.bf16.msra.mxu0 %v6132
      %7193 = vmatprep.subr.bf16.mxu0 %v6137
      %7194 = vmatpush1.bf16.msra.mxu0 %v6136
      %7195 = vmatprep.subr.bf16.mxu0 %v6141
      %7196 = vmatpush1.bf16.msra.mxu0 %v6140
      %7197 = vmatprep.subr.bf16.mxu0 %v6145
      %7198 = vmatpush1.bf16.msra.mxu0 %v6144
      %7199 = vmatprep.subr.bf16.mxu0 %v6149
      %7200 = vmatpush1.bf16.msra.mxu0 %v6148
      %7201 = vmatprep.subr.bf16.mxu0 %v6153
      %7202 = vmatpush1.bf16.msra.mxu0 %v6152
      %7203 = vmatprep.subr.bf16.mxu0 %v6157
      %7204 = vmatpush1.bf16.msra.mxu0 %v6156
      %7205 = vmatprep.subr.bf16.mxu0 %v6161
      %7206 = vmatpush1.bf16.msra.mxu0 %v6160
      %7207 = vmatprep.mubr.bf16.mxu0 %v4014
      %7208 = vmatmul.mubr.bf16.gmra.mrb[0].mxu0 %v4013
      %v7209 = vpop.f32.mrb[0].mxu0
      %v7210 = vadd.f32 %v7169, %v7209
      %v7211 = vpop.f32.mrb[0].mxu0
      %v7212 = vadd.f32 %v7171, %v7211
      %v7213 = vpop.f32.mrb[0].mxu0
      %v7214 = vpop.f32.mrb[0].mxu0
      %7215 = vdwg.mxu0
      %7216 = vmatprep.subr.bf16.mxu0 %v6165
      %7217 = vmatpush1.bf16.msra.mxu0 %v6164
      %7218 = vmatprep.subr.bf16.mxu0 %v6169
      %7219 = vmatpush1.bf16.msra.mxu0 %v6168
      %7220 = vmatprep.subr.bf16.mxu0 %v6173
      %7221 = vmatpush1.bf16.msra.mxu0 %v6172
      %7222 = vmatprep.subr.bf16.mxu0 %v6177
      %7223 = vmatpush1.bf16.msra.mxu0 %v6176
      %7224 = vmatprep.subr.bf16.mxu0 %v6181
      %7225 = vmatpush1.bf16.msra.mxu0 %v6180
      %7226 = vmatprep.subr.bf16.mxu0 %v6185
      %7227 = vmatpush1.bf16.msra.mxu0 %v6184
      %7228 = vmatprep.subr.bf16.mxu0 %v6189
      %7229 = vmatpush1.bf16.msra.mxu0 %v6188
      %7230 = vmatprep.subr.bf16.mxu0 %v6193
      %7231 = vmatpush1.bf16.msra.mxu0 %v6192
      %7232 = vmatprep.subr.bf16.mxu0 %v6197
      %7233 = vmatpush1.bf16.msra.mxu0 %v6196
      %7234 = vmatprep.subr.bf16.mxu0 %v6201
      %7235 = vmatpush1.bf16.msra.mxu0 %v6200
      %7236 = vmatprep.subr.bf16.mxu0 %v6205
      %7237 = vmatpush1.bf16.msra.mxu0 %v6204
      %7238 = vmatprep.subr.bf16.mxu0 %v6209
      %7239 = vmatpush1.bf16.msra.mxu0 %v6208
      %7240 = vmatprep.subr.bf16.mxu0 %v6213
      %7241 = vmatpush1.bf16.msra.mxu0 %v6212
      %7242 = vmatprep.subr.bf16.mxu0 %v6217
      %7243 = vmatpush1.bf16.msra.mxu0 %v6216
      %7244 = vmatprep.subr.bf16.mxu0 0
      %7245 = vmatpush1.bf16.msra.mxu0 0
      %7246 = vmatprep.subr.bf16.mxu0 0
      %7247 = vmatpush1.bf16.msra.mxu0 0
      %7248 = vmatprep.mubr.bf16.mxu0 %v6681
      %7249 = vmatmul.mubr.bf16.gmra.mrb[0].mxu0 %v4015
      %v7250 = vpop.f32.mrb[0].mxu0
      %v7251 = vadd.f32 %v7210, %v7250
      %v7252 = vpop.f32.mrb[0].mxu0
      %v7253 = vadd.f32 %v7212, %v7252
      %v7254 = vpop.f32.mrb[0].mxu0
      %v7255 = vpop.f32.mrb[0].mxu0
      %7256 = vdwg.mxu0
      %v7257 = vmax.f32 %v6964, 0.0
      %v7258 = vmax.f32 %v6966, 0.0
      %v7259 = vmax.f32 %v7251, 0.0
      %v7260 = vmax.f32 %v7253, 0.0
      %v7261 = vpack.c.bf16 %v7257, %v7257
      %v7262 = vpack.c.bf16 %v7258, %v7258
      %v7263 = vpack.c.bf16 %v7259, %v7259
      %v7264 = vpack.c.bf16 %v7260, %v7260
      %v7265 = vld [vmem:[%s6] sm:$0xf]
      %v7266 = vld [vmem:[%s6 + $0x4] sm:$0xf]
      %v7267 = vld [vmem:[%s6 + $0x8] sm:$0xf]
      %v7268 = vld [vmem:[%s6 + $0xc] sm:$0xf]
      %v7269 = vld [vmem:[%s6 + $0x10] sm:$0xf]
      %v7270 = vld [vmem:[%s6 + $0x14] sm:$0xf]
      %v7271 = vld [vmem:[%s6 + $0x18] sm:$0xf]
      %v7272 = vld [vmem:[%s6 + $0x1c] sm:$0xf]
      %v7273 = vld [vmem:[%s6 + $0x20] sm:$0xf]
      %v7274 = vld [vmem:[%s6 + $0x24] sm:$0xf]
      %v7275 = vld [vmem:[%s6 + $0x28] sm:$0xf]
      %v7276 = vld [vmem:[%s6 + $0x2c] sm:$0xf]
      %v7277 = vld [vmem:[%s6 + $0x30] sm:$0xf]
      %v7278 = vld [vmem:[%s6 + $0x34] sm:$0xf]
      %v7279 = vld [vmem:[%s6 + $0x38] sm:$0xf]
      %v7280 = vld [vmem:[%s6 + $0x3c] sm:$0xf]
      %v7281 = vld [vmem:[%s6 + $0x40] sm:$0xf]
      %v7282 = vld [vmem:[%s6 + $0x44] sm:$0xf]
      %v7283 = vld [vmem:[%s6 + $0x48] sm:$0xf]
      %v7284 = vld [vmem:[%s6 + $0x4c] sm:$0xf]
      %v7285 = vld [vmem:[%s6 + $0x50] sm:$0xf]
      %v7286 = vld [vmem:[%s6 + $0x54] sm:$0xf]
      %v7287 = vld [vmem:[%s6 + $0x58] sm:$0xf]
      %v7288 = vld [vmem:[%s6 + $0x5c] sm:$0xf]
      %v7289 = vld [vmem:[%s6 + $0x60] sm:$0xf]
      %v7290 = vld [vmem:[%s6 + $0x64] sm:$0xf]
      %v7291 = vld [vmem:[%s6 + $0x68] sm:$0xf]
      %v7292 = vld [vmem:[%s6 + $0x6c] sm:$0xf]
      %v7293 = vld [vmem:[%s6 + $0x70] sm:$0xf]
      %v7294 = vld [vmem:[%s6 + $0x74] sm:$0xf]
      %v7295 = vld [vmem:[%s6 + $0x78] sm:$0xf]
      %v7296 = vld [vmem:[%s6 + $0x7c] sm:$0xf]
      %v7297 = vld [vmem:[%s6 + $0x80] sm:$0xf]
      %v7298 = vld [vmem:[%s6 + $0x84] sm:$0xf]
      %v7299 = vld [vmem:[%s6 + $0x88] sm:$0xf]
      %v7300 = vld [vmem:[%s6 + $0x8c] sm:$0xf]
      %v7301 = vld [vmem:[%s6 + $0x90] sm:$0xf]
      %v7302 = vld [vmem:[%s6 + $0x94] sm:$0xf]
      %v7303 = vld [vmem:[%s6 + $0x98] sm:$0xf]
      %v7304 = vld [vmem:[%s6 + $0x9c] sm:$0xf]
      %v7305 = vld [vmem:[%s6 + $0xa0] sm:$0xf]
      %v7306 = vld [vmem:[%s6 + $0xa4] sm:$0xf]
      %v7307 = vld [vmem:[%s6 + $0xa8] sm:$0xf]
      %v7308 = vld [vmem:[%s6 + $0xac] sm:$0xf]
      %v7309 = vld [vmem:[%s6 + $0xb0] sm:$0xf]
      %v7310 = vld [vmem:[%s6 + $0xb4] sm:$0xf]
      %v7311 = vld [vmem:[%s6 + $0xb8] sm:$0xf]
      %v7312 = vld [vmem:[%s6 + $0xbc] sm:$0xf]
      %v7313 = vld [vmem:[%s6 + $0xc0] sm:$0xf]
      %v7314 = vld [vmem:[%s6 + $0xc4] sm:$0xf]
      %v7315 = vld [vmem:[%s6 + $0xc8] sm:$0xf]
      %v7316 = vld [vmem:[%s6 + $0xcc] sm:$0xf]
      %v7317 = vld [vmem:[%s6 + $0xd0] sm:$0xf]
      %v7318 = vld [vmem:[%s6 + $0xd4] sm:$0xf]
      %v7319 = vld [vmem:[%s6 + $0xd8] sm:$0xf]
      %v7320 = vld [vmem:[%s6 + $0xdc] sm:$0xf]
      %v7321 = vld [vmem:[%s6 + $0xe0] sm:$0xf]
      %v7322 = vld [vmem:[%s6 + $0xe4] sm:$0xf]
      %v7323 = vld [vmem:[%s6 + $0xe8] sm:$0xf]
      %v7324 = vld [vmem:[%s6 + $0xec] sm:$0xf]
      %v7325 = vld [vmem:[%s6 + $0xf0] sm:$0xf]
      %v7326 = vld [vmem:[%s6 + $0xf4] sm:$0xf]
      %v7327 = vld [vmem:[%s6 + $0xf8] sm:$0xf]
      %v7328 = vld [vmem:[%s6 + $0xfc] sm:$0xf]
      %v7329 = vld [vmem:[%s7] sm:$0x1]
      %v7394 = vunpack.c.l.b16 %v7265
      %v7395 = vunpack.c.l.b16 %v7266
      %v7396 = vunpack.c.l.b16 %v7267
      %v7397 = vunpack.c.l.b16 %v7268
      %v7398 = vunpack.c.l.b16 %v7269
      %v7399 = vunpack.c.l.b16 %v7270
      %v7400 = vunpack.c.l.b16 %v7271
      %v7401 = vunpack.c.l.b16 %v7272
      %v7402 = vunpack.c.l.b16 %v7273
      %v7403 = vunpack.c.l.b16 %v7274
      %v7404 = vunpack.c.l.b16 %v7275
      %v7405 = vunpack.c.l.b16 %v7276
      %v7406 = vunpack.c.l.b16 %v7277
      %v7407 = vunpack.c.l.b16 %v7278
      %v7408 = vunpack.c.l.b16 %v7279
      %v7409 = vunpack.c.l.b16 %v7280
      %v7410 = vunpack.c.l.b16 %v7281
      %v7411 = vunpack.c.l.b16 %v7282
      %v7412 = vunpack.c.l.b16 %v7283
      %v7413 = vunpack.c.l.b16 %v7284
      %v7414 = vunpack.c.l.b16 %v7285
      %v7415 = vunpack.c.l.b16 %v7286
      %v7416 = vunpack.c.l.b16 %v7287
      %v7417 = vunpack.c.l.b16 %v7288
      %v7418 = vunpack.c.l.b16 %v7289
      %v7419 = vunpack.c.l.b16 %v7290
      %v7420 = vunpack.c.l.b16 %v7291
      %v7421 = vunpack.c.l.b16 %v7292
      %v7422 = vunpack.c.l.b16 %v7293
      %v7423 = vunpack.c.l.b16 %v7294
      %v7424 = vunpack.c.l.b16 %v7295
      %v7425 = vunpack.c.l.b16 %v7296
      %v7426 = vunpack.c.l.b16 %v7297
      %v7427 = vunpack.c.l.b16 %v7298
      %v7428 = vunpack.c.l.b16 %v7299
      %v7429 = vunpack.c.l.b16 %v7300
      %v7430 = vunpack.c.l.b16 %v7301
      %v7431 = vunpack.c.l.b16 %v7302
      %v7432 = vunpack.c.l.b16 %v7303
      %v7433 = vunpack.c.l.b16 %v7304
      %v7434 = vunpack.c.l.b16 %v7305
      %v7435 = vunpack.c.l.b16 %v7306
      %v7436 = vunpack.c.l.b16 %v7307
      %v7437 = vunpack.c.l.b16 %v7308
      %v7438 = vunpack.c.l.b16 %v7309
      %v7439 = vunpack.c.l.b16 %v7310
      %v7440 = vunpack.c.l.b16 %v7311
      %v7441 = vunpack.c.l.b16 %v7312
      %v7442 = vunpack.c.l.b16 %v7313
      %v7443 = vunpack.c.l.b16 %v7314
      %v7444 = vunpack.c.l.b16 %v7315
      %v7445 = vunpack.c.l.b16 %v7316
      %v7446 = vunpack.c.l.b16 %v7317
      %v7447 = vunpack.c.l.b16 %v7318
      %v7448 = vunpack.c.l.b16 %v7319
      %v7449 = vunpack.c.l.b16 %v7320
      %v7450 = vunpack.c.l.b16 %v7321
      %v7451 = vunpack.c.l.b16 %v7322
      %v7452 = vunpack.c.l.b16 %v7323
      %v7453 = vunpack.c.l.b16 %v7324
      %v7454 = vunpack.c.l.b16 %v7325
      %v7455 = vunpack.c.l.b16 %v7326
      %v7456 = vunpack.c.l.b16 %v7327
      %v7457 = vunpack.c.l.b16 %v7328
      %v7458 = vpack.c.b16 %v7395, %v7394
      %v7459 = vpack.c.b16 %v7397, %v7396
      %v7460 = vpack.c.b16 %v7399, %v7398
      %v7461 = vpack.c.b16 %v7401, %v7400
      %v7462 = vpack.c.b16 %v7403, %v7402
      %v7463 = vpack.c.b16 %v7405, %v7404
      %v7464 = vpack.c.b16 %v7407, %v7406
      %v7465 = vpack.c.b16 %v7409, %v7408
      %v7466 = vpack.c.b16 %v7411, %v7410
      %v7467 = vpack.c.b16 %v7413, %v7412
      %v7468 = vpack.c.b16 %v7415, %v7414
      %v7469 = vpack.c.b16 %v7417, %v7416
      %v7470 = vpack.c.b16 %v7419, %v7418
      %v7471 = vpack.c.b16 %v7421, %v7420
      %v7472 = vpack.c.b16 %v7423, %v7422
      %v7473 = vpack.c.b16 %v7425, %v7424
      %v7474 = vpack.c.b16 %v7427, %v7426
      %v7475 = vpack.c.b16 %v7429, %v7428
      %v7476 = vpack.c.b16 %v7431, %v7430
      %v7477 = vpack.c.b16 %v7433, %v7432
      %v7478 = vpack.c.b16 %v7435, %v7434
      %v7479 = vpack.c.b16 %v7437, %v7436
      %v7480 = vpack.c.b16 %v7439, %v7438
      %v7481 = vpack.c.b16 %v7441, %v7440
      %v7482 = vpack.c.b16 %v7443, %v7442
      %v7483 = vpack.c.b16 %v7445, %v7444
      %v7484 = vpack.c.b16 %v7447, %v7446
      %v7485 = vpack.c.b16 %v7449, %v7448
      %v7486 = vpack.c.b16 %v7451, %v7450
      %v7487 = vpack.c.b16 %v7453, %v7452
      %v7488 = vpack.c.b16 %v7455, %v7454
      %v7489 = vpack.c.b16 %v7457, %v7456
      %7522 = vmatprep.subr.bf16.mxu0 0
      %7523 = vmatpush1.bf16.msra.mxu0 %v7458
      %7524 = vmatprep.subr.bf16.mxu0 0
      %7525 = vmatpush1.bf16.msra.mxu0 %v7459
      %7526 = vmatprep.subr.bf16.mxu0 0
      %7527 = vmatpush1.bf16.msra.mxu0 %v7460
      %7528 = vmatprep.subr.bf16.mxu0 0
      %7529 = vmatpush1.bf16.msra.mxu0 %v7461
      %7530 = vmatprep.subr.bf16.mxu0 0
      %7531 = vmatpush1.bf16.msra.mxu0 %v7462
      %7532 = vmatprep.subr.bf16.mxu0 0
      %7533 = vmatpush1.bf16.msra.mxu0 %v7463
      %7534 = vmatprep.subr.bf16.mxu0 0
      %7535 = vmatpush1.bf16.msra.mxu0 %v7464
      %7536 = vmatprep.subr.bf16.mxu0 0
      %7537 = vmatpush1.bf16.msra.mxu0 %v7465
      %7538 = vmatprep.subr.bf16.mxu0 0
      %7539 = vmatpush1.bf16.msra.mxu0 %v7466
      %7540 = vmatprep.subr.bf16.mxu0 0
      %7541 = vmatpush1.bf16.msra.mxu0 %v7467
      %7542 = vmatprep.subr.bf16.mxu0 0
      %7543 = vmatpush1.bf16.msra.mxu0 %v7468
      %7544 = vmatprep.subr.bf16.mxu0 0
      %7545 = vmatpush1.bf16.msra.mxu0 %v7469
      %7546 = vmatprep.subr.bf16.mxu0 0
      %7547 = vmatpush1.bf16.msra.mxu0 %v7470
      %7548 = vmatprep.subr.bf16.mxu0 0
      %7549 = vmatpush1.bf16.msra.mxu0 %v7471
      %7550 = vmatprep.subr.bf16.mxu0 0
      %7551 = vmatpush1.bf16.msra.mxu0 %v7472
      %7552 = vmatprep.subr.bf16.mxu0 0
      %7553 = vmatpush1.bf16.msra.mxu0 %v7473
      %7554 = vmatprep.mubr.bf16.mxu0 %v7262
      %7555 = vmatmul.mubr.bf16.gmra.mrb[0].mxu0 %v7261
      %v7556 = vpop.f32.mrb[0].mxu0
      %v7557 = vadd.f32 %v7329, %v7556
      %v7558 = vpop.f32.mrb[0].mxu0
      %v7559 = vpop.f32.mrb[0].mxu0
      %v7560 = vpop.f32.mrb[0].mxu0
      %7561 = vdwg.mxu0
      %7562 = vmatprep.subr.bf16.mxu0 0
      %7563 = vmatpush1.bf16.msra.mxu0 %v7474
      %7564 = vmatprep.subr.bf16.mxu0 0
      %7565 = vmatpush1.bf16.msra.mxu0 %v7475
      %7566 = vmatprep.subr.bf16.mxu0 0
      %7567 = vmatpush1.bf16.msra.mxu0 %v7476
      %7568 = vmatprep.subr.bf16.mxu0 0
      %7569 = vmatpush1.bf16.msra.mxu0 %v7477
      %7570 = vmatprep.subr.bf16.mxu0 0
      %7571 = vmatpush1.bf16.msra.mxu0 %v7478
      %7572 = vmatprep.subr.bf16.mxu0 0
      %7573 = vmatpush1.bf16.msra.mxu0 %v7479
      %7574 = vmatprep.subr.bf16.mxu0 0
      %7575 = vmatpush1.bf16.msra.mxu0 %v7480
      %7576 = vmatprep.subr.bf16.mxu0 0
      %7577 = vmatpush1.bf16.msra.mxu0 %v7481
      %7578 = vmatprep.subr.bf16.mxu0 0
      %7579 = vmatpush1.bf16.msra.mxu0 %v7482
      %7580 = vmatprep.subr.bf16.mxu0 0
      %7581 = vmatpush1.bf16.msra.mxu0 %v7483
      %7582 = vmatprep.subr.bf16.mxu0 0
      %7583 = vmatpush1.bf16.msra.mxu0 %v7484
      %7584 = vmatprep.subr.bf16.mxu0 0
      %7585 = vmatpush1.bf16.msra.mxu0 %v7485
      %7586 = vmatprep.subr.bf16.mxu0 0
      %7587 = vmatpush1.bf16.msra.mxu0 %v7486
      %7588 = vmatprep.subr.bf16.mxu0 0
      %7589 = vmatpush1.bf16.msra.mxu0 %v7487
      %7590 = vmatprep.subr.bf16.mxu0 0
      %7591 = vmatpush1.bf16.msra.mxu0 %v7488
      %7592 = vmatprep.subr.bf16.mxu0 0
      %7593 = vmatpush1.bf16.msra.mxu0 %v7489
      %7594 = vmatprep.mubr.bf16.mxu0 %v7264
      %7595 = vmatmul.mubr.bf16.gmra.mrb[0].mxu0 %v7263
      %v7596 = vpop.f32.mrb[0].mxu0
      %v7597 = vadd.f32 %v7557, %v7596
      %v7598 = vpop.f32.mrb[0].mxu0
      %v7599 = vpop.f32.mrb[0].mxu0
      %v7600 = vpop.f32.mrb[0].mxu0
      %7601 = vdwg.mxu0
      %v7602 = vlaneseq
      %v7603 = vshrl.u32 %v7602, 7
      %v7604 = vsub.s32 0, %v7603
      %v7605 = vrot.slane %v7597, %v7604
      %7606 = vst [vmem:[%s303] sm:$0xff] %v7605
      %p7607 = scmp.lt.s32.totalorder %s19, 1
      %s7608 = scalar_select %p7607, %s19, 1
      %s7609 = smul.addr %s7608, 8
      %s7610 = scalar_lea.vmem %s8, %s7609
      // Predicated region
      $region53: #{chess_piece_model_forward.1} parent=51 // pred_check
        %p7611 = pneg %p210
      $region54: #{chess_piece_model_forward.1} parent=51 // pred_check_branch
        %7613 = sbr.rel (%p7611) target = $region56
      $region55: #{chess_piece_model_forward.1} parent=51 // pred_region
        _
      $region56: #{chess_piece_model_forward.1} parent=51 // pred_fallthru
        _
    $region52: #{chess_piece_model_forward.1} parent=5 // pred_fallthru
      _
    %p7614 = scmp.le.s32.totalorder 2, %s14
    // Predicated region
    $region57: #{chess_piece_model_forward.1} parent=5 // pred_check
      %p7615 = pneg %p7614
    $region58: #{chess_piece_model_forward.1} parent=5 // pred_check_branch
      %7617 = sbr.rel (%p7615) target = $region60
    $region59: #{chess_piece_model_forward.1} parent=5 // pred_region
      %s7618 = ssub.s32 %s14, 2
      // Predicated region
      $region61: #{chess_piece_model_forward.1} parent=59 // pred_check
        %p7619 = pneg %p216
      $region62: #{chess_piece_model_forward.1} parent=59 // pred_check_branch
        %7621 = sbr.rel (%p7619) target = $region64
      $region63: #{chess_piece_model_forward.1} parent=59 // pred_region
        %p7622 = scmp.lt.s32.totalorder %s20, 1
        %s7623 = scalar_select %p7622, %s20, 1
        %s7624 = smul.addr %s7623, 8
        %s7625 = scalar_lea.vmem %s8, %s7624
      $region64: #{chess_piece_model_forward.1} parent=59 // pred_fallthru
        _
    $region60: #{chess_piece_model_forward.1} parent=5 // pred_fallthru
      _
  $region6: #{chess_piece_model_forward.1} parent=0 // loop_footer
    %s18 = sadd.s32 1, %s14
  $region7: #{chess_piece_model_forward.1} parent=0 // loop_footer_branch
    %13 = sbr.rel target = $region3
  $region8: #{chess_piece_model_forward.1} parent=0 // loop_exit
    _

</llo_original>
